<compile_context>
chip_gen: v5e
topology: v5e:2x2
jax: 0.10.0
libtpu: 0.0.40
codegen_flags: <defaults>
</compile_context>

<pallas_src>
import functools

import jax
import jax.numpy as jnp
import numpy as np
from jax import lax
from jax.experimental import pallas as pl
from jax.experimental.pallas import tpu as pltpu

EPS = 1e-5
LANE = 128     # TPU lane width: channel axes are padded to a multiple of this
LPAD = 8       # left zero-pad (columns) of the conv2 scratch -> aligned interior store


def _round_up(x, m):
    return ((x + m - 1) // m) * m


def _fused_block_kernel(H, W, LP, has_proj, *refs):
    if has_proj:
        (xp_ref,            # (1, H+2, W+2, Cpi)  bf16 padded input
         w1_ref,            # (9, Cpi, Cpo)       bf16 conv1 taps
         s1_ref, b1_ref,    # (1, Cpo) f32        folded BN1
         w2_ref,            # (9, Cpo, Cpo)       bf16 conv2 taps
         s2_ref, b2_ref,    # (1, Cpo) f32        folded BN2 (+ shortcut-BN bias)
         ws_ref,            # (Cpi, Cpo) bf16     1x1 projection (BN scale folded in)
         out_ref,           # (1, H, W, Cpo) f32
         pad2_ref) = refs   # VMEM scratch (H+2, WT, Cpo) bf16
    else:
        (xp_ref, w1_ref, s1_ref, b1_ref, w2_ref, s2_ref, b2_ref,
         out_ref, pad2_ref) = refs
        ws_ref = None

    # Zero the conv2 scratch (including its halo ring) exactly once.  The
    # scratch persists across grid iterations and the interior store below
    # never touches the halo, so later iterations reuse the zeros for free.
    @pl.when(pl.program_id(0) == 0)
    def _init_scratch():
        pad2_ref[...] = jnp.zeros_like(pad2_ref)

    # ---- conv1: 9 MXU matmuls (K = Cpi), taps read directly from the ref ------------
    acc1 = None
    center = None
    for kh in range(3):
        for kw in range(3):
            tap = xp_ref[0, kh:kh + H, kw:kw + W, :]               # (H, W, Cpi) bf16
            if kh == 1 and kw == 1:
                center = tap                                       # un-padded input window
            part = jnp.einsum('hwi,io->hwo', tap, w1_ref[3 * kh + kw],
                              preferred_element_type=jnp.float32)
            acc1 = part if acc1 is None else acc1 + part

    out1 = jnp.maximum(acc1 * s1_ref[0] + b1_ref[0], 0.0)          # BN1 + ReLU (f32)
    pad2_ref[1:H + 1, LP:LP + W, :] = out1.astype(jnp.bfloat16)    # aligned interior store

    # ---- shortcut --------------------------------------------------------------------
    if has_proj:   # 1x1 projection conv; its BN scale is already folded into ws
        sc = jnp.einsum('hwi,io->hwo', center, ws_ref[...],
                        preferred_element_type=jnp.float32)
    else:          # identity shortcut: add the residual directly, no matmul
        sc = center.astype(jnp.float32)

    # ---- conv2: 9 MXU matmuls, windows read directly from the scratch ref ------------
    acc2 = None
    for kh in range(3):
        for kw in range(3):
            tap = pad2_ref[kh:kh + H, LP - 1 + kw:LP - 1 + kw + W, :]
            part = jnp.einsum('hwi,io->hwo', tap, w2_ref[3 * kh + kw],
                              preferred_element_type=jnp.float32)
            acc2 = part if acc2 is None else acc2 + part

    out2 = acc2 * s2_ref[0] + sc + b2_ref[0]               # BN2 + shortcut (+ its bias)
    out_ref[0] = jnp.maximum(out2, 0.0).astype(out_ref.dtype)


# ------------------------------ wrapper-side folding --------------------------------
def _fold_bn(bn, cpad):
    gamma, beta, mean, var = bn
    s = gamma / jnp.sqrt(var + EPS)
    b = beta - mean * s
    s = jnp.pad(s, (0, cpad - s.shape[0]))
    b = jnp.pad(b, (0, cpad - b.shape[0]))
    return s.reshape(1, cpad), b.reshape(1, cpad)


def _fold_conv3x3(w_oihw, cpi, cpo):
    """OIHW 3x3 -> (9, Cin_padded, Cout_padded) bf16, tap-major."""
    co, ci = w_oihw.shape[0], w_oihw.shape[1]
    w = jnp.transpose(w_oihw, (2, 3, 1, 0))                      # (3, 3, ci, co)
    w = jnp.pad(w, ((0, 0), (0, 0), (0, cpi - ci), (0, cpo - co)))
    return w.reshape(9, cpi, cpo).astype(jnp.bfloat16)


def _vmem_limit_bytes():
    """Per-generation VMEM limit with headroom (v7x: 64 MiB physical)."""
    cap = 128 * 1024 * 1024
    try:
        cap = int(getattr(pltpu.get_tpu_info(), "vmem_capacity_bytes", cap))
    except Exception:
        pass
    return min(100 * 1024 * 1024, (3 * cap) // 4)


def basic_block_forward(x_nchw, params, stride=1, keep_padded_nhwc=False):
    """Fused Pallas BasicBlock forward.  x_nchw: [N, Cin, H, W] float32."""
    # TODO(synk): stride > 1 (strided spatial subsampling) is not implemented.
    assert stride == 1, "only stride=1 supported by this kernel"

    x = jnp.transpose(x_nchw, (0, 2, 3, 1)).astype(jnp.float32)  # NHWC
    N, H, W, Cin = x.shape
    Cout = params['w1'].shape[0]
    Cpi = _round_up(Cin, LANE)
    Cpo = _round_up(Cout, LANE)
    has_proj = 'ws' in params
    if not has_proj:
        assert Cin == Cout, "identity shortcut requires Cin == Cout"

    # spatial pad=1, channel pad to a lane multiple, bf16 for the MXU
    xp = jnp.pad(x, ((0, 0), (1, 1), (1, 1), (0, Cpi - Cin))).astype(jnp.bfloat16)

    w1 = _fold_conv3x3(params['w1'], Cpi, Cpo)
    w2 = _fold_conv3x3(params['w2'], Cpo, Cpo)
    s1, b1 = _fold_bn(params['bn1'], Cpo)
    s2, b2 = _fold_bn(params['bn2'], Cpo)

    ws = None
    if has_proj:                                                  # projection shortcut
        ss, bs = _fold_bn(params['bns'], Cpo)
        ws = jnp.transpose(params['ws'][:, :, 0, 0], (1, 0))      # (Cin, Cout)
        ws = jnp.pad(ws, ((0, Cpi - Cin), (0, Cpo - Cout)))
        ws = (ws * ss).astype(jnp.bfloat16)                       # fold shortcut BN scale
        b2 = b2 + bs                                              # fold shortcut BN bias

    def fixed(shape):
        nd = len(shape)
        return pl.BlockSpec(shape, lambda n, _nd=nd: (0,) * _nd)

    args = [xp, w1, s1, b1, w2, s2, b2]
    in_specs = [
        pl.BlockSpec((1, H + 2, W + 2, Cpi), lambda n: (n, 0, 0, 0)),
        fixed((9, Cpi, Cpo)),
        fixed((1, Cpo)), fixed((1, Cpo)),
        fixed((9, Cpo, Cpo)),
        fixed((1, Cpo)), fixed((1, Cpo)),
    ]
    if has_proj:
        args.append(ws)
        in_specs.append(fixed((Cpi, Cpo)))

    WT = LPAD + _round_up(W + 1, 8)                               # scratch width
    kernel = functools.partial(_fused_block_kernel, H, W, LPAD, has_proj)

    out = pl.pallas_call(
        kernel,
        out_shape=jax.ShapeDtypeStruct((N, H, W, Cpo), jnp.float32),
        grid=(N,),
        in_specs=in_specs,
        out_specs=pl.BlockSpec((1, H, W, Cpo), lambda n: (n, 0, 0, 0)),
        scratch_shapes=[pltpu.VMEM((H + 2, WT, Cpo), jnp.bfloat16)],
        compiler_params=pltpu.CompilerParams(
            # "arbitrary": the persistent scratch halo is zeroed only at
            # program_id == 0, so the batch axis must stay on a single core.
            # TODO(synk): add an H-strip "parallel" axis to feed both v7x cores.
            dimension_semantics=("arbitrary",),
            vmem_limit_bytes=_vmem_limit_bytes()),
    )(*args)

    if keep_padded_nhwc:            # cheap hand-off when the next block consumes NHWC
        return out
    out = out[..., :Cout]                                         # drop channel padding
    return jnp.transpose(out, (0, 3, 1, 2))                       # back to NCHW


# ------------------------ pure-JAX reference (f32, for checking) ---------------------
def basic_block_reference(x_nchw, params, stride=1):
    x = jnp.transpose(x_nchw, (0, 2, 3, 1)).astype(jnp.float32)

    def conv(y, w_oihw, s, pad):
        w = jnp.transpose(w_oihw, (2, 3, 1, 0))                   # HWIO
        return lax.conv_general_dilated(y, w, (s, s), ((pad, pad), (pad, pad)),
                                        dimension_numbers=('NHWC', 'HWIO', 'NHWC'))

    def bn(y, p):
        gamma, beta, mean, var = p
        return (y - mean) / jnp.sqrt(var + EPS) * gamma + beta

    out = jax.nn.relu(bn(conv(x, params['w1'], stride, 1), params['bn1']))
    out = bn(conv(out, params['w2'], 1, 1), params['bn2'])
    if 'ws' in params:
        sc = bn(conv(x, params['ws'], stride, 0), params['bns'])
    else:
        sc = x
    out = jax.nn.relu(out + sc)
    return jnp.transpose(out, (0, 3, 1, 2))


# ------------------------ deterministic parameter init -------------------------------
def init_basic_block_params(key, cin, cout, stride=1):
    keys = jax.random.split(key, 6)

    def bn_params(k):
        k1, k2, k3, k4 = jax.random.split(k, 4)
        gamma = jax.random.uniform(k1, (cout,), jnp.float32, 0.5, 1.5)
        beta = jax.random.normal(k2, (cout,), jnp.float32) * 0.1
        mean = jax.random.normal(k3, (cout,), jnp.float32) * 0.1
        var = jax.random.uniform(k4, (cout,), jnp.float32, 0.5, 1.5)
        return (gamma, beta, mean, var)

    p = {
        'w1': jax.random.normal(keys[0], (cout, cin, 3, 3), jnp.float32) * 0.1,
        'bn1': bn_params(keys[1]),
        'w2': jax.random.normal(keys[2], (cout, cout, 3, 3), jnp.float32) * 0.1,
        'bn2': bn_params(keys[3]),
    }
    if stride != 1 or cin != cout:
        p['ws'] = jax.random.normal(keys[4], (cout, cin, 1, 1), jnp.float32) * 0.1
        p['bns'] = bn_params(keys[5])
    return p


if __name__ == "__main__":
    key = jax.random.PRNGKey(0)
    kx, kp1, kp2 = jax.random.split(key, 3)

    N, Cin, H, W = 2, 4, 16, 16
    x = jax.random.normal(kx, (N, Cin, H, W), jnp.float32)

    # Case A: identity shortcut (in_channels == out_channels, stride=1)
    pA = init_basic_block_params(kp1, Cin, Cin, stride=1)
    outA = jax.block_until_ready(basic_block_forward(x, pA, stride=1))
    refA = basic_block_reference(x, pA, stride=1)
    np.testing.assert_allclose(np.asarray(outA), np.asarray(refA), rtol=5e-2, atol=5e-2)

    # Case B: projection shortcut (1x1 conv + BN), stride=1, Cout != Cin
    Cout = 8
    pB = init_basic_block_params(kp2, Cin, Cout, stride=1)
    outB = jax.block_until_ready(basic_block_forward(x, pB, stride=1))
    refB = basic_block_reference(x, pB, stride=1)
    np.testing.assert_allclose(np.asarray(outB), np.asarray(refB), rtol=5e-2, atol=5e-2)

    assert outA.shape == (N, Cin, H, W) and outB.shape == (N, Cout, H, W)
    print("KERNEL_OK")
</pallas_src>

<mosaic_0001>
module attributes {stable_mosaic.version = 11 : i64} {
  func.func @_fused_block_kernel(%arg0: i32, %arg1: memref<1x18x18x128xbf16, #tpu.memory_space<vmem>>, %arg2: memref<9x128x128xbf16, #tpu.memory_space<vmem>>, %arg3: memref<1x128xf32, #tpu.memory_space<vmem>>, %arg4: memref<1x128xf32, #tpu.memory_space<vmem>>, %arg5: memref<9x128x128xbf16, #tpu.memory_space<vmem>>, %arg6: memref<1x128xf32, #tpu.memory_space<vmem>>, %arg7: memref<1x128xf32, #tpu.memory_space<vmem>>, %arg8: memref<1x16x16x128xf32, #tpu.memory_space<vmem>>, %arg9: memref<18x32x128xbf16, #tpu.memory_space<vmem>>) attributes {dimension_semantics = [#tpu.dimension_semantics<arbitrary>], iteration_bounds = array<i64: 2>, scalar_prefetch = 0 : i64, scratch_operands = 1 : i64, tpu.core_type = #tpu.core_type<tc>, window_params = [{transform_indices = @transform_0, window_bounds = array<i64: 1, 18, 18, 128>}, {pipeline_mode = #tpu.pipeline_mode<synchronous>, transform_indices = @transform_1, window_bounds = array<i64: 9, 128, 128>}, {pipeline_mode = #tpu.pipeline_mode<synchronous>, transform_indices = @transform_2, window_bounds = array<i64: 1, 128>}, {pipeline_mode = #tpu.pipeline_mode<synchronous>, transform_indices = @transform_3, window_bounds = array<i64: 1, 128>}, {pipeline_mode = #tpu.pipeline_mode<synchronous>, transform_indices = @transform_4, window_bounds = array<i64: 9, 128, 128>}, {pipeline_mode = #tpu.pipeline_mode<synchronous>, transform_indices = @transform_5, window_bounds = array<i64: 1, 128>}, {pipeline_mode = #tpu.pipeline_mode<synchronous>, transform_indices = @transform_6, window_bounds = array<i64: 1, 128>}, {transform_indices = @transform_7, window_bounds = array<i64: 1, 16, 16, 128>}]} {
    %c0_i32 = arith.constant 0 : i32
    %0 = arith.cmpi eq, %arg0, %c0_i32 : i32
    %1 = arith.extui %0 : i1 to i32
    %c0_i32_0 = arith.constant 0 : i32
    %2 = arith.cmpi ne, %1, %c0_i32_0 : i32
    scf.if %2 {
      %cst_142 = arith.constant 0.000000e+00 : bf16
      %131 = vector.broadcast %cst_142 : bf16 to vector<18x32x128xbf16>
      %c0_143 = arith.constant 0 : index
      %c0_144 = arith.constant 0 : index
      %c0_145 = arith.constant 0 : index
      %132 = vector.load %arg9[%c0_143, %c0_144, %c0_145] : memref<18x32x128xbf16, #tpu.memory_space<vmem>>, vector<18x32x128xbf16>
      tpu.vector_store %arg9[%c0_143, %c0_144, %c0_145], %131 {strides = array<i32>} : memref<18x32x128xbf16, #tpu.memory_space<vmem>>, vector<18x32x128xbf16>,
    } else {
    }
    %c0 = arith.constant 0 : index
    %c0_1 = arith.constant 0 : index
    %c0_2 = arith.constant 0 : index
    %c0_3 = arith.constant 0 : index
    %3 = vector.load %arg1[%c0, %c0_1, %c0_2, %c0_3] : memref<1x18x18x128xbf16, #tpu.memory_space<vmem>>, vector<1x16x16x128xbf16>
    %4 = vector.shape_cast %3 : vector<1x16x16x128xbf16> to vector<16x16x128xbf16>
    %c0_4 = arith.constant 0 : index
    %c0_5 = arith.constant 0 : index
    %c0_6 = arith.constant 0 : index
    %5 = vector.load %arg2[%c0_4, %c0_5, %c0_6] : memref<9x128x128xbf16, #tpu.memory_space<vmem>>, vector<1x128x128xbf16>
    %6 = vector.shape_cast %5 : vector<1x128x128xbf16> to vector<128x128xbf16>
    "tpu.trace_start"() <{level = 10 : i32, message = "hwi,io->hwo"}> : () -> ()
    %cst = arith.constant dense<0.000000e+00> : vector<16x16x128xf32>
    %7 = tpu.matmul %4, %6, %cst {dimension_numbers = #tpu.dot_dimension_numbers<[2], [0], [0, 1], [1], [0, 0, 0, 1, 1, 1], [], []>} : vector<16x16x128xbf16>, vector<128x128xbf16>, vector<16x16x128xf32> -> vector<16x16x128xf32>
    "tpu.trace_stop"() : () -> ()
    %c0_7 = arith.constant 0 : index
    %c0_8 = arith.constant 0 : index
    %c1 = arith.constant 1 : index
    %c0_9 = arith.constant 0 : index
    %8 = vector.load %arg1[%c0_7, %c0_8, %c1, %c0_9] : memref<1x18x18x128xbf16, #tpu.memory_space<vmem>>, vector<1x16x16x128xbf16>
    %9 = vector.shape_cast %8 : vector<1x16x16x128xbf16> to vector<16x16x128xbf16>
    %c1_10 = arith.constant 1 : index
    %c0_11 = arith.constant 0 : index
    %c0_12 = arith.constant 0 : index
    %10 = vector.load %arg2[%c1_10, %c0_11, %c0_12] : memref<9x128x128xbf16, #tpu.memory_space<vmem>>, vector<1x128x128xbf16>
    %11 = vector.shape_cast %10 : vector<1x128x128xbf16> to vector<128x128xbf16>
    "tpu.trace_start"() <{level = 10 : i32, message = "hwi,io->hwo"}> : () -> ()
    %cst_13 = arith.constant dense<0.000000e+00> : vector<16x16x128xf32>
    %12 = tpu.matmul %9, %11, %cst_13 {dimension_numbers = #tpu.dot_dimension_numbers<[2], [0], [0, 1], [1], [0, 0, 0, 1, 1, 1], [], []>} : vector<16x16x128xbf16>, vector<128x128xbf16>, vector<16x16x128xf32> -> vector<16x16x128xf32>
    "tpu.trace_stop"() : () -> ()
    %13 = arith.addf %7, %12 : vector<16x16x128xf32>
    %c0_14 = arith.constant 0 : index
    %c0_15 = arith.constant 0 : index
    %c2 = arith.constant 2 : index
    %c0_16 = arith.constant 0 : index
    %14 = vector.load %arg1[%c0_14, %c0_15, %c2, %c0_16] : memref<1x18x18x128xbf16, #tpu.memory_space<vmem>>, vector<1x16x16x128xbf16>
    %15 = vector.shape_cast %14 : vector<1x16x16x128xbf16> to vector<16x16x128xbf16>
    %c2_17 = arith.constant 2 : index
    %c0_18 = arith.constant 0 : index
    %c0_19 = arith.constant 0 : index
    %16 = vector.load %arg2[%c2_17, %c0_18, %c0_19] : memref<9x128x128xbf16, #tpu.memory_space<vmem>>, vector<1x128x128xbf16>
    %17 = vector.shape_cast %16 : vector<1x128x128xbf16> to vector<128x128xbf16>
    "tpu.trace_start"() <{level = 10 : i32, message = "hwi,io->hwo"}> : () -> ()
    %cst_20 = arith.constant dense<0.000000e+00> : vector<16x16x128xf32>
    %18 = tpu.matmul %15, %17, %cst_20 {dimension_numbers = #tpu.dot_dimension_numbers<[2], [0], [0, 1], [1], [0, 0, 0, 1, 1, 1], [], []>} : vector<16x16x128xbf16>, vector<128x128xbf16>, vector<16x16x128xf32> -> vector<16x16x128xf32>
    "tpu.trace_stop"() : () -> ()
    %19 = arith.addf %13, %18 : vector<16x16x128xf32>
    %c0_21 = arith.constant 0 : index
    %c1_22 = arith.constant 1 : index
    %c0_23 = arith.constant 0 : index
    %c0_24 = arith.constant 0 : index
    %20 = vector.load %arg1[%c0_21, %c1_22, %c0_23, %c0_24] : memref<1x18x18x128xbf16, #tpu.memory_space<vmem>>, vector<1x16x16x128xbf16>
    %21 = vector.shape_cast %20 : vector<1x16x16x128xbf16> to vector<16x16x128xbf16>
    %c3 = arith.constant 3 : index
    %c0_25 = arith.constant 0 : index
    %c0_26 = arith.constant 0 : index
    %22 = vector.load %arg2[%c3, %c0_25, %c0_26] : memref<9x128x128xbf16, #tpu.memory_space<vmem>>, vector<1x128x128xbf16>
    %23 = vector.shape_cast %22 : vector<1x128x128xbf16> to vector<128x128xbf16>
    "tpu.trace_start"() <{level = 10 : i32, message = "hwi,io->hwo"}> : () -> ()
    %cst_27 = arith.constant dense<0.000000e+00> : vector<16x16x128xf32>
    %24 = tpu.matmul %21, %23, %cst_27 {dimension_numbers = #tpu.dot_dimension_numbers<[2], [0], [0, 1], [1], [0, 0, 0, 1, 1, 1], [], []>} : vector<16x16x128xbf16>, vector<128x128xbf16>, vector<16x16x128xf32> -> vector<16x16x128xf32>
    "tpu.trace_stop"() : () -> ()
    %25 = arith.addf %19, %24 : vector<16x16x128xf32>
    %c0_28 = arith.constant 0 : index
    %c1_29 = arith.constant 1 : index
    %c1_30 = arith.constant 1 : index
    %c0_31 = arith.constant 0 : index
    %26 = vector.load %arg1[%c0_28, %c1_29, %c1_30, %c0_31] : memref<1x18x18x128xbf16, #tpu.memory_space<vmem>>, vector<1x16x16x128xbf16>
    %27 = vector.shape_cast %26 : vector<1x16x16x128xbf16> to vector<16x16x128xbf16>
    %c4 = arith.constant 4 : index
    %c0_32 = arith.constant 0 : index
    %c0_33 = arith.constant 0 : index
    %28 = vector.load %arg2[%c4, %c0_32, %c0_33] : memref<9x128x128xbf16, #tpu.memory_space<vmem>>, vector<1x128x128xbf16>
    %29 = vector.shape_cast %28 : vector<1x128x128xbf16> to vector<128x128xbf16>
    "tpu.trace_start"() <{level = 10 : i32, message = "hwi,io->hwo"}> : () -> ()
    %cst_34 = arith.constant dense<0.000000e+00> : vector<16x16x128xf32>
    %30 = tpu.matmul %27, %29, %cst_34 {dimension_numbers = #tpu.dot_dimension_numbers<[2], [0], [0, 1], [1], [0, 0, 0, 1, 1, 1], [], []>} : vector<16x16x128xbf16>, vector<128x128xbf16>, vector<16x16x128xf32> -> vector<16x16x128xf32>
    "tpu.trace_stop"() : () -> ()
    %31 = arith.addf %25, %30 : vector<16x16x128xf32>
    %c0_35 = arith.constant 0 : index
    %c1_36 = arith.constant 1 : index
    %c2_37 = arith.constant 2 : index
    %c0_38 = arith.constant 0 : index
    %32 = vector.load %arg1[%c0_35, %c1_36, %c2_37, %c0_38] : memref<1x18x18x128xbf16, #tpu.memory_space<vmem>>, vector<1x16x16x128xbf16>
    %33 = vector.shape_cast %32 : vector<1x16x16x128xbf16> to vector<16x16x128xbf16>
    %c5 = arith.constant 5 : index
    %c0_39 = arith.constant 0 : index
    %c0_40 = arith.constant 0 : index
    %34 = vector.load %arg2[%c5, %c0_39, %c0_40] : memref<9x128x128xbf16, #tpu.memory_space<vmem>>, vector<1x128x128xbf16>
    %35 = vector.shape_cast %34 : vector<1x128x128xbf16> to vector<128x128xbf16>
    "tpu.trace_start"() <{level = 10 : i32, message = "hwi,io->hwo"}> : () -> ()
    %cst_41 = arith.constant dense<0.000000e+00> : vector<16x16x128xf32>
    %36 = tpu.matmul %33, %35, %cst_41 {dimension_numbers = #tpu.dot_dimension_numbers<[2], [0], [0, 1], [1], [0, 0, 0, 1, 1, 1], [], []>} : vector<16x16x128xbf16>, vector<128x128xbf16>, vector<16x16x128xf32> -> vector<16x16x128xf32>
    "tpu.trace_stop"() : () -> ()
    %37 = arith.addf %31, %36 : vector<16x16x128xf32>
    %c0_42 = arith.constant 0 : index
    %c2_43 = arith.constant 2 : index
    %c0_44 = arith.constant 0 : index
    %c0_45 = arith.constant 0 : index
    %38 = vector.load %arg1[%c0_42, %c2_43, %c0_44, %c0_45] : memref<1x18x18x128xbf16, #tpu.memory_space<vmem>>, vector<1x16x16x128xbf16>
    %39 = vector.shape_cast %38 : vector<1x16x16x128xbf16> to vector<16x16x128xbf16>
    %c6 = arith.constant 6 : index
    %c0_46 = arith.constant 0 : index
    %c0_47 = arith.constant 0 : index
    %40 = vector.load %arg2[%c6, %c0_46, %c0_47] : memref<9x128x128xbf16, #tpu.memory_space<vmem>>, vector<1x128x128xbf16>
    %41 = vector.shape_cast %40 : vector<1x128x128xbf16> to vector<128x128xbf16>
    "tpu.trace_start"() <{level = 10 : i32, message = "hwi,io->hwo"}> : () -> ()
    %cst_48 = arith.constant dense<0.000000e+00> : vector<16x16x128xf32>
    %42 = tpu.matmul %39, %41, %cst_48 {dimension_numbers = #tpu.dot_dimension_numbers<[2], [0], [0, 1], [1], [0, 0, 0, 1, 1, 1], [], []>} : vector<16x16x128xbf16>, vector<128x128xbf16>, vector<16x16x128xf32> -> vector<16x16x128xf32>
    "tpu.trace_stop"() : () -> ()
    %43 = arith.addf %37, %42 : vector<16x16x128xf32>
    %c0_49 = arith.constant 0 : index
    %c2_50 = arith.constant 2 : index
    %c1_51 = arith.constant 1 : index
    %c0_52 = arith.constant 0 : index
    %44 = vector.load %arg1[%c0_49, %c2_50, %c1_51, %c0_52] : memref<1x18x18x128xbf16, #tpu.memory_space<vmem>>, vector<1x16x16x128xbf16>
    %45 = vector.shape_cast %44 : vector<1x16x16x128xbf16> to vector<16x16x128xbf16>
    %c7 = arith.constant 7 : index
    %c0_53 = arith.constant 0 : index
    %c0_54 = arith.constant 0 : index
    %46 = vector.load %arg2[%c7, %c0_53, %c0_54] : memref<9x128x128xbf16, #tpu.memory_space<vmem>>, vector<1x128x128xbf16>
    %47 = vector.shape_cast %46 : vector<1x128x128xbf16> to vector<128x128xbf16>
    "tpu.trace_start"() <{level = 10 : i32, message = "hwi,io->hwo"}> : () -> ()
    %cst_55 = arith.constant dense<0.000000e+00> : vector<16x16x128xf32>
    %48 = tpu.matmul %45, %47, %cst_55 {dimension_numbers = #tpu.dot_dimension_numbers<[2], [0], [0, 1], [1], [0, 0, 0, 1, 1, 1], [], []>} : vector<16x16x128xbf16>, vector<128x128xbf16>, vector<16x16x128xf32> -> vector<16x16x128xf32>
    "tpu.trace_stop"() : () -> ()
    %49 = arith.addf %43, %48 : vector<16x16x128xf32>
    %c0_56 = arith.constant 0 : index
    %c2_57 = arith.constant 2 : index
    %c2_58 = arith.constant 2 : index
    %c0_59 = arith.constant 0 : index
    %50 = vector.load %arg1[%c0_56, %c2_57, %c2_58, %c0_59] : memref<1x18x18x128xbf16, #tpu.memory_space<vmem>>, vector<1x16x16x128xbf16>
    %51 = vector.shape_cast %50 : vector<1x16x16x128xbf16> to vector<16x16x128xbf16>
    %c8 = arith.constant 8 : index
    %c0_60 = arith.constant 0 : index
    %c0_61 = arith.constant 0 : index
    %52 = vector.load %arg2[%c8, %c0_60, %c0_61] : memref<9x128x128xbf16, #tpu.memory_space<vmem>>, vector<1x128x128xbf16>
    %53 = vector.shape_cast %52 : vector<1x128x128xbf16> to vector<128x128xbf16>
    "tpu.trace_start"() <{level = 10 : i32, message = "hwi,io->hwo"}> : () -> ()
    %cst_62 = arith.constant dense<0.000000e+00> : vector<16x16x128xf32>
    %54 = tpu.matmul %51, %53, %cst_62 {dimension_numbers = #tpu.dot_dimension_numbers<[2], [0], [0, 1], [1], [0, 0, 0, 1, 1, 1], [], []>} : vector<16x16x128xbf16>, vector<128x128xbf16>, vector<16x16x128xf32> -> vector<16x16x128xf32>
    "tpu.trace_stop"() : () -> ()
    %55 = arith.addf %49, %54 : vector<16x16x128xf32>
    %c0_63 = arith.constant 0 : index
    %c0_64 = arith.constant 0 : index
    %56 = vector.load %arg3[%c0_63, %c0_64] : memref<1x128xf32, #tpu.memory_space<vmem>>, vector<1x128xf32>
    %57 = vector.shape_cast %56 : vector<1x128xf32> to vector<128xf32>
    %58 = vector.shape_cast %57 : vector<128xf32> to vector<1x1x128xf32>
    %59 = vector.broadcast %58 : vector<1x1x128xf32> to vector<16x16x128xf32>
    %60 = arith.mulf %55, %59 : vector<16x16x128xf32>
    %c0_65 = arith.constant 0 : index
    %c0_66 = arith.constant 0 : index
    %61 = vector.load %arg4[%c0_65, %c0_66] : memref<1x128xf32, #tpu.memory_space<vmem>>, vector<1x128xf32>
    %62 = vector.shape_cast %61 : vector<1x128xf32> to vector<128xf32>
    %63 = vector.shape_cast %62 : vector<128xf32> to vector<1x1x128xf32>
    %64 = vector.broadcast %63 : vector<1x1x128xf32> to vector<16x16x128xf32>
    %65 = arith.addf %60, %64 : vector<16x16x128xf32>
    %cst_67 = arith.constant 0.000000e+00 : f32
    %66 = vector.broadcast %cst_67 : f32 to vector<16x16x128xf32>
    %67 = arith.maximumf %65, %66 : vector<16x16x128xf32>
    %68 = arith.truncf %67 : vector<16x16x128xf32> to vector<16x16x128xbf16>
    %c1_68 = arith.constant 1 : index
    %c8_69 = arith.constant 8 : index
    %c0_70 = arith.constant 0 : index
    %69 = vector.load %arg9[%c1_68, %c8_69, %c0_70] : memref<18x32x128xbf16, #tpu.memory_space<vmem>>, vector<16x16x128xbf16>
    tpu.vector_store %arg9[%c1_68, %c8_69, %c0_70], %68 {strides = array<i32>} : memref<18x32x128xbf16, #tpu.memory_space<vmem>>, vector<16x16x128xbf16>,
    %70 = arith.extf %27 : vector<16x16x128xbf16> to vector<16x16x128xf32>
    %c0_71 = arith.constant 0 : index
    %c7_72 = arith.constant 7 : index
    %c0_73 = arith.constant 0 : index
    %71 = vector.load %arg9[%c0_71, %c7_72, %c0_73] : memref<18x32x128xbf16, #tpu.memory_space<vmem>>, vector<16x16x128xbf16>
    %c0_74 = arith.constant 0 : index
    %c0_75 = arith.constant 0 : index
    %c0_76 = arith.constant 0 : index
    %72 = vector.load %arg5[%c0_74, %c0_75, %c0_76] : memref<9x128x128xbf16, #tpu.memory_space<vmem>>, vector<1x128x128xbf16>
    %73 = vector.shape_cast %72 : vector<1x128x128xbf16> to vector<128x128xbf16>
    "tpu.trace_start"() <{level = 10 : i32, message = "hwi,io->hwo"}> : () -> ()
    %cst_77 = arith.constant dense<0.000000e+00> : vector<16x16x128xf32>
    %74 = tpu.matmul %71, %73, %cst_77 {dimension_numbers = #tpu.dot_dimension_numbers<[2], [0], [0, 1], [1], [0, 0, 0, 1, 1, 1], [], []>} : vector<16x16x128xbf16>, vector<128x128xbf16>, vector<16x16x128xf32> -> vector<16x16x128xf32>
    "tpu.trace_stop"() : () -> ()
    %c0_78 = arith.constant 0 : index
    %c8_79 = arith.constant 8 : index
    %c0_80 = arith.constant 0 : index
    %75 = vector.load %arg9[%c0_78, %c8_79, %c0_80] : memref<18x32x128xbf16, #tpu.memory_space<vmem>>, vector<16x16x128xbf16>
    %c1_81 = arith.constant 1 : index
    %c0_82 = arith.constant 0 : index
    %c0_83 = arith.constant 0 : index
    %76 = vector.load %arg5[%c1_81, %c0_82, %c0_83] : memref<9x128x128xbf16, #tpu.memory_space<vmem>>, vector<1x128x128xbf16>
    %77 = vector.shape_cast %76 : vector<1x128x128xbf16> to vector<128x128xbf16>
    "tpu.trace_start"() <{level = 10 : i32, message = "hwi,io->hwo"}> : () -> ()
    %cst_84 = arith.constant dense<0.000000e+00> : vector<16x16x128xf32>
    %78 = tpu.matmul %75, %77, %cst_84 {dimension_numbers = #tpu.dot_dimension_numbers<[2], [0], [0, 1], [1], [0, 0, 0, 1, 1, 1], [], []>} : vector<16x16x128xbf16>, vector<128x128xbf16>, vector<16x16x128xf32> -> vector<16x16x128xf32>
    "tpu.trace_stop"() : () -> ()
    %79 = arith.addf %74, %78 : vector<16x16x128xf32>
    %c0_85 = arith.constant 0 : index
    %c9 = arith.constant 9 : index
    %c0_86 = arith.constant 0 : index
    %80 = vector.load %arg9[%c0_85, %c9, %c0_86] : memref<18x32x128xbf16, #tpu.memory_space<vmem>>, vector<16x16x128xbf16>
    %c2_87 = arith.constant 2 : index
    %c0_88 = arith.constant 0 : index
    %c0_89 = arith.constant 0 : index
    %81 = vector.load %arg5[%c2_87, %c0_88, %c0_89] : memref<9x128x128xbf16, #tpu.memory_space<vmem>>, vector<1x128x128xbf16>
    %82 = vector.shape_cast %81 : vector<1x128x128xbf16> to vector<128x128xbf16>
    "tpu.trace_start"() <{level = 10 : i32, message = "hwi,io->hwo"}> : () -> ()
    %cst_90 = arith.constant dense<0.000000e+00> : vector<16x16x128xf32>
    %83 = tpu.matmul %80, %82, %cst_90 {dimension_numbers = #tpu.dot_dimension_numbers<[2], [0], [0, 1], [1], [0, 0, 0, 1, 1, 1], [], []>} : vector<16x16x128xbf16>, vector<128x128xbf16>, vector<16x16x128xf32> -> vector<16x16x128xf32>
    "tpu.trace_stop"() : () -> ()
    %84 = arith.addf %79, %83 : vector<16x16x128xf32>
    %c1_91 = arith.constant 1 : index
    %c7_92 = arith.constant 7 : index
    %c0_93 = arith.constant 0 : index
    %85 = vector.load %arg9[%c1_91, %c7_92, %c0_93] : memref<18x32x128xbf16, #tpu.memory_space<vmem>>, vector<16x16x128xbf16>
    %c3_94 = arith.constant 3 : index
    %c0_95 = arith.constant 0 : index
    %c0_96 = arith.constant 0 : index
    %86 = vector.load %arg5[%c3_94, %c0_95, %c0_96] : memref<9x128x128xbf16, #tpu.memory_space<vmem>>, vector<1x128x128xbf16>
    %87 = vector.shape_cast %86 : vector<1x128x128xbf16> to vector<128x128xbf16>
    "tpu.trace_start"() <{level = 10 : i32, message = "hwi,io->hwo"}> : () -> ()
    %cst_97 = arith.constant dense<0.000000e+00> : vector<16x16x128xf32>
    %88 = tpu.matmul %85, %87, %cst_97 {dimension_numbers = #tpu.dot_dimension_numbers<[2], [0], [0, 1], [1], [0, 0, 0, 1, 1, 1], [], []>} : vector<16x16x128xbf16>, vector<128x128xbf16>, vector<16x16x128xf32> -> vector<16x16x128xf32>
    "tpu.trace_stop"() : () -> ()
    %89 = arith.addf %84, %88 : vector<16x16x128xf32>
    %c1_98 = arith.constant 1 : index
    %c8_99 = arith.constant 8 : index
    %c0_100 = arith.constant 0 : index
    %90 = vector.load %arg9[%c1_98, %c8_99, %c0_100] : memref<18x32x128xbf16, #tpu.memory_space<vmem>>, vector<16x16x128xbf16>
    %c4_101 = arith.constant 4 : index
    %c0_102 = arith.constant 0 : index
    %c0_103 = arith.constant 0 : index
    %91 = vector.load %arg5[%c4_101, %c0_102, %c0_103] : memref<9x128x128xbf16, #tpu.memory_space<vmem>>, vector<1x128x128xbf16>
    %92 = vector.shape_cast %91 : vector<1x128x128xbf16> to vector<128x128xbf16>
    "tpu.trace_start"() <{level = 10 : i32, message = "hwi,io->hwo"}> : () -> ()
    %cst_104 = arith.constant dense<0.000000e+00> : vector<16x16x128xf32>
    %93 = tpu.matmul %90, %92, %cst_104 {dimension_numbers = #tpu.dot_dimension_numbers<[2], [0], [0, 1], [1], [0, 0, 0, 1, 1, 1], [], []>} : vector<16x16x128xbf16>, vector<128x128xbf16>, vector<16x16x128xf32> -> vector<16x16x128xf32>
    "tpu.trace_stop"() : () -> ()
    %94 = arith.addf %89, %93 : vector<16x16x128xf32>
    %c1_105 = arith.constant 1 : index
    %c9_106 = arith.constant 9 : index
    %c0_107 = arith.constant 0 : index
    %95 = vector.load %arg9[%c1_105, %c9_106, %c0_107] : memref<18x32x128xbf16, #tpu.memory_space<vmem>>, vector<16x16x128xbf16>
    %c5_108 = arith.constant 5 : index
    %c0_109 = arith.constant 0 : index
    %c0_110 = arith.constant 0 : index
    %96 = vector.load %arg5[%c5_108, %c0_109, %c0_110] : memref<9x128x128xbf16, #tpu.memory_space<vmem>>, vector<1x128x128xbf16>
    %97 = vector.shape_cast %96 : vector<1x128x128xbf16> to vector<128x128xbf16>
    "tpu.trace_start"() <{level = 10 : i32, message = "hwi,io->hwo"}> : () -> ()
    %cst_111 = arith.constant dense<0.000000e+00> : vector<16x16x128xf32>
    %98 = tpu.matmul %95, %97, %cst_111 {dimension_numbers = #tpu.dot_dimension_numbers<[2], [0], [0, 1], [1], [0, 0, 0, 1, 1, 1], [], []>} : vector<16x16x128xbf16>, vector<128x128xbf16>, vector<16x16x128xf32> -> vector<16x16x128xf32>
    "tpu.trace_stop"() : () -> ()
    %99 = arith.addf %94, %98 : vector<16x16x128xf32>
    %c2_112 = arith.constant 2 : index
    %c7_113 = arith.constant 7 : index
    %c0_114 = arith.constant 0 : index
    %100 = vector.load %arg9[%c2_112, %c7_113, %c0_114] : memref<18x32x128xbf16, #tpu.memory_space<vmem>>, vector<16x16x128xbf16>
    %c6_115 = arith.constant 6 : index
    %c0_116 = arith.constant 0 : index
    %c0_117 = arith.constant 0 : index
    %101 = vector.load %arg5[%c6_115, %c0_116, %c0_117] : memref<9x128x128xbf16, #tpu.memory_space<vmem>>, vector<1x128x128xbf16>
    %102 = vector.shape_cast %101 : vector<1x128x128xbf16> to vector<128x128xbf16>
    "tpu.trace_start"() <{level = 10 : i32, message = "hwi,io->hwo"}> : () -> ()
    %cst_118 = arith.constant dense<0.000000e+00> : vector<16x16x128xf32>
    %103 = tpu.matmul %100, %102, %cst_118 {dimension_numbers = #tpu.dot_dimension_numbers<[2], [0], [0, 1], [1], [0, 0, 0, 1, 1, 1], [], []>} : vector<16x16x128xbf16>, vector<128x128xbf16>, vector<16x16x128xf32> -> vector<16x16x128xf32>
    "tpu.trace_stop"() : () -> ()
    %104 = arith.addf %99, %103 : vector<16x16x128xf32>
    %c2_119 = arith.constant 2 : index
    %c8_120 = arith.constant 8 : index
    %c0_121 = arith.constant 0 : index
    %105 = vector.load %arg9[%c2_119, %c8_120, %c0_121] : memref<18x32x128xbf16, #tpu.memory_space<vmem>>, vector<16x16x128xbf16>
    %c7_122 = arith.constant 7 : index
    %c0_123 = arith.constant 0 : index
    %c0_124 = arith.constant 0 : index
    %106 = vector.load %arg5[%c7_122, %c0_123, %c0_124] : memref<9x128x128xbf16, #tpu.memory_space<vmem>>, vector<1x128x128xbf16>
    %107 = vector.shape_cast %106 : vector<1x128x128xbf16> to vector<128x128xbf16>
    "tpu.trace_start"() <{level = 10 : i32, message = "hwi,io->hwo"}> : () -> ()
    %cst_125 = arith.constant dense<0.000000e+00> : vector<16x16x128xf32>
    %108 = tpu.matmul %105, %107, %cst_125 {dimension_numbers = #tpu.dot_dimension_numbers<[2], [0], [0, 1], [1], [0, 0, 0, 1, 1, 1], [], []>} : vector<16x16x128xbf16>, vector<128x128xbf16>, vector<16x16x128xf32> -> vector<16x16x128xf32>
    "tpu.trace_stop"() : () -> ()
    %109 = arith.addf %104, %108 : vector<16x16x128xf32>
    %c2_126 = arith.constant 2 : index
    %c9_127 = arith.constant 9 : index
    %c0_128 = arith.constant 0 : index
    %110 = vector.load %arg9[%c2_126, %c9_127, %c0_128] : memref<18x32x128xbf16, #tpu.memory_space<vmem>>, vector<16x16x128xbf16>
    %c8_129 = arith.constant 8 : index
    %c0_130 = arith.constant 0 : index
    %c0_131 = arith.constant 0 : index
    %111 = vector.load %arg5[%c8_129, %c0_130, %c0_131] : memref<9x128x128xbf16, #tpu.memory_space<vmem>>, vector<1x128x128xbf16>
    %112 = vector.shape_cast %111 : vector<1x128x128xbf16> to vector<128x128xbf16>
    "tpu.trace_start"() <{level = 10 : i32, message = "hwi,io->hwo"}> : () -> ()
    %cst_132 = arith.constant dense<0.000000e+00> : vector<16x16x128xf32>
    %113 = tpu.matmul %110, %112, %cst_132 {dimension_numbers = #tpu.dot_dimension_numbers<[2], [0], [0, 1], [1], [0, 0, 0, 1, 1, 1], [], []>} : vector<16x16x128xbf16>, vector<128x128xbf16>, vector<16x16x128xf32> -> vector<16x16x128xf32>
    "tpu.trace_stop"() : () -> ()
    %114 = arith.addf %109, %113 : vector<16x16x128xf32>
    %c0_133 = arith.constant 0 : index
    %c0_134 = arith.constant 0 : index
    %115 = vector.load %arg6[%c0_133, %c0_134] : memref<1x128xf32, #tpu.memory_space<vmem>>, vector<1x128xf32>
    %116 = vector.shape_cast %115 : vector<1x128xf32> to vector<128xf32>
    %117 = vector.shape_cast %116 : vector<128xf32> to vector<1x1x128xf32>
    %118 = vector.broadcast %117 : vector<1x1x128xf32> to vector<16x16x128xf32>
    %119 = arith.mulf %114, %118 : vector<16x16x128xf32>
    %120 = arith.addf %119, %70 : vector<16x16x128xf32>
    %c0_135 = arith.constant 0 : index
    %c0_136 = arith.constant 0 : index
    %121 = vector.load %arg7[%c0_135, %c0_136] : memref<1x128xf32, #tpu.memory_space<vmem>>, vector<1x128xf32>
    %122 = vector.shape_cast %121 : vector<1x128xf32> to vector<128xf32>
    %123 = vector.shape_cast %122 : vector<128xf32> to vector<1x1x128xf32>
    %124 = vector.broadcast %123 : vector<1x1x128xf32> to vector<16x16x128xf32>
    %125 = arith.addf %120, %124 : vector<16x16x128xf32>
    %cst_137 = arith.constant 0.000000e+00 : f32
    %126 = vector.broadcast %cst_137 : f32 to vector<16x16x128xf32>
    %127 = arith.maximumf %125, %126 : vector<16x16x128xf32>
    %c0_138 = arith.constant 0 : index
    %c0_139 = arith.constant 0 : index
    %c0_140 = arith.constant 0 : index
    %c0_141 = arith.constant 0 : index
    %128 = vector.load %arg8[%c0_138, %c0_139, %c0_140, %c0_141] : memref<1x16x16x128xf32, #tpu.memory_space<vmem>>, vector<1x16x16x128xf32>
    %129 = vector.shape_cast %128 : vector<1x16x16x128xf32> to vector<16x16x128xf32>
    %130 = vector.shape_cast %127 : vector<16x16x128xf32> to vector<1x16x16x128xf32>
    tpu.vector_store %arg8[%c0_138, %c0_139, %c0_140, %c0_141], %130 {strides = array<i32>} : memref<1x16x16x128xf32, #tpu.memory_space<vmem>>, vector<1x16x16x128xf32>,
    return
  }
  func.func @transform_0(%arg0: i32) -> (i32, i32, i32, i32) {
    %c0_i32 = arith.constant 0 : i32
    %c0_i32_0 = arith.constant 0 : i32
    %c0_i32_1 = arith.constant 0 : i32
    %c0_i32_2 = arith.constant 0 : i32
    return %arg0, %c0_i32, %c0_i32_0, %c0_i32_1 : i32, i32, i32, i32
  }
  func.func @transform_1(%arg0: i32) -> (i32, i32, i32) {
    %c0_i32 = arith.constant 0 : i32
    %c0_i32_0 = arith.constant 0 : i32
    %c0_i32_1 = arith.constant 0 : i32
    %c0_i32_2 = arith.constant 0 : i32
    return %c0_i32, %c0_i32_0, %c0_i32_1 : i32, i32, i32
  }
  func.func @transform_2(%arg0: i32) -> (i32, i32) {
    %c0_i32 = arith.constant 0 : i32
    %c0_i32_0 = arith.constant 0 : i32
    %c0_i32_1 = arith.constant 0 : i32
    return %c0_i32, %c0_i32_0 : i32, i32
  }
  func.func @transform_3(%arg0: i32) -> (i32, i32) {
    %c0_i32 = arith.constant 0 : i32
    %c0_i32_0 = arith.constant 0 : i32
    %c0_i32_1 = arith.constant 0 : i32
    return %c0_i32, %c0_i32_0 : i32, i32
  }
  func.func @transform_4(%arg0: i32) -> (i32, i32, i32) {
    %c0_i32 = arith.constant 0 : i32
    %c0_i32_0 = arith.constant 0 : i32
    %c0_i32_1 = arith.constant 0 : i32
    %c0_i32_2 = arith.constant 0 : i32
    return %c0_i32, %c0_i32_0, %c0_i32_1 : i32, i32, i32
  }
  func.func @transform_5(%arg0: i32) -> (i32, i32) {
    %c0_i32 = arith.constant 0 : i32
    %c0_i32_0 = arith.constant 0 : i32
    %c0_i32_1 = arith.constant 0 : i32
    return %c0_i32, %c0_i32_0 : i32, i32
  }
  func.func @transform_6(%arg0: i32) -> (i32, i32) {
    %c0_i32 = arith.constant 0 : i32
    %c0_i32_0 = arith.constant 0 : i32
    %c0_i32_1 = arith.constant 0 : i32
    return %c0_i32, %c0_i32_0 : i32, i32
  }
  func.func @transform_7(%arg0: i32) -> (i32, i32, i32, i32) {
    %c0_i32 = arith.constant 0 : i32
    %c0_i32_0 = arith.constant 0 : i32
    %c0_i32_1 = arith.constant 0 : i32
    %c0_i32_2 = arith.constant 0 : i32
    return %arg0, %c0_i32, %c0_i32_0, %c0_i32_1 : i32, i32, i32, i32
  }
}

</mosaic_0001>

<llo_original>
// kernel: tpu_custom_call.1
$region0: #{tpu_custom_call.1}
  #allocation0 [shape = 'u32[]', space=smem, size = 0x4, offset = 0x4, fixed_abs, tag = 'smem constant byte address 0x4 - core index']
  #allocation1 [shape = 'u32[72,128]{1,0:T(1,128)}', space=vmem, size = 0x9000, scoped, tag = 'internal scratch']
  #allocation2 [shape = 'bf16[18,32,128]{2,1,0:T(8,128)(2,1)}', space=vmem, size = 0x24000, scoped, tag = 'scratch operand']
  %s0 = inlined_call_operand.vmem [shape: bf16[2,18,18,128], index: 0, kind: input, shape index: {}]
  %s1 = inlined_call_operand.vmem [shape: bf16[9,128,128], index: 1, kind: input, shape index: {}]
  %s2 = inlined_call_operand.vmem [shape: f32[1,128], index: 2, kind: input, shape index: {}]
  %s3 = inlined_call_operand.vmem [shape: f32[1,128], index: 3, kind: input, shape index: {}]
  %s4 = inlined_call_operand.hbm [shape: bf16[9,128,128], index: 4, kind: input, shape index: {}]
  %s5 = inlined_call_operand.vmem [shape: f32[1,128], index: 5, kind: input, shape index: {}]
  %s6 = inlined_call_operand.vmem [shape: f32[1,128], index: 6, kind: input, shape index: {}]
  %s7 = inlined_call_operand.hbm [shape: f32[2,16,16,128], index: 7, kind: output, shape index: {}]
  %s8 = sld [smem:[#allocation0]]
  $region69: #{tpu_custom_call.1} parent=0
    _
  %s10 = ssub.s32 1, %s8
  %s11 = scalar_select 0, %s10, %s8
  $region1: #{tpu_custom_call.1} parent=0
    #allocation3 [shape = 'u8[294912]{0}', space=vmem, size = 0x48000, scoped, tag = 'input window, operand 4, single buffered']
    #allocation4 [shape = 's32[2]{0}', space=sflag, size = 0x8, scoped, tag = 'scoped memory for tpu_custom_call.1']
    #allocation5 [shape = 's32[2]{0}', space=sflag, size = 0x8, scoped, tag = 'scoped memory for tpu_custom_call.1']
    #allocation6 [shape = 'u8[262144]{0}', space=vmem, size = 0x40000, scoped, tag = 'output window, operand 0']
    %12 = vsyncpa [#allocation4], 0
    %13 = vsyncpa [#allocation5], 0
    %s14 = scalar_lea.sflag [#allocation5], 1
    %15 = vsyncpa %s14, 0
    loop: start=0, step=1, limit=4
    $region2: #{tpu_custom_call.1} parent=1 // loop_pre_header
      _
    $region3: #{tpu_custom_call.1} parent=1 // loop_header
      %s17 = sphi 0, %s21
      %p18 = scmp.ge.s32.totalorder %s17, 4
      %s27 = sphi 0, %s29
      %s30 = sphi 0, %s27
      %s31 = sphi 0, %s30
      %s47 = sphi 0, %s31
      %s51 = sphi 0, %s51
      %s53 = sphi 0, %s51
      %s54 = sphi 0, %s53
      %s68 = sphi 0, %s54
      %s72 = sphi 0, %s72
      %s74 = sphi 0, %s72
      %s75 = sphi 0, %s74
      %s89 = sphi 0, %s75
      %s93 = sphi 0, %s93
      %s95 = sphi 0, %s93
      %s96 = sphi 0, %s95
      %s110 = sphi 0, %s96
      %s114 = sphi 0, %s114
      %s116 = sphi 0, %s114
      %s117 = sphi 0, %s116
      %s131 = sphi 0, %s117
      %s135 = sphi 0, %s135
      %s137 = sphi 0, %s135
      %s138 = sphi 0, %s137
      %s152 = sphi 0, %s138
      %s156 = sphi 0, %s156
      %s158 = sphi 0, %s156
      %s159 = sphi 0, %s158
      %s173 = sphi 0, %s159
      %s179 = sphi 0, %s181
      %s182 = sphi 0, %s179
      %s183 = sphi 0, %s182
      %s199 = sphi 0, %s183
    $region4: #{tpu_custom_call.1} parent=1 // loop_header_branch
      %20 = sbr.rel (%p18) target = $region8
    $region5: #{tpu_custom_call.1} parent=1 // loop_body
      %s22 = ssub.s32 %s17, 1
      %s23 = ssub.s32 %s17, 2
      %s24 = sadd.s32 %s17, 1
      %s25 = ssub.s32 %s17, %s24
      %p26 = scmp.eq.s32.totalorder %s25, 0
      %s28 = sadd.s32 %s27, 1
      %s29 = scalar_select %p26, %s27, %s28
      %p32 = pneg %p26
      %p33 = scmp.eq.s32.totalorder %s17, 1
      %p34 = por %p32, %p33
      %p35 = scmp.ne.s32.totalorder %s27, %s30
      %p36 = scmp.eq.s32.totalorder %s17, 0
      %p37 = por %p35, %p36
      %p38 = scmp.ne.s32.totalorder %s27, %s30
      %p39 = scmp.eq.s32.totalorder %s22, 1
      %p40 = por %p38, %p39
      %p41 = scmp.ne.s32.totalorder %s30, %s31
      %p42 = scmp.eq.s32.totalorder %s22, 0
      %p43 = por %p41, %p42
      %p44 = scmp.ne.s32.totalorder %s30, %s31
      %p45 = scmp.eq.s32.totalorder %s23, 1
      %p46 = por %p44, %p45
      %p48 = scmp.ne.s32.totalorder %s31, %s47
      %p49 = scmp.eq.s32.totalorder %s23, 0
      %p50 = por %p48, %p49
      %s52 = sadd.s32 %s51, 1
      %p55 = scmp.eq.s32.totalorder %s17, 1
      %p56 = scmp.ne.s32.totalorder %s51, %s53
      %p57 = scmp.eq.s32.totalorder %s17, 0
      %p58 = por %p56, %p57
      %p59 = scmp.ne.s32.totalorder %s51, %s53
      %p60 = scmp.eq.s32.totalorder %s22, 1
      %p61 = por %p59, %p60
      %p62 = scmp.ne.s32.totalorder %s53, %s54
      %p63 = scmp.eq.s32.totalorder %s22, 0
      %p64 = por %p62, %p63
      %p65 = scmp.ne.s32.totalorder %s53, %s54
      %p66 = scmp.eq.s32.totalorder %s23, 1
      %p67 = por %p65, %p66
      %p69 = scmp.ne.s32.totalorder %s54, %s68
      %p70 = scmp.eq.s32.totalorder %s23, 0
      %p71 = por %p69, %p70
      %s73 = sadd.s32 %s72, 1
      %p76 = scmp.eq.s32.totalorder %s17, 1
      %p77 = scmp.ne.s32.totalorder %s72, %s74
      %p78 = scmp.eq.s32.totalorder %s17, 0
      %p79 = por %p77, %p78
      %p80 = scmp.ne.s32.totalorder %s72, %s74
      %p81 = scmp.eq.s32.totalorder %s22, 1
      %p82 = por %p80, %p81
      %p83 = scmp.ne.s32.totalorder %s74, %s75
      %p84 = scmp.eq.s32.totalorder %s22, 0
      %p85 = por %p83, %p84
      %p86 = scmp.ne.s32.totalorder %s74, %s75
      %p87 = scmp.eq.s32.totalorder %s23, 1
      %p88 = por %p86, %p87
      %p90 = scmp.ne.s32.totalorder %s75, %s89
      %p91 = scmp.eq.s32.totalorder %s23, 0
      %p92 = por %p90, %p91
      %s94 = sadd.s32 %s93, 1
      %p97 = scmp.eq.s32.totalorder %s17, 1
      %p98 = scmp.ne.s32.totalorder %s93, %s95
      %p99 = scmp.eq.s32.totalorder %s17, 0
      %p100 = por %p98, %p99
      %p101 = scmp.ne.s32.totalorder %s93, %s95
      %p102 = scmp.eq.s32.totalorder %s22, 1
      %p103 = por %p101, %p102
      %p104 = scmp.ne.s32.totalorder %s95, %s96
      %p105 = scmp.eq.s32.totalorder %s22, 0
      %p106 = por %p104, %p105
      %p107 = scmp.ne.s32.totalorder %s95, %s96
      %p108 = scmp.eq.s32.totalorder %s23, 1
      %p109 = por %p107, %p108
      %p111 = scmp.ne.s32.totalorder %s96, %s110
      %p112 = scmp.eq.s32.totalorder %s23, 0
      %p113 = por %p111, %p112
      %s115 = sadd.s32 %s114, 1
      %p118 = scmp.eq.s32.totalorder %s17, 1
      %p119 = scmp.ne.s32.totalorder %s114, %s116
      %p120 = scmp.eq.s32.totalorder %s17, 0
      %p121 = por %p119, %p120
      %p122 = scmp.ne.s32.totalorder %s114, %s116
      %p123 = scmp.eq.s32.totalorder %s22, 1
      %p124 = por %p122, %p123
      %p125 = scmp.ne.s32.totalorder %s116, %s117
      %p126 = scmp.eq.s32.totalorder %s22, 0
      %p127 = por %p125, %p126
      %p128 = scmp.ne.s32.totalorder %s116, %s117
      %p129 = scmp.eq.s32.totalorder %s23, 1
      %p130 = por %p128, %p129
      %p132 = scmp.ne.s32.totalorder %s117, %s131
      %p133 = scmp.eq.s32.totalorder %s23, 0
      %p134 = por %p132, %p133
      %s136 = sadd.s32 %s135, 1
      %p139 = scmp.eq.s32.totalorder %s17, 1
      %p140 = scmp.ne.s32.totalorder %s135, %s137
      %p141 = scmp.eq.s32.totalorder %s17, 0
      %p142 = por %p140, %p141
      %p143 = scmp.ne.s32.totalorder %s135, %s137
      %p144 = scmp.eq.s32.totalorder %s22, 1
      %p145 = por %p143, %p144
      %p146 = scmp.ne.s32.totalorder %s137, %s138
      %p147 = scmp.eq.s32.totalorder %s22, 0
      %p148 = por %p146, %p147
      %p149 = scmp.ne.s32.totalorder %s137, %s138
      %p150 = scmp.eq.s32.totalorder %s23, 1
      %p151 = por %p149, %p150
      %p153 = scmp.ne.s32.totalorder %s138, %s152
      %p154 = scmp.eq.s32.totalorder %s23, 0
      %p155 = por %p153, %p154
      %s157 = sadd.s32 %s156, 1
      %p160 = scmp.eq.s32.totalorder %s17, 1
      %p161 = scmp.ne.s32.totalorder %s156, %s158
      %p162 = scmp.eq.s32.totalorder %s17, 0
      %p163 = por %p161, %p162
      %p164 = scmp.ne.s32.totalorder %s156, %s158
      %p165 = scmp.eq.s32.totalorder %s22, 1
      %p166 = por %p164, %p165
      %p167 = scmp.ne.s32.totalorder %s158, %s159
      %p168 = scmp.eq.s32.totalorder %s22, 0
      %p169 = por %p167, %p168
      %p170 = scmp.ne.s32.totalorder %s158, %s159
      %p171 = scmp.eq.s32.totalorder %s23, 1
      %p172 = por %p170, %p171
      %p174 = scmp.ne.s32.totalorder %s159, %s173
      %p175 = scmp.eq.s32.totalorder %s23, 0
      %p176 = por %p174, %p175
      %s177 = ssub.s32 %s17, %s24
      %p178 = scmp.eq.s32.totalorder %s177, 0
      %s180 = sadd.s32 %s179, 1
      %s181 = scalar_select %p178, %s179, %s180
      %p184 = pneg %p178
      %p185 = scmp.eq.s32.totalorder %s17, 1
      %p186 = por %p184, %p185
      %p187 = scmp.ne.s32.totalorder %s179, %s182
      %p188 = scmp.eq.s32.totalorder %s17, 0
      %p189 = por %p187, %p188
      %p190 = scmp.ne.s32.totalorder %s179, %s182
      %p191 = scmp.eq.s32.totalorder %s22, 1
      %p192 = por %p190, %p191
      %p193 = scmp.ne.s32.totalorder %s182, %s183
      %p194 = scmp.eq.s32.totalorder %s22, 0
      %p195 = por %p193, %p194
      %p196 = scmp.ne.s32.totalorder %s182, %s183
      %p197 = scmp.eq.s32.totalorder %s23, 1
      %p198 = por %p196, %p197
      %p200 = scmp.ne.s32.totalorder %s183, %s199
      %p201 = scmp.eq.s32.totalorder %s23, 0
      %p202 = por %p200, %p201
      %p203 = scmp.le.s32.totalorder 1, %s17
      %p204 = scmp.lt.s32.totalorder %s17, 3
      %p205 = pnand %p203, %p204
      %p206 = pneg %p205
      // Predicated region
      $region9: #{tpu_custom_call.1} parent=5 // pred_check
        _
      $region10: #{tpu_custom_call.1} parent=5 // pred_check_branch
        %208 = sbr.rel (%p205) target = $region12
      $region11: #{tpu_custom_call.1} parent=5 // pred_region
        %s209 = ssub.s32 %s17, 1
        // Predicated region
        $region13: #{tpu_custom_call.1} parent=11 // pred_check
          %p210 = pneg %p64
        $region14: #{tpu_custom_call.1} parent=11 // pred_check_branch
          %212 = sbr.rel (%p210) target = $region16
        $region15: #{tpu_custom_call.1} parent=11 // pred_region
          _
        $region16: #{tpu_custom_call.1} parent=11 // pred_fallthru
          _
        // Predicated region
        $region17: #{tpu_custom_call.1} parent=11 // pred_check
          %p213 = pneg %p85
        $region18: #{tpu_custom_call.1} parent=11 // pred_check_branch
          %215 = sbr.rel (%p213) target = $region20
        $region19: #{tpu_custom_call.1} parent=11 // pred_region
          _
        $region20: #{tpu_custom_call.1} parent=11 // pred_fallthru
          _
        // Predicated region
        $region21: #{tpu_custom_call.1} parent=11 // pred_check
          %p216 = pneg %p106
        $region22: #{tpu_custom_call.1} parent=11 // pred_check_branch
          %218 = sbr.rel (%p216) target = $region24
        $region23: #{tpu_custom_call.1} parent=11 // pred_region
          _
        $region24: #{tpu_custom_call.1} parent=11 // pred_fallthru
          _
        // Predicated region
        $region25: #{tpu_custom_call.1} parent=11 // pred_check
          %p219 = pneg %p127
        $region26: #{tpu_custom_call.1} parent=11 // pred_check_branch
          %221 = sbr.rel (%p219) target = $region28
        $region27: #{tpu_custom_call.1} parent=11 // pred_region
          %223 = vsyncadd [#allocation4], 0
          %s224 = sshll.u32 %s4, 4
          %s225 = int_to_ptr.hbm [resolvable:$true] %s224
          %s226 = sshll.u32 [#allocation3], 4
          %s227 = int_to_ptr.vmem [resolvable:$true] %s226
          %232 = dma.hbm_to_vmem [thread:$0]  %s225, 9216, %s227, [#allocation4], 64, 64, 4
        $region28: #{tpu_custom_call.1} parent=11 // pred_fallthru
          _
        // Predicated region
        $region29: #{tpu_custom_call.1} parent=11 // pred_check
          %p233 = pneg %p148
        $region30: #{tpu_custom_call.1} parent=11 // pred_check_branch
          %235 = sbr.rel (%p233) target = $region32
        $region31: #{tpu_custom_call.1} parent=11 // pred_region
          _
        $region32: #{tpu_custom_call.1} parent=11 // pred_fallthru
          _
        // Predicated region
        $region33: #{tpu_custom_call.1} parent=11 // pred_check
          %p236 = pneg %p169
        $region34: #{tpu_custom_call.1} parent=11 // pred_check_branch
          %238 = sbr.rel (%p236) target = $region36
        $region35: #{tpu_custom_call.1} parent=11 // pred_region
          _
        $region36: #{tpu_custom_call.1} parent=11 // pred_fallthru
          _
      $region12: #{tpu_custom_call.1} parent=5 // pred_fallthru
        _
      %p239 = scmp.lt.s32.totalorder %s17, 2
      // Predicated region
      $region37: #{tpu_custom_call.1} parent=5 // pred_check
        %p240 = pneg %p239
      $region38: #{tpu_custom_call.1} parent=5 // pred_check_branch
        %242 = sbr.rel (%p240) target = $region40
      $region39: #{tpu_custom_call.1} parent=5 // pred_region
        // Predicated region
        $region41: #{tpu_custom_call.1} parent=39 // pred_check
          %p243 = pneg %p37
        $region42: #{tpu_custom_call.1} parent=39 // pred_check_branch
          %245 = sbr.rel (%p243) target = $region44
        $region43: #{tpu_custom_call.1} parent=39 // pred_region
          %p246 = scmp.lt.s32.totalorder %s17, 1
          %s247 = scalar_select %p246, %s17, 1
          %s248 = smul.addr %s247, 54
          %s249 = smul.addr %s248, 4
          %s250 = scalar_lea.vmem %s0, %s249
        $region44: #{tpu_custom_call.1} parent=39 // pred_fallthru
          _
      $region40: #{tpu_custom_call.1} parent=5 // pred_fallthru
        _
      %p251 = scmp.le.s32.totalorder 1, %s17
      %p252 = scmp.lt.s32.totalorder %s17, 3
      %p253 = pnand %p251, %p252
      %p254 = pneg %p253
      // Predicated region
      $region45: #{tpu_custom_call.1} parent=5 // pred_check
        _
      $region46: #{tpu_custom_call.1} parent=5 // pred_check_branch
        %256 = sbr.rel (%p253) target = $region48
      $region47: #{tpu_custom_call.1} parent=5 // pred_region
        %s257 = ssub.s32 %s17, 1
        // Predicated region
        $region49: #{tpu_custom_call.1} parent=47 // pred_check
          %p258 = pneg %p127
        $region50: #{tpu_custom_call.1} parent=47 // pred_check_branch
          %260 = sbr.rel (%p258) target = $region52
        $region51: #{tpu_custom_call.1} parent=47 // pred_region
          %262 = dma.done [#allocation4], 9216
        $region52: #{tpu_custom_call.1} parent=47 // pred_fallthru
          _
        %p263 = scmp.lt.s32.totalorder %s22, 1
        %s264 = scalar_select %p263, %s22, 1
        %s265 = smul.addr %s264, 54
        %s266 = smul.addr %s265, 4
        %s267 = scalar_lea.vmem %s0, %s266
        %p268 = pneg %p43
        %p269 = pneg %p40
        %p270 = pneg %p64
        %p271 = pneg %p61
        %p272 = pneg %p85
        %p273 = pneg %p82
        %p274 = pneg %p106
        %p275 = pneg %p103
        %p276 = pneg %p127
        %p277 = pneg %p124
        %p278 = pneg %p148
        %p279 = pneg %p145
        %p280 = pneg %p169
        %p281 = pneg %p166
        %p282 = pneg %p195
        %p283 = pneg %p192
        %s284 = sand.u32 %s182, 1
        %s285 = scalar_lea.sflag [#allocation5], %s284
        %s286 = sand.u32 %s182, 1
        %s287 = smul.addr %s286, 256
        %s288 = scalar_lea.vmem [#allocation6], %s287
        %p289 = scmp.lt.s32.totalorder %s22, 1
        %s290 = scalar_select %p289, %s22, 1
        %s291 = smul.addr %s290, 54
        %s292 = smul.addr %s291, 4
        %s293 = scalar_lea.vmem %s0, %s292
        %p295 = scmp.eq.s32.totalorder %s22, 0
        // Predicated region
        $region53: #{tpu_custom_call.1} parent=47 // pred_check
          %p296 = pneg %p295
        $region54: #{tpu_custom_call.1} parent=47 // pred_check_branch
          %298 = sbr.rel (%p296) target = $region56
        $region55: #{tpu_custom_call.1} parent=47 // pred_region
          %299 = vst [vmem:[#allocation2] sm:$0xf] 0
          %300 = vst [vmem:[#allocation2 + $0x4] sm:$0xf] 0
          %301 = vst [vmem:[#allocation2 + $0x8] sm:$0xf] 0
          %302 = vst [vmem:[#allocation2 + $0xc] sm:$0xf] 0
          %303 = vst [vmem:[#allocation2 + $0x10] sm:$0xf] 0
          %304 = vst [vmem:[#allocation2 + $0x14] sm:$0xf] 0
          %305 = vst [vmem:[#allocation2 + $0x18] sm:$0xf] 0
          %306 = vst [vmem:[#allocation2 + $0x1c] sm:$0xf] 0
          %307 = vst [vmem:[#allocation2 + $0x20] sm:$0xf] 0
          %308 = vst [vmem:[#allocation2 + $0x24] sm:$0xf] 0
          %309 = vst [vmem:[#allocation2 + $0x28] sm:$0xf] 0
          %310 = vst [vmem:[#allocation2 + $0x2c] sm:$0xf] 0
          %311 = vst [vmem:[#allocation2 + $0x30] sm:$0xf] 0
          %312 = vst [vmem:[#allocation2 + $0x34] sm:$0xf] 0
          %313 = vst [vmem:[#allocation2 + $0x38] sm:$0xf] 0
          %314 = vst [vmem:[#allocation2 + $0x3c] sm:$0xf] 0
          %315 = vst [vmem:[#allocation2 + $0x40] sm:$0xf] 0
          %316 = vst [vmem:[#allocation2 + $0x44] sm:$0xf] 0
          %317 = vst [vmem:[#allocation2 + $0x48] sm:$0xf] 0
          %318 = vst [vmem:[#allocation2 + $0x4c] sm:$0xf] 0
          %319 = vst [vmem:[#allocation2 + $0x50] sm:$0xf] 0
          %320 = vst [vmem:[#allocation2 + $0x54] sm:$0xf] 0
          %321 = vst [vmem:[#allocation2 + $0x58] sm:$0xf] 0
          %322 = vst [vmem:[#allocation2 + $0x5c] sm:$0xf] 0
          %323 = vst [vmem:[#allocation2 + $0x60] sm:$0xf] 0
          %324 = vst [vmem:[#allocation2 + $0x64] sm:$0xf] 0
          %325 = vst [vmem:[#allocation2 + $0x68] sm:$0xf] 0
          %326 = vst [vmem:[#allocation2 + $0x6c] sm:$0xf] 0
          %327 = vst [vmem:[#allocation2 + $0x70] sm:$0xf] 0
          %328 = vst [vmem:[#allocation2 + $0x74] sm:$0xf] 0
          %329 = vst [vmem:[#allocation2 + $0x78] sm:$0xf] 0
          %330 = vst [vmem:[#allocation2 + $0x7c] sm:$0xf] 0
          %331 = vst [vmem:[#allocation2 + $0x80] sm:$0xf] 0
          %332 = vst [vmem:[#allocation2 + $0x84] sm:$0xf] 0
          %333 = vst [vmem:[#allocation2 + $0x88] sm:$0xf] 0
          %334 = vst [vmem:[#allocation2 + $0x8c] sm:$0xf] 0
          %335 = vst [vmem:[#allocation2 + $0x90] sm:$0xf] 0
          %336 = vst [vmem:[#allocation2 + $0x94] sm:$0xf] 0
          %337 = vst [vmem:[#allocation2 + $0x98] sm:$0xf] 0
          %338 = vst [vmem:[#allocation2 + $0x9c] sm:$0xf] 0
          %339 = vst [vmem:[#allocation2 + $0xa0] sm:$0xf] 0
          %340 = vst [vmem:[#allocation2 + $0xa4] sm:$0xf] 0
          %341 = vst [vmem:[#allocation2 + $0xa8] sm:$0xf] 0
          %342 = vst [vmem:[#allocation2 + $0xac] sm:$0xf] 0
          %343 = vst [vmem:[#allocation2 + $0xb0] sm:$0xf] 0
          %344 = vst [vmem:[#allocation2 + $0xb4] sm:$0xf] 0
          %345 = vst [vmem:[#allocation2 + $0xb8] sm:$0xf] 0
          %346 = vst [vmem:[#allocation2 + $0xbc] sm:$0xf] 0
          %347 = vst [vmem:[#allocation2 + $0xc0] sm:$0xf] 0
          %348 = vst [vmem:[#allocation2 + $0xc4] sm:$0xf] 0
          %349 = vst [vmem:[#allocation2 + $0xc8] sm:$0xf] 0
          %350 = vst [vmem:[#allocation2 + $0xcc] sm:$0xf] 0
          %351 = vst [vmem:[#allocation2 + $0xd0] sm:$0xf] 0
          %352 = vst [vmem:[#allocation2 + $0xd4] sm:$0xf] 0
          %353 = vst [vmem:[#allocation2 + $0xd8] sm:$0xf] 0
          %354 = vst [vmem:[#allocation2 + $0xdc] sm:$0xf] 0
          %355 = vst [vmem:[#allocation2 + $0xe0] sm:$0xf] 0
          %356 = vst [vmem:[#allocation2 + $0xe4] sm:$0xf] 0
          %357 = vst [vmem:[#allocation2 + $0xe8] sm:$0xf] 0
          %358 = vst [vmem:[#allocation2 + $0xec] sm:$0xf] 0
          %359 = vst [vmem:[#allocation2 + $0xf0] sm:$0xf] 0
          %360 = vst [vmem:[#allocation2 + $0xf4] sm:$0xf] 0
          %361 = vst [vmem:[#allocation2 + $0xf8] sm:$0xf] 0
          %362 = vst [vmem:[#allocation2 + $0xfc] sm:$0xf] 0
          %363 = vst [vmem:[#allocation2 + $0x100] sm:$0xf] 0
          %364 = vst [vmem:[#allocation2 + $0x104] sm:$0xf] 0
          %365 = vst [vmem:[#allocation2 + $0x108] sm:$0xf] 0
          %366 = vst [vmem:[#allocation2 + $0x10c] sm:$0xf] 0
          %367 = vst [vmem:[#allocation2 + $0x110] sm:$0xf] 0
          %368 = vst [vmem:[#allocation2 + $0x114] sm:$0xf] 0
          %369 = vst [vmem:[#allocation2 + $0x118] sm:$0xf] 0
          %370 = vst [vmem:[#allocation2 + $0x11c] sm:$0xf] 0
        $region56: #{tpu_custom_call.1} parent=47 // pred_fallthru
          _
        %v371 = vld [vmem:[%s293] sm:$0xf]
        %v372 = vld [vmem:[%s293 + $0x4] sm:$0xf]
        %v373 = vld [vmem:[%s293 + $0xc] sm:$0xf]
        %v374 = vld [vmem:[%s293 + $0x10] sm:$0xf]
        %v375 = vld [vmem:[%s293 + $0x18] sm:$0xf]
        %v376 = vld [vmem:[%s293 + $0x1c] sm:$0xf]
        %v377 = vld [vmem:[%s293 + $0x24] sm:$0xf]
        %v378 = vld [vmem:[%s293 + $0x28] sm:$0xf]
        %v379 = vld [vmem:[%s293 + $0x30] sm:$0xf]
        %v380 = vld [vmem:[%s293 + $0x34] sm:$0xf]
        %v381 = vld [vmem:[%s293 + $0x3c] sm:$0xf]
        %v382 = vld [vmem:[%s293 + $0x40] sm:$0xf]
        %v383 = vld [vmem:[%s293 + $0x48] sm:$0xf]
        %v384 = vld [vmem:[%s293 + $0x4c] sm:$0xf]
        %v385 = vld [vmem:[%s293 + $0x54] sm:$0xf]
        %v386 = vld [vmem:[%s293 + $0x58] sm:$0xf]
        %v387 = vld [vmem:[%s293 + $0x60] sm:$0xf]
        %v388 = vld [vmem:[%s293 + $0x64] sm:$0xf]
        %v389 = vld [vmem:[%s293 + $0x6c] sm:$0xf]
        %v390 = vld [vmem:[%s293 + $0x70] sm:$0xf]
        %v391 = vld [vmem:[%s293 + $0x78] sm:$0xf]
        %v392 = vld [vmem:[%s293 + $0x7c] sm:$0xf]
        %v393 = vld [vmem:[%s293 + $0x84] sm:$0xf]
        %v394 = vld [vmem:[%s293 + $0x88] sm:$0xf]
        %v395 = vld [vmem:[%s293 + $0x90] sm:$0xf]
        %v396 = vld [vmem:[%s293 + $0x94] sm:$0xf]
        %v397 = vld [vmem:[%s293 + $0x9c] sm:$0xf]
        %v398 = vld [vmem:[%s293 + $0xa0] sm:$0xf]
        %v399 = vld [vmem:[%s293 + $0xa8] sm:$0xf]
        %v400 = vld [vmem:[%s293 + $0xac] sm:$0xf]
        %v401 = vld [vmem:[%s293 + $0xb4] sm:$0xf]
        %v402 = vld [vmem:[%s293 + $0xb8] sm:$0xf]
        %v403 = vld [vmem:[%s1] sm:$0xf]
        %v404 = vld [vmem:[%s1 + $0x4] sm:$0xf]
        %v405 = vld [vmem:[%s1 + $0x8] sm:$0xf]
        %v406 = vld [vmem:[%s1 + $0xc] sm:$0xf]
        %v407 = vld [vmem:[%s1 + $0x10] sm:$0xf]
        %v408 = vld [vmem:[%s1 + $0x14] sm:$0xf]
        %v409 = vld [vmem:[%s1 + $0x18] sm:$0xf]
        %v410 = vld [vmem:[%s1 + $0x1c] sm:$0xf]
        %v411 = vld [vmem:[%s1 + $0x20] sm:$0xf]
        %v412 = vld [vmem:[%s1 + $0x24] sm:$0xf]
        %v413 = vld [vmem:[%s1 + $0x28] sm:$0xf]
        %v414 = vld [vmem:[%s1 + $0x2c] sm:$0xf]
        %v415 = vld [vmem:[%s1 + $0x30] sm:$0xf]
        %v416 = vld [vmem:[%s1 + $0x34] sm:$0xf]
        %v417 = vld [vmem:[%s1 + $0x38] sm:$0xf]
        %v418 = vld [vmem:[%s1 + $0x3c] sm:$0xf]
        %v419 = vld [vmem:[%s293] sm:$0xf]
        %v420 = vld [vmem:[%s293 + $0x4] sm:$0xf]
        %v421 = vld [vmem:[%s293 + $0x8] sm:$0x1]
        %v422 = vld [vmem:[%s293 + $0xc] sm:$0xf]
        %v423 = vld [vmem:[%s293 + $0x10] sm:$0xf]
        %v424 = vld [vmem:[%s293 + $0x14] sm:$0x1]
        %v425 = vld [vmem:[%s293 + $0x18] sm:$0xf]
        %v426 = vld [vmem:[%s293 + $0x1c] sm:$0xf]
        %v427 = vld [vmem:[%s293 + $0x20] sm:$0x1]
        %v428 = vld [vmem:[%s293 + $0x24] sm:$0xf]
        %v429 = vld [vmem:[%s293 + $0x28] sm:$0xf]
        %v430 = vld [vmem:[%s293 + $0x2c] sm:$0x1]
        %v431 = vld [vmem:[%s293 + $0x30] sm:$0xf]
        %v432 = vld [vmem:[%s293 + $0x34] sm:$0xf]
        %v433 = vld [vmem:[%s293 + $0x38] sm:$0x1]
        %v434 = vld [vmem:[%s293 + $0x3c] sm:$0xf]
        %v435 = vld [vmem:[%s293 + $0x40] sm:$0xf]
        %v436 = vld [vmem:[%s293 + $0x44] sm:$0x1]
        %v437 = vld [vmem:[%s293 + $0x48] sm:$0xf]
        %v438 = vld [vmem:[%s293 + $0x4c] sm:$0xf]
        %v439 = vld [vmem:[%s293 + $0x50] sm:$0x1]
        %v440 = vld [vmem:[%s293 + $0x54] sm:$0xf]
        %v441 = vld [vmem:[%s293 + $0x58] sm:$0xf]
        %v442 = vld [vmem:[%s293 + $0x5c] sm:$0x1]
        %v443 = vld [vmem:[%s293 + $0x60] sm:$0xf]
        %v444 = vld [vmem:[%s293 + $0x64] sm:$0xf]
        %v445 = vld [vmem:[%s293 + $0x68] sm:$0x1]
        %v446 = vld [vmem:[%s293 + $0x6c] sm:$0xf]
        %v447 = vld [vmem:[%s293 + $0x70] sm:$0xf]
        %v448 = vld [vmem:[%s293 + $0x74] sm:$0x1]
        %v449 = vld [vmem:[%s293 + $0x78] sm:$0xf]
        %v450 = vld [vmem:[%s293 + $0x7c] sm:$0xf]
        %v451 = vld [vmem:[%s293 + $0x80] sm:$0x1]
        %v452 = vld [vmem:[%s293 + $0x84] sm:$0xf]
        %v453 = vld [vmem:[%s293 + $0x88] sm:$0xf]
        %v454 = vld [vmem:[%s293 + $0x8c] sm:$0x1]
        %v455 = vld [vmem:[%s293 + $0x90] sm:$0xf]
        %v456 = vld [vmem:[%s293 + $0x94] sm:$0xf]
        %v457 = vld [vmem:[%s293 + $0x98] sm:$0x1]
        %v458 = vld [vmem:[%s293 + $0x9c] sm:$0xf]
        %v459 = vld [vmem:[%s293 + $0xa0] sm:$0xf]
        %v460 = vld [vmem:[%s293 + $0xa4] sm:$0x1]
        %v461 = vld [vmem:[%s293 + $0xa8] sm:$0xf]
        %v462 = vld [vmem:[%s293 + $0xac] sm:$0xf]
        %v463 = vld [vmem:[%s293 + $0xb0] sm:$0x1]
        %v464 = vld [vmem:[%s293 + $0xb4] sm:$0xf]
        %v465 = vld [vmem:[%s293 + $0xb8] sm:$0xf]
        %v466 = vld [vmem:[%s293 + $0xbc] sm:$0x1]
        %s467 = scalar_lea.vmem %s1, 64
        %v468 = vld [vmem:[%s467] sm:$0xf]
        %v469 = vld [vmem:[%s467 + $0x4] sm:$0xf]
        %v470 = vld [vmem:[%s467 + $0x8] sm:$0xf]
        %v471 = vld [vmem:[%s467 + $0xc] sm:$0xf]
        %v472 = vld [vmem:[%s467 + $0x10] sm:$0xf]
        %v473 = vld [vmem:[%s467 + $0x14] sm:$0xf]
        %v474 = vld [vmem:[%s467 + $0x18] sm:$0xf]
        %v475 = vld [vmem:[%s467 + $0x1c] sm:$0xf]
        %v476 = vld [vmem:[%s467 + $0x20] sm:$0xf]
        %v477 = vld [vmem:[%s467 + $0x24] sm:$0xf]
        %v478 = vld [vmem:[%s467 + $0x28] sm:$0xf]
        %v479 = vld [vmem:[%s467 + $0x2c] sm:$0xf]
        %v480 = vld [vmem:[%s467 + $0x30] sm:$0xf]
        %v481 = vld [vmem:[%s467 + $0x34] sm:$0xf]
        %v482 = vld [vmem:[%s467 + $0x38] sm:$0xf]
        %v483 = vld [vmem:[%s467 + $0x3c] sm:$0xf]
        %vm484 = vsmask.f32 3328
        %vm485 = vsmask.f32 7440
        %vm486 = vmor %vm484, %vm485
        %v488 = vshrl.u32 %v419, 16
        %v490 = vrot.slane %v488, 4
        %v491 = vshll.u32 %v419, 16
        %v493 = vrot.slane %v491, 5
        %v494 = vor.u32 %v490, %v493
        %v495 = vrot.slane %v494, 4
        %v497 = vshll.u32 %v420, 16
        %v499 = vrot.slane %v497, 5
        %v500 = vsel %vm486, %v495, %v499
        %v501 = vshrl.u32 %v420, 16
        %v503 = vrot.slane %v501, 4
        %v504 = vor.u32 %v503, %v499
        %v505 = vrot.slane %v504, 4
        %v507 = vshll.u32 %v421, 16
        %v509 = vrot.slane %v507, 5
        %v510 = vsel %vm486, %v505, %v509
        %v512 = vshrl.u32 %v422, 16
        %v514 = vrot.slane %v512, 4
        %v515 = vshll.u32 %v422, 16
        %v517 = vrot.slane %v515, 5
        %v518 = vor.u32 %v514, %v517
        %v519 = vrot.slane %v518, 4
        %v521 = vshll.u32 %v423, 16
        %v523 = vrot.slane %v521, 5
        %v524 = vsel %vm486, %v519, %v523
        %v525 = vshrl.u32 %v423, 16
        %v527 = vrot.slane %v525, 4
        %v528 = vor.u32 %v527, %v523
        %v529 = vrot.slane %v528, 4
        %v531 = vshll.u32 %v424, 16
        %v533 = vrot.slane %v531, 5
        %v534 = vsel %vm486, %v529, %v533
        %v536 = vshrl.u32 %v425, 16
        %v538 = vrot.slane %v536, 4
        %v539 = vshll.u32 %v425, 16
        %v541 = vrot.slane %v539, 5
        %v542 = vor.u32 %v538, %v541
        %v543 = vrot.slane %v542, 4
        %v545 = vshll.u32 %v426, 16
        %v547 = vrot.slane %v545, 5
        %v548 = vsel %vm486, %v543, %v547
        %v549 = vshrl.u32 %v426, 16
        %v551 = vrot.slane %v549, 4
        %v552 = vor.u32 %v551, %v547
        %v553 = vrot.slane %v552, 4
        %v555 = vshll.u32 %v427, 16
        %v557 = vrot.slane %v555, 5
        %v558 = vsel %vm486, %v553, %v557
        %v560 = vshrl.u32 %v428, 16
        %v562 = vrot.slane %v560, 4
        %v563 = vshll.u32 %v428, 16
        %v565 = vrot.slane %v563, 5
        %v566 = vor.u32 %v562, %v565
        %v567 = vrot.slane %v566, 4
        %v569 = vshll.u32 %v429, 16
        %v571 = vrot.slane %v569, 5
        %v572 = vsel %vm486, %v567, %v571
        %v573 = vshrl.u32 %v429, 16
        %v575 = vrot.slane %v573, 4
        %v576 = vor.u32 %v575, %v571
        %v577 = vrot.slane %v576, 4
        %v579 = vshll.u32 %v430, 16
        %v581 = vrot.slane %v579, 5
        %v582 = vsel %vm486, %v577, %v581
        %v584 = vshrl.u32 %v431, 16
        %v586 = vrot.slane %v584, 4
        %v587 = vshll.u32 %v431, 16
        %v589 = vrot.slane %v587, 5
        %v590 = vor.u32 %v586, %v589
        %v591 = vrot.slane %v590, 4
        %v593 = vshll.u32 %v432, 16
        %v595 = vrot.slane %v593, 5
        %v596 = vsel %vm486, %v591, %v595
        %v597 = vshrl.u32 %v432, 16
        %v599 = vrot.slane %v597, 4
        %v600 = vor.u32 %v599, %v595
        %v601 = vrot.slane %v600, 4
        %v603 = vshll.u32 %v433, 16
        %v605 = vrot.slane %v603, 5
        %v606 = vsel %vm486, %v601, %v605
        %v608 = vshrl.u32 %v434, 16
        %v610 = vrot.slane %v608, 4
        %v611 = vshll.u32 %v434, 16
        %v613 = vrot.slane %v611, 5
        %v614 = vor.u32 %v610, %v613
        %v615 = vrot.slane %v614, 4
        %v617 = vshll.u32 %v435, 16
        %v619 = vrot.slane %v617, 5
        %v620 = vsel %vm486, %v615, %v619
        %v621 = vshrl.u32 %v435, 16
        %v623 = vrot.slane %v621, 4
        %v624 = vor.u32 %v623, %v619
        %v625 = vrot.slane %v624, 4
        %v627 = vshll.u32 %v436, 16
        %v629 = vrot.slane %v627, 5
        %v630 = vsel %vm486, %v625, %v629
        %v632 = vshrl.u32 %v437, 16
        %v634 = vrot.slane %v632, 4
        %v635 = vshll.u32 %v437, 16
        %v637 = vrot.slane %v635, 5
        %v638 = vor.u32 %v634, %v637
        %v639 = vrot.slane %v638, 4
        %v641 = vshll.u32 %v438, 16
        %v643 = vrot.slane %v641, 5
        %v644 = vsel %vm486, %v639, %v643
        %v645 = vshrl.u32 %v438, 16
        %v647 = vrot.slane %v645, 4
        %v648 = vor.u32 %v647, %v643
        %v649 = vrot.slane %v648, 4
        %v651 = vshll.u32 %v439, 16
        %v653 = vrot.slane %v651, 5
        %v654 = vsel %vm486, %v649, %v653
        %v656 = vshrl.u32 %v440, 16
        %v658 = vrot.slane %v656, 4
        %v659 = vshll.u32 %v440, 16
        %v661 = vrot.slane %v659, 5
        %v662 = vor.u32 %v658, %v661
        %v663 = vrot.slane %v662, 4
        %v665 = vshll.u32 %v441, 16
        %v667 = vrot.slane %v665, 5
        %v668 = vsel %vm486, %v663, %v667
        %v669 = vshrl.u32 %v441, 16
        %v671 = vrot.slane %v669, 4
        %v672 = vor.u32 %v671, %v667
        %v673 = vrot.slane %v672, 4
        %v675 = vshll.u32 %v442, 16
        %v677 = vrot.slane %v675, 5
        %v678 = vsel %vm486, %v673, %v677
        %v680 = vshrl.u32 %v443, 16
        %v682 = vrot.slane %v680, 4
        %v683 = vshll.u32 %v443, 16
        %v685 = vrot.slane %v683, 5
        %v686 = vor.u32 %v682, %v685
        %v687 = vrot.slane %v686, 4
        %v689 = vshll.u32 %v444, 16
        %v691 = vrot.slane %v689, 5
        %v692 = vsel %vm486, %v687, %v691
        %v693 = vshrl.u32 %v444, 16
        %v695 = vrot.slane %v693, 4
        %v696 = vor.u32 %v695, %v691
        %v697 = vrot.slane %v696, 4
        %v699 = vshll.u32 %v445, 16
        %v701 = vrot.slane %v699, 5
        %v702 = vsel %vm486, %v697, %v701
        %v704 = vshrl.u32 %v446, 16
        %v706 = vrot.slane %v704, 4
        %v707 = vshll.u32 %v446, 16
        %v709 = vrot.slane %v707, 5
        %v710 = vor.u32 %v706, %v709
        %v711 = vrot.slane %v710, 4
        %v713 = vshll.u32 %v447, 16
        %v715 = vrot.slane %v713, 5
        %v716 = vsel %vm486, %v711, %v715
        %v717 = vshrl.u32 %v447, 16
        %v719 = vrot.slane %v717, 4
        %v720 = vor.u32 %v719, %v715
        %v721 = vrot.slane %v720, 4
        %v723 = vshll.u32 %v448, 16
        %v725 = vrot.slane %v723, 5
        %v726 = vsel %vm486, %v721, %v725
        %v728 = vshrl.u32 %v449, 16
        %v730 = vrot.slane %v728, 4
        %v731 = vshll.u32 %v449, 16
        %v733 = vrot.slane %v731, 5
        %v734 = vor.u32 %v730, %v733
        %v735 = vrot.slane %v734, 4
        %v737 = vshll.u32 %v450, 16
        %v739 = vrot.slane %v737, 5
        %v740 = vsel %vm486, %v735, %v739
        %v741 = vshrl.u32 %v450, 16
        %v743 = vrot.slane %v741, 4
        %v744 = vor.u32 %v743, %v739
        %v745 = vrot.slane %v744, 4
        %v747 = vshll.u32 %v451, 16
        %v749 = vrot.slane %v747, 5
        %v750 = vsel %vm486, %v745, %v749
        %v752 = vshrl.u32 %v452, 16
        %v754 = vrot.slane %v752, 4
        %v755 = vshll.u32 %v452, 16
        %v757 = vrot.slane %v755, 5
        %v758 = vor.u32 %v754, %v757
        %v759 = vrot.slane %v758, 4
        %v761 = vshll.u32 %v453, 16
        %v763 = vrot.slane %v761, 5
        %v764 = vsel %vm486, %v759, %v763
        %v765 = vshrl.u32 %v453, 16
        %v767 = vrot.slane %v765, 4
        %v768 = vor.u32 %v767, %v763
        %v769 = vrot.slane %v768, 4
        %v771 = vshll.u32 %v454, 16
        %v773 = vrot.slane %v771, 5
        %v774 = vsel %vm486, %v769, %v773
        %v776 = vshrl.u32 %v455, 16
        %v778 = vrot.slane %v776, 4
        %v779 = vshll.u32 %v455, 16
        %v781 = vrot.slane %v779, 5
        %v782 = vor.u32 %v778, %v781
        %v783 = vrot.slane %v782, 4
        %v785 = vshll.u32 %v456, 16
        %v787 = vrot.slane %v785, 5
        %v788 = vsel %vm486, %v783, %v787
        %v789 = vshrl.u32 %v456, 16
        %v791 = vrot.slane %v789, 4
        %v792 = vor.u32 %v791, %v787
        %v793 = vrot.slane %v792, 4
        %v795 = vshll.u32 %v457, 16
        %v797 = vrot.slane %v795, 5
        %v798 = vsel %vm486, %v793, %v797
        %v800 = vshrl.u32 %v458, 16
        %v802 = vrot.slane %v800, 4
        %v803 = vshll.u32 %v458, 16
        %v805 = vrot.slane %v803, 5
        %v806 = vor.u32 %v802, %v805
        %v807 = vrot.slane %v806, 4
        %v809 = vshll.u32 %v459, 16
        %v811 = vrot.slane %v809, 5
        %v812 = vsel %vm486, %v807, %v811
        %v813 = vshrl.u32 %v459, 16
        %v815 = vrot.slane %v813, 4
        %v816 = vor.u32 %v815, %v811
        %v817 = vrot.slane %v816, 4
        %v819 = vshll.u32 %v460, 16
        %v821 = vrot.slane %v819, 5
        %v822 = vsel %vm486, %v817, %v821
        %v824 = vshrl.u32 %v461, 16
        %v826 = vrot.slane %v824, 4
        %v827 = vshll.u32 %v461, 16
        %v829 = vrot.slane %v827, 5
        %v830 = vor.u32 %v826, %v829
        %v831 = vrot.slane %v830, 4
        %v833 = vshll.u32 %v462, 16
        %v835 = vrot.slane %v833, 5
        %v836 = vsel %vm486, %v831, %v835
        %v837 = vshrl.u32 %v462, 16
        %v839 = vrot.slane %v837, 4
        %v840 = vor.u32 %v839, %v835
        %v841 = vrot.slane %v840, 4
        %v843 = vshll.u32 %v463, 16
        %v845 = vrot.slane %v843, 5
        %v846 = vsel %vm486, %v841, %v845
        %v848 = vshrl.u32 %v464, 16
        %v850 = vrot.slane %v848, 4
        %v851 = vshll.u32 %v464, 16
        %v853 = vrot.slane %v851, 5
        %v854 = vor.u32 %v850, %v853
        %v855 = vrot.slane %v854, 4
        %v857 = vshll.u32 %v465, 16
        %v859 = vrot.slane %v857, 5
        %v860 = vsel %vm486, %v855, %v859
        %v861 = vshrl.u32 %v465, 16
        %v863 = vrot.slane %v861, 4
        %v864 = vor.u32 %v863, %v859
        %v865 = vrot.slane %v864, 4
        %v867 = vshll.u32 %v466, 16
        %v869 = vrot.slane %v867, 5
        %v870 = vsel %vm486, %v865, %v869
        %v871 = vunpack.c.l.b16 %v500
        %v872 = vunpack.c.l.b16 %v510
        %v873 = vunpack.c.l.b16 %v524
        %v874 = vunpack.c.l.b16 %v534
        %v875 = vunpack.c.l.b16 %v548
        %v876 = vunpack.c.l.b16 %v558
        %v877 = vunpack.c.l.b16 %v572
        %v878 = vunpack.c.l.b16 %v582
        %v879 = vunpack.c.l.b16 %v596
        %v880 = vunpack.c.l.b16 %v606
        %v881 = vunpack.c.l.b16 %v620
        %v882 = vunpack.c.l.b16 %v630
        %v883 = vunpack.c.l.b16 %v644
        %v884 = vunpack.c.l.b16 %v654
        %v885 = vunpack.c.l.b16 %v668
        %v886 = vunpack.c.l.b16 %v678
        %v887 = vunpack.c.l.b16 %v692
        %v888 = vunpack.c.l.b16 %v702
        %v889 = vunpack.c.l.b16 %v716
        %v890 = vunpack.c.l.b16 %v726
        %v891 = vunpack.c.l.b16 %v740
        %v892 = vunpack.c.l.b16 %v750
        %v893 = vunpack.c.l.b16 %v764
        %v894 = vunpack.c.l.b16 %v774
        %v895 = vunpack.c.l.b16 %v788
        %v896 = vunpack.c.l.b16 %v798
        %v897 = vunpack.c.l.b16 %v812
        %v898 = vunpack.c.l.b16 %v822
        %v899 = vunpack.c.l.b16 %v836
        %v900 = vunpack.c.l.b16 %v846
        %v901 = vunpack.c.l.b16 %v860
        %v902 = vunpack.c.l.b16 %v870
        %v903 = vpack.c.b16 %v872, %v871
        %v904 = vpack.c.b16 %v874, %v873
        %v905 = vpack.c.b16 %v876, %v875
        %v906 = vpack.c.b16 %v878, %v877
        %v907 = vpack.c.b16 %v880, %v879
        %v908 = vpack.c.b16 %v882, %v881
        %v909 = vpack.c.b16 %v884, %v883
        %v910 = vpack.c.b16 %v886, %v885
        %v911 = vpack.c.b16 %v888, %v887
        %v912 = vpack.c.b16 %v890, %v889
        %v913 = vpack.c.b16 %v892, %v891
        %v914 = vpack.c.b16 %v894, %v893
        %v915 = vpack.c.b16 %v896, %v895
        %v916 = vpack.c.b16 %v898, %v897
        %v917 = vpack.c.b16 %v900, %v899
        %v918 = vpack.c.b16 %v902, %v901
        %v951 = vunpack.c.l.b16 %v468
        %v952 = vunpack.c.l.b16 %v469
        %v953 = vunpack.c.l.b16 %v470
        %v954 = vunpack.c.l.b16 %v471
        %v955 = vunpack.c.l.b16 %v472
        %v956 = vunpack.c.l.b16 %v473
        %v957 = vunpack.c.l.b16 %v474
        %v958 = vunpack.c.l.b16 %v475
        %v959 = vunpack.c.l.b16 %v476
        %v960 = vunpack.c.l.b16 %v477
        %v961 = vunpack.c.l.b16 %v478
        %v962 = vunpack.c.l.b16 %v479
        %v963 = vunpack.c.l.b16 %v480
        %v964 = vunpack.c.l.b16 %v481
        %v965 = vunpack.c.l.b16 %v482
        %v966 = vunpack.c.l.b16 %v483
        %v967 = vpack.c.b16 %v952, %v951
        %v968 = vpack.c.b16 %v954, %v953
        %v969 = vpack.c.b16 %v956, %v955
        %v970 = vpack.c.b16 %v958, %v957
        %v971 = vpack.c.b16 %v960, %v959
        %v972 = vpack.c.b16 %v962, %v961
        %v973 = vpack.c.b16 %v964, %v963
        %v974 = vpack.c.b16 %v966, %v965
        %983 = vmatpush.bf16.msra.mxu0 %v974
        %984 = vmatpush.bf16.msra.mxu0 %v973
        %985 = vmatpush.bf16.msra.mxu0 %v972
        %986 = vmatpush.bf16.msra.mxu0 %v971
        %987 = vmatpush.bf16.msra.mxu0 %v970
        %988 = vmatpush.bf16.msra.mxu0 %v969
        %989 = vmatpush.bf16.msra.mxu0 %v968
        %990 = vmatpush.bf16.msra.mxu0 %v967
        %991 = vmatmul.bf16.gmra.mxu0 %v903
        %v992 = vpop.f32.mrf.mxu0
        %v993 = vadd.f32 0.0, %v992
        %v994 = vpop.f32.mrf.mxu0
        %v995 = vadd.f32 0.0, %v994
        %996 = vmatmul.bf16.gmra.mxu0 %v904
        %v997 = vpop.f32.mrf.mxu0
        %v998 = vadd.f32 0.0, %v997
        %v999 = vpop.f32.mrf.mxu0
        %v1000 = vadd.f32 0.0, %v999
        %1001 = vmatmul.bf16.gmra.mxu0 %v905
        %v1002 = vpop.f32.mrf.mxu0
        %v1003 = vadd.f32 0.0, %v1002
        %v1004 = vpop.f32.mrf.mxu0
        %v1005 = vadd.f32 0.0, %v1004
        %1006 = vmatmul.bf16.gmra.mxu0 %v906
        %v1007 = vpop.f32.mrf.mxu0
        %v1008 = vadd.f32 0.0, %v1007
        %v1009 = vpop.f32.mrf.mxu0
        %v1010 = vadd.f32 0.0, %v1009
        %1011 = vmatmul.bf16.gmra.mxu0 %v907
        %v1012 = vpop.f32.mrf.mxu0
        %v1013 = vadd.f32 0.0, %v1012
        %v1014 = vpop.f32.mrf.mxu0
        %v1015 = vadd.f32 0.0, %v1014
        %1016 = vmatmul.bf16.gmra.mxu0 %v908
        %v1017 = vpop.f32.mrf.mxu0
        %v1018 = vadd.f32 0.0, %v1017
        %v1019 = vpop.f32.mrf.mxu0
        %v1020 = vadd.f32 0.0, %v1019
        %1021 = vmatmul.bf16.gmra.mxu0 %v909
        %v1022 = vpop.f32.mrf.mxu0
        %v1023 = vadd.f32 0.0, %v1022
        %v1024 = vpop.f32.mrf.mxu0
        %v1025 = vadd.f32 0.0, %v1024
        %1026 = vmatmul.bf16.gmra.mxu0 %v910
        %v1027 = vpop.f32.mrf.mxu0
        %v1028 = vadd.f32 0.0, %v1027
        %v1029 = vpop.f32.mrf.mxu0
        %v1030 = vadd.f32 0.0, %v1029
        %1031 = vmatmul.bf16.gmra.mxu0 %v911
        %v1032 = vpop.f32.mrf.mxu0
        %v1033 = vadd.f32 0.0, %v1032
        %v1034 = vpop.f32.mrf.mxu0
        %v1035 = vadd.f32 0.0, %v1034
        %1036 = vmatmul.bf16.gmra.mxu0 %v912
        %v1037 = vpop.f32.mrf.mxu0
        %v1038 = vadd.f32 0.0, %v1037
        %v1039 = vpop.f32.mrf.mxu0
        %v1040 = vadd.f32 0.0, %v1039
        %1041 = vmatmul.bf16.gmra.mxu0 %v913
        %v1042 = vpop.f32.mrf.mxu0
        %v1043 = vadd.f32 0.0, %v1042
        %v1044 = vpop.f32.mrf.mxu0
        %v1045 = vadd.f32 0.0, %v1044
        %1046 = vmatmul.bf16.gmra.mxu0 %v914
        %v1047 = vpop.f32.mrf.mxu0
        %v1048 = vadd.f32 0.0, %v1047
        %v1049 = vpop.f32.mrf.mxu0
        %v1050 = vadd.f32 0.0, %v1049
        %1051 = vmatmul.bf16.gmra.mxu0 %v915
        %v1052 = vpop.f32.mrf.mxu0
        %v1053 = vadd.f32 0.0, %v1052
        %v1054 = vpop.f32.mrf.mxu0
        %v1055 = vadd.f32 0.0, %v1054
        %1056 = vmatmul.bf16.gmra.mxu0 %v916
        %v1057 = vpop.f32.mrf.mxu0
        %v1058 = vadd.f32 0.0, %v1057
        %v1059 = vpop.f32.mrf.mxu0
        %v1060 = vadd.f32 0.0, %v1059
        %1061 = vmatmul.bf16.gmra.mxu0 %v917
        %v1062 = vpop.f32.mrf.mxu0
        %v1063 = vadd.f32 0.0, %v1062
        %v1064 = vpop.f32.mrf.mxu0
        %v1065 = vadd.f32 0.0, %v1064
        %1066 = vmatmul.bf16.gmra.mxu0 %v918
        %v1067 = vpop.f32.mrf.mxu0
        %v1068 = vadd.f32 0.0, %v1067
        %v1069 = vpop.f32.mrf.mxu0
        %v1070 = vadd.f32 0.0, %v1069
        %1071 = vdwg.mxu0
        %v1104 = vunpack.c.l.b16 %v371
        %v1105 = vunpack.c.l.b16 %v372
        %v1106 = vunpack.c.l.b16 %v373
        %v1107 = vunpack.c.l.b16 %v374
        %v1108 = vunpack.c.l.b16 %v375
        %v1109 = vunpack.c.l.b16 %v376
        %v1110 = vunpack.c.l.b16 %v377
        %v1111 = vunpack.c.l.b16 %v378
        %v1112 = vunpack.c.l.b16 %v379
        %v1113 = vunpack.c.l.b16 %v380
        %v1114 = vunpack.c.l.b16 %v381
        %v1115 = vunpack.c.l.b16 %v382
        %v1116 = vunpack.c.l.b16 %v383
        %v1117 = vunpack.c.l.b16 %v384
        %v1118 = vunpack.c.l.b16 %v385
        %v1119 = vunpack.c.l.b16 %v386
        %v1120 = vunpack.c.l.b16 %v387
        %v1121 = vunpack.c.l.b16 %v388
        %v1122 = vunpack.c.l.b16 %v389
        %v1123 = vunpack.c.l.b16 %v390
        %v1124 = vunpack.c.l.b16 %v391
        %v1125 = vunpack.c.l.b16 %v392
        %v1126 = vunpack.c.l.b16 %v393
        %v1127 = vunpack.c.l.b16 %v394
        %v1128 = vunpack.c.l.b16 %v395
        %v1129 = vunpack.c.l.b16 %v396
        %v1130 = vunpack.c.l.b16 %v397
        %v1131 = vunpack.c.l.b16 %v398
        %v1132 = vunpack.c.l.b16 %v399
        %v1133 = vunpack.c.l.b16 %v400
        %v1134 = vunpack.c.l.b16 %v401
        %v1135 = vunpack.c.l.b16 %v402
        %v1136 = vpack.c.b16 %v1105, %v1104
        %v1137 = vpack.c.b16 %v1107, %v1106
        %v1138 = vpack.c.b16 %v1109, %v1108
        %v1139 = vpack.c.b16 %v1111, %v1110
        %v1140 = vpack.c.b16 %v1113, %v1112
        %v1141 = vpack.c.b16 %v1115, %v1114
        %v1142 = vpack.c.b16 %v1117, %v1116
        %v1143 = vpack.c.b16 %v1119, %v1118
        %v1144 = vpack.c.b16 %v1121, %v1120
        %v1145 = vpack.c.b16 %v1123, %v1122
        %v1146 = vpack.c.b16 %v1125, %v1124
        %v1147 = vpack.c.b16 %v1127, %v1126
        %v1148 = vpack.c.b16 %v1129, %v1128
        %v1149 = vpack.c.b16 %v1131, %v1130
        %v1150 = vpack.c.b16 %v1133, %v1132
        %v1151 = vpack.c.b16 %v1135, %v1134
        %v1184 = vunpack.c.l.b16 %v403
        %v1185 = vunpack.c.l.b16 %v404
        %v1186 = vunpack.c.l.b16 %v405
        %v1187 = vunpack.c.l.b16 %v406
        %v1188 = vunpack.c.l.b16 %v407
        %v1189 = vunpack.c.l.b16 %v408
        %v1190 = vunpack.c.l.b16 %v409
        %v1191 = vunpack.c.l.b16 %v410
        %v1192 = vunpack.c.l.b16 %v411
        %v1193 = vunpack.c.l.b16 %v412
        %v1194 = vunpack.c.l.b16 %v413
        %v1195 = vunpack.c.l.b16 %v414
        %v1196 = vunpack.c.l.b16 %v415
        %v1197 = vunpack.c.l.b16 %v416
        %v1198 = vunpack.c.l.b16 %v417
        %v1199 = vunpack.c.l.b16 %v418
        %v1200 = vpack.c.b16 %v1185, %v1184
        %v1201 = vpack.c.b16 %v1187, %v1186
        %v1202 = vpack.c.b16 %v1189, %v1188
        %v1203 = vpack.c.b16 %v1191, %v1190
        %v1204 = vpack.c.b16 %v1193, %v1192
        %v1205 = vpack.c.b16 %v1195, %v1194
        %v1206 = vpack.c.b16 %v1197, %v1196
        %v1207 = vpack.c.b16 %v1199, %v1198
        %1216 = vmatpush.bf16.msra.mxu0 %v1207
        %1217 = vmatpush.bf16.msra.mxu0 %v1206
        %1218 = vmatpush.bf16.msra.mxu0 %v1205
        %1219 = vmatpush.bf16.msra.mxu0 %v1204
        %1220 = vmatpush.bf16.msra.mxu0 %v1203
        %1221 = vmatpush.bf16.msra.mxu0 %v1202
        %1222 = vmatpush.bf16.msra.mxu0 %v1201
        %1223 = vmatpush.bf16.msra.mxu0 %v1200
        %1224 = vmatmul.bf16.gmra.mxu0 %v1136
        %v1225 = vpop.f32.mrf.mxu0
        %v1226 = vadd.f32 %v993, %v1225
        %v1227 = vpop.f32.mrf.mxu0
        %v1228 = vadd.f32 %v995, %v1227
        %1229 = vmatmul.bf16.gmra.mxu0 %v1137
        %v1230 = vpop.f32.mrf.mxu0
        %v1231 = vadd.f32 %v998, %v1230
        %v1232 = vpop.f32.mrf.mxu0
        %v1233 = vadd.f32 %v1000, %v1232
        %1234 = vmatmul.bf16.gmra.mxu0 %v1138
        %v1235 = vpop.f32.mrf.mxu0
        %v1236 = vadd.f32 %v1003, %v1235
        %v1237 = vpop.f32.mrf.mxu0
        %v1238 = vadd.f32 %v1005, %v1237
        %1239 = vmatmul.bf16.gmra.mxu0 %v1139
        %v1240 = vpop.f32.mrf.mxu0
        %v1241 = vadd.f32 %v1008, %v1240
        %v1242 = vpop.f32.mrf.mxu0
        %v1243 = vadd.f32 %v1010, %v1242
        %1244 = vmatmul.bf16.gmra.mxu0 %v1140
        %v1245 = vpop.f32.mrf.mxu0
        %v1246 = vadd.f32 %v1013, %v1245
        %v1247 = vpop.f32.mrf.mxu0
        %v1248 = vadd.f32 %v1015, %v1247
        %1249 = vmatmul.bf16.gmra.mxu0 %v1141
        %v1250 = vpop.f32.mrf.mxu0
        %v1251 = vadd.f32 %v1018, %v1250
        %v1252 = vpop.f32.mrf.mxu0
        %v1253 = vadd.f32 %v1020, %v1252
        %1254 = vmatmul.bf16.gmra.mxu0 %v1142
        %v1255 = vpop.f32.mrf.mxu0
        %v1256 = vadd.f32 %v1023, %v1255
        %v1257 = vpop.f32.mrf.mxu0
        %v1258 = vadd.f32 %v1025, %v1257
        %1259 = vmatmul.bf16.gmra.mxu0 %v1143
        %v1260 = vpop.f32.mrf.mxu0
        %v1261 = vadd.f32 %v1028, %v1260
        %v1262 = vpop.f32.mrf.mxu0
        %v1263 = vadd.f32 %v1030, %v1262
        %1264 = vmatmul.bf16.gmra.mxu0 %v1144
        %v1265 = vpop.f32.mrf.mxu0
        %v1266 = vadd.f32 %v1033, %v1265
        %v1267 = vpop.f32.mrf.mxu0
        %v1268 = vadd.f32 %v1035, %v1267
        %1269 = vmatmul.bf16.gmra.mxu0 %v1145
        %v1270 = vpop.f32.mrf.mxu0
        %v1271 = vadd.f32 %v1038, %v1270
        %v1272 = vpop.f32.mrf.mxu0
        %v1273 = vadd.f32 %v1040, %v1272
        %1274 = vmatmul.bf16.gmra.mxu0 %v1146
        %v1275 = vpop.f32.mrf.mxu0
        %v1276 = vadd.f32 %v1043, %v1275
        %v1277 = vpop.f32.mrf.mxu0
        %v1278 = vadd.f32 %v1045, %v1277
        %1279 = vmatmul.bf16.gmra.mxu0 %v1147
        %v1280 = vpop.f32.mrf.mxu0
        %v1281 = vadd.f32 %v1048, %v1280
        %v1282 = vpop.f32.mrf.mxu0
        %v1283 = vadd.f32 %v1050, %v1282
        %1284 = vmatmul.bf16.gmra.mxu0 %v1148
        %v1285 = vpop.f32.mrf.mxu0
        %v1286 = vadd.f32 %v1053, %v1285
        %v1287 = vpop.f32.mrf.mxu0
        %v1288 = vadd.f32 %v1055, %v1287
        %1289 = vmatmul.bf16.gmra.mxu0 %v1149
        %v1290 = vpop.f32.mrf.mxu0
        %v1291 = vadd.f32 %v1058, %v1290
        %v1292 = vpop.f32.mrf.mxu0
        %v1293 = vadd.f32 %v1060, %v1292
        %1294 = vmatmul.bf16.gmra.mxu0 %v1150
        %v1295 = vpop.f32.mrf.mxu0
        %v1296 = vadd.f32 %v1063, %v1295
        %v1297 = vpop.f32.mrf.mxu0
        %v1298 = vadd.f32 %v1065, %v1297
        %1299 = vmatmul.bf16.gmra.mxu0 %v1151
        %v1300 = vpop.f32.mrf.mxu0
        %v1301 = vadd.f32 %v1068, %v1300
        %v1302 = vpop.f32.mrf.mxu0
        %v1303 = vadd.f32 %v1070, %v1302
        %1304 = vdwg.mxu0
        %v1305 = vld [vmem:[%s293] sm:$0xe]
        %v1306 = vld [vmem:[%s293 + $0x4] sm:$0xf]
        %v1307 = vld [vmem:[%s293 + $0x8] sm:$0x1]
        %v1308 = vld [vmem:[%s293 + $0xc] sm:$0xe]
        %v1309 = vld [vmem:[%s293 + $0x10] sm:$0xf]
        %v1310 = vld [vmem:[%s293 + $0x14] sm:$0x1]
        %v1311 = vld [vmem:[%s293 + $0x18] sm:$0xe]
        %v1312 = vld [vmem:[%s293 + $0x1c] sm:$0xf]
        %v1313 = vld [vmem:[%s293 + $0x20] sm:$0x1]
        %v1314 = vld [vmem:[%s293 + $0x24] sm:$0xe]
        %v1315 = vld [vmem:[%s293 + $0x28] sm:$0xf]
        %v1316 = vld [vmem:[%s293 + $0x2c] sm:$0x1]
        %v1317 = vld [vmem:[%s293 + $0x30] sm:$0xe]
        %v1318 = vld [vmem:[%s293 + $0x34] sm:$0xf]
        %v1319 = vld [vmem:[%s293 + $0x38] sm:$0x1]
        %v1320 = vld [vmem:[%s293 + $0x3c] sm:$0xe]
        %v1321 = vld [vmem:[%s293 + $0x40] sm:$0xf]
        %v1322 = vld [vmem:[%s293 + $0x44] sm:$0x1]
        %v1323 = vld [vmem:[%s293 + $0x48] sm:$0xe]
        %v1324 = vld [vmem:[%s293 + $0x4c] sm:$0xf]
        %v1325 = vld [vmem:[%s293 + $0x50] sm:$0x1]
        %v1326 = vld [vmem:[%s293 + $0x54] sm:$0xe]
        %v1327 = vld [vmem:[%s293 + $0x58] sm:$0xf]
        %v1328 = vld [vmem:[%s293 + $0x5c] sm:$0x1]
        %v1329 = vld [vmem:[%s293 + $0x60] sm:$0xe]
        %v1330 = vld [vmem:[%s293 + $0x64] sm:$0xf]
        %v1331 = vld [vmem:[%s293 + $0x68] sm:$0x1]
        %v1332 = vld [vmem:[%s293 + $0x6c] sm:$0xe]
        %v1333 = vld [vmem:[%s293 + $0x70] sm:$0xf]
        %v1334 = vld [vmem:[%s293 + $0x74] sm:$0x1]
        %v1335 = vld [vmem:[%s293 + $0x78] sm:$0xe]
        %v1336 = vld [vmem:[%s293 + $0x7c] sm:$0xf]
        %v1337 = vld [vmem:[%s293 + $0x80] sm:$0x1]
        %v1338 = vld [vmem:[%s293 + $0x84] sm:$0xe]
        %v1339 = vld [vmem:[%s293 + $0x88] sm:$0xf]
        %v1340 = vld [vmem:[%s293 + $0x8c] sm:$0x1]
        %v1341 = vld [vmem:[%s293 + $0x90] sm:$0xe]
        %v1342 = vld [vmem:[%s293 + $0x94] sm:$0xf]
        %v1343 = vld [vmem:[%s293 + $0x98] sm:$0x1]
        %v1344 = vld [vmem:[%s293 + $0x9c] sm:$0xe]
        %v1345 = vld [vmem:[%s293 + $0xa0] sm:$0xf]
        %v1346 = vld [vmem:[%s293 + $0xa4] sm:$0x1]
        %v1347 = vld [vmem:[%s293 + $0xa8] sm:$0xe]
        %v1348 = vld [vmem:[%s293 + $0xac] sm:$0xf]
        %v1349 = vld [vmem:[%s293 + $0xb0] sm:$0x1]
        %v1350 = vld [vmem:[%s293 + $0xb4] sm:$0xe]
        %v1351 = vld [vmem:[%s293 + $0xb8] sm:$0xf]
        %v1352 = vld [vmem:[%s293 + $0xbc] sm:$0x1]
        %s1353 = scalar_lea.vmem %s1, 128
        %v1354 = vld [vmem:[%s1353] sm:$0xf]
        %v1355 = vld [vmem:[%s1353 + $0x4] sm:$0xf]
        %v1356 = vld [vmem:[%s1353 + $0x8] sm:$0xf]
        %v1357 = vld [vmem:[%s1353 + $0xc] sm:$0xf]
        %v1358 = vld [vmem:[%s1353 + $0x10] sm:$0xf]
        %v1359 = vld [vmem:[%s1353 + $0x14] sm:$0xf]
        %v1360 = vld [vmem:[%s1353 + $0x18] sm:$0xf]
        %v1361 = vld [vmem:[%s1353 + $0x1c] sm:$0xf]
        %v1362 = vld [vmem:[%s1353 + $0x20] sm:$0xf]
        %v1363 = vld [vmem:[%s1353 + $0x24] sm:$0xf]
        %v1364 = vld [vmem:[%s1353 + $0x28] sm:$0xf]
        %v1365 = vld [vmem:[%s1353 + $0x2c] sm:$0xf]
        %v1366 = vld [vmem:[%s1353 + $0x30] sm:$0xf]
        %v1367 = vld [vmem:[%s1353 + $0x34] sm:$0xf]
        %v1368 = vld [vmem:[%s1353 + $0x38] sm:$0xf]
        %v1369 = vld [vmem:[%s1353 + $0x3c] sm:$0xf]
        %vm1418 = vcmask 1042432
        %vm1419 = vcmask 1046532
        %vm1420 = vmor %vm1418, %vm1419
        %v1421 = vrot.slane %v1305, 5
        %v1422 = vrot.slane %v1421, 4
        %v1423 = vrot.slane %v1306, 5
        %v1424 = vsel %vm1420, %v1422, %v1423
        %v1425 = vrot.slane %v1423, 4
        %v1426 = vrot.slane %v1307, 5
        %v1427 = vsel %vm1420, %v1425, %v1426
        %v1428 = vrot.slane %v1308, 5
        %v1429 = vrot.slane %v1428, 4
        %v1430 = vrot.slane %v1309, 5
        %v1431 = vsel %vm1420, %v1429, %v1430
        %v1432 = vrot.slane %v1430, 4
        %v1433 = vrot.slane %v1310, 5
        %v1434 = vsel %vm1420, %v1432, %v1433
        %v1435 = vrot.slane %v1311, 5
        %v1436 = vrot.slane %v1435, 4
        %v1437 = vrot.slane %v1312, 5
        %v1438 = vsel %vm1420, %v1436, %v1437
        %v1439 = vrot.slane %v1437, 4
        %v1440 = vrot.slane %v1313, 5
        %v1441 = vsel %vm1420, %v1439, %v1440
        %v1442 = vrot.slane %v1314, 5
        %v1443 = vrot.slane %v1442, 4
        %v1444 = vrot.slane %v1315, 5
        %v1445 = vsel %vm1420, %v1443, %v1444
        %v1446 = vrot.slane %v1444, 4
        %v1447 = vrot.slane %v1316, 5
        %v1448 = vsel %vm1420, %v1446, %v1447
        %v1449 = vrot.slane %v1317, 5
        %v1450 = vrot.slane %v1449, 4
        %v1451 = vrot.slane %v1318, 5
        %v1452 = vsel %vm1420, %v1450, %v1451
        %v1453 = vrot.slane %v1451, 4
        %v1454 = vrot.slane %v1319, 5
        %v1455 = vsel %vm1420, %v1453, %v1454
        %v1456 = vrot.slane %v1320, 5
        %v1457 = vrot.slane %v1456, 4
        %v1458 = vrot.slane %v1321, 5
        %v1459 = vsel %vm1420, %v1457, %v1458
        %v1460 = vrot.slane %v1458, 4
        %v1461 = vrot.slane %v1322, 5
        %v1462 = vsel %vm1420, %v1460, %v1461
        %v1463 = vrot.slane %v1323, 5
        %v1464 = vrot.slane %v1463, 4
        %v1465 = vrot.slane %v1324, 5
        %v1466 = vsel %vm1420, %v1464, %v1465
        %v1467 = vrot.slane %v1465, 4
        %v1468 = vrot.slane %v1325, 5
        %v1469 = vsel %vm1420, %v1467, %v1468
        %v1470 = vrot.slane %v1326, 5
        %v1471 = vrot.slane %v1470, 4
        %v1472 = vrot.slane %v1327, 5
        %v1473 = vsel %vm1420, %v1471, %v1472
        %v1474 = vrot.slane %v1472, 4
        %v1475 = vrot.slane %v1328, 5
        %v1476 = vsel %vm1420, %v1474, %v1475
        %v1477 = vrot.slane %v1329, 5
        %v1478 = vrot.slane %v1477, 4
        %v1479 = vrot.slane %v1330, 5
        %v1480 = vsel %vm1420, %v1478, %v1479
        %v1481 = vrot.slane %v1479, 4
        %v1482 = vrot.slane %v1331, 5
        %v1483 = vsel %vm1420, %v1481, %v1482
        %v1484 = vrot.slane %v1332, 5
        %v1485 = vrot.slane %v1484, 4
        %v1486 = vrot.slane %v1333, 5
        %v1487 = vsel %vm1420, %v1485, %v1486
        %v1488 = vrot.slane %v1486, 4
        %v1489 = vrot.slane %v1334, 5
        %v1490 = vsel %vm1420, %v1488, %v1489
        %v1491 = vrot.slane %v1335, 5
        %v1492 = vrot.slane %v1491, 4
        %v1493 = vrot.slane %v1336, 5
        %v1494 = vsel %vm1420, %v1492, %v1493
        %v1495 = vrot.slane %v1493, 4
        %v1496 = vrot.slane %v1337, 5
        %v1497 = vsel %vm1420, %v1495, %v1496
        %v1498 = vrot.slane %v1338, 5
        %v1499 = vrot.slane %v1498, 4
        %v1500 = vrot.slane %v1339, 5
        %v1501 = vsel %vm1420, %v1499, %v1500
        %v1502 = vrot.slane %v1500, 4
        %v1503 = vrot.slane %v1340, 5
        %v1504 = vsel %vm1420, %v1502, %v1503
        %v1505 = vrot.slane %v1341, 5
        %v1506 = vrot.slane %v1505, 4
        %v1507 = vrot.slane %v1342, 5
        %v1508 = vsel %vm1420, %v1506, %v1507
        %v1509 = vrot.slane %v1507, 4
        %v1510 = vrot.slane %v1343, 5
        %v1511 = vsel %vm1420, %v1509, %v1510
        %v1512 = vrot.slane %v1344, 5
        %v1513 = vrot.slane %v1512, 4
        %v1514 = vrot.slane %v1345, 5
        %v1515 = vsel %vm1420, %v1513, %v1514
        %v1516 = vrot.slane %v1514, 4
        %v1517 = vrot.slane %v1346, 5
        %v1518 = vsel %vm1420, %v1516, %v1517
        %v1519 = vrot.slane %v1347, 5
        %v1520 = vrot.slane %v1519, 4
        %v1521 = vrot.slane %v1348, 5
        %v1522 = vsel %vm1420, %v1520, %v1521
        %v1523 = vrot.slane %v1521, 4
        %v1524 = vrot.slane %v1349, 5
        %v1525 = vsel %vm1420, %v1523, %v1524
        %v1526 = vrot.slane %v1350, 5
        %v1527 = vrot.slane %v1526, 4
        %v1528 = vrot.slane %v1351, 5
        %v1529 = vsel %vm1420, %v1527, %v1528
        %v1530 = vrot.slane %v1528, 4
        %v1531 = vrot.slane %v1352, 5
        %v1532 = vsel %vm1420, %v1530, %v1531
        %v1533 = vunpack.c.l.b16 %v1424
        %v1534 = vunpack.c.l.b16 %v1427
        %v1535 = vunpack.c.l.b16 %v1431
        %v1536 = vunpack.c.l.b16 %v1434
        %v1537 = vunpack.c.l.b16 %v1438
        %v1538 = vunpack.c.l.b16 %v1441
        %v1539 = vunpack.c.l.b16 %v1445
        %v1540 = vunpack.c.l.b16 %v1448
        %v1541 = vunpack.c.l.b16 %v1452
        %v1542 = vunpack.c.l.b16 %v1455
        %v1543 = vunpack.c.l.b16 %v1459
        %v1544 = vunpack.c.l.b16 %v1462
        %v1545 = vunpack.c.l.b16 %v1466
        %v1546 = vunpack.c.l.b16 %v1469
        %v1547 = vunpack.c.l.b16 %v1473
        %v1548 = vunpack.c.l.b16 %v1476
        %v1549 = vunpack.c.l.b16 %v1480
        %v1550 = vunpack.c.l.b16 %v1483
        %v1551 = vunpack.c.l.b16 %v1487
        %v1552 = vunpack.c.l.b16 %v1490
        %v1553 = vunpack.c.l.b16 %v1494
        %v1554 = vunpack.c.l.b16 %v1497
        %v1555 = vunpack.c.l.b16 %v1501
        %v1556 = vunpack.c.l.b16 %v1504
        %v1557 = vunpack.c.l.b16 %v1508
        %v1558 = vunpack.c.l.b16 %v1511
        %v1559 = vunpack.c.l.b16 %v1515
        %v1560 = vunpack.c.l.b16 %v1518
        %v1561 = vunpack.c.l.b16 %v1522
        %v1562 = vunpack.c.l.b16 %v1525
        %v1563 = vunpack.c.l.b16 %v1529
        %v1564 = vunpack.c.l.b16 %v1532
        %v1565 = vpack.c.b16 %v1534, %v1533
        %v1566 = vpack.c.b16 %v1536, %v1535
        %v1567 = vpack.c.b16 %v1538, %v1537
        %v1568 = vpack.c.b16 %v1540, %v1539
        %v1569 = vpack.c.b16 %v1542, %v1541
        %v1570 = vpack.c.b16 %v1544, %v1543
        %v1571 = vpack.c.b16 %v1546, %v1545
        %v1572 = vpack.c.b16 %v1548, %v1547
        %v1573 = vpack.c.b16 %v1550, %v1549
        %v1574 = vpack.c.b16 %v1552, %v1551
        %v1575 = vpack.c.b16 %v1554, %v1553
        %v1576 = vpack.c.b16 %v1556, %v1555
        %v1577 = vpack.c.b16 %v1558, %v1557
        %v1578 = vpack.c.b16 %v1560, %v1559
        %v1579 = vpack.c.b16 %v1562, %v1561
        %v1580 = vpack.c.b16 %v1564, %v1563
        %v1613 = vunpack.c.l.b16 %v1354
        %v1614 = vunpack.c.l.b16 %v1355
        %v1615 = vunpack.c.l.b16 %v1356
        %v1616 = vunpack.c.l.b16 %v1357
        %v1617 = vunpack.c.l.b16 %v1358
        %v1618 = vunpack.c.l.b16 %v1359
        %v1619 = vunpack.c.l.b16 %v1360
        %v1620 = vunpack.c.l.b16 %v1361
        %v1621 = vunpack.c.l.b16 %v1362
        %v1622 = vunpack.c.l.b16 %v1363
        %v1623 = vunpack.c.l.b16 %v1364
        %v1624 = vunpack.c.l.b16 %v1365
        %v1625 = vunpack.c.l.b16 %v1366
        %v1626 = vunpack.c.l.b16 %v1367
        %v1627 = vunpack.c.l.b16 %v1368
        %v1628 = vunpack.c.l.b16 %v1369
        %v1629 = vpack.c.b16 %v1614, %v1613
        %v1630 = vpack.c.b16 %v1616, %v1615
        %v1631 = vpack.c.b16 %v1618, %v1617
        %v1632 = vpack.c.b16 %v1620, %v1619
        %v1633 = vpack.c.b16 %v1622, %v1621
        %v1634 = vpack.c.b16 %v1624, %v1623
        %v1635 = vpack.c.b16 %v1626, %v1625
        %v1636 = vpack.c.b16 %v1628, %v1627
        %1645 = vmatpush.bf16.msra.mxu0 %v1636
        %1646 = vmatpush.bf16.msra.mxu0 %v1635
        %1647 = vmatpush.bf16.msra.mxu0 %v1634
        %1648 = vmatpush.bf16.msra.mxu0 %v1633
        %1649 = vmatpush.bf16.msra.mxu0 %v1632
        %1650 = vmatpush.bf16.msra.mxu0 %v1631
        %1651 = vmatpush.bf16.msra.mxu0 %v1630
        %1652 = vmatpush.bf16.msra.mxu0 %v1629
        %1653 = vmatmul.bf16.gmra.mxu0 %v1565
        %v1654 = vpop.f32.mrf.mxu0
        %v1655 = vadd.f32 0.0, %v1654
        %v1656 = vpop.f32.mrf.mxu0
        %v1657 = vadd.f32 0.0, %v1656
        %1658 = vmatmul.bf16.gmra.mxu0 %v1566
        %v1659 = vpop.f32.mrf.mxu0
        %v1660 = vadd.f32 0.0, %v1659
        %v1661 = vpop.f32.mrf.mxu0
        %v1662 = vadd.f32 0.0, %v1661
        %1663 = vmatmul.bf16.gmra.mxu0 %v1567
        %v1664 = vpop.f32.mrf.mxu0
        %v1665 = vadd.f32 0.0, %v1664
        %v1666 = vpop.f32.mrf.mxu0
        %v1667 = vadd.f32 0.0, %v1666
        %1668 = vmatmul.bf16.gmra.mxu0 %v1568
        %v1669 = vpop.f32.mrf.mxu0
        %v1670 = vadd.f32 0.0, %v1669
        %v1671 = vpop.f32.mrf.mxu0
        %v1672 = vadd.f32 0.0, %v1671
        %1673 = vmatmul.bf16.gmra.mxu0 %v1569
        %v1674 = vpop.f32.mrf.mxu0
        %v1675 = vadd.f32 0.0, %v1674
        %v1676 = vpop.f32.mrf.mxu0
        %v1677 = vadd.f32 0.0, %v1676
        %1678 = vmatmul.bf16.gmra.mxu0 %v1570
        %v1679 = vpop.f32.mrf.mxu0
        %v1680 = vadd.f32 0.0, %v1679
        %v1681 = vpop.f32.mrf.mxu0
        %v1682 = vadd.f32 0.0, %v1681
        %1683 = vmatmul.bf16.gmra.mxu0 %v1571
        %v1684 = vpop.f32.mrf.mxu0
        %v1685 = vadd.f32 0.0, %v1684
        %v1686 = vpop.f32.mrf.mxu0
        %v1687 = vadd.f32 0.0, %v1686
        %1688 = vmatmul.bf16.gmra.mxu0 %v1572
        %v1689 = vpop.f32.mrf.mxu0
        %v1690 = vadd.f32 0.0, %v1689
        %v1691 = vpop.f32.mrf.mxu0
        %v1692 = vadd.f32 0.0, %v1691
        %1693 = vmatmul.bf16.gmra.mxu0 %v1573
        %v1694 = vpop.f32.mrf.mxu0
        %v1695 = vadd.f32 0.0, %v1694
        %v1696 = vpop.f32.mrf.mxu0
        %v1697 = vadd.f32 0.0, %v1696
        %1698 = vmatmul.bf16.gmra.mxu0 %v1574
        %v1699 = vpop.f32.mrf.mxu0
        %v1700 = vadd.f32 0.0, %v1699
        %v1701 = vpop.f32.mrf.mxu0
        %v1702 = vadd.f32 0.0, %v1701
        %1703 = vmatmul.bf16.gmra.mxu0 %v1575
        %v1704 = vpop.f32.mrf.mxu0
        %v1705 = vadd.f32 0.0, %v1704
        %v1706 = vpop.f32.mrf.mxu0
        %v1707 = vadd.f32 0.0, %v1706
        %1708 = vmatmul.bf16.gmra.mxu0 %v1576
        %v1709 = vpop.f32.mrf.mxu0
        %v1710 = vadd.f32 0.0, %v1709
        %v1711 = vpop.f32.mrf.mxu0
        %v1712 = vadd.f32 0.0, %v1711
        %1713 = vmatmul.bf16.gmra.mxu0 %v1577
        %v1714 = vpop.f32.mrf.mxu0
        %v1715 = vadd.f32 0.0, %v1714
        %v1716 = vpop.f32.mrf.mxu0
        %v1717 = vadd.f32 0.0, %v1716
        %1718 = vmatmul.bf16.gmra.mxu0 %v1578
        %v1719 = vpop.f32.mrf.mxu0
        %v1720 = vadd.f32 0.0, %v1719
        %v1721 = vpop.f32.mrf.mxu0
        %v1722 = vadd.f32 0.0, %v1721
        %1723 = vmatmul.bf16.gmra.mxu0 %v1579
        %v1724 = vpop.f32.mrf.mxu0
        %v1725 = vadd.f32 0.0, %v1724
        %v1726 = vpop.f32.mrf.mxu0
        %v1727 = vadd.f32 0.0, %v1726
        %1728 = vmatmul.bf16.gmra.mxu0 %v1580
        %v1729 = vpop.f32.mrf.mxu0
        %v1730 = vadd.f32 0.0, %v1729
        %v1731 = vpop.f32.mrf.mxu0
        %v1732 = vadd.f32 0.0, %v1731
        %1733 = vdwg.mxu0
        %v1734 = vadd.f32 %v1226, %v1655
        %v1735 = vadd.f32 %v1228, %v1657
        %v1736 = vadd.f32 %v1231, %v1660
        %v1737 = vadd.f32 %v1233, %v1662
        %v1738 = vadd.f32 %v1236, %v1665
        %v1739 = vadd.f32 %v1238, %v1667
        %v1740 = vadd.f32 %v1241, %v1670
        %v1741 = vadd.f32 %v1243, %v1672
        %v1742 = vadd.f32 %v1246, %v1675
        %v1743 = vadd.f32 %v1248, %v1677
        %v1744 = vadd.f32 %v1251, %v1680
        %v1745 = vadd.f32 %v1253, %v1682
        %v1746 = vadd.f32 %v1256, %v1685
        %v1747 = vadd.f32 %v1258, %v1687
        %v1748 = vadd.f32 %v1261, %v1690
        %v1749 = vadd.f32 %v1263, %v1692
        %v1750 = vadd.f32 %v1266, %v1695
        %v1751 = vadd.f32 %v1268, %v1697
        %v1752 = vadd.f32 %v1271, %v1700
        %v1753 = vadd.f32 %v1273, %v1702
        %v1754 = vadd.f32 %v1276, %v1705
        %v1755 = vadd.f32 %v1278, %v1707
        %v1756 = vadd.f32 %v1281, %v1710
        %v1757 = vadd.f32 %v1283, %v1712
        %v1758 = vadd.f32 %v1286, %v1715
        %v1759 = vadd.f32 %v1288, %v1717
        %v1760 = vadd.f32 %v1291, %v1720
        %v1761 = vadd.f32 %v1293, %v1722
        %v1762 = vadd.f32 %v1296, %v1725
        %v1763 = vadd.f32 %v1298, %v1727
        %v1764 = vadd.f32 %v1301, %v1730
        %v1765 = vadd.f32 %v1303, %v1732
        %s1766 = scalar_lea.vmem %s293, 12
        %v1767 = vld [vmem:[%s1766] sm:$0xf]
        %v1768 = vld [vmem:[%s1766 + $0x4] sm:$0xf]
        %v1769 = vld [vmem:[%s1766 + $0xc] sm:$0xf]
        %v1770 = vld [vmem:[%s1766 + $0x10] sm:$0xf]
        %v1771 = vld [vmem:[%s1766 + $0x18] sm:$0xf]
        %v1772 = vld [vmem:[%s1766 + $0x1c] sm:$0xf]
        %v1773 = vld [vmem:[%s1766 + $0x24] sm:$0xf]
        %v1774 = vld [vmem:[%s1766 + $0x28] sm:$0xf]
        %v1775 = vld [vmem:[%s1766 + $0x30] sm:$0xf]
        %v1776 = vld [vmem:[%s1766 + $0x34] sm:$0xf]
        %v1777 = vld [vmem:[%s1766 + $0x3c] sm:$0xf]
        %v1778 = vld [vmem:[%s1766 + $0x40] sm:$0xf]
        %v1779 = vld [vmem:[%s1766 + $0x48] sm:$0xf]
        %v1780 = vld [vmem:[%s1766 + $0x4c] sm:$0xf]
        %v1781 = vld [vmem:[%s1766 + $0x54] sm:$0xf]
        %v1782 = vld [vmem:[%s1766 + $0x58] sm:$0xf]
        %v1783 = vld [vmem:[%s1766 + $0x60] sm:$0xf]
        %v1784 = vld [vmem:[%s1766 + $0x64] sm:$0xf]
        %v1785 = vld [vmem:[%s1766 + $0x6c] sm:$0xf]
        %v1786 = vld [vmem:[%s1766 + $0x70] sm:$0xf]
        %v1787 = vld [vmem:[%s1766 + $0x78] sm:$0xf]
        %v1788 = vld [vmem:[%s1766 + $0x7c] sm:$0xf]
        %v1789 = vld [vmem:[%s1766 + $0x84] sm:$0xf]
        %v1790 = vld [vmem:[%s1766 + $0x88] sm:$0xf]
        %v1791 = vld [vmem:[%s1766 + $0x90] sm:$0xf]
        %v1792 = vld [vmem:[%s1766 + $0x94] sm:$0xf]
        %v1793 = vld [vmem:[%s1766 + $0x9c] sm:$0xf]
        %v1794 = vld [vmem:[%s1766 + $0xa0] sm:$0xf]
        %v1795 = vld [vmem:[%s1766 + $0xa8] sm:$0xf]
        %v1796 = vld [vmem:[%s1766 + $0xac] sm:$0xf]
        %v1797 = vld [vmem:[%s1766 + $0xb4] sm:$0xf]
        %v1798 = vld [vmem:[%s1766 + $0xb8] sm:$0xf]
        %s1799 = scalar_lea.vmem %s1, 192
        %v1800 = vld [vmem:[%s1799] sm:$0xf]
        %v1801 = vld [vmem:[%s1799 + $0x4] sm:$0xf]
        %v1802 = vld [vmem:[%s1799 + $0x8] sm:$0xf]
        %v1803 = vld [vmem:[%s1799 + $0xc] sm:$0xf]
        %v1804 = vld [vmem:[%s1799 + $0x10] sm:$0xf]
        %v1805 = vld [vmem:[%s1799 + $0x14] sm:$0xf]
        %v1806 = vld [vmem:[%s1799 + $0x18] sm:$0xf]
        %v1807 = vld [vmem:[%s1799 + $0x1c] sm:$0xf]
        %v1808 = vld [vmem:[%s1799 + $0x20] sm:$0xf]
        %v1809 = vld [vmem:[%s1799 + $0x24] sm:$0xf]
        %v1810 = vld [vmem:[%s1799 + $0x28] sm:$0xf]
        %v1811 = vld [vmem:[%s1799 + $0x2c] sm:$0xf]
        %v1812 = vld [vmem:[%s1799 + $0x30] sm:$0xf]
        %v1813 = vld [vmem:[%s1799 + $0x34] sm:$0xf]
        %v1814 = vld [vmem:[%s1799 + $0x38] sm:$0xf]
        %v1815 = vld [vmem:[%s1799 + $0x3c] sm:$0xf]
        %v1848 = vunpack.c.l.b16 %v1767
        %v1849 = vunpack.c.l.b16 %v1768
        %v1850 = vunpack.c.l.b16 %v1769
        %v1851 = vunpack.c.l.b16 %v1770
        %v1852 = vunpack.c.l.b16 %v1771
        %v1853 = vunpack.c.l.b16 %v1772
        %v1854 = vunpack.c.l.b16 %v1773
        %v1855 = vunpack.c.l.b16 %v1774
        %v1856 = vunpack.c.l.b16 %v1775
        %v1857 = vunpack.c.l.b16 %v1776
        %v1858 = vunpack.c.l.b16 %v1777
        %v1859 = vunpack.c.l.b16 %v1778
        %v1860 = vunpack.c.l.b16 %v1779
        %v1861 = vunpack.c.l.b16 %v1780
        %v1862 = vunpack.c.l.b16 %v1781
        %v1863 = vunpack.c.l.b16 %v1782
        %v1864 = vunpack.c.l.b16 %v1783
        %v1865 = vunpack.c.l.b16 %v1784
        %v1866 = vunpack.c.l.b16 %v1785
        %v1867 = vunpack.c.l.b16 %v1786
        %v1868 = vunpack.c.l.b16 %v1787
        %v1869 = vunpack.c.l.b16 %v1788
        %v1870 = vunpack.c.l.b16 %v1789
        %v1871 = vunpack.c.l.b16 %v1790
        %v1872 = vunpack.c.l.b16 %v1791
        %v1873 = vunpack.c.l.b16 %v1792
        %v1874 = vunpack.c.l.b16 %v1793
        %v1875 = vunpack.c.l.b16 %v1794
        %v1876 = vunpack.c.l.b16 %v1795
        %v1877 = vunpack.c.l.b16 %v1796
        %v1878 = vunpack.c.l.b16 %v1797
        %v1879 = vunpack.c.l.b16 %v1798
        %v1880 = vpack.c.b16 %v1849, %v1848
        %v1881 = vpack.c.b16 %v1851, %v1850
        %v1882 = vpack.c.b16 %v1853, %v1852
        %v1883 = vpack.c.b16 %v1855, %v1854
        %v1884 = vpack.c.b16 %v1857, %v1856
        %v1885 = vpack.c.b16 %v1859, %v1858
        %v1886 = vpack.c.b16 %v1861, %v1860
        %v1887 = vpack.c.b16 %v1863, %v1862
        %v1888 = vpack.c.b16 %v1865, %v1864
        %v1889 = vpack.c.b16 %v1867, %v1866
        %v1890 = vpack.c.b16 %v1869, %v1868
        %v1891 = vpack.c.b16 %v1871, %v1870
        %v1892 = vpack.c.b16 %v1873, %v1872
        %v1893 = vpack.c.b16 %v1875, %v1874
        %v1894 = vpack.c.b16 %v1877, %v1876
        %v1895 = vpack.c.b16 %v1879, %v1878
        %v1928 = vunpack.c.l.b16 %v1800
        %v1929 = vunpack.c.l.b16 %v1801
        %v1930 = vunpack.c.l.b16 %v1802
        %v1931 = vunpack.c.l.b16 %v1803
        %v1932 = vunpack.c.l.b16 %v1804
        %v1933 = vunpack.c.l.b16 %v1805
        %v1934 = vunpack.c.l.b16 %v1806
        %v1935 = vunpack.c.l.b16 %v1807
        %v1936 = vunpack.c.l.b16 %v1808
        %v1937 = vunpack.c.l.b16 %v1809
        %v1938 = vunpack.c.l.b16 %v1810
        %v1939 = vunpack.c.l.b16 %v1811
        %v1940 = vunpack.c.l.b16 %v1812
        %v1941 = vunpack.c.l.b16 %v1813
        %v1942 = vunpack.c.l.b16 %v1814
        %v1943 = vunpack.c.l.b16 %v1815
        %v1944 = vpack.c.b16 %v1929, %v1928
        %v1945 = vpack.c.b16 %v1931, %v1930
        %v1946 = vpack.c.b16 %v1933, %v1932
        %v1947 = vpack.c.b16 %v1935, %v1934
        %v1948 = vpack.c.b16 %v1937, %v1936
        %v1949 = vpack.c.b16 %v1939, %v1938
        %v1950 = vpack.c.b16 %v1941, %v1940
        %v1951 = vpack.c.b16 %v1943, %v1942
        %1960 = vmatpush.bf16.msra.mxu0 %v1951
        %1961 = vmatpush.bf16.msra.mxu0 %v1950
        %1962 = vmatpush.bf16.msra.mxu0 %v1949
        %1963 = vmatpush.bf16.msra.mxu0 %v1948
        %1964 = vmatpush.bf16.msra.mxu0 %v1947
        %1965 = vmatpush.bf16.msra.mxu0 %v1946
        %1966 = vmatpush.bf16.msra.mxu0 %v1945
        %1967 = vmatpush.bf16.msra.mxu0 %v1944
        %1968 = vmatmul.bf16.gmra.mxu0 %v1880
        %v1969 = vpop.f32.mrf.mxu0
        %v1970 = vadd.f32 0.0, %v1969
        %v1971 = vpop.f32.mrf.mxu0
        %v1972 = vadd.f32 0.0, %v1971
        %1973 = vmatmul.bf16.gmra.mxu0 %v1881
        %v1974 = vpop.f32.mrf.mxu0
        %v1975 = vadd.f32 0.0, %v1974
        %v1976 = vpop.f32.mrf.mxu0
        %v1977 = vadd.f32 0.0, %v1976
        %1978 = vmatmul.bf16.gmra.mxu0 %v1882
        %v1979 = vpop.f32.mrf.mxu0
        %v1980 = vadd.f32 0.0, %v1979
        %v1981 = vpop.f32.mrf.mxu0
        %v1982 = vadd.f32 0.0, %v1981
        %1983 = vmatmul.bf16.gmra.mxu0 %v1883
        %v1984 = vpop.f32.mrf.mxu0
        %v1985 = vadd.f32 0.0, %v1984
        %v1986 = vpop.f32.mrf.mxu0
        %v1987 = vadd.f32 0.0, %v1986
        %1988 = vmatmul.bf16.gmra.mxu0 %v1884
        %v1989 = vpop.f32.mrf.mxu0
        %v1990 = vadd.f32 0.0, %v1989
        %v1991 = vpop.f32.mrf.mxu0
        %v1992 = vadd.f32 0.0, %v1991
        %1993 = vmatmul.bf16.gmra.mxu0 %v1885
        %v1994 = vpop.f32.mrf.mxu0
        %v1995 = vadd.f32 0.0, %v1994
        %v1996 = vpop.f32.mrf.mxu0
        %v1997 = vadd.f32 0.0, %v1996
        %1998 = vmatmul.bf16.gmra.mxu0 %v1886
        %v1999 = vpop.f32.mrf.mxu0
        %v2000 = vadd.f32 0.0, %v1999
        %v2001 = vpop.f32.mrf.mxu0
        %v2002 = vadd.f32 0.0, %v2001
        %2003 = vmatmul.bf16.gmra.mxu0 %v1887
        %v2004 = vpop.f32.mrf.mxu0
        %v2005 = vadd.f32 0.0, %v2004
        %v2006 = vpop.f32.mrf.mxu0
        %v2007 = vadd.f32 0.0, %v2006
        %2008 = vmatmul.bf16.gmra.mxu0 %v1888
        %v2009 = vpop.f32.mrf.mxu0
        %v2010 = vadd.f32 0.0, %v2009
        %v2011 = vpop.f32.mrf.mxu0
        %v2012 = vadd.f32 0.0, %v2011
        %2013 = vmatmul.bf16.gmra.mxu0 %v1889
        %v2014 = vpop.f32.mrf.mxu0
        %v2015 = vadd.f32 0.0, %v2014
        %v2016 = vpop.f32.mrf.mxu0
        %v2017 = vadd.f32 0.0, %v2016
        %2018 = vmatmul.bf16.gmra.mxu0 %v1890
        %v2019 = vpop.f32.mrf.mxu0
        %v2020 = vadd.f32 0.0, %v2019
        %v2021 = vpop.f32.mrf.mxu0
        %v2022 = vadd.f32 0.0, %v2021
        %2023 = vmatmul.bf16.gmra.mxu0 %v1891
        %v2024 = vpop.f32.mrf.mxu0
        %v2025 = vadd.f32 0.0, %v2024
        %v2026 = vpop.f32.mrf.mxu0
        %v2027 = vadd.f32 0.0, %v2026
        %2028 = vmatmul.bf16.gmra.mxu0 %v1892
        %v2029 = vpop.f32.mrf.mxu0
        %v2030 = vadd.f32 0.0, %v2029
        %v2031 = vpop.f32.mrf.mxu0
        %v2032 = vadd.f32 0.0, %v2031
        %2033 = vmatmul.bf16.gmra.mxu0 %v1893
        %v2034 = vpop.f32.mrf.mxu0
        %v2035 = vadd.f32 0.0, %v2034
        %v2036 = vpop.f32.mrf.mxu0
        %v2037 = vadd.f32 0.0, %v2036
        %2038 = vmatmul.bf16.gmra.mxu0 %v1894
        %v2039 = vpop.f32.mrf.mxu0
        %v2040 = vadd.f32 0.0, %v2039
        %v2041 = vpop.f32.mrf.mxu0
        %v2042 = vadd.f32 0.0, %v2041
        %2043 = vmatmul.bf16.gmra.mxu0 %v1895
        %v2044 = vpop.f32.mrf.mxu0
        %v2045 = vadd.f32 0.0, %v2044
        %v2046 = vpop.f32.mrf.mxu0
        %v2047 = vadd.f32 0.0, %v2046
        %2048 = vdwg.mxu0
        %v2049 = vadd.f32 %v1734, %v1970
        %v2050 = vadd.f32 %v1735, %v1972
        %v2051 = vadd.f32 %v1736, %v1975
        %v2052 = vadd.f32 %v1737, %v1977
        %v2053 = vadd.f32 %v1738, %v1980
        %v2054 = vadd.f32 %v1739, %v1982
        %v2055 = vadd.f32 %v1740, %v1985
        %v2056 = vadd.f32 %v1741, %v1987
        %v2057 = vadd.f32 %v1742, %v1990
        %v2058 = vadd.f32 %v1743, %v1992
        %v2059 = vadd.f32 %v1744, %v1995
        %v2060 = vadd.f32 %v1745, %v1997
        %v2061 = vadd.f32 %v1746, %v2000
        %v2062 = vadd.f32 %v1747, %v2002
        %v2063 = vadd.f32 %v1748, %v2005
        %v2064 = vadd.f32 %v1749, %v2007
        %v2065 = vadd.f32 %v1750, %v2010
        %v2066 = vadd.f32 %v1751, %v2012
        %v2067 = vadd.f32 %v1752, %v2015
        %v2068 = vadd.f32 %v1753, %v2017
        %v2069 = vadd.f32 %v1754, %v2020
        %v2070 = vadd.f32 %v1755, %v2022
        %v2071 = vadd.f32 %v1756, %v2025
        %v2072 = vadd.f32 %v1757, %v2027
        %v2073 = vadd.f32 %v1758, %v2030
        %v2074 = vadd.f32 %v1759, %v2032
        %v2075 = vadd.f32 %v1760, %v2035
        %v2076 = vadd.f32 %v1761, %v2037
        %v2077 = vadd.f32 %v1762, %v2040
        %v2078 = vadd.f32 %v1763, %v2042
        %v2079 = vadd.f32 %v1764, %v2045
        %v2080 = vadd.f32 %v1765, %v2047
        %v2081 = vld [vmem:[%s1766] sm:$0xf]
        %v2082 = vld [vmem:[%s1766 + $0x4] sm:$0xf]
        %v2083 = vld [vmem:[%s1766 + $0x8] sm:$0x1]
        %v2084 = vld [vmem:[%s1766 + $0xc] sm:$0xf]
        %v2085 = vld [vmem:[%s1766 + $0x10] sm:$0xf]
        %v2086 = vld [vmem:[%s1766 + $0x14] sm:$0x1]
        %v2087 = vld [vmem:[%s1766 + $0x18] sm:$0xf]
        %v2088 = vld [vmem:[%s1766 + $0x1c] sm:$0xf]
        %v2089 = vld [vmem:[%s1766 + $0x20] sm:$0x1]
        %v2090 = vld [vmem:[%s1766 + $0x24] sm:$0xf]
        %v2091 = vld [vmem:[%s1766 + $0x28] sm:$0xf]
        %v2092 = vld [vmem:[%s1766 + $0x2c] sm:$0x1]
        %v2093 = vld [vmem:[%s1766 + $0x30] sm:$0xf]
        %v2094 = vld [vmem:[%s1766 + $0x34] sm:$0xf]
        %v2095 = vld [vmem:[%s1766 + $0x38] sm:$0x1]
        %v2096 = vld [vmem:[%s1766 + $0x3c] sm:$0xf]
        %v2097 = vld [vmem:[%s1766 + $0x40] sm:$0xf]
        %v2098 = vld [vmem:[%s1766 + $0x44] sm:$0x1]
        %v2099 = vld [vmem:[%s1766 + $0x48] sm:$0xf]
        %v2100 = vld [vmem:[%s1766 + $0x4c] sm:$0xf]
        %v2101 = vld [vmem:[%s1766 + $0x50] sm:$0x1]
        %v2102 = vld [vmem:[%s1766 + $0x54] sm:$0xf]
        %v2103 = vld [vmem:[%s1766 + $0x58] sm:$0xf]
        %v2104 = vld [vmem:[%s1766 + $0x5c] sm:$0x1]
        %v2105 = vld [vmem:[%s1766 + $0x60] sm:$0xf]
        %v2106 = vld [vmem:[%s1766 + $0x64] sm:$0xf]
        %v2107 = vld [vmem:[%s1766 + $0x68] sm:$0x1]
        %v2108 = vld [vmem:[%s1766 + $0x6c] sm:$0xf]
        %v2109 = vld [vmem:[%s1766 + $0x70] sm:$0xf]
        %v2110 = vld [vmem:[%s1766 + $0x74] sm:$0x1]
        %v2111 = vld [vmem:[%s1766 + $0x78] sm:$0xf]
        %v2112 = vld [vmem:[%s1766 + $0x7c] sm:$0xf]
        %v2113 = vld [vmem:[%s1766 + $0x80] sm:$0x1]
        %v2114 = vld [vmem:[%s1766 + $0x84] sm:$0xf]
        %v2115 = vld [vmem:[%s1766 + $0x88] sm:$0xf]
        %v2116 = vld [vmem:[%s1766 + $0x8c] sm:$0x1]
        %v2117 = vld [vmem:[%s1766 + $0x90] sm:$0xf]
        %v2118 = vld [vmem:[%s1766 + $0x94] sm:$0xf]
        %v2119 = vld [vmem:[%s1766 + $0x98] sm:$0x1]
        %v2120 = vld [vmem:[%s1766 + $0x9c] sm:$0xf]
        %v2121 = vld [vmem:[%s1766 + $0xa0] sm:$0xf]
        %v2122 = vld [vmem:[%s1766 + $0xa4] sm:$0x1]
        %v2123 = vld [vmem:[%s1766 + $0xa8] sm:$0xf]
        %v2124 = vld [vmem:[%s1766 + $0xac] sm:$0xf]
        %v2125 = vld [vmem:[%s1766 + $0xb0] sm:$0x1]
        %v2126 = vld [vmem:[%s1766 + $0xb4] sm:$0xf]
        %v2127 = vld [vmem:[%s1766 + $0xb8] sm:$0xf]
        %v2128 = vld [vmem:[%s1766 + $0xbc] sm:$0x1]
        %s2129 = scalar_lea.vmem %s1, 256
        %v2130 = vld [vmem:[%s2129] sm:$0xf]
        %v2131 = vld [vmem:[%s2129 + $0x4] sm:$0xf]
        %v2132 = vld [vmem:[%s2129 + $0x8] sm:$0xf]
        %v2133 = vld [vmem:[%s2129 + $0xc] sm:$0xf]
        %v2134 = vld [vmem:[%s2129 + $0x10] sm:$0xf]
        %v2135 = vld [vmem:[%s2129 + $0x14] sm:$0xf]
        %v2136 = vld [vmem:[%s2129 + $0x18] sm:$0xf]
        %v2137 = vld [vmem:[%s2129 + $0x1c] sm:$0xf]
        %v2138 = vld [vmem:[%s2129 + $0x20] sm:$0xf]
        %v2139 = vld [vmem:[%s2129 + $0x24] sm:$0xf]
        %v2140 = vld [vmem:[%s2129 + $0x28] sm:$0xf]
        %v2141 = vld [vmem:[%s2129 + $0x2c] sm:$0xf]
        %v2142 = vld [vmem:[%s2129 + $0x30] sm:$0xf]
        %v2143 = vld [vmem:[%s2129 + $0x34] sm:$0xf]
        %v2144 = vld [vmem:[%s2129 + $0x38] sm:$0xf]
        %v2145 = vld [vmem:[%s2129 + $0x3c] sm:$0xf]
        %v2147 = vshrl.u32 %v2081, 16
        %v2149 = vrot.slane %v2147, 4
        %v2150 = vshll.u32 %v2081, 16
        %v2152 = vrot.slane %v2150, 5
        %v2153 = vor.u32 %v2149, %v2152
        %v2154 = vrot.slane %v2153, 4
        %v2156 = vshll.u32 %v2082, 16
        %v2158 = vrot.slane %v2156, 5
        %v2159 = vsel %vm486, %v2154, %v2158
        %v2160 = vshrl.u32 %v2082, 16
        %v2162 = vrot.slane %v2160, 4
        %v2163 = vor.u32 %v2162, %v2158
        %v2164 = vrot.slane %v2163, 4
        %v2166 = vshll.u32 %v2083, 16
        %v2168 = vrot.slane %v2166, 5
        %v2169 = vsel %vm486, %v2164, %v2168
        %v2171 = vshrl.u32 %v2084, 16
        %v2173 = vrot.slane %v2171, 4
        %v2174 = vshll.u32 %v2084, 16
        %v2176 = vrot.slane %v2174, 5
        %v2177 = vor.u32 %v2173, %v2176
        %v2178 = vrot.slane %v2177, 4
        %v2180 = vshll.u32 %v2085, 16
        %v2182 = vrot.slane %v2180, 5
        %v2183 = vsel %vm486, %v2178, %v2182
        %v2184 = vshrl.u32 %v2085, 16
        %v2186 = vrot.slane %v2184, 4
        %v2187 = vor.u32 %v2186, %v2182
        %v2188 = vrot.slane %v2187, 4
        %v2190 = vshll.u32 %v2086, 16
        %v2192 = vrot.slane %v2190, 5
        %v2193 = vsel %vm486, %v2188, %v2192
        %v2195 = vshrl.u32 %v2087, 16
        %v2197 = vrot.slane %v2195, 4
        %v2198 = vshll.u32 %v2087, 16
        %v2200 = vrot.slane %v2198, 5
        %v2201 = vor.u32 %v2197, %v2200
        %v2202 = vrot.slane %v2201, 4
        %v2204 = vshll.u32 %v2088, 16
        %v2206 = vrot.slane %v2204, 5
        %v2207 = vsel %vm486, %v2202, %v2206
        %v2208 = vshrl.u32 %v2088, 16
        %v2210 = vrot.slane %v2208, 4
        %v2211 = vor.u32 %v2210, %v2206
        %v2212 = vrot.slane %v2211, 4
        %v2214 = vshll.u32 %v2089, 16
        %v2216 = vrot.slane %v2214, 5
        %v2217 = vsel %vm486, %v2212, %v2216
        %v2219 = vshrl.u32 %v2090, 16
        %v2221 = vrot.slane %v2219, 4
        %v2222 = vshll.u32 %v2090, 16
        %v2224 = vrot.slane %v2222, 5
        %v2225 = vor.u32 %v2221, %v2224
        %v2226 = vrot.slane %v2225, 4
        %v2228 = vshll.u32 %v2091, 16
        %v2230 = vrot.slane %v2228, 5
        %v2231 = vsel %vm486, %v2226, %v2230
        %v2232 = vshrl.u32 %v2091, 16
        %v2234 = vrot.slane %v2232, 4
        %v2235 = vor.u32 %v2234, %v2230
        %v2236 = vrot.slane %v2235, 4
        %v2238 = vshll.u32 %v2092, 16
        %v2240 = vrot.slane %v2238, 5
        %v2241 = vsel %vm486, %v2236, %v2240
        %v2243 = vshrl.u32 %v2093, 16
        %v2245 = vrot.slane %v2243, 4
        %v2246 = vshll.u32 %v2093, 16
        %v2248 = vrot.slane %v2246, 5
        %v2249 = vor.u32 %v2245, %v2248
        %v2250 = vrot.slane %v2249, 4
        %v2252 = vshll.u32 %v2094, 16
        %v2254 = vrot.slane %v2252, 5
        %v2255 = vsel %vm486, %v2250, %v2254
        %v2256 = vshrl.u32 %v2094, 16
        %v2258 = vrot.slane %v2256, 4
        %v2259 = vor.u32 %v2258, %v2254
        %v2260 = vrot.slane %v2259, 4
        %v2262 = vshll.u32 %v2095, 16
        %v2264 = vrot.slane %v2262, 5
        %v2265 = vsel %vm486, %v2260, %v2264
        %v2267 = vshrl.u32 %v2096, 16
        %v2269 = vrot.slane %v2267, 4
        %v2270 = vshll.u32 %v2096, 16
        %v2272 = vrot.slane %v2270, 5
        %v2273 = vor.u32 %v2269, %v2272
        %v2274 = vrot.slane %v2273, 4
        %v2276 = vshll.u32 %v2097, 16
        %v2278 = vrot.slane %v2276, 5
        %v2279 = vsel %vm486, %v2274, %v2278
        %v2280 = vshrl.u32 %v2097, 16
        %v2282 = vrot.slane %v2280, 4
        %v2283 = vor.u32 %v2282, %v2278
        %v2284 = vrot.slane %v2283, 4
        %v2286 = vshll.u32 %v2098, 16
        %v2288 = vrot.slane %v2286, 5
        %v2289 = vsel %vm486, %v2284, %v2288
        %v2291 = vshrl.u32 %v2099, 16
        %v2293 = vrot.slane %v2291, 4
        %v2294 = vshll.u32 %v2099, 16
        %v2296 = vrot.slane %v2294, 5
        %v2297 = vor.u32 %v2293, %v2296
        %v2298 = vrot.slane %v2297, 4
        %v2300 = vshll.u32 %v2100, 16
        %v2302 = vrot.slane %v2300, 5
        %v2303 = vsel %vm486, %v2298, %v2302
        %v2304 = vshrl.u32 %v2100, 16
        %v2306 = vrot.slane %v2304, 4
        %v2307 = vor.u32 %v2306, %v2302
        %v2308 = vrot.slane %v2307, 4
        %v2310 = vshll.u32 %v2101, 16
        %v2312 = vrot.slane %v2310, 5
        %v2313 = vsel %vm486, %v2308, %v2312
        %v2315 = vshrl.u32 %v2102, 16
        %v2317 = vrot.slane %v2315, 4
        %v2318 = vshll.u32 %v2102, 16
        %v2320 = vrot.slane %v2318, 5
        %v2321 = vor.u32 %v2317, %v2320
        %v2322 = vrot.slane %v2321, 4
        %v2324 = vshll.u32 %v2103, 16
        %v2326 = vrot.slane %v2324, 5
        %v2327 = vsel %vm486, %v2322, %v2326
        %v2328 = vshrl.u32 %v2103, 16
        %v2330 = vrot.slane %v2328, 4
        %v2331 = vor.u32 %v2330, %v2326
        %v2332 = vrot.slane %v2331, 4
        %v2334 = vshll.u32 %v2104, 16
        %v2336 = vrot.slane %v2334, 5
        %v2337 = vsel %vm486, %v2332, %v2336
        %v2339 = vshrl.u32 %v2105, 16
        %v2341 = vrot.slane %v2339, 4
        %v2342 = vshll.u32 %v2105, 16
        %v2344 = vrot.slane %v2342, 5
        %v2345 = vor.u32 %v2341, %v2344
        %v2346 = vrot.slane %v2345, 4
        %v2348 = vshll.u32 %v2106, 16
        %v2350 = vrot.slane %v2348, 5
        %v2351 = vsel %vm486, %v2346, %v2350
        %v2352 = vshrl.u32 %v2106, 16
        %v2354 = vrot.slane %v2352, 4
        %v2355 = vor.u32 %v2354, %v2350
        %v2356 = vrot.slane %v2355, 4
        %v2358 = vshll.u32 %v2107, 16
        %v2360 = vrot.slane %v2358, 5
        %v2361 = vsel %vm486, %v2356, %v2360
        %v2363 = vshrl.u32 %v2108, 16
        %v2365 = vrot.slane %v2363, 4
        %v2366 = vshll.u32 %v2108, 16
        %v2368 = vrot.slane %v2366, 5
        %v2369 = vor.u32 %v2365, %v2368
        %v2370 = vrot.slane %v2369, 4
        %v2372 = vshll.u32 %v2109, 16
        %v2374 = vrot.slane %v2372, 5
        %v2375 = vsel %vm486, %v2370, %v2374
        %v2376 = vshrl.u32 %v2109, 16
        %v2378 = vrot.slane %v2376, 4
        %v2379 = vor.u32 %v2378, %v2374
        %v2380 = vrot.slane %v2379, 4
        %v2382 = vshll.u32 %v2110, 16
        %v2384 = vrot.slane %v2382, 5
        %v2385 = vsel %vm486, %v2380, %v2384
        %v2387 = vshrl.u32 %v2111, 16
        %v2389 = vrot.slane %v2387, 4
        %v2390 = vshll.u32 %v2111, 16
        %v2392 = vrot.slane %v2390, 5
        %v2393 = vor.u32 %v2389, %v2392
        %v2394 = vrot.slane %v2393, 4
        %v2396 = vshll.u32 %v2112, 16
        %v2398 = vrot.slane %v2396, 5
        %v2399 = vsel %vm486, %v2394, %v2398
        %v2400 = vshrl.u32 %v2112, 16
        %v2402 = vrot.slane %v2400, 4
        %v2403 = vor.u32 %v2402, %v2398
        %v2404 = vrot.slane %v2403, 4
        %v2406 = vshll.u32 %v2113, 16
        %v2408 = vrot.slane %v2406, 5
        %v2409 = vsel %vm486, %v2404, %v2408
        %v2411 = vshrl.u32 %v2114, 16
        %v2413 = vrot.slane %v2411, 4
        %v2414 = vshll.u32 %v2114, 16
        %v2416 = vrot.slane %v2414, 5
        %v2417 = vor.u32 %v2413, %v2416
        %v2418 = vrot.slane %v2417, 4
        %v2420 = vshll.u32 %v2115, 16
        %v2422 = vrot.slane %v2420, 5
        %v2423 = vsel %vm486, %v2418, %v2422
        %v2424 = vshrl.u32 %v2115, 16
        %v2426 = vrot.slane %v2424, 4
        %v2427 = vor.u32 %v2426, %v2422
        %v2428 = vrot.slane %v2427, 4
        %v2430 = vshll.u32 %v2116, 16
        %v2432 = vrot.slane %v2430, 5
        %v2433 = vsel %vm486, %v2428, %v2432
        %v2435 = vshrl.u32 %v2117, 16
        %v2437 = vrot.slane %v2435, 4
        %v2438 = vshll.u32 %v2117, 16
        %v2440 = vrot.slane %v2438, 5
        %v2441 = vor.u32 %v2437, %v2440
        %v2442 = vrot.slane %v2441, 4
        %v2444 = vshll.u32 %v2118, 16
        %v2446 = vrot.slane %v2444, 5
        %v2447 = vsel %vm486, %v2442, %v2446
        %v2448 = vshrl.u32 %v2118, 16
        %v2450 = vrot.slane %v2448, 4
        %v2451 = vor.u32 %v2450, %v2446
        %v2452 = vrot.slane %v2451, 4
        %v2454 = vshll.u32 %v2119, 16
        %v2456 = vrot.slane %v2454, 5
        %v2457 = vsel %vm486, %v2452, %v2456
        %v2459 = vshrl.u32 %v2120, 16
        %v2461 = vrot.slane %v2459, 4
        %v2462 = vshll.u32 %v2120, 16
        %v2464 = vrot.slane %v2462, 5
        %v2465 = vor.u32 %v2461, %v2464
        %v2466 = vrot.slane %v2465, 4
        %v2468 = vshll.u32 %v2121, 16
        %v2470 = vrot.slane %v2468, 5
        %v2471 = vsel %vm486, %v2466, %v2470
        %v2472 = vshrl.u32 %v2121, 16
        %v2474 = vrot.slane %v2472, 4
        %v2475 = vor.u32 %v2474, %v2470
        %v2476 = vrot.slane %v2475, 4
        %v2478 = vshll.u32 %v2122, 16
        %v2480 = vrot.slane %v2478, 5
        %v2481 = vsel %vm486, %v2476, %v2480
        %v2483 = vshrl.u32 %v2123, 16
        %v2485 = vrot.slane %v2483, 4
        %v2486 = vshll.u32 %v2123, 16
        %v2488 = vrot.slane %v2486, 5
        %v2489 = vor.u32 %v2485, %v2488
        %v2490 = vrot.slane %v2489, 4
        %v2492 = vshll.u32 %v2124, 16
        %v2494 = vrot.slane %v2492, 5
        %v2495 = vsel %vm486, %v2490, %v2494
        %v2496 = vshrl.u32 %v2124, 16
        %v2498 = vrot.slane %v2496, 4
        %v2499 = vor.u32 %v2498, %v2494
        %v2500 = vrot.slane %v2499, 4
        %v2502 = vshll.u32 %v2125, 16
        %v2504 = vrot.slane %v2502, 5
        %v2505 = vsel %vm486, %v2500, %v2504
        %v2507 = vshrl.u32 %v2126, 16
        %v2509 = vrot.slane %v2507, 4
        %v2510 = vshll.u32 %v2126, 16
        %v2512 = vrot.slane %v2510, 5
        %v2513 = vor.u32 %v2509, %v2512
        %v2514 = vrot.slane %v2513, 4
        %v2516 = vshll.u32 %v2127, 16
        %v2518 = vrot.slane %v2516, 5
        %v2519 = vsel %vm486, %v2514, %v2518
        %v2520 = vshrl.u32 %v2127, 16
        %v2522 = vrot.slane %v2520, 4
        %v2523 = vor.u32 %v2522, %v2518
        %v2524 = vrot.slane %v2523, 4
        %v2526 = vshll.u32 %v2128, 16
        %v2528 = vrot.slane %v2526, 5
        %v2529 = vsel %vm486, %v2524, %v2528
        %v2530 = vunpack.c.l.b16 %v2159
        %v2531 = vunpack.c.l.b16 %v2169
        %v2532 = vunpack.c.l.b16 %v2183
        %v2533 = vunpack.c.l.b16 %v2193
        %v2534 = vunpack.c.l.b16 %v2207
        %v2535 = vunpack.c.l.b16 %v2217
        %v2536 = vunpack.c.l.b16 %v2231
        %v2537 = vunpack.c.l.b16 %v2241
        %v2538 = vunpack.c.l.b16 %v2255
        %v2539 = vunpack.c.l.b16 %v2265
        %v2540 = vunpack.c.l.b16 %v2279
        %v2541 = vunpack.c.l.b16 %v2289
        %v2542 = vunpack.c.l.b16 %v2303
        %v2543 = vunpack.c.l.b16 %v2313
        %v2544 = vunpack.c.l.b16 %v2327
        %v2545 = vunpack.c.l.b16 %v2337
        %v2546 = vunpack.c.l.b16 %v2351
        %v2547 = vunpack.c.l.b16 %v2361
        %v2548 = vunpack.c.l.b16 %v2375
        %v2549 = vunpack.c.l.b16 %v2385
        %v2550 = vunpack.c.l.b16 %v2399
        %v2551 = vunpack.c.l.b16 %v2409
        %v2552 = vunpack.c.l.b16 %v2423
        %v2553 = vunpack.c.l.b16 %v2433
        %v2554 = vunpack.c.l.b16 %v2447
        %v2555 = vunpack.c.l.b16 %v2457
        %v2556 = vunpack.c.l.b16 %v2471
        %v2557 = vunpack.c.l.b16 %v2481
        %v2558 = vunpack.c.l.b16 %v2495
        %v2559 = vunpack.c.l.b16 %v2505
        %v2560 = vunpack.c.l.b16 %v2519
        %v2561 = vunpack.c.l.b16 %v2529
        %v2562 = vpack.c.b16 %v2531, %v2530
        %v2563 = vpack.c.b16 %v2533, %v2532
        %v2564 = vpack.c.b16 %v2535, %v2534
        %v2565 = vpack.c.b16 %v2537, %v2536
        %v2566 = vpack.c.b16 %v2539, %v2538
        %v2567 = vpack.c.b16 %v2541, %v2540
        %v2568 = vpack.c.b16 %v2543, %v2542
        %v2569 = vpack.c.b16 %v2545, %v2544
        %v2570 = vpack.c.b16 %v2547, %v2546
        %v2571 = vpack.c.b16 %v2549, %v2548
        %v2572 = vpack.c.b16 %v2551, %v2550
        %v2573 = vpack.c.b16 %v2553, %v2552
        %v2574 = vpack.c.b16 %v2555, %v2554
        %v2575 = vpack.c.b16 %v2557, %v2556
        %v2576 = vpack.c.b16 %v2559, %v2558
        %v2577 = vpack.c.b16 %v2561, %v2560
        %v2610 = vunpack.c.l.b16 %v2130
        %v2611 = vunpack.c.l.b16 %v2131
        %v2612 = vunpack.c.l.b16 %v2132
        %v2613 = vunpack.c.l.b16 %v2133
        %v2614 = vunpack.c.l.b16 %v2134
        %v2615 = vunpack.c.l.b16 %v2135
        %v2616 = vunpack.c.l.b16 %v2136
        %v2617 = vunpack.c.l.b16 %v2137
        %v2618 = vunpack.c.l.b16 %v2138
        %v2619 = vunpack.c.l.b16 %v2139
        %v2620 = vunpack.c.l.b16 %v2140
        %v2621 = vunpack.c.l.b16 %v2141
        %v2622 = vunpack.c.l.b16 %v2142
        %v2623 = vunpack.c.l.b16 %v2143
        %v2624 = vunpack.c.l.b16 %v2144
        %v2625 = vunpack.c.l.b16 %v2145
        %v2626 = vpack.c.b16 %v2611, %v2610
        %v2627 = vpack.c.b16 %v2613, %v2612
        %v2628 = vpack.c.b16 %v2615, %v2614
        %v2629 = vpack.c.b16 %v2617, %v2616
        %v2630 = vpack.c.b16 %v2619, %v2618
        %v2631 = vpack.c.b16 %v2621, %v2620
        %v2632 = vpack.c.b16 %v2623, %v2622
        %v2633 = vpack.c.b16 %v2625, %v2624
        %2642 = vmatpush.bf16.msra.mxu0 %v2633
        %2643 = vmatpush.bf16.msra.mxu0 %v2632
        %2644 = vmatpush.bf16.msra.mxu0 %v2631
        %2645 = vmatpush.bf16.msra.mxu0 %v2630
        %2646 = vmatpush.bf16.msra.mxu0 %v2629
        %2647 = vmatpush.bf16.msra.mxu0 %v2628
        %2648 = vmatpush.bf16.msra.mxu0 %v2627
        %2649 = vmatpush.bf16.msra.mxu0 %v2626
        %2650 = vmatmul.bf16.gmra.mxu0 %v2562
        %v2651 = vpop.f32.mrf.mxu0
        %v2652 = vadd.f32 0.0, %v2651
        %v2653 = vpop.f32.mrf.mxu0
        %v2654 = vadd.f32 0.0, %v2653
        %2655 = vmatmul.bf16.gmra.mxu0 %v2563
        %v2656 = vpop.f32.mrf.mxu0
        %v2657 = vadd.f32 0.0, %v2656
        %v2658 = vpop.f32.mrf.mxu0
        %v2659 = vadd.f32 0.0, %v2658
        %2660 = vmatmul.bf16.gmra.mxu0 %v2564
        %v2661 = vpop.f32.mrf.mxu0
        %v2662 = vadd.f32 0.0, %v2661
        %v2663 = vpop.f32.mrf.mxu0
        %v2664 = vadd.f32 0.0, %v2663
        %2665 = vmatmul.bf16.gmra.mxu0 %v2565
        %v2666 = vpop.f32.mrf.mxu0
        %v2667 = vadd.f32 0.0, %v2666
        %v2668 = vpop.f32.mrf.mxu0
        %v2669 = vadd.f32 0.0, %v2668
        %2670 = vmatmul.bf16.gmra.mxu0 %v2566
        %v2671 = vpop.f32.mrf.mxu0
        %v2672 = vadd.f32 0.0, %v2671
        %v2673 = vpop.f32.mrf.mxu0
        %v2674 = vadd.f32 0.0, %v2673
        %2675 = vmatmul.bf16.gmra.mxu0 %v2567
        %v2676 = vpop.f32.mrf.mxu0
        %v2677 = vadd.f32 0.0, %v2676
        %v2678 = vpop.f32.mrf.mxu0
        %v2679 = vadd.f32 0.0, %v2678
        %2680 = vmatmul.bf16.gmra.mxu0 %v2568
        %v2681 = vpop.f32.mrf.mxu0
        %v2682 = vadd.f32 0.0, %v2681
        %v2683 = vpop.f32.mrf.mxu0
        %v2684 = vadd.f32 0.0, %v2683
        %2685 = vmatmul.bf16.gmra.mxu0 %v2569
        %v2686 = vpop.f32.mrf.mxu0
        %v2687 = vadd.f32 0.0, %v2686
        %v2688 = vpop.f32.mrf.mxu0
        %v2689 = vadd.f32 0.0, %v2688
        %2690 = vmatmul.bf16.gmra.mxu0 %v2570
        %v2691 = vpop.f32.mrf.mxu0
        %v2692 = vadd.f32 0.0, %v2691
        %v2693 = vpop.f32.mrf.mxu0
        %v2694 = vadd.f32 0.0, %v2693
        %2695 = vmatmul.bf16.gmra.mxu0 %v2571
        %v2696 = vpop.f32.mrf.mxu0
        %v2697 = vadd.f32 0.0, %v2696
        %v2698 = vpop.f32.mrf.mxu0
        %v2699 = vadd.f32 0.0, %v2698
        %2700 = vmatmul.bf16.gmra.mxu0 %v2572
        %v2701 = vpop.f32.mrf.mxu0
        %v2702 = vadd.f32 0.0, %v2701
        %v2703 = vpop.f32.mrf.mxu0
        %v2704 = vadd.f32 0.0, %v2703
        %2705 = vmatmul.bf16.gmra.mxu0 %v2573
        %v2706 = vpop.f32.mrf.mxu0
        %v2707 = vadd.f32 0.0, %v2706
        %v2708 = vpop.f32.mrf.mxu0
        %v2709 = vadd.f32 0.0, %v2708
        %2710 = vmatmul.bf16.gmra.mxu0 %v2574
        %v2711 = vpop.f32.mrf.mxu0
        %v2712 = vadd.f32 0.0, %v2711
        %v2713 = vpop.f32.mrf.mxu0
        %v2714 = vadd.f32 0.0, %v2713
        %2715 = vmatmul.bf16.gmra.mxu0 %v2575
        %v2716 = vpop.f32.mrf.mxu0
        %v2717 = vadd.f32 0.0, %v2716
        %v2718 = vpop.f32.mrf.mxu0
        %v2719 = vadd.f32 0.0, %v2718
        %2720 = vmatmul.bf16.gmra.mxu0 %v2576
        %v2721 = vpop.f32.mrf.mxu0
        %v2722 = vadd.f32 0.0, %v2721
        %v2723 = vpop.f32.mrf.mxu0
        %v2724 = vadd.f32 0.0, %v2723
        %2725 = vmatmul.bf16.gmra.mxu0 %v2577
        %v2726 = vpop.f32.mrf.mxu0
        %v2727 = vadd.f32 0.0, %v2726
        %v2728 = vpop.f32.mrf.mxu0
        %v2729 = vadd.f32 0.0, %v2728
        %2730 = vdwg.mxu0
        %v2731 = vadd.f32 %v2049, %v2652
        %v2732 = vadd.f32 %v2050, %v2654
        %v2733 = vadd.f32 %v2051, %v2657
        %v2734 = vadd.f32 %v2052, %v2659
        %v2735 = vadd.f32 %v2053, %v2662
        %v2736 = vadd.f32 %v2054, %v2664
        %v2737 = vadd.f32 %v2055, %v2667
        %v2738 = vadd.f32 %v2056, %v2669
        %v2739 = vadd.f32 %v2057, %v2672
        %v2740 = vadd.f32 %v2058, %v2674
        %v2741 = vadd.f32 %v2059, %v2677
        %v2742 = vadd.f32 %v2060, %v2679
        %v2743 = vadd.f32 %v2061, %v2682
        %v2744 = vadd.f32 %v2062, %v2684
        %v2745 = vadd.f32 %v2063, %v2687
        %v2746 = vadd.f32 %v2064, %v2689
        %v2747 = vadd.f32 %v2065, %v2692
        %v2748 = vadd.f32 %v2066, %v2694
        %v2749 = vadd.f32 %v2067, %v2697
        %v2750 = vadd.f32 %v2068, %v2699
        %v2751 = vadd.f32 %v2069, %v2702
        %v2752 = vadd.f32 %v2070, %v2704
        %v2753 = vadd.f32 %v2071, %v2707
        %v2754 = vadd.f32 %v2072, %v2709
        %v2755 = vadd.f32 %v2073, %v2712
        %v2756 = vadd.f32 %v2074, %v2714
        %v2757 = vadd.f32 %v2075, %v2717
        %v2758 = vadd.f32 %v2076, %v2719
        %v2759 = vadd.f32 %v2077, %v2722
        %v2760 = vadd.f32 %v2078, %v2724
        %v2761 = vadd.f32 %v2079, %v2727
        %v2762 = vadd.f32 %v2080, %v2729
        %v2763 = vld [vmem:[%s1766] sm:$0xe]
        %v2764 = vld [vmem:[%s1766 + $0x4] sm:$0xf]
        %v2765 = vld [vmem:[%s1766 + $0x8] sm:$0x1]
        %v2766 = vld [vmem:[%s1766 + $0xc] sm:$0xe]
        %v2767 = vld [vmem:[%s1766 + $0x10] sm:$0xf]
        %v2768 = vld [vmem:[%s1766 + $0x14] sm:$0x1]
        %v2769 = vld [vmem:[%s1766 + $0x18] sm:$0xe]
        %v2770 = vld [vmem:[%s1766 + $0x1c] sm:$0xf]
        %v2771 = vld [vmem:[%s1766 + $0x20] sm:$0x1]
        %v2772 = vld [vmem:[%s1766 + $0x24] sm:$0xe]
        %v2773 = vld [vmem:[%s1766 + $0x28] sm:$0xf]
        %v2774 = vld [vmem:[%s1766 + $0x2c] sm:$0x1]
        %v2775 = vld [vmem:[%s1766 + $0x30] sm:$0xe]
        %v2776 = vld [vmem:[%s1766 + $0x34] sm:$0xf]
        %v2777 = vld [vmem:[%s1766 + $0x38] sm:$0x1]
        %v2778 = vld [vmem:[%s1766 + $0x3c] sm:$0xe]
        %v2779 = vld [vmem:[%s1766 + $0x40] sm:$0xf]
        %v2780 = vld [vmem:[%s1766 + $0x44] sm:$0x1]
        %v2781 = vld [vmem:[%s1766 + $0x48] sm:$0xe]
        %v2782 = vld [vmem:[%s1766 + $0x4c] sm:$0xf]
        %v2783 = vld [vmem:[%s1766 + $0x50] sm:$0x1]
        %v2784 = vld [vmem:[%s1766 + $0x54] sm:$0xe]
        %v2785 = vld [vmem:[%s1766 + $0x58] sm:$0xf]
        %v2786 = vld [vmem:[%s1766 + $0x5c] sm:$0x1]
        %v2787 = vld [vmem:[%s1766 + $0x60] sm:$0xe]
        %v2788 = vld [vmem:[%s1766 + $0x64] sm:$0xf]
        %v2789 = vld [vmem:[%s1766 + $0x68] sm:$0x1]
        %v2790 = vld [vmem:[%s1766 + $0x6c] sm:$0xe]
        %v2791 = vld [vmem:[%s1766 + $0x70] sm:$0xf]
        %v2792 = vld [vmem:[%s1766 + $0x74] sm:$0x1]
        %v2793 = vld [vmem:[%s1766 + $0x78] sm:$0xe]
        %v2794 = vld [vmem:[%s1766 + $0x7c] sm:$0xf]
        %v2795 = vld [vmem:[%s1766 + $0x80] sm:$0x1]
        %v2796 = vld [vmem:[%s1766 + $0x84] sm:$0xe]
        %v2797 = vld [vmem:[%s1766 + $0x88] sm:$0xf]
        %v2798 = vld [vmem:[%s1766 + $0x8c] sm:$0x1]
        %v2799 = vld [vmem:[%s1766 + $0x90] sm:$0xe]
        %v2800 = vld [vmem:[%s1766 + $0x94] sm:$0xf]
        %v2801 = vld [vmem:[%s1766 + $0x98] sm:$0x1]
        %v2802 = vld [vmem:[%s1766 + $0x9c] sm:$0xe]
        %v2803 = vld [vmem:[%s1766 + $0xa0] sm:$0xf]
        %v2804 = vld [vmem:[%s1766 + $0xa4] sm:$0x1]
        %v2805 = vld [vmem:[%s1766 + $0xa8] sm:$0xe]
        %v2806 = vld [vmem:[%s1766 + $0xac] sm:$0xf]
        %v2807 = vld [vmem:[%s1766 + $0xb0] sm:$0x1]
        %v2808 = vld [vmem:[%s1766 + $0xb4] sm:$0xe]
        %v2809 = vld [vmem:[%s1766 + $0xb8] sm:$0xf]
        %v2810 = vld [vmem:[%s1766 + $0xbc] sm:$0x1]
        %s2811 = scalar_lea.vmem %s1, 320
        %v2812 = vld [vmem:[%s2811] sm:$0xf]
        %v2813 = vld [vmem:[%s2811 + $0x4] sm:$0xf]
        %v2814 = vld [vmem:[%s2811 + $0x8] sm:$0xf]
        %v2815 = vld [vmem:[%s2811 + $0xc] sm:$0xf]
        %v2816 = vld [vmem:[%s2811 + $0x10] sm:$0xf]
        %v2817 = vld [vmem:[%s2811 + $0x14] sm:$0xf]
        %v2818 = vld [vmem:[%s2811 + $0x18] sm:$0xf]
        %v2819 = vld [vmem:[%s2811 + $0x1c] sm:$0xf]
        %v2820 = vld [vmem:[%s2811 + $0x20] sm:$0xf]
        %v2821 = vld [vmem:[%s2811 + $0x24] sm:$0xf]
        %v2822 = vld [vmem:[%s2811 + $0x28] sm:$0xf]
        %v2823 = vld [vmem:[%s2811 + $0x2c] sm:$0xf]
        %v2824 = vld [vmem:[%s2811 + $0x30] sm:$0xf]
        %v2825 = vld [vmem:[%s2811 + $0x34] sm:$0xf]
        %v2826 = vld [vmem:[%s2811 + $0x38] sm:$0xf]
        %v2827 = vld [vmem:[%s2811 + $0x3c] sm:$0xf]
        %v2876 = vrot.slane %v2763, 5
        %v2877 = vrot.slane %v2876, 4
        %v2878 = vrot.slane %v2764, 5
        %v2879 = vsel %vm1420, %v2877, %v2878
        %v2880 = vrot.slane %v2878, 4
        %v2881 = vrot.slane %v2765, 5
        %v2882 = vsel %vm1420, %v2880, %v2881
        %v2883 = vrot.slane %v2766, 5
        %v2884 = vrot.slane %v2883, 4
        %v2885 = vrot.slane %v2767, 5
        %v2886 = vsel %vm1420, %v2884, %v2885
        %v2887 = vrot.slane %v2885, 4
        %v2888 = vrot.slane %v2768, 5
        %v2889 = vsel %vm1420, %v2887, %v2888
        %v2890 = vrot.slane %v2769, 5
        %v2891 = vrot.slane %v2890, 4
        %v2892 = vrot.slane %v2770, 5
        %v2893 = vsel %vm1420, %v2891, %v2892
        %v2894 = vrot.slane %v2892, 4
        %v2895 = vrot.slane %v2771, 5
        %v2896 = vsel %vm1420, %v2894, %v2895
        %v2897 = vrot.slane %v2772, 5
        %v2898 = vrot.slane %v2897, 4
        %v2899 = vrot.slane %v2773, 5
        %v2900 = vsel %vm1420, %v2898, %v2899
        %v2901 = vrot.slane %v2899, 4
        %v2902 = vrot.slane %v2774, 5
        %v2903 = vsel %vm1420, %v2901, %v2902
        %v2904 = vrot.slane %v2775, 5
        %v2905 = vrot.slane %v2904, 4
        %v2906 = vrot.slane %v2776, 5
        %v2907 = vsel %vm1420, %v2905, %v2906
        %v2908 = vrot.slane %v2906, 4
        %v2909 = vrot.slane %v2777, 5
        %v2910 = vsel %vm1420, %v2908, %v2909
        %v2911 = vrot.slane %v2778, 5
        %v2912 = vrot.slane %v2911, 4
        %v2913 = vrot.slane %v2779, 5
        %v2914 = vsel %vm1420, %v2912, %v2913
        %v2915 = vrot.slane %v2913, 4
        %v2916 = vrot.slane %v2780, 5
        %v2917 = vsel %vm1420, %v2915, %v2916
        %v2918 = vrot.slane %v2781, 5
        %v2919 = vrot.slane %v2918, 4
        %v2920 = vrot.slane %v2782, 5
        %v2921 = vsel %vm1420, %v2919, %v2920
        %v2922 = vrot.slane %v2920, 4
        %v2923 = vrot.slane %v2783, 5
        %v2924 = vsel %vm1420, %v2922, %v2923
        %v2925 = vrot.slane %v2784, 5
        %v2926 = vrot.slane %v2925, 4
        %v2927 = vrot.slane %v2785, 5
        %v2928 = vsel %vm1420, %v2926, %v2927
        %v2929 = vrot.slane %v2927, 4
        %v2930 = vrot.slane %v2786, 5
        %v2931 = vsel %vm1420, %v2929, %v2930
        %v2932 = vrot.slane %v2787, 5
        %v2933 = vrot.slane %v2932, 4
        %v2934 = vrot.slane %v2788, 5
        %v2935 = vsel %vm1420, %v2933, %v2934
        %v2936 = vrot.slane %v2934, 4
        %v2937 = vrot.slane %v2789, 5
        %v2938 = vsel %vm1420, %v2936, %v2937
        %v2939 = vrot.slane %v2790, 5
        %v2940 = vrot.slane %v2939, 4
        %v2941 = vrot.slane %v2791, 5
        %v2942 = vsel %vm1420, %v2940, %v2941
        %v2943 = vrot.slane %v2941, 4
        %v2944 = vrot.slane %v2792, 5
        %v2945 = vsel %vm1420, %v2943, %v2944
        %v2946 = vrot.slane %v2793, 5
        %v2947 = vrot.slane %v2946, 4
        %v2948 = vrot.slane %v2794, 5
        %v2949 = vsel %vm1420, %v2947, %v2948
        %v2950 = vrot.slane %v2948, 4
        %v2951 = vrot.slane %v2795, 5
        %v2952 = vsel %vm1420, %v2950, %v2951
        %v2953 = vrot.slane %v2796, 5
        %v2954 = vrot.slane %v2953, 4
        %v2955 = vrot.slane %v2797, 5
        %v2956 = vsel %vm1420, %v2954, %v2955
        %v2957 = vrot.slane %v2955, 4
        %v2958 = vrot.slane %v2798, 5
        %v2959 = vsel %vm1420, %v2957, %v2958
        %v2960 = vrot.slane %v2799, 5
        %v2961 = vrot.slane %v2960, 4
        %v2962 = vrot.slane %v2800, 5
        %v2963 = vsel %vm1420, %v2961, %v2962
        %v2964 = vrot.slane %v2962, 4
        %v2965 = vrot.slane %v2801, 5
        %v2966 = vsel %vm1420, %v2964, %v2965
        %v2967 = vrot.slane %v2802, 5
        %v2968 = vrot.slane %v2967, 4
        %v2969 = vrot.slane %v2803, 5
        %v2970 = vsel %vm1420, %v2968, %v2969
        %v2971 = vrot.slane %v2969, 4
        %v2972 = vrot.slane %v2804, 5
        %v2973 = vsel %vm1420, %v2971, %v2972
        %v2974 = vrot.slane %v2805, 5
        %v2975 = vrot.slane %v2974, 4
        %v2976 = vrot.slane %v2806, 5
        %v2977 = vsel %vm1420, %v2975, %v2976
        %v2978 = vrot.slane %v2976, 4
        %v2979 = vrot.slane %v2807, 5
        %v2980 = vsel %vm1420, %v2978, %v2979
        %v2981 = vrot.slane %v2808, 5
        %v2982 = vrot.slane %v2981, 4
        %v2983 = vrot.slane %v2809, 5
        %v2984 = vsel %vm1420, %v2982, %v2983
        %v2985 = vrot.slane %v2983, 4
        %v2986 = vrot.slane %v2810, 5
        %v2987 = vsel %vm1420, %v2985, %v2986
        %v2988 = vunpack.c.l.b16 %v2879
        %v2989 = vunpack.c.l.b16 %v2882
        %v2990 = vunpack.c.l.b16 %v2886
        %v2991 = vunpack.c.l.b16 %v2889
        %v2992 = vunpack.c.l.b16 %v2893
        %v2993 = vunpack.c.l.b16 %v2896
        %v2994 = vunpack.c.l.b16 %v2900
        %v2995 = vunpack.c.l.b16 %v2903
        %v2996 = vunpack.c.l.b16 %v2907
        %v2997 = vunpack.c.l.b16 %v2910
        %v2998 = vunpack.c.l.b16 %v2914
        %v2999 = vunpack.c.l.b16 %v2917
        %v3000 = vunpack.c.l.b16 %v2921
        %v3001 = vunpack.c.l.b16 %v2924
        %v3002 = vunpack.c.l.b16 %v2928
        %v3003 = vunpack.c.l.b16 %v2931
        %v3004 = vunpack.c.l.b16 %v2935
        %v3005 = vunpack.c.l.b16 %v2938
        %v3006 = vunpack.c.l.b16 %v2942
        %v3007 = vunpack.c.l.b16 %v2945
        %v3008 = vunpack.c.l.b16 %v2949
        %v3009 = vunpack.c.l.b16 %v2952
        %v3010 = vunpack.c.l.b16 %v2956
        %v3011 = vunpack.c.l.b16 %v2959
        %v3012 = vunpack.c.l.b16 %v2963
        %v3013 = vunpack.c.l.b16 %v2966
        %v3014 = vunpack.c.l.b16 %v2970
        %v3015 = vunpack.c.l.b16 %v2973
        %v3016 = vunpack.c.l.b16 %v2977
        %v3017 = vunpack.c.l.b16 %v2980
        %v3018 = vunpack.c.l.b16 %v2984
        %v3019 = vunpack.c.l.b16 %v2987
        %v3020 = vpack.c.b16 %v2989, %v2988
        %v3021 = vpack.c.b16 %v2991, %v2990
        %v3022 = vpack.c.b16 %v2993, %v2992
        %v3023 = vpack.c.b16 %v2995, %v2994
        %v3024 = vpack.c.b16 %v2997, %v2996
        %v3025 = vpack.c.b16 %v2999, %v2998
        %v3026 = vpack.c.b16 %v3001, %v3000
        %v3027 = vpack.c.b16 %v3003, %v3002
        %v3028 = vpack.c.b16 %v3005, %v3004
        %v3029 = vpack.c.b16 %v3007, %v3006
        %v3030 = vpack.c.b16 %v3009, %v3008
        %v3031 = vpack.c.b16 %v3011, %v3010
        %v3032 = vpack.c.b16 %v3013, %v3012
        %v3033 = vpack.c.b16 %v3015, %v3014
        %v3034 = vpack.c.b16 %v3017, %v3016
        %v3035 = vpack.c.b16 %v3019, %v3018
        %v3068 = vunpack.c.l.b16 %v2812
        %v3069 = vunpack.c.l.b16 %v2813
        %v3070 = vunpack.c.l.b16 %v2814
        %v3071 = vunpack.c.l.b16 %v2815
        %v3072 = vunpack.c.l.b16 %v2816
        %v3073 = vunpack.c.l.b16 %v2817
        %v3074 = vunpack.c.l.b16 %v2818
        %v3075 = vunpack.c.l.b16 %v2819
        %v3076 = vunpack.c.l.b16 %v2820
        %v3077 = vunpack.c.l.b16 %v2821
        %v3078 = vunpack.c.l.b16 %v2822
        %v3079 = vunpack.c.l.b16 %v2823
        %v3080 = vunpack.c.l.b16 %v2824
        %v3081 = vunpack.c.l.b16 %v2825
        %v3082 = vunpack.c.l.b16 %v2826
        %v3083 = vunpack.c.l.b16 %v2827
        %v3084 = vpack.c.b16 %v3069, %v3068
        %v3085 = vpack.c.b16 %v3071, %v3070
        %v3086 = vpack.c.b16 %v3073, %v3072
        %v3087 = vpack.c.b16 %v3075, %v3074
        %v3088 = vpack.c.b16 %v3077, %v3076
        %v3089 = vpack.c.b16 %v3079, %v3078
        %v3090 = vpack.c.b16 %v3081, %v3080
        %v3091 = vpack.c.b16 %v3083, %v3082
        %3100 = vmatpush.bf16.msra.mxu0 %v3091
        %3101 = vmatpush.bf16.msra.mxu0 %v3090
        %3102 = vmatpush.bf16.msra.mxu0 %v3089
        %3103 = vmatpush.bf16.msra.mxu0 %v3088
        %3104 = vmatpush.bf16.msra.mxu0 %v3087
        %3105 = vmatpush.bf16.msra.mxu0 %v3086
        %3106 = vmatpush.bf16.msra.mxu0 %v3085
        %3107 = vmatpush.bf16.msra.mxu0 %v3084
        %3108 = vmatmul.bf16.gmra.mxu0 %v3020
        %v3109 = vpop.f32.mrf.mxu0
        %v3110 = vadd.f32 0.0, %v3109
        %v3111 = vpop.f32.mrf.mxu0
        %v3112 = vadd.f32 0.0, %v3111
        %3113 = vmatmul.bf16.gmra.mxu0 %v3021
        %v3114 = vpop.f32.mrf.mxu0
        %v3115 = vadd.f32 0.0, %v3114
        %v3116 = vpop.f32.mrf.mxu0
        %v3117 = vadd.f32 0.0, %v3116
        %3118 = vmatmul.bf16.gmra.mxu0 %v3022
        %v3119 = vpop.f32.mrf.mxu0
        %v3120 = vadd.f32 0.0, %v3119
        %v3121 = vpop.f32.mrf.mxu0
        %v3122 = vadd.f32 0.0, %v3121
        %3123 = vmatmul.bf16.gmra.mxu0 %v3023
        %v3124 = vpop.f32.mrf.mxu0
        %v3125 = vadd.f32 0.0, %v3124
        %v3126 = vpop.f32.mrf.mxu0
        %v3127 = vadd.f32 0.0, %v3126
        %3128 = vmatmul.bf16.gmra.mxu0 %v3024
        %v3129 = vpop.f32.mrf.mxu0
        %v3130 = vadd.f32 0.0, %v3129
        %v3131 = vpop.f32.mrf.mxu0
        %v3132 = vadd.f32 0.0, %v3131
        %3133 = vmatmul.bf16.gmra.mxu0 %v3025
        %v3134 = vpop.f32.mrf.mxu0
        %v3135 = vadd.f32 0.0, %v3134
        %v3136 = vpop.f32.mrf.mxu0
        %v3137 = vadd.f32 0.0, %v3136
        %3138 = vmatmul.bf16.gmra.mxu0 %v3026
        %v3139 = vpop.f32.mrf.mxu0
        %v3140 = vadd.f32 0.0, %v3139
        %v3141 = vpop.f32.mrf.mxu0
        %v3142 = vadd.f32 0.0, %v3141
        %3143 = vmatmul.bf16.gmra.mxu0 %v3027
        %v3144 = vpop.f32.mrf.mxu0
        %v3145 = vadd.f32 0.0, %v3144
        %v3146 = vpop.f32.mrf.mxu0
        %v3147 = vadd.f32 0.0, %v3146
        %3148 = vmatmul.bf16.gmra.mxu0 %v3028
        %v3149 = vpop.f32.mrf.mxu0
        %v3150 = vadd.f32 0.0, %v3149
        %v3151 = vpop.f32.mrf.mxu0
        %v3152 = vadd.f32 0.0, %v3151
        %3153 = vmatmul.bf16.gmra.mxu0 %v3029
        %v3154 = vpop.f32.mrf.mxu0
        %v3155 = vadd.f32 0.0, %v3154
        %v3156 = vpop.f32.mrf.mxu0
        %v3157 = vadd.f32 0.0, %v3156
        %3158 = vmatmul.bf16.gmra.mxu0 %v3030
        %v3159 = vpop.f32.mrf.mxu0
        %v3160 = vadd.f32 0.0, %v3159
        %v3161 = vpop.f32.mrf.mxu0
        %v3162 = vadd.f32 0.0, %v3161
        %3163 = vmatmul.bf16.gmra.mxu0 %v3031
        %v3164 = vpop.f32.mrf.mxu0
        %v3165 = vadd.f32 0.0, %v3164
        %v3166 = vpop.f32.mrf.mxu0
        %v3167 = vadd.f32 0.0, %v3166
        %3168 = vmatmul.bf16.gmra.mxu0 %v3032
        %v3169 = vpop.f32.mrf.mxu0
        %v3170 = vadd.f32 0.0, %v3169
        %v3171 = vpop.f32.mrf.mxu0
        %v3172 = vadd.f32 0.0, %v3171
        %3173 = vmatmul.bf16.gmra.mxu0 %v3033
        %v3174 = vpop.f32.mrf.mxu0
        %v3175 = vadd.f32 0.0, %v3174
        %v3176 = vpop.f32.mrf.mxu0
        %v3177 = vadd.f32 0.0, %v3176
        %3178 = vmatmul.bf16.gmra.mxu0 %v3034
        %v3179 = vpop.f32.mrf.mxu0
        %v3180 = vadd.f32 0.0, %v3179
        %v3181 = vpop.f32.mrf.mxu0
        %v3182 = vadd.f32 0.0, %v3181
        %3183 = vmatmul.bf16.gmra.mxu0 %v3035
        %v3184 = vpop.f32.mrf.mxu0
        %v3185 = vadd.f32 0.0, %v3184
        %v3186 = vpop.f32.mrf.mxu0
        %v3187 = vadd.f32 0.0, %v3186
        %3188 = vdwg.mxu0
        %v3189 = vadd.f32 %v2731, %v3110
        %v3190 = vadd.f32 %v2732, %v3112
        %v3191 = vadd.f32 %v2733, %v3115
        %v3192 = vadd.f32 %v2734, %v3117
        %v3193 = vadd.f32 %v2735, %v3120
        %v3194 = vadd.f32 %v2736, %v3122
        %v3195 = vadd.f32 %v2737, %v3125
        %v3196 = vadd.f32 %v2738, %v3127
        %v3197 = vadd.f32 %v2739, %v3130
        %v3198 = vadd.f32 %v2740, %v3132
        %v3199 = vadd.f32 %v2741, %v3135
        %v3200 = vadd.f32 %v2742, %v3137
        %v3201 = vadd.f32 %v2743, %v3140
        %v3202 = vadd.f32 %v2744, %v3142
        %v3203 = vadd.f32 %v2745, %v3145
        %v3204 = vadd.f32 %v2746, %v3147
        %v3205 = vadd.f32 %v2747, %v3150
        %v3206 = vadd.f32 %v2748, %v3152
        %v3207 = vadd.f32 %v2749, %v3155
        %v3208 = vadd.f32 %v2750, %v3157
        %v3209 = vadd.f32 %v2751, %v3160
        %v3210 = vadd.f32 %v2752, %v3162
        %v3211 = vadd.f32 %v2753, %v3165
        %v3212 = vadd.f32 %v2754, %v3167
        %v3213 = vadd.f32 %v2755, %v3170
        %v3214 = vadd.f32 %v2756, %v3172
        %v3215 = vadd.f32 %v2757, %v3175
        %v3216 = vadd.f32 %v2758, %v3177
        %v3217 = vadd.f32 %v2759, %v3180
        %v3218 = vadd.f32 %v2760, %v3182
        %v3219 = vadd.f32 %v2761, %v3185
        %v3220 = vadd.f32 %v2762, %v3187
        %s3221 = scalar_lea.vmem %s293, 24
        %v3222 = vld [vmem:[%s3221] sm:$0xf]
        %v3223 = vld [vmem:[%s3221 + $0x4] sm:$0xf]
        %v3224 = vld [vmem:[%s3221 + $0xc] sm:$0xf]
        %v3225 = vld [vmem:[%s3221 + $0x10] sm:$0xf]
        %v3226 = vld [vmem:[%s3221 + $0x18] sm:$0xf]
        %v3227 = vld [vmem:[%s3221 + $0x1c] sm:$0xf]
        %v3228 = vld [vmem:[%s3221 + $0x24] sm:$0xf]
        %v3229 = vld [vmem:[%s3221 + $0x28] sm:$0xf]
        %v3230 = vld [vmem:[%s3221 + $0x30] sm:$0xf]
        %v3231 = vld [vmem:[%s3221 + $0x34] sm:$0xf]
        %v3232 = vld [vmem:[%s3221 + $0x3c] sm:$0xf]
        %v3233 = vld [vmem:[%s3221 + $0x40] sm:$0xf]
        %v3234 = vld [vmem:[%s3221 + $0x48] sm:$0xf]
        %v3235 = vld [vmem:[%s3221 + $0x4c] sm:$0xf]
        %v3236 = vld [vmem:[%s3221 + $0x54] sm:$0xf]
        %v3237 = vld [vmem:[%s3221 + $0x58] sm:$0xf]
        %v3238 = vld [vmem:[%s3221 + $0x60] sm:$0xf]
        %v3239 = vld [vmem:[%s3221 + $0x64] sm:$0xf]
        %v3240 = vld [vmem:[%s3221 + $0x6c] sm:$0xf]
        %v3241 = vld [vmem:[%s3221 + $0x70] sm:$0xf]
        %v3242 = vld [vmem:[%s3221 + $0x78] sm:$0xf]
        %v3243 = vld [vmem:[%s3221 + $0x7c] sm:$0xf]
        %v3244 = vld [vmem:[%s3221 + $0x84] sm:$0xf]
        %v3245 = vld [vmem:[%s3221 + $0x88] sm:$0xf]
        %v3246 = vld [vmem:[%s3221 + $0x90] sm:$0xf]
        %v3247 = vld [vmem:[%s3221 + $0x94] sm:$0xf]
        %v3248 = vld [vmem:[%s3221 + $0x9c] sm:$0xf]
        %v3249 = vld [vmem:[%s3221 + $0xa0] sm:$0xf]
        %v3250 = vld [vmem:[%s3221 + $0xa8] sm:$0xf]
        %v3251 = vld [vmem:[%s3221 + $0xac] sm:$0xf]
        %v3252 = vld [vmem:[%s3221 + $0xb4] sm:$0xf]
        %v3253 = vld [vmem:[%s3221 + $0xb8] sm:$0xf]
        %s3254 = scalar_lea.vmem %s1, 384
        %v3255 = vld [vmem:[%s3254] sm:$0xf]
        %v3256 = vld [vmem:[%s3254 + $0x4] sm:$0xf]
        %v3257 = vld [vmem:[%s3254 + $0x8] sm:$0xf]
        %v3258 = vld [vmem:[%s3254 + $0xc] sm:$0xf]
        %v3259 = vld [vmem:[%s3254 + $0x10] sm:$0xf]
        %v3260 = vld [vmem:[%s3254 + $0x14] sm:$0xf]
        %v3261 = vld [vmem:[%s3254 + $0x18] sm:$0xf]
        %v3262 = vld [vmem:[%s3254 + $0x1c] sm:$0xf]
        %v3263 = vld [vmem:[%s3254 + $0x20] sm:$0xf]
        %v3264 = vld [vmem:[%s3254 + $0x24] sm:$0xf]
        %v3265 = vld [vmem:[%s3254 + $0x28] sm:$0xf]
        %v3266 = vld [vmem:[%s3254 + $0x2c] sm:$0xf]
        %v3267 = vld [vmem:[%s3254 + $0x30] sm:$0xf]
        %v3268 = vld [vmem:[%s3254 + $0x34] sm:$0xf]
        %v3269 = vld [vmem:[%s3254 + $0x38] sm:$0xf]
        %v3270 = vld [vmem:[%s3254 + $0x3c] sm:$0xf]
        %v3303 = vunpack.c.l.b16 %v3222
        %v3304 = vunpack.c.l.b16 %v3223
        %v3305 = vunpack.c.l.b16 %v3224
        %v3306 = vunpack.c.l.b16 %v3225
        %v3307 = vunpack.c.l.b16 %v3226
        %v3308 = vunpack.c.l.b16 %v3227
        %v3309 = vunpack.c.l.b16 %v3228
        %v3310 = vunpack.c.l.b16 %v3229
        %v3311 = vunpack.c.l.b16 %v3230
        %v3312 = vunpack.c.l.b16 %v3231
        %v3313 = vunpack.c.l.b16 %v3232
        %v3314 = vunpack.c.l.b16 %v3233
        %v3315 = vunpack.c.l.b16 %v3234
        %v3316 = vunpack.c.l.b16 %v3235
        %v3317 = vunpack.c.l.b16 %v3236
        %v3318 = vunpack.c.l.b16 %v3237
        %v3319 = vunpack.c.l.b16 %v3238
        %v3320 = vunpack.c.l.b16 %v3239
        %v3321 = vunpack.c.l.b16 %v3240
        %v3322 = vunpack.c.l.b16 %v3241
        %v3323 = vunpack.c.l.b16 %v3242
        %v3324 = vunpack.c.l.b16 %v3243
        %v3325 = vunpack.c.l.b16 %v3244
        %v3326 = vunpack.c.l.b16 %v3245
        %v3327 = vunpack.c.l.b16 %v3246
        %v3328 = vunpack.c.l.b16 %v3247
        %v3329 = vunpack.c.l.b16 %v3248
        %v3330 = vunpack.c.l.b16 %v3249
        %v3331 = vunpack.c.l.b16 %v3250
        %v3332 = vunpack.c.l.b16 %v3251
        %v3333 = vunpack.c.l.b16 %v3252
        %v3334 = vunpack.c.l.b16 %v3253
        %v3335 = vpack.c.b16 %v3304, %v3303
        %v3336 = vpack.c.b16 %v3306, %v3305
        %v3337 = vpack.c.b16 %v3308, %v3307
        %v3338 = vpack.c.b16 %v3310, %v3309
        %v3339 = vpack.c.b16 %v3312, %v3311
        %v3340 = vpack.c.b16 %v3314, %v3313
        %v3341 = vpack.c.b16 %v3316, %v3315
        %v3342 = vpack.c.b16 %v3318, %v3317
        %v3343 = vpack.c.b16 %v3320, %v3319
        %v3344 = vpack.c.b16 %v3322, %v3321
        %v3345 = vpack.c.b16 %v3324, %v3323
        %v3346 = vpack.c.b16 %v3326, %v3325
        %v3347 = vpack.c.b16 %v3328, %v3327
        %v3348 = vpack.c.b16 %v3330, %v3329
        %v3349 = vpack.c.b16 %v3332, %v3331
        %v3350 = vpack.c.b16 %v3334, %v3333
        %v3383 = vunpack.c.l.b16 %v3255
        %v3384 = vunpack.c.l.b16 %v3256
        %v3385 = vunpack.c.l.b16 %v3257
        %v3386 = vunpack.c.l.b16 %v3258
        %v3387 = vunpack.c.l.b16 %v3259
        %v3388 = vunpack.c.l.b16 %v3260
        %v3389 = vunpack.c.l.b16 %v3261
        %v3390 = vunpack.c.l.b16 %v3262
        %v3391 = vunpack.c.l.b16 %v3263
        %v3392 = vunpack.c.l.b16 %v3264
        %v3393 = vunpack.c.l.b16 %v3265
        %v3394 = vunpack.c.l.b16 %v3266
        %v3395 = vunpack.c.l.b16 %v3267
        %v3396 = vunpack.c.l.b16 %v3268
        %v3397 = vunpack.c.l.b16 %v3269
        %v3398 = vunpack.c.l.b16 %v3270
        %v3399 = vpack.c.b16 %v3384, %v3383
        %v3400 = vpack.c.b16 %v3386, %v3385
        %v3401 = vpack.c.b16 %v3388, %v3387
        %v3402 = vpack.c.b16 %v3390, %v3389
        %v3403 = vpack.c.b16 %v3392, %v3391
        %v3404 = vpack.c.b16 %v3394, %v3393
        %v3405 = vpack.c.b16 %v3396, %v3395
        %v3406 = vpack.c.b16 %v3398, %v3397
        %3415 = vmatpush.bf16.msra.mxu0 %v3406
        %3416 = vmatpush.bf16.msra.mxu0 %v3405
        %3417 = vmatpush.bf16.msra.mxu0 %v3404
        %3418 = vmatpush.bf16.msra.mxu0 %v3403
        %3419 = vmatpush.bf16.msra.mxu0 %v3402
        %3420 = vmatpush.bf16.msra.mxu0 %v3401
        %3421 = vmatpush.bf16.msra.mxu0 %v3400
        %3422 = vmatpush.bf16.msra.mxu0 %v3399
        %3423 = vmatmul.bf16.gmra.mxu0 %v3335
        %v3424 = vpop.f32.mrf.mxu0
        %v3425 = vadd.f32 0.0, %v3424
        %v3426 = vpop.f32.mrf.mxu0
        %v3427 = vadd.f32 0.0, %v3426
        %3428 = vmatmul.bf16.gmra.mxu0 %v3336
        %v3429 = vpop.f32.mrf.mxu0
        %v3430 = vadd.f32 0.0, %v3429
        %v3431 = vpop.f32.mrf.mxu0
        %v3432 = vadd.f32 0.0, %v3431
        %3433 = vmatmul.bf16.gmra.mxu0 %v3337
        %v3434 = vpop.f32.mrf.mxu0
        %v3435 = vadd.f32 0.0, %v3434
        %v3436 = vpop.f32.mrf.mxu0
        %v3437 = vadd.f32 0.0, %v3436
        %3438 = vmatmul.bf16.gmra.mxu0 %v3338
        %v3439 = vpop.f32.mrf.mxu0
        %v3440 = vadd.f32 0.0, %v3439
        %v3441 = vpop.f32.mrf.mxu0
        %v3442 = vadd.f32 0.0, %v3441
        %3443 = vmatmul.bf16.gmra.mxu0 %v3339
        %v3444 = vpop.f32.mrf.mxu0
        %v3445 = vadd.f32 0.0, %v3444
        %v3446 = vpop.f32.mrf.mxu0
        %v3447 = vadd.f32 0.0, %v3446
        %3448 = vmatmul.bf16.gmra.mxu0 %v3340
        %v3449 = vpop.f32.mrf.mxu0
        %v3450 = vadd.f32 0.0, %v3449
        %v3451 = vpop.f32.mrf.mxu0
        %v3452 = vadd.f32 0.0, %v3451
        %3453 = vmatmul.bf16.gmra.mxu0 %v3341
        %v3454 = vpop.f32.mrf.mxu0
        %v3455 = vadd.f32 0.0, %v3454
        %v3456 = vpop.f32.mrf.mxu0
        %v3457 = vadd.f32 0.0, %v3456
        %3458 = vmatmul.bf16.gmra.mxu0 %v3342
        %v3459 = vpop.f32.mrf.mxu0
        %v3460 = vadd.f32 0.0, %v3459
        %v3461 = vpop.f32.mrf.mxu0
        %v3462 = vadd.f32 0.0, %v3461
        %3463 = vmatmul.bf16.gmra.mxu0 %v3343
        %v3464 = vpop.f32.mrf.mxu0
        %v3465 = vadd.f32 0.0, %v3464
        %v3466 = vpop.f32.mrf.mxu0
        %v3467 = vadd.f32 0.0, %v3466
        %3468 = vmatmul.bf16.gmra.mxu0 %v3344
        %v3469 = vpop.f32.mrf.mxu0
        %v3470 = vadd.f32 0.0, %v3469
        %v3471 = vpop.f32.mrf.mxu0
        %v3472 = vadd.f32 0.0, %v3471
        %3473 = vmatmul.bf16.gmra.mxu0 %v3345
        %v3474 = vpop.f32.mrf.mxu0
        %v3475 = vadd.f32 0.0, %v3474
        %v3476 = vpop.f32.mrf.mxu0
        %v3477 = vadd.f32 0.0, %v3476
        %3478 = vmatmul.bf16.gmra.mxu0 %v3346
        %v3479 = vpop.f32.mrf.mxu0
        %v3480 = vadd.f32 0.0, %v3479
        %v3481 = vpop.f32.mrf.mxu0
        %v3482 = vadd.f32 0.0, %v3481
        %3483 = vmatmul.bf16.gmra.mxu0 %v3347
        %v3484 = vpop.f32.mrf.mxu0
        %v3485 = vadd.f32 0.0, %v3484
        %v3486 = vpop.f32.mrf.mxu0
        %v3487 = vadd.f32 0.0, %v3486
        %3488 = vmatmul.bf16.gmra.mxu0 %v3348
        %v3489 = vpop.f32.mrf.mxu0
        %v3490 = vadd.f32 0.0, %v3489
        %v3491 = vpop.f32.mrf.mxu0
        %v3492 = vadd.f32 0.0, %v3491
        %3493 = vmatmul.bf16.gmra.mxu0 %v3349
        %v3494 = vpop.f32.mrf.mxu0
        %v3495 = vadd.f32 0.0, %v3494
        %v3496 = vpop.f32.mrf.mxu0
        %v3497 = vadd.f32 0.0, %v3496
        %3498 = vmatmul.bf16.gmra.mxu0 %v3350
        %v3499 = vpop.f32.mrf.mxu0
        %v3500 = vadd.f32 0.0, %v3499
        %v3501 = vpop.f32.mrf.mxu0
        %v3502 = vadd.f32 0.0, %v3501
        %3503 = vdwg.mxu0
        %v3504 = vadd.f32 %v3189, %v3425
        %v3505 = vadd.f32 %v3190, %v3427
        %v3506 = vadd.f32 %v3191, %v3430
        %v3507 = vadd.f32 %v3192, %v3432
        %v3508 = vadd.f32 %v3193, %v3435
        %v3509 = vadd.f32 %v3194, %v3437
        %v3510 = vadd.f32 %v3195, %v3440
        %v3511 = vadd.f32 %v3196, %v3442
        %v3512 = vadd.f32 %v3197, %v3445
        %v3513 = vadd.f32 %v3198, %v3447
        %v3514 = vadd.f32 %v3199, %v3450
        %v3515 = vadd.f32 %v3200, %v3452
        %v3516 = vadd.f32 %v3201, %v3455
        %v3517 = vadd.f32 %v3202, %v3457
        %v3518 = vadd.f32 %v3203, %v3460
        %v3519 = vadd.f32 %v3204, %v3462
        %v3520 = vadd.f32 %v3205, %v3465
        %v3521 = vadd.f32 %v3206, %v3467
        %v3522 = vadd.f32 %v3207, %v3470
        %v3523 = vadd.f32 %v3208, %v3472
        %v3524 = vadd.f32 %v3209, %v3475
        %v3525 = vadd.f32 %v3210, %v3477
        %v3526 = vadd.f32 %v3211, %v3480
        %v3527 = vadd.f32 %v3212, %v3482
        %v3528 = vadd.f32 %v3213, %v3485
        %v3529 = vadd.f32 %v3214, %v3487
        %v3530 = vadd.f32 %v3215, %v3490
        %v3531 = vadd.f32 %v3216, %v3492
        %v3532 = vadd.f32 %v3217, %v3495
        %v3533 = vadd.f32 %v3218, %v3497
        %v3534 = vadd.f32 %v3219, %v3500
        %v3535 = vadd.f32 %v3220, %v3502
        %v3536 = vld [vmem:[%s3221] sm:$0xf]
        %v3537 = vld [vmem:[%s3221 + $0x4] sm:$0xf]
        %v3538 = vld [vmem:[%s3221 + $0x8] sm:$0x1]
        %v3539 = vld [vmem:[%s3221 + $0xc] sm:$0xf]
        %v3540 = vld [vmem:[%s3221 + $0x10] sm:$0xf]
        %v3541 = vld [vmem:[%s3221 + $0x14] sm:$0x1]
        %v3542 = vld [vmem:[%s3221 + $0x18] sm:$0xf]
        %v3543 = vld [vmem:[%s3221 + $0x1c] sm:$0xf]
        %v3544 = vld [vmem:[%s3221 + $0x20] sm:$0x1]
        %v3545 = vld [vmem:[%s3221 + $0x24] sm:$0xf]
        %v3546 = vld [vmem:[%s3221 + $0x28] sm:$0xf]
        %v3547 = vld [vmem:[%s3221 + $0x2c] sm:$0x1]
        %v3548 = vld [vmem:[%s3221 + $0x30] sm:$0xf]
        %v3549 = vld [vmem:[%s3221 + $0x34] sm:$0xf]
        %v3550 = vld [vmem:[%s3221 + $0x38] sm:$0x1]
        %v3551 = vld [vmem:[%s3221 + $0x3c] sm:$0xf]
        %v3552 = vld [vmem:[%s3221 + $0x40] sm:$0xf]
        %v3553 = vld [vmem:[%s3221 + $0x44] sm:$0x1]
        %v3554 = vld [vmem:[%s3221 + $0x48] sm:$0xf]
        %v3555 = vld [vmem:[%s3221 + $0x4c] sm:$0xf]
        %v3556 = vld [vmem:[%s3221 + $0x50] sm:$0x1]
        %v3557 = vld [vmem:[%s3221 + $0x54] sm:$0xf]
        %v3558 = vld [vmem:[%s3221 + $0x58] sm:$0xf]
        %v3559 = vld [vmem:[%s3221 + $0x5c] sm:$0x1]
        %v3560 = vld [vmem:[%s3221 + $0x60] sm:$0xf]
        %v3561 = vld [vmem:[%s3221 + $0x64] sm:$0xf]
        %v3562 = vld [vmem:[%s3221 + $0x68] sm:$0x1]
        %v3563 = vld [vmem:[%s3221 + $0x6c] sm:$0xf]
        %v3564 = vld [vmem:[%s3221 + $0x70] sm:$0xf]
        %v3565 = vld [vmem:[%s3221 + $0x74] sm:$0x1]
        %v3566 = vld [vmem:[%s3221 + $0x78] sm:$0xf]
        %v3567 = vld [vmem:[%s3221 + $0x7c] sm:$0xf]
        %v3568 = vld [vmem:[%s3221 + $0x80] sm:$0x1]
        %v3569 = vld [vmem:[%s3221 + $0x84] sm:$0xf]
        %v3570 = vld [vmem:[%s3221 + $0x88] sm:$0xf]
        %v3571 = vld [vmem:[%s3221 + $0x8c] sm:$0x1]
        %v3572 = vld [vmem:[%s3221 + $0x90] sm:$0xf]
        %v3573 = vld [vmem:[%s3221 + $0x94] sm:$0xf]
        %v3574 = vld [vmem:[%s3221 + $0x98] sm:$0x1]
        %v3575 = vld [vmem:[%s3221 + $0x9c] sm:$0xf]
        %v3576 = vld [vmem:[%s3221 + $0xa0] sm:$0xf]
        %v3577 = vld [vmem:[%s3221 + $0xa4] sm:$0x1]
        %v3578 = vld [vmem:[%s3221 + $0xa8] sm:$0xf]
        %v3579 = vld [vmem:[%s3221 + $0xac] sm:$0xf]
        %v3580 = vld [vmem:[%s3221 + $0xb0] sm:$0x1]
        %v3581 = vld [vmem:[%s3221 + $0xb4] sm:$0xf]
        %v3582 = vld [vmem:[%s3221 + $0xb8] sm:$0xf]
        %v3583 = vld [vmem:[%s3221 + $0xbc] sm:$0x1]
        %s3584 = scalar_lea.vmem %s1, 448
        %v3585 = vld [vmem:[%s3584] sm:$0xf]
        %v3586 = vld [vmem:[%s3584 + $0x4] sm:$0xf]
        %v3587 = vld [vmem:[%s3584 + $0x8] sm:$0xf]
        %v3588 = vld [vmem:[%s3584 + $0xc] sm:$0xf]
        %v3589 = vld [vmem:[%s3584 + $0x10] sm:$0xf]
        %v3590 = vld [vmem:[%s3584 + $0x14] sm:$0xf]
        %v3591 = vld [vmem:[%s3584 + $0x18] sm:$0xf]
        %v3592 = vld [vmem:[%s3584 + $0x1c] sm:$0xf]
        %v3593 = vld [vmem:[%s3584 + $0x20] sm:$0xf]
        %v3594 = vld [vmem:[%s3584 + $0x24] sm:$0xf]
        %v3595 = vld [vmem:[%s3584 + $0x28] sm:$0xf]
        %v3596 = vld [vmem:[%s3584 + $0x2c] sm:$0xf]
        %v3597 = vld [vmem:[%s3584 + $0x30] sm:$0xf]
        %v3598 = vld [vmem:[%s3584 + $0x34] sm:$0xf]
        %v3599 = vld [vmem:[%s3584 + $0x38] sm:$0xf]
        %v3600 = vld [vmem:[%s3584 + $0x3c] sm:$0xf]
        %v3602 = vshrl.u32 %v3536, 16
        %v3604 = vrot.slane %v3602, 4
        %v3605 = vshll.u32 %v3536, 16
        %v3607 = vrot.slane %v3605, 5
        %v3608 = vor.u32 %v3604, %v3607
        %v3609 = vrot.slane %v3608, 4
        %v3611 = vshll.u32 %v3537, 16
        %v3613 = vrot.slane %v3611, 5
        %v3614 = vsel %vm486, %v3609, %v3613
        %v3615 = vshrl.u32 %v3537, 16
        %v3617 = vrot.slane %v3615, 4
        %v3618 = vor.u32 %v3617, %v3613
        %v3619 = vrot.slane %v3618, 4
        %v3621 = vshll.u32 %v3538, 16
        %v3623 = vrot.slane %v3621, 5
        %v3624 = vsel %vm486, %v3619, %v3623
        %v3626 = vshrl.u32 %v3539, 16
        %v3628 = vrot.slane %v3626, 4
        %v3629 = vshll.u32 %v3539, 16
        %v3631 = vrot.slane %v3629, 5
        %v3632 = vor.u32 %v3628, %v3631
        %v3633 = vrot.slane %v3632, 4
        %v3635 = vshll.u32 %v3540, 16
        %v3637 = vrot.slane %v3635, 5
        %v3638 = vsel %vm486, %v3633, %v3637
        %v3639 = vshrl.u32 %v3540, 16
        %v3641 = vrot.slane %v3639, 4
        %v3642 = vor.u32 %v3641, %v3637
        %v3643 = vrot.slane %v3642, 4
        %v3645 = vshll.u32 %v3541, 16
        %v3647 = vrot.slane %v3645, 5
        %v3648 = vsel %vm486, %v3643, %v3647
        %v3650 = vshrl.u32 %v3542, 16
        %v3652 = vrot.slane %v3650, 4
        %v3653 = vshll.u32 %v3542, 16
        %v3655 = vrot.slane %v3653, 5
        %v3656 = vor.u32 %v3652, %v3655
        %v3657 = vrot.slane %v3656, 4
        %v3659 = vshll.u32 %v3543, 16
        %v3661 = vrot.slane %v3659, 5
        %v3662 = vsel %vm486, %v3657, %v3661
        %v3663 = vshrl.u32 %v3543, 16
        %v3665 = vrot.slane %v3663, 4
        %v3666 = vor.u32 %v3665, %v3661
        %v3667 = vrot.slane %v3666, 4
        %v3669 = vshll.u32 %v3544, 16
        %v3671 = vrot.slane %v3669, 5
        %v3672 = vsel %vm486, %v3667, %v3671
        %v3674 = vshrl.u32 %v3545, 16
        %v3676 = vrot.slane %v3674, 4
        %v3677 = vshll.u32 %v3545, 16
        %v3679 = vrot.slane %v3677, 5
        %v3680 = vor.u32 %v3676, %v3679
        %v3681 = vrot.slane %v3680, 4
        %v3683 = vshll.u32 %v3546, 16
        %v3685 = vrot.slane %v3683, 5
        %v3686 = vsel %vm486, %v3681, %v3685
        %v3687 = vshrl.u32 %v3546, 16
        %v3689 = vrot.slane %v3687, 4
        %v3690 = vor.u32 %v3689, %v3685
        %v3691 = vrot.slane %v3690, 4
        %v3693 = vshll.u32 %v3547, 16
        %v3695 = vrot.slane %v3693, 5
        %v3696 = vsel %vm486, %v3691, %v3695
        %v3698 = vshrl.u32 %v3548, 16
        %v3700 = vrot.slane %v3698, 4
        %v3701 = vshll.u32 %v3548, 16
        %v3703 = vrot.slane %v3701, 5
        %v3704 = vor.u32 %v3700, %v3703
        %v3705 = vrot.slane %v3704, 4
        %v3707 = vshll.u32 %v3549, 16
        %v3709 = vrot.slane %v3707, 5
        %v3710 = vsel %vm486, %v3705, %v3709
        %v3711 = vshrl.u32 %v3549, 16
        %v3713 = vrot.slane %v3711, 4
        %v3714 = vor.u32 %v3713, %v3709
        %v3715 = vrot.slane %v3714, 4
        %v3717 = vshll.u32 %v3550, 16
        %v3719 = vrot.slane %v3717, 5
        %v3720 = vsel %vm486, %v3715, %v3719
        %v3722 = vshrl.u32 %v3551, 16
        %v3724 = vrot.slane %v3722, 4
        %v3725 = vshll.u32 %v3551, 16
        %v3727 = vrot.slane %v3725, 5
        %v3728 = vor.u32 %v3724, %v3727
        %v3729 = vrot.slane %v3728, 4
        %v3731 = vshll.u32 %v3552, 16
        %v3733 = vrot.slane %v3731, 5
        %v3734 = vsel %vm486, %v3729, %v3733
        %v3735 = vshrl.u32 %v3552, 16
        %v3737 = vrot.slane %v3735, 4
        %v3738 = vor.u32 %v3737, %v3733
        %v3739 = vrot.slane %v3738, 4
        %v3741 = vshll.u32 %v3553, 16
        %v3743 = vrot.slane %v3741, 5
        %v3744 = vsel %vm486, %v3739, %v3743
        %v3746 = vshrl.u32 %v3554, 16
        %v3748 = vrot.slane %v3746, 4
        %v3749 = vshll.u32 %v3554, 16
        %v3751 = vrot.slane %v3749, 5
        %v3752 = vor.u32 %v3748, %v3751
        %v3753 = vrot.slane %v3752, 4
        %v3755 = vshll.u32 %v3555, 16
        %v3757 = vrot.slane %v3755, 5
        %v3758 = vsel %vm486, %v3753, %v3757
        %v3759 = vshrl.u32 %v3555, 16
        %v3761 = vrot.slane %v3759, 4
        %v3762 = vor.u32 %v3761, %v3757
        %v3763 = vrot.slane %v3762, 4
        %v3765 = vshll.u32 %v3556, 16
        %v3767 = vrot.slane %v3765, 5
        %v3768 = vsel %vm486, %v3763, %v3767
        %v3770 = vshrl.u32 %v3557, 16
        %v3772 = vrot.slane %v3770, 4
        %v3773 = vshll.u32 %v3557, 16
        %v3775 = vrot.slane %v3773, 5
        %v3776 = vor.u32 %v3772, %v3775
        %v3777 = vrot.slane %v3776, 4
        %v3779 = vshll.u32 %v3558, 16
        %v3781 = vrot.slane %v3779, 5
        %v3782 = vsel %vm486, %v3777, %v3781
        %v3783 = vshrl.u32 %v3558, 16
        %v3785 = vrot.slane %v3783, 4
        %v3786 = vor.u32 %v3785, %v3781
        %v3787 = vrot.slane %v3786, 4
        %v3789 = vshll.u32 %v3559, 16
        %v3791 = vrot.slane %v3789, 5
        %v3792 = vsel %vm486, %v3787, %v3791
        %v3794 = vshrl.u32 %v3560, 16
        %v3796 = vrot.slane %v3794, 4
        %v3797 = vshll.u32 %v3560, 16
        %v3799 = vrot.slane %v3797, 5
        %v3800 = vor.u32 %v3796, %v3799
        %v3801 = vrot.slane %v3800, 4
        %v3803 = vshll.u32 %v3561, 16
        %v3805 = vrot.slane %v3803, 5
        %v3806 = vsel %vm486, %v3801, %v3805
        %v3807 = vshrl.u32 %v3561, 16
        %v3809 = vrot.slane %v3807, 4
        %v3810 = vor.u32 %v3809, %v3805
        %v3811 = vrot.slane %v3810, 4
        %v3813 = vshll.u32 %v3562, 16
        %v3815 = vrot.slane %v3813, 5
        %v3816 = vsel %vm486, %v3811, %v3815
        %v3818 = vshrl.u32 %v3563, 16
        %v3820 = vrot.slane %v3818, 4
        %v3821 = vshll.u32 %v3563, 16
        %v3823 = vrot.slane %v3821, 5
        %v3824 = vor.u32 %v3820, %v3823
        %v3825 = vrot.slane %v3824, 4
        %v3827 = vshll.u32 %v3564, 16
        %v3829 = vrot.slane %v3827, 5
        %v3830 = vsel %vm486, %v3825, %v3829
        %v3831 = vshrl.u32 %v3564, 16
        %v3833 = vrot.slane %v3831, 4
        %v3834 = vor.u32 %v3833, %v3829
        %v3835 = vrot.slane %v3834, 4
        %v3837 = vshll.u32 %v3565, 16
        %v3839 = vrot.slane %v3837, 5
        %v3840 = vsel %vm486, %v3835, %v3839
        %v3842 = vshrl.u32 %v3566, 16
        %v3844 = vrot.slane %v3842, 4
        %v3845 = vshll.u32 %v3566, 16
        %v3847 = vrot.slane %v3845, 5
        %v3848 = vor.u32 %v3844, %v3847
        %v3849 = vrot.slane %v3848, 4
        %v3851 = vshll.u32 %v3567, 16
        %v3853 = vrot.slane %v3851, 5
        %v3854 = vsel %vm486, %v3849, %v3853
        %v3855 = vshrl.u32 %v3567, 16
        %v3857 = vrot.slane %v3855, 4
        %v3858 = vor.u32 %v3857, %v3853
        %v3859 = vrot.slane %v3858, 4
        %v3861 = vshll.u32 %v3568, 16
        %v3863 = vrot.slane %v3861, 5
        %v3864 = vsel %vm486, %v3859, %v3863
        %v3866 = vshrl.u32 %v3569, 16
        %v3868 = vrot.slane %v3866, 4
        %v3869 = vshll.u32 %v3569, 16
        %v3871 = vrot.slane %v3869, 5
        %v3872 = vor.u32 %v3868, %v3871
        %v3873 = vrot.slane %v3872, 4
        %v3875 = vshll.u32 %v3570, 16
        %v3877 = vrot.slane %v3875, 5
        %v3878 = vsel %vm486, %v3873, %v3877
        %v3879 = vshrl.u32 %v3570, 16
        %v3881 = vrot.slane %v3879, 4
        %v3882 = vor.u32 %v3881, %v3877
        %v3883 = vrot.slane %v3882, 4
        %v3885 = vshll.u32 %v3571, 16
        %v3887 = vrot.slane %v3885, 5
        %v3888 = vsel %vm486, %v3883, %v3887
        %v3890 = vshrl.u32 %v3572, 16
        %v3892 = vrot.slane %v3890, 4
        %v3893 = vshll.u32 %v3572, 16
        %v3895 = vrot.slane %v3893, 5
        %v3896 = vor.u32 %v3892, %v3895
        %v3897 = vrot.slane %v3896, 4
        %v3899 = vshll.u32 %v3573, 16
        %v3901 = vrot.slane %v3899, 5
        %v3902 = vsel %vm486, %v3897, %v3901
        %v3903 = vshrl.u32 %v3573, 16
        %v3905 = vrot.slane %v3903, 4
        %v3906 = vor.u32 %v3905, %v3901
        %v3907 = vrot.slane %v3906, 4
        %v3909 = vshll.u32 %v3574, 16
        %v3911 = vrot.slane %v3909, 5
        %v3912 = vsel %vm486, %v3907, %v3911
        %v3914 = vshrl.u32 %v3575, 16
        %v3916 = vrot.slane %v3914, 4
        %v3917 = vshll.u32 %v3575, 16
        %v3919 = vrot.slane %v3917, 5
        %v3920 = vor.u32 %v3916, %v3919
        %v3921 = vrot.slane %v3920, 4
        %v3923 = vshll.u32 %v3576, 16
        %v3925 = vrot.slane %v3923, 5
        %v3926 = vsel %vm486, %v3921, %v3925
        %v3927 = vshrl.u32 %v3576, 16
        %v3929 = vrot.slane %v3927, 4
        %v3930 = vor.u32 %v3929, %v3925
        %v3931 = vrot.slane %v3930, 4
        %v3933 = vshll.u32 %v3577, 16
        %v3935 = vrot.slane %v3933, 5
        %v3936 = vsel %vm486, %v3931, %v3935
        %v3938 = vshrl.u32 %v3578, 16
        %v3940 = vrot.slane %v3938, 4
        %v3941 = vshll.u32 %v3578, 16
        %v3943 = vrot.slane %v3941, 5
        %v3944 = vor.u32 %v3940, %v3943
        %v3945 = vrot.slane %v3944, 4
        %v3947 = vshll.u32 %v3579, 16
        %v3949 = vrot.slane %v3947, 5
        %v3950 = vsel %vm486, %v3945, %v3949
        %v3951 = vshrl.u32 %v3579, 16
        %v3953 = vrot.slane %v3951, 4
        %v3954 = vor.u32 %v3953, %v3949
        %v3955 = vrot.slane %v3954, 4
        %v3957 = vshll.u32 %v3580, 16
        %v3959 = vrot.slane %v3957, 5
        %v3960 = vsel %vm486, %v3955, %v3959
        %v3962 = vshrl.u32 %v3581, 16
        %v3964 = vrot.slane %v3962, 4
        %v3965 = vshll.u32 %v3581, 16
        %v3967 = vrot.slane %v3965, 5
        %v3968 = vor.u32 %v3964, %v3967
        %v3969 = vrot.slane %v3968, 4
        %v3971 = vshll.u32 %v3582, 16
        %v3973 = vrot.slane %v3971, 5
        %v3974 = vsel %vm486, %v3969, %v3973
        %v3975 = vshrl.u32 %v3582, 16
        %v3977 = vrot.slane %v3975, 4
        %v3978 = vor.u32 %v3977, %v3973
        %v3979 = vrot.slane %v3978, 4
        %v3981 = vshll.u32 %v3583, 16
        %v3983 = vrot.slane %v3981, 5
        %v3984 = vsel %vm486, %v3979, %v3983
        %v3985 = vunpack.c.l.b16 %v3614
        %v3986 = vunpack.c.l.b16 %v3624
        %v3987 = vunpack.c.l.b16 %v3638
        %v3988 = vunpack.c.l.b16 %v3648
        %v3989 = vunpack.c.l.b16 %v3662
        %v3990 = vunpack.c.l.b16 %v3672
        %v3991 = vunpack.c.l.b16 %v3686
        %v3992 = vunpack.c.l.b16 %v3696
        %v3993 = vunpack.c.l.b16 %v3710
        %v3994 = vunpack.c.l.b16 %v3720
        %v3995 = vunpack.c.l.b16 %v3734
        %v3996 = vunpack.c.l.b16 %v3744
        %v3997 = vunpack.c.l.b16 %v3758
        %v3998 = vunpack.c.l.b16 %v3768
        %v3999 = vunpack.c.l.b16 %v3782
        %v4000 = vunpack.c.l.b16 %v3792
        %v4001 = vunpack.c.l.b16 %v3806
        %v4002 = vunpack.c.l.b16 %v3816
        %v4003 = vunpack.c.l.b16 %v3830
        %v4004 = vunpack.c.l.b16 %v3840
        %v4005 = vunpack.c.l.b16 %v3854
        %v4006 = vunpack.c.l.b16 %v3864
        %v4007 = vunpack.c.l.b16 %v3878
        %v4008 = vunpack.c.l.b16 %v3888
        %v4009 = vunpack.c.l.b16 %v3902
        %v4010 = vunpack.c.l.b16 %v3912
        %v4011 = vunpack.c.l.b16 %v3926
        %v4012 = vunpack.c.l.b16 %v3936
        %v4013 = vunpack.c.l.b16 %v3950
        %v4014 = vunpack.c.l.b16 %v3960
        %v4015 = vunpack.c.l.b16 %v3974
        %v4016 = vunpack.c.l.b16 %v3984
        %v4017 = vpack.c.b16 %v3986, %v3985
        %v4018 = vpack.c.b16 %v3988, %v3987
        %v4019 = vpack.c.b16 %v3990, %v3989
        %v4020 = vpack.c.b16 %v3992, %v3991
        %v4021 = vpack.c.b16 %v3994, %v3993
        %v4022 = vpack.c.b16 %v3996, %v3995
        %v4023 = vpack.c.b16 %v3998, %v3997
        %v4024 = vpack.c.b16 %v4000, %v3999
        %v4025 = vpack.c.b16 %v4002, %v4001
        %v4026 = vpack.c.b16 %v4004, %v4003
        %v4027 = vpack.c.b16 %v4006, %v4005
        %v4028 = vpack.c.b16 %v4008, %v4007
        %v4029 = vpack.c.b16 %v4010, %v4009
        %v4030 = vpack.c.b16 %v4012, %v4011
        %v4031 = vpack.c.b16 %v4014, %v4013
        %v4032 = vpack.c.b16 %v4016, %v4015
        %v4065 = vunpack.c.l.b16 %v3585
        %v4066 = vunpack.c.l.b16 %v3586
        %v4067 = vunpack.c.l.b16 %v3587
        %v4068 = vunpack.c.l.b16 %v3588
        %v4069 = vunpack.c.l.b16 %v3589
        %v4070 = vunpack.c.l.b16 %v3590
        %v4071 = vunpack.c.l.b16 %v3591
        %v4072 = vunpack.c.l.b16 %v3592
        %v4073 = vunpack.c.l.b16 %v3593
        %v4074 = vunpack.c.l.b16 %v3594
        %v4075 = vunpack.c.l.b16 %v3595
        %v4076 = vunpack.c.l.b16 %v3596
        %v4077 = vunpack.c.l.b16 %v3597
        %v4078 = vunpack.c.l.b16 %v3598
        %v4079 = vunpack.c.l.b16 %v3599
        %v4080 = vunpack.c.l.b16 %v3600
        %v4081 = vpack.c.b16 %v4066, %v4065
        %v4082 = vpack.c.b16 %v4068, %v4067
        %v4083 = vpack.c.b16 %v4070, %v4069
        %v4084 = vpack.c.b16 %v4072, %v4071
        %v4085 = vpack.c.b16 %v4074, %v4073
        %v4086 = vpack.c.b16 %v4076, %v4075
        %v4087 = vpack.c.b16 %v4078, %v4077
        %v4088 = vpack.c.b16 %v4080, %v4079
        %4097 = vmatpush.bf16.msra.mxu0 %v4088
        %4098 = vmatpush.bf16.msra.mxu0 %v4087
        %4099 = vmatpush.bf16.msra.mxu0 %v4086
        %4100 = vmatpush.bf16.msra.mxu0 %v4085
        %4101 = vmatpush.bf16.msra.mxu0 %v4084
        %4102 = vmatpush.bf16.msra.mxu0 %v4083
        %4103 = vmatpush.bf16.msra.mxu0 %v4082
        %4104 = vmatpush.bf16.msra.mxu0 %v4081
        %4105 = vmatmul.bf16.gmra.mxu0 %v4017
        %v4106 = vpop.f32.mrf.mxu0
        %v4107 = vadd.f32 0.0, %v4106
        %v4108 = vpop.f32.mrf.mxu0
        %v4109 = vadd.f32 0.0, %v4108
        %4110 = vmatmul.bf16.gmra.mxu0 %v4018
        %v4111 = vpop.f32.mrf.mxu0
        %v4112 = vadd.f32 0.0, %v4111
        %v4113 = vpop.f32.mrf.mxu0
        %v4114 = vadd.f32 0.0, %v4113
        %4115 = vmatmul.bf16.gmra.mxu0 %v4019
        %v4116 = vpop.f32.mrf.mxu0
        %v4117 = vadd.f32 0.0, %v4116
        %v4118 = vpop.f32.mrf.mxu0
        %v4119 = vadd.f32 0.0, %v4118
        %4120 = vmatmul.bf16.gmra.mxu0 %v4020
        %v4121 = vpop.f32.mrf.mxu0
        %v4122 = vadd.f32 0.0, %v4121
        %v4123 = vpop.f32.mrf.mxu0
        %v4124 = vadd.f32 0.0, %v4123
        %4125 = vmatmul.bf16.gmra.mxu0 %v4021
        %v4126 = vpop.f32.mrf.mxu0
        %v4127 = vadd.f32 0.0, %v4126
        %v4128 = vpop.f32.mrf.mxu0
        %v4129 = vadd.f32 0.0, %v4128
        %4130 = vmatmul.bf16.gmra.mxu0 %v4022
        %v4131 = vpop.f32.mrf.mxu0
        %v4132 = vadd.f32 0.0, %v4131
        %v4133 = vpop.f32.mrf.mxu0
        %v4134 = vadd.f32 0.0, %v4133
        %4135 = vmatmul.bf16.gmra.mxu0 %v4023
        %v4136 = vpop.f32.mrf.mxu0
        %v4137 = vadd.f32 0.0, %v4136
        %v4138 = vpop.f32.mrf.mxu0
        %v4139 = vadd.f32 0.0, %v4138
        %4140 = vmatmul.bf16.gmra.mxu0 %v4024
        %v4141 = vpop.f32.mrf.mxu0
        %v4142 = vadd.f32 0.0, %v4141
        %v4143 = vpop.f32.mrf.mxu0
        %v4144 = vadd.f32 0.0, %v4143
        %4145 = vmatmul.bf16.gmra.mxu0 %v4025
        %v4146 = vpop.f32.mrf.mxu0
        %v4147 = vadd.f32 0.0, %v4146
        %v4148 = vpop.f32.mrf.mxu0
        %v4149 = vadd.f32 0.0, %v4148
        %4150 = vmatmul.bf16.gmra.mxu0 %v4026
        %v4151 = vpop.f32.mrf.mxu0
        %v4152 = vadd.f32 0.0, %v4151
        %v4153 = vpop.f32.mrf.mxu0
        %v4154 = vadd.f32 0.0, %v4153
        %4155 = vmatmul.bf16.gmra.mxu0 %v4027
        %v4156 = vpop.f32.mrf.mxu0
        %v4157 = vadd.f32 0.0, %v4156
        %v4158 = vpop.f32.mrf.mxu0
        %v4159 = vadd.f32 0.0, %v4158
        %4160 = vmatmul.bf16.gmra.mxu0 %v4028
        %v4161 = vpop.f32.mrf.mxu0
        %v4162 = vadd.f32 0.0, %v4161
        %v4163 = vpop.f32.mrf.mxu0
        %v4164 = vadd.f32 0.0, %v4163
        %4165 = vmatmul.bf16.gmra.mxu0 %v4029
        %v4166 = vpop.f32.mrf.mxu0
        %v4167 = vadd.f32 0.0, %v4166
        %v4168 = vpop.f32.mrf.mxu0
        %v4169 = vadd.f32 0.0, %v4168
        %4170 = vmatmul.bf16.gmra.mxu0 %v4030
        %v4171 = vpop.f32.mrf.mxu0
        %v4172 = vadd.f32 0.0, %v4171
        %v4173 = vpop.f32.mrf.mxu0
        %v4174 = vadd.f32 0.0, %v4173
        %4175 = vmatmul.bf16.gmra.mxu0 %v4031
        %v4176 = vpop.f32.mrf.mxu0
        %v4177 = vadd.f32 0.0, %v4176
        %v4178 = vpop.f32.mrf.mxu0
        %v4179 = vadd.f32 0.0, %v4178
        %4180 = vmatmul.bf16.gmra.mxu0 %v4032
        %v4181 = vpop.f32.mrf.mxu0
        %v4182 = vadd.f32 0.0, %v4181
        %v4183 = vpop.f32.mrf.mxu0
        %v4184 = vadd.f32 0.0, %v4183
        %4185 = vdwg.mxu0
        %v4186 = vadd.f32 %v3504, %v4107
        %v4187 = vadd.f32 %v3505, %v4109
        %v4188 = vadd.f32 %v3506, %v4112
        %v4189 = vadd.f32 %v3507, %v4114
        %v4190 = vadd.f32 %v3508, %v4117
        %v4191 = vadd.f32 %v3509, %v4119
        %v4192 = vadd.f32 %v3510, %v4122
        %v4193 = vadd.f32 %v3511, %v4124
        %v4194 = vadd.f32 %v3512, %v4127
        %v4195 = vadd.f32 %v3513, %v4129
        %v4196 = vadd.f32 %v3514, %v4132
        %v4197 = vadd.f32 %v3515, %v4134
        %v4198 = vadd.f32 %v3516, %v4137
        %v4199 = vadd.f32 %v3517, %v4139
        %v4200 = vadd.f32 %v3518, %v4142
        %v4201 = vadd.f32 %v3519, %v4144
        %v4202 = vadd.f32 %v3520, %v4147
        %v4203 = vadd.f32 %v3521, %v4149
        %v4204 = vadd.f32 %v3522, %v4152
        %v4205 = vadd.f32 %v3523, %v4154
        %v4206 = vadd.f32 %v3524, %v4157
        %v4207 = vadd.f32 %v3525, %v4159
        %v4208 = vadd.f32 %v3526, %v4162
        %v4209 = vadd.f32 %v3527, %v4164
        %v4210 = vadd.f32 %v3528, %v4167
        %v4211 = vadd.f32 %v3529, %v4169
        %v4212 = vadd.f32 %v3530, %v4172
        %v4213 = vadd.f32 %v3531, %v4174
        %v4214 = vadd.f32 %v3532, %v4177
        %v4215 = vadd.f32 %v3533, %v4179
        %v4216 = vadd.f32 %v3534, %v4182
        %v4217 = vadd.f32 %v3535, %v4184
        %v4218 = vld [vmem:[%s3221] sm:$0xe]
        %v4219 = vld [vmem:[%s3221 + $0x4] sm:$0xf]
        %v4220 = vld [vmem:[%s3221 + $0x8] sm:$0x1]
        %v4221 = vld [vmem:[%s3221 + $0xc] sm:$0xe]
        %v4222 = vld [vmem:[%s3221 + $0x10] sm:$0xf]
        %v4223 = vld [vmem:[%s3221 + $0x14] sm:$0x1]
        %v4224 = vld [vmem:[%s3221 + $0x18] sm:$0xe]
        %v4225 = vld [vmem:[%s3221 + $0x1c] sm:$0xf]
        %v4226 = vld [vmem:[%s3221 + $0x20] sm:$0x1]
        %v4227 = vld [vmem:[%s3221 + $0x24] sm:$0xe]
        %v4228 = vld [vmem:[%s3221 + $0x28] sm:$0xf]
        %v4229 = vld [vmem:[%s3221 + $0x2c] sm:$0x1]
        %v4230 = vld [vmem:[%s3221 + $0x30] sm:$0xe]
        %v4231 = vld [vmem:[%s3221 + $0x34] sm:$0xf]
        %v4232 = vld [vmem:[%s3221 + $0x38] sm:$0x1]
        %v4233 = vld [vmem:[%s3221 + $0x3c] sm:$0xe]
        %v4234 = vld [vmem:[%s3221 + $0x40] sm:$0xf]
        %v4235 = vld [vmem:[%s3221 + $0x44] sm:$0x1]
        %v4236 = vld [vmem:[%s3221 + $0x48] sm:$0xe]
        %v4237 = vld [vmem:[%s3221 + $0x4c] sm:$0xf]
        %v4238 = vld [vmem:[%s3221 + $0x50] sm:$0x1]
        %v4239 = vld [vmem:[%s3221 + $0x54] sm:$0xe]
        %v4240 = vld [vmem:[%s3221 + $0x58] sm:$0xf]
        %v4241 = vld [vmem:[%s3221 + $0x5c] sm:$0x1]
        %v4242 = vld [vmem:[%s3221 + $0x60] sm:$0xe]
        %v4243 = vld [vmem:[%s3221 + $0x64] sm:$0xf]
        %v4244 = vld [vmem:[%s3221 + $0x68] sm:$0x1]
        %v4245 = vld [vmem:[%s3221 + $0x6c] sm:$0xe]
        %v4246 = vld [vmem:[%s3221 + $0x70] sm:$0xf]
        %v4247 = vld [vmem:[%s3221 + $0x74] sm:$0x1]
        %v4248 = vld [vmem:[%s3221 + $0x78] sm:$0xe]
        %v4249 = vld [vmem:[%s3221 + $0x7c] sm:$0xf]
        %v4250 = vld [vmem:[%s3221 + $0x80] sm:$0x1]
        %v4251 = vld [vmem:[%s3221 + $0x84] sm:$0xe]
        %v4252 = vld [vmem:[%s3221 + $0x88] sm:$0xf]
        %v4253 = vld [vmem:[%s3221 + $0x8c] sm:$0x1]
        %v4254 = vld [vmem:[%s3221 + $0x90] sm:$0xe]
        %v4255 = vld [vmem:[%s3221 + $0x94] sm:$0xf]
        %v4256 = vld [vmem:[%s3221 + $0x98] sm:$0x1]
        %v4257 = vld [vmem:[%s3221 + $0x9c] sm:$0xe]
        %v4258 = vld [vmem:[%s3221 + $0xa0] sm:$0xf]
        %v4259 = vld [vmem:[%s3221 + $0xa4] sm:$0x1]
        %v4260 = vld [vmem:[%s3221 + $0xa8] sm:$0xe]
        %v4261 = vld [vmem:[%s3221 + $0xac] sm:$0xf]
        %v4262 = vld [vmem:[%s3221 + $0xb0] sm:$0x1]
        %v4263 = vld [vmem:[%s3221 + $0xb4] sm:$0xe]
        %v4264 = vld [vmem:[%s3221 + $0xb8] sm:$0xf]
        %v4265 = vld [vmem:[%s3221 + $0xbc] sm:$0x1]
        %s4266 = scalar_lea.vmem %s1, 512
        %v4267 = vld [vmem:[%s4266] sm:$0xf]
        %v4268 = vld [vmem:[%s4266 + $0x4] sm:$0xf]
        %v4269 = vld [vmem:[%s4266 + $0x8] sm:$0xf]
        %v4270 = vld [vmem:[%s4266 + $0xc] sm:$0xf]
        %v4271 = vld [vmem:[%s4266 + $0x10] sm:$0xf]
        %v4272 = vld [vmem:[%s4266 + $0x14] sm:$0xf]
        %v4273 = vld [vmem:[%s4266 + $0x18] sm:$0xf]
        %v4274 = vld [vmem:[%s4266 + $0x1c] sm:$0xf]
        %v4275 = vld [vmem:[%s4266 + $0x20] sm:$0xf]
        %v4276 = vld [vmem:[%s4266 + $0x24] sm:$0xf]
        %v4277 = vld [vmem:[%s4266 + $0x28] sm:$0xf]
        %v4278 = vld [vmem:[%s4266 + $0x2c] sm:$0xf]
        %v4279 = vld [vmem:[%s4266 + $0x30] sm:$0xf]
        %v4280 = vld [vmem:[%s4266 + $0x34] sm:$0xf]
        %v4281 = vld [vmem:[%s4266 + $0x38] sm:$0xf]
        %v4282 = vld [vmem:[%s4266 + $0x3c] sm:$0xf]
        %v4331 = vrot.slane %v4218, 5
        %v4332 = vrot.slane %v4331, 4
        %v4333 = vrot.slane %v4219, 5
        %v4334 = vsel %vm1420, %v4332, %v4333
        %v4335 = vrot.slane %v4333, 4
        %v4336 = vrot.slane %v4220, 5
        %v4337 = vsel %vm1420, %v4335, %v4336
        %v4338 = vrot.slane %v4221, 5
        %v4339 = vrot.slane %v4338, 4
        %v4340 = vrot.slane %v4222, 5
        %v4341 = vsel %vm1420, %v4339, %v4340
        %v4342 = vrot.slane %v4340, 4
        %v4343 = vrot.slane %v4223, 5
        %v4344 = vsel %vm1420, %v4342, %v4343
        %v4345 = vrot.slane %v4224, 5
        %v4346 = vrot.slane %v4345, 4
        %v4347 = vrot.slane %v4225, 5
        %v4348 = vsel %vm1420, %v4346, %v4347
        %v4349 = vrot.slane %v4347, 4
        %v4350 = vrot.slane %v4226, 5
        %v4351 = vsel %vm1420, %v4349, %v4350
        %v4352 = vrot.slane %v4227, 5
        %v4353 = vrot.slane %v4352, 4
        %v4354 = vrot.slane %v4228, 5
        %v4355 = vsel %vm1420, %v4353, %v4354
        %v4356 = vrot.slane %v4354, 4
        %v4357 = vrot.slane %v4229, 5
        %v4358 = vsel %vm1420, %v4356, %v4357
        %v4359 = vrot.slane %v4230, 5
        %v4360 = vrot.slane %v4359, 4
        %v4361 = vrot.slane %v4231, 5
        %v4362 = vsel %vm1420, %v4360, %v4361
        %v4363 = vrot.slane %v4361, 4
        %v4364 = vrot.slane %v4232, 5
        %v4365 = vsel %vm1420, %v4363, %v4364
        %v4366 = vrot.slane %v4233, 5
        %v4367 = vrot.slane %v4366, 4
        %v4368 = vrot.slane %v4234, 5
        %v4369 = vsel %vm1420, %v4367, %v4368
        %v4370 = vrot.slane %v4368, 4
        %v4371 = vrot.slane %v4235, 5
        %v4372 = vsel %vm1420, %v4370, %v4371
        %v4373 = vrot.slane %v4236, 5
        %v4374 = vrot.slane %v4373, 4
        %v4375 = vrot.slane %v4237, 5
        %v4376 = vsel %vm1420, %v4374, %v4375
        %v4377 = vrot.slane %v4375, 4
        %v4378 = vrot.slane %v4238, 5
        %v4379 = vsel %vm1420, %v4377, %v4378
        %v4380 = vrot.slane %v4239, 5
        %v4381 = vrot.slane %v4380, 4
        %v4382 = vrot.slane %v4240, 5
        %v4383 = vsel %vm1420, %v4381, %v4382
        %v4384 = vrot.slane %v4382, 4
        %v4385 = vrot.slane %v4241, 5
        %v4386 = vsel %vm1420, %v4384, %v4385
        %v4387 = vrot.slane %v4242, 5
        %v4388 = vrot.slane %v4387, 4
        %v4389 = vrot.slane %v4243, 5
        %v4390 = vsel %vm1420, %v4388, %v4389
        %v4391 = vrot.slane %v4389, 4
        %v4392 = vrot.slane %v4244, 5
        %v4393 = vsel %vm1420, %v4391, %v4392
        %v4394 = vrot.slane %v4245, 5
        %v4395 = vrot.slane %v4394, 4
        %v4396 = vrot.slane %v4246, 5
        %v4397 = vsel %vm1420, %v4395, %v4396
        %v4398 = vrot.slane %v4396, 4
        %v4399 = vrot.slane %v4247, 5
        %v4400 = vsel %vm1420, %v4398, %v4399
        %v4401 = vrot.slane %v4248, 5
        %v4402 = vrot.slane %v4401, 4
        %v4403 = vrot.slane %v4249, 5
        %v4404 = vsel %vm1420, %v4402, %v4403
        %v4405 = vrot.slane %v4403, 4
        %v4406 = vrot.slane %v4250, 5
        %v4407 = vsel %vm1420, %v4405, %v4406
        %v4408 = vrot.slane %v4251, 5
        %v4409 = vrot.slane %v4408, 4
        %v4410 = vrot.slane %v4252, 5
        %v4411 = vsel %vm1420, %v4409, %v4410
        %v4412 = vrot.slane %v4410, 4
        %v4413 = vrot.slane %v4253, 5
        %v4414 = vsel %vm1420, %v4412, %v4413
        %v4415 = vrot.slane %v4254, 5
        %v4416 = vrot.slane %v4415, 4
        %v4417 = vrot.slane %v4255, 5
        %v4418 = vsel %vm1420, %v4416, %v4417
        %v4419 = vrot.slane %v4417, 4
        %v4420 = vrot.slane %v4256, 5
        %v4421 = vsel %vm1420, %v4419, %v4420
        %v4422 = vrot.slane %v4257, 5
        %v4423 = vrot.slane %v4422, 4
        %v4424 = vrot.slane %v4258, 5
        %v4425 = vsel %vm1420, %v4423, %v4424
        %v4426 = vrot.slane %v4424, 4
        %v4427 = vrot.slane %v4259, 5
        %v4428 = vsel %vm1420, %v4426, %v4427
        %v4429 = vrot.slane %v4260, 5
        %v4430 = vrot.slane %v4429, 4
        %v4431 = vrot.slane %v4261, 5
        %v4432 = vsel %vm1420, %v4430, %v4431
        %v4433 = vrot.slane %v4431, 4
        %v4434 = vrot.slane %v4262, 5
        %v4435 = vsel %vm1420, %v4433, %v4434
        %v4436 = vrot.slane %v4263, 5
        %v4437 = vrot.slane %v4436, 4
        %v4438 = vrot.slane %v4264, 5
        %v4439 = vsel %vm1420, %v4437, %v4438
        %v4440 = vrot.slane %v4438, 4
        %v4441 = vrot.slane %v4265, 5
        %v4442 = vsel %vm1420, %v4440, %v4441
        %v4443 = vunpack.c.l.b16 %v4334
        %v4444 = vunpack.c.l.b16 %v4337
        %v4445 = vunpack.c.l.b16 %v4341
        %v4446 = vunpack.c.l.b16 %v4344
        %v4447 = vunpack.c.l.b16 %v4348
        %v4448 = vunpack.c.l.b16 %v4351
        %v4449 = vunpack.c.l.b16 %v4355
        %v4450 = vunpack.c.l.b16 %v4358
        %v4451 = vunpack.c.l.b16 %v4362
        %v4452 = vunpack.c.l.b16 %v4365
        %v4453 = vunpack.c.l.b16 %v4369
        %v4454 = vunpack.c.l.b16 %v4372
        %v4455 = vunpack.c.l.b16 %v4376
        %v4456 = vunpack.c.l.b16 %v4379
        %v4457 = vunpack.c.l.b16 %v4383
        %v4458 = vunpack.c.l.b16 %v4386
        %v4459 = vunpack.c.l.b16 %v4390
        %v4460 = vunpack.c.l.b16 %v4393
        %v4461 = vunpack.c.l.b16 %v4397
        %v4462 = vunpack.c.l.b16 %v4400
        %v4463 = vunpack.c.l.b16 %v4404
        %v4464 = vunpack.c.l.b16 %v4407
        %v4465 = vunpack.c.l.b16 %v4411
        %v4466 = vunpack.c.l.b16 %v4414
        %v4467 = vunpack.c.l.b16 %v4418
        %v4468 = vunpack.c.l.b16 %v4421
        %v4469 = vunpack.c.l.b16 %v4425
        %v4470 = vunpack.c.l.b16 %v4428
        %v4471 = vunpack.c.l.b16 %v4432
        %v4472 = vunpack.c.l.b16 %v4435
        %v4473 = vunpack.c.l.b16 %v4439
        %v4474 = vunpack.c.l.b16 %v4442
        %v4475 = vpack.c.b16 %v4444, %v4443
        %v4476 = vpack.c.b16 %v4446, %v4445
        %v4477 = vpack.c.b16 %v4448, %v4447
        %v4478 = vpack.c.b16 %v4450, %v4449
        %v4479 = vpack.c.b16 %v4452, %v4451
        %v4480 = vpack.c.b16 %v4454, %v4453
        %v4481 = vpack.c.b16 %v4456, %v4455
        %v4482 = vpack.c.b16 %v4458, %v4457
        %v4483 = vpack.c.b16 %v4460, %v4459
        %v4484 = vpack.c.b16 %v4462, %v4461
        %v4485 = vpack.c.b16 %v4464, %v4463
        %v4486 = vpack.c.b16 %v4466, %v4465
        %v4487 = vpack.c.b16 %v4468, %v4467
        %v4488 = vpack.c.b16 %v4470, %v4469
        %v4489 = vpack.c.b16 %v4472, %v4471
        %v4490 = vpack.c.b16 %v4474, %v4473
        %v4523 = vunpack.c.l.b16 %v4267
        %v4524 = vunpack.c.l.b16 %v4268
        %v4525 = vunpack.c.l.b16 %v4269
        %v4526 = vunpack.c.l.b16 %v4270
        %v4527 = vunpack.c.l.b16 %v4271
        %v4528 = vunpack.c.l.b16 %v4272
        %v4529 = vunpack.c.l.b16 %v4273
        %v4530 = vunpack.c.l.b16 %v4274
        %v4531 = vunpack.c.l.b16 %v4275
        %v4532 = vunpack.c.l.b16 %v4276
        %v4533 = vunpack.c.l.b16 %v4277
        %v4534 = vunpack.c.l.b16 %v4278
        %v4535 = vunpack.c.l.b16 %v4279
        %v4536 = vunpack.c.l.b16 %v4280
        %v4537 = vunpack.c.l.b16 %v4281
        %v4538 = vunpack.c.l.b16 %v4282
        %v4539 = vpack.c.b16 %v4524, %v4523
        %v4540 = vpack.c.b16 %v4526, %v4525
        %v4541 = vpack.c.b16 %v4528, %v4527
        %v4542 = vpack.c.b16 %v4530, %v4529
        %v4543 = vpack.c.b16 %v4532, %v4531
        %v4544 = vpack.c.b16 %v4534, %v4533
        %v4545 = vpack.c.b16 %v4536, %v4535
        %v4546 = vpack.c.b16 %v4538, %v4537
        %4555 = vmatpush.bf16.msra.mxu0 %v4546
        %4556 = vmatpush.bf16.msra.mxu0 %v4545
        %4557 = vmatpush.bf16.msra.mxu0 %v4544
        %4558 = vmatpush.bf16.msra.mxu0 %v4543
        %4559 = vmatpush.bf16.msra.mxu0 %v4542
        %4560 = vmatpush.bf16.msra.mxu0 %v4541
        %4561 = vmatpush.bf16.msra.mxu0 %v4540
        %4562 = vmatpush.bf16.msra.mxu0 %v4539
        %4563 = vmatmul.bf16.gmra.mxu0 %v4475
        %v4564 = vpop.f32.mrf.mxu0
        %v4565 = vadd.f32 0.0, %v4564
        %v4566 = vpop.f32.mrf.mxu0
        %v4567 = vadd.f32 0.0, %v4566
        %4568 = vmatmul.bf16.gmra.mxu0 %v4476
        %v4569 = vpop.f32.mrf.mxu0
        %v4570 = vadd.f32 0.0, %v4569
        %v4571 = vpop.f32.mrf.mxu0
        %v4572 = vadd.f32 0.0, %v4571
        %4573 = vmatmul.bf16.gmra.mxu0 %v4477
        %v4574 = vpop.f32.mrf.mxu0
        %v4575 = vadd.f32 0.0, %v4574
        %v4576 = vpop.f32.mrf.mxu0
        %v4577 = vadd.f32 0.0, %v4576
        %4578 = vmatmul.bf16.gmra.mxu0 %v4478
        %v4579 = vpop.f32.mrf.mxu0
        %v4580 = vadd.f32 0.0, %v4579
        %v4581 = vpop.f32.mrf.mxu0
        %v4582 = vadd.f32 0.0, %v4581
        %4583 = vmatmul.bf16.gmra.mxu0 %v4479
        %v4584 = vpop.f32.mrf.mxu0
        %v4585 = vadd.f32 0.0, %v4584
        %v4586 = vpop.f32.mrf.mxu0
        %v4587 = vadd.f32 0.0, %v4586
        %4588 = vmatmul.bf16.gmra.mxu0 %v4480
        %v4589 = vpop.f32.mrf.mxu0
        %v4590 = vadd.f32 0.0, %v4589
        %v4591 = vpop.f32.mrf.mxu0
        %v4592 = vadd.f32 0.0, %v4591
        %4593 = vmatmul.bf16.gmra.mxu0 %v4481
        %v4594 = vpop.f32.mrf.mxu0
        %v4595 = vadd.f32 0.0, %v4594
        %v4596 = vpop.f32.mrf.mxu0
        %v4597 = vadd.f32 0.0, %v4596
        %4598 = vmatmul.bf16.gmra.mxu0 %v4482
        %v4599 = vpop.f32.mrf.mxu0
        %v4600 = vadd.f32 0.0, %v4599
        %v4601 = vpop.f32.mrf.mxu0
        %v4602 = vadd.f32 0.0, %v4601
        %4603 = vmatmul.bf16.gmra.mxu0 %v4483
        %v4604 = vpop.f32.mrf.mxu0
        %v4605 = vadd.f32 0.0, %v4604
        %v4606 = vpop.f32.mrf.mxu0
        %v4607 = vadd.f32 0.0, %v4606
        %4608 = vmatmul.bf16.gmra.mxu0 %v4484
        %v4609 = vpop.f32.mrf.mxu0
        %v4610 = vadd.f32 0.0, %v4609
        %v4611 = vpop.f32.mrf.mxu0
        %v4612 = vadd.f32 0.0, %v4611
        %4613 = vmatmul.bf16.gmra.mxu0 %v4485
        %v4614 = vpop.f32.mrf.mxu0
        %v4615 = vadd.f32 0.0, %v4614
        %v4616 = vpop.f32.mrf.mxu0
        %v4617 = vadd.f32 0.0, %v4616
        %4618 = vmatmul.bf16.gmra.mxu0 %v4486
        %v4619 = vpop.f32.mrf.mxu0
        %v4620 = vadd.f32 0.0, %v4619
        %v4621 = vpop.f32.mrf.mxu0
        %v4622 = vadd.f32 0.0, %v4621
        %4623 = vmatmul.bf16.gmra.mxu0 %v4487
        %v4624 = vpop.f32.mrf.mxu0
        %v4625 = vadd.f32 0.0, %v4624
        %v4626 = vpop.f32.mrf.mxu0
        %v4627 = vadd.f32 0.0, %v4626
        %4628 = vmatmul.bf16.gmra.mxu0 %v4488
        %v4629 = vpop.f32.mrf.mxu0
        %v4630 = vadd.f32 0.0, %v4629
        %v4631 = vpop.f32.mrf.mxu0
        %v4632 = vadd.f32 0.0, %v4631
        %4633 = vmatmul.bf16.gmra.mxu0 %v4489
        %v4634 = vpop.f32.mrf.mxu0
        %v4635 = vadd.f32 0.0, %v4634
        %v4636 = vpop.f32.mrf.mxu0
        %v4637 = vadd.f32 0.0, %v4636
        %4638 = vmatmul.bf16.gmra.mxu0 %v4490
        %v4639 = vpop.f32.mrf.mxu0
        %v4640 = vadd.f32 0.0, %v4639
        %v4641 = vpop.f32.mrf.mxu0
        %v4642 = vadd.f32 0.0, %v4641
        %4643 = vdwg.mxu0
        %v4644 = vadd.f32 %v4186, %v4565
        %v4645 = vadd.f32 %v4187, %v4567
        %v4646 = vadd.f32 %v4188, %v4570
        %v4647 = vadd.f32 %v4189, %v4572
        %v4648 = vadd.f32 %v4190, %v4575
        %v4649 = vadd.f32 %v4191, %v4577
        %v4650 = vadd.f32 %v4192, %v4580
        %v4651 = vadd.f32 %v4193, %v4582
        %v4652 = vadd.f32 %v4194, %v4585
        %v4653 = vadd.f32 %v4195, %v4587
        %v4654 = vadd.f32 %v4196, %v4590
        %v4655 = vadd.f32 %v4197, %v4592
        %v4656 = vadd.f32 %v4198, %v4595
        %v4657 = vadd.f32 %v4199, %v4597
        %v4658 = vadd.f32 %v4200, %v4600
        %v4659 = vadd.f32 %v4201, %v4602
        %v4660 = vadd.f32 %v4202, %v4605
        %v4661 = vadd.f32 %v4203, %v4607
        %v4662 = vadd.f32 %v4204, %v4610
        %v4663 = vadd.f32 %v4205, %v4612
        %v4664 = vadd.f32 %v4206, %v4615
        %v4665 = vadd.f32 %v4207, %v4617
        %v4666 = vadd.f32 %v4208, %v4620
        %v4667 = vadd.f32 %v4209, %v4622
        %v4668 = vadd.f32 %v4210, %v4625
        %v4669 = vadd.f32 %v4211, %v4627
        %v4670 = vadd.f32 %v4212, %v4630
        %v4671 = vadd.f32 %v4213, %v4632
        %v4672 = vadd.f32 %v4214, %v4635
        %v4673 = vadd.f32 %v4215, %v4637
        %v4674 = vadd.f32 %v4216, %v4640
        %v4675 = vadd.f32 %v4217, %v4642
        %v4676 = vld [vmem:[%s2] sm:$0x1]
        %v4678 = vperm.slane %v4676, 0
        %v4680 = vmul.f32 %v4644, %v4678
        %v4681 = vmul.f32 %v4645, %v4678
        %v4682 = vmul.f32 %v4646, %v4678
        %v4683 = vmul.f32 %v4647, %v4678
        %v4684 = vmul.f32 %v4648, %v4678
        %v4685 = vmul.f32 %v4649, %v4678
        %v4686 = vmul.f32 %v4650, %v4678
        %v4687 = vmul.f32 %v4651, %v4678
        %v4688 = vmul.f32 %v4652, %v4678
        %v4689 = vmul.f32 %v4653, %v4678
        %v4690 = vmul.f32 %v4654, %v4678
        %v4691 = vmul.f32 %v4655, %v4678
        %v4692 = vmul.f32 %v4656, %v4678
        %v4693 = vmul.f32 %v4657, %v4678
        %v4694 = vmul.f32 %v4658, %v4678
        %v4695 = vmul.f32 %v4659, %v4678
        %v4696 = vmul.f32 %v4660, %v4678
        %v4697 = vmul.f32 %v4661, %v4678
        %v4698 = vmul.f32 %v4662, %v4678
        %v4699 = vmul.f32 %v4663, %v4678
        %v4700 = vmul.f32 %v4664, %v4678
        %v4701 = vmul.f32 %v4665, %v4678
        %v4702 = vmul.f32 %v4666, %v4678
        %v4703 = vmul.f32 %v4667, %v4678
        %v4704 = vmul.f32 %v4668, %v4678
        %v4705 = vmul.f32 %v4669, %v4678
        %v4706 = vmul.f32 %v4670, %v4678
        %v4707 = vmul.f32 %v4671, %v4678
        %v4708 = vmul.f32 %v4672, %v4678
        %v4709 = vmul.f32 %v4673, %v4678
        %v4710 = vmul.f32 %v4674, %v4678
        %v4711 = vmul.f32 %v4675, %v4678
        %v4712 = vld [vmem:[%s3] sm:$0x1]
        %v4714 = vperm.slane %v4712, 0
        %v4716 = vadd.f32 %v4680, %v4714
        %v4717 = vadd.f32 %v4681, %v4714
        %v4718 = vadd.f32 %v4682, %v4714
        %v4719 = vadd.f32 %v4683, %v4714
        %v4720 = vadd.f32 %v4684, %v4714
        %v4721 = vadd.f32 %v4685, %v4714
        %v4722 = vadd.f32 %v4686, %v4714
        %v4723 = vadd.f32 %v4687, %v4714
        %v4724 = vadd.f32 %v4688, %v4714
        %v4725 = vadd.f32 %v4689, %v4714
        %v4726 = vadd.f32 %v4690, %v4714
        %v4727 = vadd.f32 %v4691, %v4714
        %v4728 = vadd.f32 %v4692, %v4714
        %v4729 = vadd.f32 %v4693, %v4714
        %v4730 = vadd.f32 %v4694, %v4714
        %v4731 = vadd.f32 %v4695, %v4714
        %v4732 = vadd.f32 %v4696, %v4714
        %v4733 = vadd.f32 %v4697, %v4714
        %v4734 = vadd.f32 %v4698, %v4714
        %v4735 = vadd.f32 %v4699, %v4714
        %v4736 = vadd.f32 %v4700, %v4714
        %v4737 = vadd.f32 %v4701, %v4714
        %v4738 = vadd.f32 %v4702, %v4714
        %v4739 = vadd.f32 %v4703, %v4714
        %v4740 = vadd.f32 %v4704, %v4714
        %v4741 = vadd.f32 %v4705, %v4714
        %v4742 = vadd.f32 %v4706, %v4714
        %v4743 = vadd.f32 %v4707, %v4714
        %v4744 = vadd.f32 %v4708, %v4714
        %v4745 = vadd.f32 %v4709, %v4714
        %v4746 = vadd.f32 %v4710, %v4714
        %v4747 = vadd.f32 %v4711, %v4714
        %v4748 = vmax.f32 %v4716, 0.0
        %v4749 = vmax.f32 %v4717, 0.0
        %v4750 = vmax.f32 %v4718, 0.0
        %v4751 = vmax.f32 %v4719, 0.0
        %v4752 = vmax.f32 %v4720, 0.0
        %v4753 = vmax.f32 %v4721, 0.0
        %v4754 = vmax.f32 %v4722, 0.0
        %v4755 = vmax.f32 %v4723, 0.0
        %v4756 = vmax.f32 %v4724, 0.0
        %v4757 = vmax.f32 %v4725, 0.0
        %v4758 = vmax.f32 %v4726, 0.0
        %v4759 = vmax.f32 %v4727, 0.0
        %v4760 = vmax.f32 %v4728, 0.0
        %v4761 = vmax.f32 %v4729, 0.0
        %v4762 = vmax.f32 %v4730, 0.0
        %v4763 = vmax.f32 %v4731, 0.0
        %v4764 = vmax.f32 %v4732, 0.0
        %v4765 = vmax.f32 %v4733, 0.0
        %v4766 = vmax.f32 %v4734, 0.0
        %v4767 = vmax.f32 %v4735, 0.0
        %v4768 = vmax.f32 %v4736, 0.0
        %v4769 = vmax.f32 %v4737, 0.0
        %v4770 = vmax.f32 %v4738, 0.0
        %v4771 = vmax.f32 %v4739, 0.0
        %v4772 = vmax.f32 %v4740, 0.0
        %v4773 = vmax.f32 %v4741, 0.0
        %v4774 = vmax.f32 %v4742, 0.0
        %v4775 = vmax.f32 %v4743, 0.0
        %v4776 = vmax.f32 %v4744, 0.0
        %v4777 = vmax.f32 %v4745, 0.0
        %v4778 = vmax.f32 %v4746, 0.0
        %v4779 = vmax.f32 %v4747, 0.0
        %v4780 = vpack.c.bf16 %v4748, %v4748
        %v4781 = vpack.c.bf16 %v4749, %v4749
        %v4782 = vpack.c.bf16 %v4750, %v4750
        %v4783 = vpack.c.bf16 %v4751, %v4751
        %v4784 = vpack.c.bf16 %v4752, %v4752
        %v4785 = vpack.c.bf16 %v4753, %v4753
        %v4786 = vpack.c.bf16 %v4754, %v4754
        %v4787 = vpack.c.bf16 %v4755, %v4755
        %v4788 = vpack.c.bf16 %v4756, %v4756
        %v4789 = vpack.c.bf16 %v4757, %v4757
        %v4790 = vpack.c.bf16 %v4758, %v4758
        %v4791 = vpack.c.bf16 %v4759, %v4759
        %v4792 = vpack.c.bf16 %v4760, %v4760
        %v4793 = vpack.c.bf16 %v4761, %v4761
        %v4794 = vpack.c.bf16 %v4762, %v4762
        %v4795 = vpack.c.bf16 %v4763, %v4763
        %v4796 = vpack.c.bf16 %v4764, %v4764
        %v4797 = vpack.c.bf16 %v4765, %v4765
        %v4798 = vpack.c.bf16 %v4766, %v4766
        %v4799 = vpack.c.bf16 %v4767, %v4767
        %v4800 = vpack.c.bf16 %v4768, %v4768
        %v4801 = vpack.c.bf16 %v4769, %v4769
        %v4802 = vpack.c.bf16 %v4770, %v4770
        %v4803 = vpack.c.bf16 %v4771, %v4771
        %v4804 = vpack.c.bf16 %v4772, %v4772
        %v4805 = vpack.c.bf16 %v4773, %v4773
        %v4806 = vpack.c.bf16 %v4774, %v4774
        %v4807 = vpack.c.bf16 %v4775, %v4775
        %v4808 = vpack.c.bf16 %v4776, %v4776
        %v4809 = vpack.c.bf16 %v4777, %v4777
        %v4810 = vpack.c.bf16 %v4778, %v4778
        %v4811 = vpack.c.bf16 %v4779, %v4779
        %s4812 = scalar_lea.vmem [#allocation2], 16
        %4813 = vst [vmem:[%s4812 + $0x4] sm:$0xf] %v4780
        %4814 = vst [vmem:[%s4812 + $0x8] sm:$0xf] %v4781
        %4815 = vst [vmem:[%s4812 + $0x14] sm:$0xf] %v4782
        %4816 = vst [vmem:[%s4812 + $0x18] sm:$0xf] %v4783
        %4817 = vst [vmem:[%s4812 + $0x24] sm:$0xf] %v4784
        %4818 = vst [vmem:[%s4812 + $0x28] sm:$0xf] %v4785
        %4819 = vst [vmem:[%s4812 + $0x34] sm:$0xf] %v4786
        %4820 = vst [vmem:[%s4812 + $0x38] sm:$0xf] %v4787
        %4821 = vst [vmem:[%s4812 + $0x44] sm:$0xf] %v4788
        %4822 = vst [vmem:[%s4812 + $0x48] sm:$0xf] %v4789
        %4823 = vst [vmem:[%s4812 + $0x54] sm:$0xf] %v4790
        %4824 = vst [vmem:[%s4812 + $0x58] sm:$0xf] %v4791
        %4825 = vst [vmem:[%s4812 + $0x64] sm:$0xf] %v4792
        %4826 = vst [vmem:[%s4812 + $0x68] sm:$0xf] %v4793
        %4827 = vst [vmem:[%s4812 + $0x74] sm:$0xf] %v4794
        %4828 = vst [vmem:[%s4812 + $0x78] sm:$0xf] %v4795
        %4829 = vst [vmem:[%s4812 + $0x84] sm:$0xf] %v4796
        %4830 = vst [vmem:[%s4812 + $0x88] sm:$0xf] %v4797
        %4831 = vst [vmem:[%s4812 + $0x94] sm:$0xf] %v4798
        %4832 = vst [vmem:[%s4812 + $0x98] sm:$0xf] %v4799
        %4833 = vst [vmem:[%s4812 + $0xa4] sm:$0xf] %v4800
        %4834 = vst [vmem:[%s4812 + $0xa8] sm:$0xf] %v4801
        %4835 = vst [vmem:[%s4812 + $0xb4] sm:$0xf] %v4802
        %4836 = vst [vmem:[%s4812 + $0xb8] sm:$0xf] %v4803
        %4837 = vst [vmem:[%s4812 + $0xc4] sm:$0xf] %v4804
        %4838 = vst [vmem:[%s4812 + $0xc8] sm:$0xf] %v4805
        %4839 = vst [vmem:[%s4812 + $0xd4] sm:$0xf] %v4806
        %4840 = vst [vmem:[%s4812 + $0xd8] sm:$0xf] %v4807
        %4841 = vst [vmem:[%s4812 + $0xe4] sm:$0xf] %v4808
        %4842 = vst [vmem:[%s4812 + $0xe8] sm:$0xf] %v4809
        %4843 = vst [vmem:[%s4812 + $0xf4] sm:$0xf] %v4810
        %4844 = vst [vmem:[%s4812 + $0xf8] sm:$0xf] %v4811
        %v4845 = vunpack.c.l.bf16 %v2081
        %v4846 = vunpack.c.l.bf16 %v2082
        %v4847 = vunpack.c.l.bf16 %v2083
        %v4848 = vunpack.c.l.bf16 %v2084
        %v4849 = vunpack.c.l.bf16 %v2085
        %v4850 = vunpack.c.l.bf16 %v2086
        %v4851 = vunpack.c.l.bf16 %v2087
        %v4852 = vunpack.c.l.bf16 %v2088
        %v4853 = vunpack.c.l.bf16 %v2089
        %v4854 = vunpack.c.l.bf16 %v2090
        %v4855 = vunpack.c.l.bf16 %v2091
        %v4856 = vunpack.c.l.bf16 %v2092
        %v4857 = vunpack.c.l.bf16 %v2093
        %v4858 = vunpack.c.l.bf16 %v2094
        %v4859 = vunpack.c.l.bf16 %v2095
        %v4860 = vunpack.c.l.bf16 %v2096
        %v4861 = vunpack.c.l.bf16 %v2097
        %v4862 = vunpack.c.l.bf16 %v2098
        %v4863 = vunpack.c.l.bf16 %v2099
        %v4864 = vunpack.c.l.bf16 %v2100
        %v4865 = vunpack.c.l.bf16 %v2101
        %v4866 = vunpack.c.l.bf16 %v2102
        %v4867 = vunpack.c.l.bf16 %v2103
        %v4868 = vunpack.c.l.bf16 %v2104
        %v4869 = vunpack.c.l.bf16 %v2105
        %v4870 = vunpack.c.l.bf16 %v2106
        %v4871 = vunpack.c.l.bf16 %v2107
        %v4872 = vunpack.c.l.bf16 %v2108
        %v4873 = vunpack.c.l.bf16 %v2109
        %v4874 = vunpack.c.l.bf16 %v2110
        %v4875 = vunpack.c.l.bf16 %v2111
        %v4876 = vunpack.c.l.bf16 %v2112
        %v4877 = vunpack.c.l.bf16 %v2113
        %v4878 = vunpack.c.l.bf16 %v2114
        %v4879 = vunpack.c.l.bf16 %v2115
        %v4880 = vunpack.c.l.bf16 %v2116
        %v4881 = vunpack.c.l.bf16 %v2117
        %v4882 = vunpack.c.l.bf16 %v2118
        %v4883 = vunpack.c.l.bf16 %v2119
        %v4884 = vunpack.c.l.bf16 %v2120
        %v4885 = vunpack.c.l.bf16 %v2121
        %v4886 = vunpack.c.l.bf16 %v2122
        %v4887 = vunpack.c.l.bf16 %v2123
        %v4888 = vunpack.c.l.bf16 %v2124
        %v4889 = vunpack.c.l.bf16 %v2125
        %v4890 = vunpack.c.l.bf16 %v2126
        %v4891 = vunpack.c.l.bf16 %v2127
        %v4892 = vunpack.c.l.bf16 %v2128
        %v4893 = vld [vmem:[#allocation2] sm:$0x8]
        %v4894 = vld [vmem:[#allocation2 + $0x4] sm:$0xf]
        %v4895 = vld [vmem:[#allocation2 + $0x8] sm:$0xf]
        %v4896 = vld [vmem:[#allocation2 + $0x10] sm:$0x8]
        %v4897 = vld [vmem:[#allocation2 + $0x14] sm:$0xf]
        %v4898 = vld [vmem:[#allocation2 + $0x18] sm:$0xf]
        %v4899 = vld [vmem:[#allocation2 + $0x20] sm:$0x8]
        %v4900 = vld [vmem:[#allocation2 + $0x24] sm:$0xf]
        %v4901 = vld [vmem:[#allocation2 + $0x28] sm:$0xf]
        %v4902 = vld [vmem:[#allocation2 + $0x30] sm:$0x8]
        %v4903 = vld [vmem:[#allocation2 + $0x34] sm:$0xf]
        %v4904 = vld [vmem:[#allocation2 + $0x38] sm:$0xf]
        %v4905 = vld [vmem:[#allocation2 + $0x40] sm:$0x8]
        %v4906 = vld [vmem:[#allocation2 + $0x44] sm:$0xf]
        %v4907 = vld [vmem:[#allocation2 + $0x48] sm:$0xf]
        %v4908 = vld [vmem:[#allocation2 + $0x50] sm:$0x8]
        %v4909 = vld [vmem:[#allocation2 + $0x54] sm:$0xf]
        %v4910 = vld [vmem:[#allocation2 + $0x58] sm:$0xf]
        %v4911 = vld [vmem:[#allocation2 + $0x60] sm:$0x8]
        %v4912 = vld [vmem:[#allocation2 + $0x64] sm:$0xf]
        %v4913 = vld [vmem:[#allocation2 + $0x68] sm:$0xf]
        %v4914 = vld [vmem:[#allocation2 + $0x70] sm:$0x8]
        %v4915 = vld [vmem:[#allocation2 + $0x74] sm:$0xf]
        %v4916 = vld [vmem:[#allocation2 + $0x78] sm:$0xf]
        %v4917 = vld [vmem:[#allocation2 + $0x80] sm:$0x8]
        %v4918 = vld [vmem:[#allocation2 + $0x84] sm:$0xf]
        %v4919 = vld [vmem:[#allocation2 + $0x88] sm:$0xf]
        %v4920 = vld [vmem:[#allocation2 + $0x90] sm:$0x8]
        %v4921 = vld [vmem:[#allocation2 + $0x94] sm:$0xf]
        %v4922 = vld [vmem:[#allocation2 + $0x98] sm:$0xf]
        %v4923 = vld [vmem:[#allocation2 + $0xa0] sm:$0x8]
        %v4924 = vld [vmem:[#allocation2 + $0xa4] sm:$0xf]
        %v4925 = vld [vmem:[#allocation2 + $0xa8] sm:$0xf]
        %v4926 = vld [vmem:[#allocation2 + $0xb0] sm:$0x8]
        %v4927 = vld [vmem:[#allocation2 + $0xb4] sm:$0xf]
        %v4928 = vld [vmem:[#allocation2 + $0xb8] sm:$0xf]
        %v4929 = vld [vmem:[#allocation2 + $0xc0] sm:$0x8]
        %v4930 = vld [vmem:[#allocation2 + $0xc4] sm:$0xf]
        %v4931 = vld [vmem:[#allocation2 + $0xc8] sm:$0xf]
        %v4932 = vld [vmem:[#allocation2 + $0xd0] sm:$0x8]
        %v4933 = vld [vmem:[#allocation2 + $0xd4] sm:$0xf]
        %v4934 = vld [vmem:[#allocation2 + $0xd8] sm:$0xf]
        %v4935 = vld [vmem:[#allocation2 + $0xe0] sm:$0x8]
        %v4936 = vld [vmem:[#allocation2 + $0xe4] sm:$0xf]
        %v4937 = vld [vmem:[#allocation2 + $0xe8] sm:$0xf]
        %v4938 = vld [vmem:[#allocation2 + $0xf0] sm:$0x8]
        %v4939 = vld [vmem:[#allocation2 + $0xf4] sm:$0xf]
        %v4940 = vld [vmem:[#allocation2 + $0xf8] sm:$0xf]
        %v4941 = vld [vmem:[#allocation3] sm:$0xf]
        %v4942 = vld [vmem:[#allocation3 + $0x4] sm:$0xf]
        %v4943 = vld [vmem:[#allocation3 + $0x8] sm:$0xf]
        %v4944 = vld [vmem:[#allocation3 + $0xc] sm:$0xf]
        %v4945 = vld [vmem:[#allocation3 + $0x10] sm:$0xf]
        %v4946 = vld [vmem:[#allocation3 + $0x14] sm:$0xf]
        %v4947 = vld [vmem:[#allocation3 + $0x18] sm:$0xf]
        %v4948 = vld [vmem:[#allocation3 + $0x1c] sm:$0xf]
        %v4949 = vld [vmem:[#allocation3 + $0x20] sm:$0xf]
        %v4950 = vld [vmem:[#allocation3 + $0x24] sm:$0xf]
        %v4951 = vld [vmem:[#allocation3 + $0x28] sm:$0xf]
        %v4952 = vld [vmem:[#allocation3 + $0x2c] sm:$0xf]
        %v4953 = vld [vmem:[#allocation3 + $0x30] sm:$0xf]
        %v4954 = vld [vmem:[#allocation3 + $0x34] sm:$0xf]
        %v4955 = vld [vmem:[#allocation3 + $0x38] sm:$0xf]
        %v4956 = vld [vmem:[#allocation3 + $0x3c] sm:$0xf]
        %v4957 = vld [vmem:[#allocation2 + $0x4] sm:$0xf]
        %v4958 = vld [vmem:[#allocation2 + $0x8] sm:$0xf]
        %v4959 = vld [vmem:[#allocation2 + $0x14] sm:$0xf]
        %v4960 = vld [vmem:[#allocation2 + $0x18] sm:$0xf]
        %v4961 = vld [vmem:[#allocation2 + $0x24] sm:$0xf]
        %v4962 = vld [vmem:[#allocation2 + $0x28] sm:$0xf]
        %v4963 = vld [vmem:[#allocation2 + $0x34] sm:$0xf]
        %v4964 = vld [vmem:[#allocation2 + $0x38] sm:$0xf]
        %v4965 = vld [vmem:[#allocation2 + $0x44] sm:$0xf]
        %v4966 = vld [vmem:[#allocation2 + $0x48] sm:$0xf]
        %v4967 = vld [vmem:[#allocation2 + $0x54] sm:$0xf]
        %v4968 = vld [vmem:[#allocation2 + $0x58] sm:$0xf]
        %v4969 = vld [vmem:[#allocation2 + $0x64] sm:$0xf]
        %v4970 = vld [vmem:[#allocation2 + $0x68] sm:$0xf]
        %v4971 = vld [vmem:[#allocation2 + $0x74] sm:$0xf]
        %v4972 = vld [vmem:[#allocation2 + $0x78] sm:$0xf]
        %v4973 = vld [vmem:[#allocation2 + $0x84] sm:$0xf]
        %v4974 = vld [vmem:[#allocation2 + $0x88] sm:$0xf]
        %v4975 = vld [vmem:[#allocation2 + $0x94] sm:$0xf]
        %v4976 = vld [vmem:[#allocation2 + $0x98] sm:$0xf]
        %v4977 = vld [vmem:[#allocation2 + $0xa4] sm:$0xf]
        %v4978 = vld [vmem:[#allocation2 + $0xa8] sm:$0xf]
        %v4979 = vld [vmem:[#allocation2 + $0xb4] sm:$0xf]
        %v4980 = vld [vmem:[#allocation2 + $0xb8] sm:$0xf]
        %v4981 = vld [vmem:[#allocation2 + $0xc4] sm:$0xf]
        %v4982 = vld [vmem:[#allocation2 + $0xc8] sm:$0xf]
        %v4983 = vld [vmem:[#allocation2 + $0xd4] sm:$0xf]
        %v4984 = vld [vmem:[#allocation2 + $0xd8] sm:$0xf]
        %v4985 = vld [vmem:[#allocation2 + $0xe4] sm:$0xf]
        %v4986 = vld [vmem:[#allocation2 + $0xe8] sm:$0xf]
        %v4987 = vld [vmem:[#allocation2 + $0xf4] sm:$0xf]
        %v4988 = vld [vmem:[#allocation2 + $0xf8] sm:$0xf]
        %s4989 = scalar_lea.vmem [#allocation3], 64
        %v4990 = vld [vmem:[%s4989] sm:$0xf]
        %v4991 = vld [vmem:[%s4989 + $0x4] sm:$0xf]
        %v4992 = vld [vmem:[%s4989 + $0x8] sm:$0xf]
        %v4993 = vld [vmem:[%s4989 + $0xc] sm:$0xf]
        %v4994 = vld [vmem:[%s4989 + $0x10] sm:$0xf]
        %v4995 = vld [vmem:[%s4989 + $0x14] sm:$0xf]
        %v4996 = vld [vmem:[%s4989 + $0x18] sm:$0xf]
        %v4997 = vld [vmem:[%s4989 + $0x1c] sm:$0xf]
        %v4998 = vld [vmem:[%s4989 + $0x20] sm:$0xf]
        %v4999 = vld [vmem:[%s4989 + $0x24] sm:$0xf]
        %v5000 = vld [vmem:[%s4989 + $0x28] sm:$0xf]
        %v5001 = vld [vmem:[%s4989 + $0x2c] sm:$0xf]
        %v5002 = vld [vmem:[%s4989 + $0x30] sm:$0xf]
        %v5003 = vld [vmem:[%s4989 + $0x34] sm:$0xf]
        %v5004 = vld [vmem:[%s4989 + $0x38] sm:$0xf]
        %v5005 = vld [vmem:[%s4989 + $0x3c] sm:$0xf]
        %v5038 = vunpack.c.l.b16 %v4957
        %v5039 = vunpack.c.l.b16 %v4958
        %v5040 = vunpack.c.l.b16 %v4959
        %v5041 = vunpack.c.l.b16 %v4960
        %v5042 = vunpack.c.l.b16 %v4961
        %v5043 = vunpack.c.l.b16 %v4962
        %v5044 = vunpack.c.l.b16 %v4963
        %v5045 = vunpack.c.l.b16 %v4964
        %v5046 = vunpack.c.l.b16 %v4965
        %v5047 = vunpack.c.l.b16 %v4966
        %v5048 = vunpack.c.l.b16 %v4967
        %v5049 = vunpack.c.l.b16 %v4968
        %v5050 = vunpack.c.l.b16 %v4969
        %v5051 = vunpack.c.l.b16 %v4970
        %v5052 = vunpack.c.l.b16 %v4971
        %v5053 = vunpack.c.l.b16 %v4972
        %v5054 = vunpack.c.l.b16 %v4973
        %v5055 = vunpack.c.l.b16 %v4974
        %v5056 = vunpack.c.l.b16 %v4975
        %v5057 = vunpack.c.l.b16 %v4976
        %v5058 = vunpack.c.l.b16 %v4977
        %v5059 = vunpack.c.l.b16 %v4978
        %v5060 = vunpack.c.l.b16 %v4979
        %v5061 = vunpack.c.l.b16 %v4980
        %v5062 = vunpack.c.l.b16 %v4981
        %v5063 = vunpack.c.l.b16 %v4982
        %v5064 = vunpack.c.l.b16 %v4983
        %v5065 = vunpack.c.l.b16 %v4984
        %v5066 = vunpack.c.l.b16 %v4985
        %v5067 = vunpack.c.l.b16 %v4986
        %v5068 = vunpack.c.l.b16 %v4987
        %v5069 = vunpack.c.l.b16 %v4988
        %v5070 = vpack.c.b16 %v5039, %v5038
        %v5071 = vpack.c.b16 %v5041, %v5040
        %v5072 = vpack.c.b16 %v5043, %v5042
        %v5073 = vpack.c.b16 %v5045, %v5044
        %v5074 = vpack.c.b16 %v5047, %v5046
        %v5075 = vpack.c.b16 %v5049, %v5048
        %v5076 = vpack.c.b16 %v5051, %v5050
        %v5077 = vpack.c.b16 %v5053, %v5052
        %v5078 = vpack.c.b16 %v5055, %v5054
        %v5079 = vpack.c.b16 %v5057, %v5056
        %v5080 = vpack.c.b16 %v5059, %v5058
        %v5081 = vpack.c.b16 %v5061, %v5060
        %v5082 = vpack.c.b16 %v5063, %v5062
        %v5083 = vpack.c.b16 %v5065, %v5064
        %v5084 = vpack.c.b16 %v5067, %v5066
        %v5085 = vpack.c.b16 %v5069, %v5068
        %v5118 = vunpack.c.l.b16 %v4990
        %v5119 = vunpack.c.l.b16 %v4991
        %v5120 = vunpack.c.l.b16 %v4992
        %v5121 = vunpack.c.l.b16 %v4993
        %v5122 = vunpack.c.l.b16 %v4994
        %v5123 = vunpack.c.l.b16 %v4995
        %v5124 = vunpack.c.l.b16 %v4996
        %v5125 = vunpack.c.l.b16 %v4997
        %v5126 = vunpack.c.l.b16 %v4998
        %v5127 = vunpack.c.l.b16 %v4999
        %v5128 = vunpack.c.l.b16 %v5000
        %v5129 = vunpack.c.l.b16 %v5001
        %v5130 = vunpack.c.l.b16 %v5002
        %v5131 = vunpack.c.l.b16 %v5003
        %v5132 = vunpack.c.l.b16 %v5004
        %v5133 = vunpack.c.l.b16 %v5005
        %v5134 = vpack.c.b16 %v5119, %v5118
        %v5135 = vpack.c.b16 %v5121, %v5120
        %v5136 = vpack.c.b16 %v5123, %v5122
        %v5137 = vpack.c.b16 %v5125, %v5124
        %v5138 = vpack.c.b16 %v5127, %v5126
        %v5139 = vpack.c.b16 %v5129, %v5128
        %v5140 = vpack.c.b16 %v5131, %v5130
        %v5141 = vpack.c.b16 %v5133, %v5132
        %5150 = vmatpush.bf16.msra.mxu0 %v5141
        %5151 = vmatpush.bf16.msra.mxu0 %v5140
        %5152 = vmatpush.bf16.msra.mxu0 %v5139
        %5153 = vmatpush.bf16.msra.mxu0 %v5138
        %5154 = vmatpush.bf16.msra.mxu0 %v5137
        %5155 = vmatpush.bf16.msra.mxu0 %v5136
        %5156 = vmatpush.bf16.msra.mxu0 %v5135
        %5157 = vmatpush.bf16.msra.mxu0 %v5134
        %5158 = vmatmul.bf16.gmra.mxu0 %v5070
        %v5159 = vpop.f32.mrf.mxu0
        %v5160 = vadd.f32 0.0, %v5159
        %v5161 = vpop.f32.mrf.mxu0
        %v5162 = vadd.f32 0.0, %v5161
        %5163 = vmatmul.bf16.gmra.mxu0 %v5071
        %v5164 = vpop.f32.mrf.mxu0
        %v5165 = vadd.f32 0.0, %v5164
        %v5166 = vpop.f32.mrf.mxu0
        %v5167 = vadd.f32 0.0, %v5166
        %5168 = vmatmul.bf16.gmra.mxu0 %v5072
        %v5169 = vpop.f32.mrf.mxu0
        %v5170 = vadd.f32 0.0, %v5169
        %v5171 = vpop.f32.mrf.mxu0
        %v5172 = vadd.f32 0.0, %v5171
        %5173 = vmatmul.bf16.gmra.mxu0 %v5073
        %v5174 = vpop.f32.mrf.mxu0
        %v5175 = vadd.f32 0.0, %v5174
        %v5176 = vpop.f32.mrf.mxu0
        %v5177 = vadd.f32 0.0, %v5176
        %5178 = vmatmul.bf16.gmra.mxu0 %v5074
        %v5179 = vpop.f32.mrf.mxu0
        %v5180 = vadd.f32 0.0, %v5179
        %v5181 = vpop.f32.mrf.mxu0
        %v5182 = vadd.f32 0.0, %v5181
        %5183 = vmatmul.bf16.gmra.mxu0 %v5075
        %v5184 = vpop.f32.mrf.mxu0
        %v5185 = vadd.f32 0.0, %v5184
        %v5186 = vpop.f32.mrf.mxu0
        %v5187 = vadd.f32 0.0, %v5186
        %5188 = vmatmul.bf16.gmra.mxu0 %v5076
        %v5189 = vpop.f32.mrf.mxu0
        %v5190 = vadd.f32 0.0, %v5189
        %v5191 = vpop.f32.mrf.mxu0
        %v5192 = vadd.f32 0.0, %v5191
        %5193 = vmatmul.bf16.gmra.mxu0 %v5077
        %v5194 = vpop.f32.mrf.mxu0
        %v5195 = vadd.f32 0.0, %v5194
        %v5196 = vpop.f32.mrf.mxu0
        %v5197 = vadd.f32 0.0, %v5196
        %5198 = vmatmul.bf16.gmra.mxu0 %v5078
        %v5199 = vpop.f32.mrf.mxu0
        %v5200 = vadd.f32 0.0, %v5199
        %v5201 = vpop.f32.mrf.mxu0
        %v5202 = vadd.f32 0.0, %v5201
        %5203 = vmatmul.bf16.gmra.mxu0 %v5079
        %v5204 = vpop.f32.mrf.mxu0
        %v5205 = vadd.f32 0.0, %v5204
        %v5206 = vpop.f32.mrf.mxu0
        %v5207 = vadd.f32 0.0, %v5206
        %5208 = vmatmul.bf16.gmra.mxu0 %v5080
        %v5209 = vpop.f32.mrf.mxu0
        %v5210 = vadd.f32 0.0, %v5209
        %v5211 = vpop.f32.mrf.mxu0
        %v5212 = vadd.f32 0.0, %v5211
        %5213 = vmatmul.bf16.gmra.mxu0 %v5081
        %v5214 = vpop.f32.mrf.mxu0
        %v5215 = vadd.f32 0.0, %v5214
        %v5216 = vpop.f32.mrf.mxu0
        %v5217 = vadd.f32 0.0, %v5216
        %5218 = vmatmul.bf16.gmra.mxu0 %v5082
        %v5219 = vpop.f32.mrf.mxu0
        %v5220 = vadd.f32 0.0, %v5219
        %v5221 = vpop.f32.mrf.mxu0
        %v5222 = vadd.f32 0.0, %v5221
        %5223 = vmatmul.bf16.gmra.mxu0 %v5083
        %v5224 = vpop.f32.mrf.mxu0
        %v5225 = vadd.f32 0.0, %v5224
        %v5226 = vpop.f32.mrf.mxu0
        %v5227 = vadd.f32 0.0, %v5226
        %5228 = vmatmul.bf16.gmra.mxu0 %v5084
        %v5229 = vpop.f32.mrf.mxu0
        %v5230 = vadd.f32 0.0, %v5229
        %v5231 = vpop.f32.mrf.mxu0
        %v5232 = vadd.f32 0.0, %v5231
        %5233 = vmatmul.bf16.gmra.mxu0 %v5085
        %v5234 = vpop.f32.mrf.mxu0
        %v5235 = vadd.f32 0.0, %v5234
        %v5236 = vpop.f32.mrf.mxu0
        %v5237 = vadd.f32 0.0, %v5236
        %5238 = vdwg.mxu0
        %vm5239 = vsmask.f32 256
        %vm5240 = vsmask.f32 4368
        %vm5241 = vmor %vm5239, %vm5240
        %v5243 = vshrl.u32 %v4893, 16
        %v5245 = vrot.slane %v5243, 7
        %v5246 = vrot.slane %v5245, 4
        %v5248 = vshrl.u32 %v4894, 16
        %v5250 = vrot.slane %v5248, 7
        %v5251 = vshll.u32 %v4894, 16
        %v5253 = vor.u32 %v5250, %v5251
        %v5254 = vsel %vm5241, %v5246, %v5253
        %v5255 = vrot.slane %v5250, 4
        %v5257 = vshrl.u32 %v4895, 16
        %v5259 = vrot.slane %v5257, 7
        %v5260 = vshll.u32 %v4895, 16
        %v5262 = vor.u32 %v5259, %v5260
        %v5263 = vsel %vm5241, %v5255, %v5262
        %v5265 = vshrl.u32 %v4896, 16
        %v5267 = vrot.slane %v5265, 7
        %v5268 = vrot.slane %v5267, 4
        %v5270 = vshrl.u32 %v4897, 16
        %v5272 = vrot.slane %v5270, 7
        %v5273 = vshll.u32 %v4897, 16
        %v5275 = vor.u32 %v5272, %v5273
        %v5276 = vsel %vm5241, %v5268, %v5275
        %v5277 = vrot.slane %v5272, 4
        %v5279 = vshrl.u32 %v4898, 16
        %v5281 = vrot.slane %v5279, 7
        %v5282 = vshll.u32 %v4898, 16
        %v5284 = vor.u32 %v5281, %v5282
        %v5285 = vsel %vm5241, %v5277, %v5284
        %v5287 = vshrl.u32 %v4899, 16
        %v5289 = vrot.slane %v5287, 7
        %v5290 = vrot.slane %v5289, 4
        %v5292 = vshrl.u32 %v4900, 16
        %v5294 = vrot.slane %v5292, 7
        %v5295 = vshll.u32 %v4900, 16
        %v5297 = vor.u32 %v5294, %v5295
        %v5298 = vsel %vm5241, %v5290, %v5297
        %v5299 = vrot.slane %v5294, 4
        %v5301 = vshrl.u32 %v4901, 16
        %v5303 = vrot.slane %v5301, 7
        %v5304 = vshll.u32 %v4901, 16
        %v5306 = vor.u32 %v5303, %v5304
        %v5307 = vsel %vm5241, %v5299, %v5306
        %v5309 = vshrl.u32 %v4902, 16
        %v5311 = vrot.slane %v5309, 7
        %v5312 = vrot.slane %v5311, 4
        %v5314 = vshrl.u32 %v4903, 16
        %v5316 = vrot.slane %v5314, 7
        %v5317 = vshll.u32 %v4903, 16
        %v5319 = vor.u32 %v5316, %v5317
        %v5320 = vsel %vm5241, %v5312, %v5319
        %v5321 = vrot.slane %v5316, 4
        %v5323 = vshrl.u32 %v4904, 16
        %v5325 = vrot.slane %v5323, 7
        %v5326 = vshll.u32 %v4904, 16
        %v5328 = vor.u32 %v5325, %v5326
        %v5329 = vsel %vm5241, %v5321, %v5328
        %v5331 = vshrl.u32 %v4905, 16
        %v5333 = vrot.slane %v5331, 7
        %v5334 = vrot.slane %v5333, 4
        %v5336 = vshrl.u32 %v4906, 16
        %v5338 = vrot.slane %v5336, 7
        %v5339 = vshll.u32 %v4906, 16
        %v5341 = vor.u32 %v5338, %v5339
        %v5342 = vsel %vm5241, %v5334, %v5341
        %v5343 = vrot.slane %v5338, 4
        %v5345 = vshrl.u32 %v4907, 16
        %v5347 = vrot.slane %v5345, 7
        %v5348 = vshll.u32 %v4907, 16
        %v5350 = vor.u32 %v5347, %v5348
        %v5351 = vsel %vm5241, %v5343, %v5350
        %v5353 = vshrl.u32 %v4908, 16
        %v5355 = vrot.slane %v5353, 7
        %v5356 = vrot.slane %v5355, 4
        %v5358 = vshrl.u32 %v4909, 16
        %v5360 = vrot.slane %v5358, 7
        %v5361 = vshll.u32 %v4909, 16
        %v5363 = vor.u32 %v5360, %v5361
        %v5364 = vsel %vm5241, %v5356, %v5363
        %v5365 = vrot.slane %v5360, 4
        %v5367 = vshrl.u32 %v4910, 16
        %v5369 = vrot.slane %v5367, 7
        %v5370 = vshll.u32 %v4910, 16
        %v5372 = vor.u32 %v5369, %v5370
        %v5373 = vsel %vm5241, %v5365, %v5372
        %v5375 = vshrl.u32 %v4911, 16
        %v5377 = vrot.slane %v5375, 7
        %v5378 = vrot.slane %v5377, 4
        %v5380 = vshrl.u32 %v4912, 16
        %v5382 = vrot.slane %v5380, 7
        %v5383 = vshll.u32 %v4912, 16
        %v5385 = vor.u32 %v5382, %v5383
        %v5386 = vsel %vm5241, %v5378, %v5385
        %v5387 = vrot.slane %v5382, 4
        %v5389 = vshrl.u32 %v4913, 16
        %v5391 = vrot.slane %v5389, 7
        %v5392 = vshll.u32 %v4913, 16
        %v5394 = vor.u32 %v5391, %v5392
        %v5395 = vsel %vm5241, %v5387, %v5394
        %v5397 = vshrl.u32 %v4914, 16
        %v5399 = vrot.slane %v5397, 7
        %v5400 = vrot.slane %v5399, 4
        %v5402 = vshrl.u32 %v4915, 16
        %v5404 = vrot.slane %v5402, 7
        %v5405 = vshll.u32 %v4915, 16
        %v5407 = vor.u32 %v5404, %v5405
        %v5408 = vsel %vm5241, %v5400, %v5407
        %v5409 = vrot.slane %v5404, 4
        %v5411 = vshrl.u32 %v4916, 16
        %v5413 = vrot.slane %v5411, 7
        %v5414 = vshll.u32 %v4916, 16
        %v5416 = vor.u32 %v5413, %v5414
        %v5417 = vsel %vm5241, %v5409, %v5416
        %v5419 = vshrl.u32 %v4917, 16
        %v5421 = vrot.slane %v5419, 7
        %v5422 = vrot.slane %v5421, 4
        %v5424 = vshrl.u32 %v4918, 16
        %v5426 = vrot.slane %v5424, 7
        %v5427 = vshll.u32 %v4918, 16
        %v5429 = vor.u32 %v5426, %v5427
        %v5430 = vsel %vm5241, %v5422, %v5429
        %v5431 = vrot.slane %v5426, 4
        %v5433 = vshrl.u32 %v4919, 16
        %v5435 = vrot.slane %v5433, 7
        %v5436 = vshll.u32 %v4919, 16
        %v5438 = vor.u32 %v5435, %v5436
        %v5439 = vsel %vm5241, %v5431, %v5438
        %v5441 = vshrl.u32 %v4920, 16
        %v5443 = vrot.slane %v5441, 7
        %v5444 = vrot.slane %v5443, 4
        %v5446 = vshrl.u32 %v4921, 16
        %v5448 = vrot.slane %v5446, 7
        %v5449 = vshll.u32 %v4921, 16
        %v5451 = vor.u32 %v5448, %v5449
        %v5452 = vsel %vm5241, %v5444, %v5451
        %v5453 = vrot.slane %v5448, 4
        %v5455 = vshrl.u32 %v4922, 16
        %v5457 = vrot.slane %v5455, 7
        %v5458 = vshll.u32 %v4922, 16
        %v5460 = vor.u32 %v5457, %v5458
        %v5461 = vsel %vm5241, %v5453, %v5460
        %v5463 = vshrl.u32 %v4923, 16
        %v5465 = vrot.slane %v5463, 7
        %v5466 = vrot.slane %v5465, 4
        %v5468 = vshrl.u32 %v4924, 16
        %v5470 = vrot.slane %v5468, 7
        %v5471 = vshll.u32 %v4924, 16
        %v5473 = vor.u32 %v5470, %v5471
        %v5474 = vsel %vm5241, %v5466, %v5473
        %v5475 = vrot.slane %v5470, 4
        %v5477 = vshrl.u32 %v4925, 16
        %v5479 = vrot.slane %v5477, 7
        %v5480 = vshll.u32 %v4925, 16
        %v5482 = vor.u32 %v5479, %v5480
        %v5483 = vsel %vm5241, %v5475, %v5482
        %v5485 = vshrl.u32 %v4926, 16
        %v5487 = vrot.slane %v5485, 7
        %v5488 = vrot.slane %v5487, 4
        %v5490 = vshrl.u32 %v4927, 16
        %v5492 = vrot.slane %v5490, 7
        %v5493 = vshll.u32 %v4927, 16
        %v5495 = vor.u32 %v5492, %v5493
        %v5496 = vsel %vm5241, %v5488, %v5495
        %v5497 = vrot.slane %v5492, 4
        %v5499 = vshrl.u32 %v4928, 16
        %v5501 = vrot.slane %v5499, 7
        %v5502 = vshll.u32 %v4928, 16
        %v5504 = vor.u32 %v5501, %v5502
        %v5505 = vsel %vm5241, %v5497, %v5504
        %v5507 = vshrl.u32 %v4929, 16
        %v5509 = vrot.slane %v5507, 7
        %v5510 = vrot.slane %v5509, 4
        %v5512 = vshrl.u32 %v4930, 16
        %v5514 = vrot.slane %v5512, 7
        %v5515 = vshll.u32 %v4930, 16
        %v5517 = vor.u32 %v5514, %v5515
        %v5518 = vsel %vm5241, %v5510, %v5517
        %v5519 = vrot.slane %v5514, 4
        %v5521 = vshrl.u32 %v4931, 16
        %v5523 = vrot.slane %v5521, 7
        %v5524 = vshll.u32 %v4931, 16
        %v5526 = vor.u32 %v5523, %v5524
        %v5527 = vsel %vm5241, %v5519, %v5526
        %v5529 = vshrl.u32 %v4932, 16
        %v5531 = vrot.slane %v5529, 7
        %v5532 = vrot.slane %v5531, 4
        %v5534 = vshrl.u32 %v4933, 16
        %v5536 = vrot.slane %v5534, 7
        %v5537 = vshll.u32 %v4933, 16
        %v5539 = vor.u32 %v5536, %v5537
        %v5540 = vsel %vm5241, %v5532, %v5539
        %v5541 = vrot.slane %v5536, 4
        %v5543 = vshrl.u32 %v4934, 16
        %v5545 = vrot.slane %v5543, 7
        %v5546 = vshll.u32 %v4934, 16
        %v5548 = vor.u32 %v5545, %v5546
        %v5549 = vsel %vm5241, %v5541, %v5548
        %v5551 = vshrl.u32 %v4935, 16
        %v5553 = vrot.slane %v5551, 7
        %v5554 = vrot.slane %v5553, 4
        %v5556 = vshrl.u32 %v4936, 16
        %v5558 = vrot.slane %v5556, 7
        %v5559 = vshll.u32 %v4936, 16
        %v5561 = vor.u32 %v5558, %v5559
        %v5562 = vsel %vm5241, %v5554, %v5561
        %v5563 = vrot.slane %v5558, 4
        %v5565 = vshrl.u32 %v4937, 16
        %v5567 = vrot.slane %v5565, 7
        %v5568 = vshll.u32 %v4937, 16
        %v5570 = vor.u32 %v5567, %v5568
        %v5571 = vsel %vm5241, %v5563, %v5570
        %v5573 = vshrl.u32 %v4938, 16
        %v5575 = vrot.slane %v5573, 7
        %v5576 = vrot.slane %v5575, 4
        %v5578 = vshrl.u32 %v4939, 16
        %v5580 = vrot.slane %v5578, 7
        %v5581 = vshll.u32 %v4939, 16
        %v5583 = vor.u32 %v5580, %v5581
        %v5584 = vsel %vm5241, %v5576, %v5583
        %v5585 = vrot.slane %v5580, 4
        %v5587 = vshrl.u32 %v4940, 16
        %v5589 = vrot.slane %v5587, 7
        %v5590 = vshll.u32 %v4940, 16
        %v5592 = vor.u32 %v5589, %v5590
        %v5593 = vsel %vm5241, %v5585, %v5592
        %v5594 = vunpack.c.l.b16 %v5254
        %v5595 = vunpack.c.l.b16 %v5263
        %v5596 = vunpack.c.l.b16 %v5276
        %v5597 = vunpack.c.l.b16 %v5285
        %v5598 = vunpack.c.l.b16 %v5298
        %v5599 = vunpack.c.l.b16 %v5307
        %v5600 = vunpack.c.l.b16 %v5320
        %v5601 = vunpack.c.l.b16 %v5329
        %v5602 = vunpack.c.l.b16 %v5342
        %v5603 = vunpack.c.l.b16 %v5351
        %v5604 = vunpack.c.l.b16 %v5364
        %v5605 = vunpack.c.l.b16 %v5373
        %v5606 = vunpack.c.l.b16 %v5386
        %v5607 = vunpack.c.l.b16 %v5395
        %v5608 = vunpack.c.l.b16 %v5408
        %v5609 = vunpack.c.l.b16 %v5417
        %v5610 = vunpack.c.l.b16 %v5430
        %v5611 = vunpack.c.l.b16 %v5439
        %v5612 = vunpack.c.l.b16 %v5452
        %v5613 = vunpack.c.l.b16 %v5461
        %v5614 = vunpack.c.l.b16 %v5474
        %v5615 = vunpack.c.l.b16 %v5483
        %v5616 = vunpack.c.l.b16 %v5496
        %v5617 = vunpack.c.l.b16 %v5505
        %v5618 = vunpack.c.l.b16 %v5518
        %v5619 = vunpack.c.l.b16 %v5527
        %v5620 = vunpack.c.l.b16 %v5540
        %v5621 = vunpack.c.l.b16 %v5549
        %v5622 = vunpack.c.l.b16 %v5562
        %v5623 = vunpack.c.l.b16 %v5571
        %v5624 = vunpack.c.l.b16 %v5584
        %v5625 = vunpack.c.l.b16 %v5593
        %v5626 = vpack.c.b16 %v5595, %v5594
        %v5627 = vpack.c.b16 %v5597, %v5596
        %v5628 = vpack.c.b16 %v5599, %v5598
        %v5629 = vpack.c.b16 %v5601, %v5600
        %v5630 = vpack.c.b16 %v5603, %v5602
        %v5631 = vpack.c.b16 %v5605, %v5604
        %v5632 = vpack.c.b16 %v5607, %v5606
        %v5633 = vpack.c.b16 %v5609, %v5608
        %v5634 = vpack.c.b16 %v5611, %v5610
        %v5635 = vpack.c.b16 %v5613, %v5612
        %v5636 = vpack.c.b16 %v5615, %v5614
        %v5637 = vpack.c.b16 %v5617, %v5616
        %v5638 = vpack.c.b16 %v5619, %v5618
        %v5639 = vpack.c.b16 %v5621, %v5620
        %v5640 = vpack.c.b16 %v5623, %v5622
        %v5641 = vpack.c.b16 %v5625, %v5624
        %v5674 = vunpack.c.l.b16 %v4941
        %v5675 = vunpack.c.l.b16 %v4942
        %v5676 = vunpack.c.l.b16 %v4943
        %v5677 = vunpack.c.l.b16 %v4944
        %v5678 = vunpack.c.l.b16 %v4945
        %v5679 = vunpack.c.l.b16 %v4946
        %v5680 = vunpack.c.l.b16 %v4947
        %v5681 = vunpack.c.l.b16 %v4948
        %v5682 = vunpack.c.l.b16 %v4949
        %v5683 = vunpack.c.l.b16 %v4950
        %v5684 = vunpack.c.l.b16 %v4951
        %v5685 = vunpack.c.l.b16 %v4952
        %v5686 = vunpack.c.l.b16 %v4953
        %v5687 = vunpack.c.l.b16 %v4954
        %v5688 = vunpack.c.l.b16 %v4955
        %v5689 = vunpack.c.l.b16 %v4956
        %v5690 = vpack.c.b16 %v5675, %v5674
        %v5691 = vpack.c.b16 %v5677, %v5676
        %v5692 = vpack.c.b16 %v5679, %v5678
        %v5693 = vpack.c.b16 %v5681, %v5680
        %v5694 = vpack.c.b16 %v5683, %v5682
        %v5695 = vpack.c.b16 %v5685, %v5684
        %v5696 = vpack.c.b16 %v5687, %v5686
        %v5697 = vpack.c.b16 %v5689, %v5688
        %5706 = vmatpush.bf16.msra.mxu0 %v5697
        %5707 = vmatpush.bf16.msra.mxu0 %v5696
        %5708 = vmatpush.bf16.msra.mxu0 %v5695
        %5709 = vmatpush.bf16.msra.mxu0 %v5694
        %5710 = vmatpush.bf16.msra.mxu0 %v5693
        %5711 = vmatpush.bf16.msra.mxu0 %v5692
        %5712 = vmatpush.bf16.msra.mxu0 %v5691
        %5713 = vmatpush.bf16.msra.mxu0 %v5690
        %5714 = vmatmul.bf16.gmra.mxu0 %v5626
        %v5715 = vpop.f32.mrf.mxu0
        %v5716 = vadd.f32 %v5160, %v5715
        %v5717 = vpop.f32.mrf.mxu0
        %v5718 = vadd.f32 %v5162, %v5717
        %5719 = vmatmul.bf16.gmra.mxu0 %v5627
        %v5720 = vpop.f32.mrf.mxu0
        %v5721 = vadd.f32 %v5165, %v5720
        %v5722 = vpop.f32.mrf.mxu0
        %v5723 = vadd.f32 %v5167, %v5722
        %5724 = vmatmul.bf16.gmra.mxu0 %v5628
        %v5725 = vpop.f32.mrf.mxu0
        %v5726 = vadd.f32 %v5170, %v5725
        %v5727 = vpop.f32.mrf.mxu0
        %v5728 = vadd.f32 %v5172, %v5727
        %5729 = vmatmul.bf16.gmra.mxu0 %v5629
        %v5730 = vpop.f32.mrf.mxu0
        %v5731 = vadd.f32 %v5175, %v5730
        %v5732 = vpop.f32.mrf.mxu0
        %v5733 = vadd.f32 %v5177, %v5732
        %5734 = vmatmul.bf16.gmra.mxu0 %v5630
        %v5735 = vpop.f32.mrf.mxu0
        %v5736 = vadd.f32 %v5180, %v5735
        %v5737 = vpop.f32.mrf.mxu0
        %v5738 = vadd.f32 %v5182, %v5737
        %5739 = vmatmul.bf16.gmra.mxu0 %v5631
        %v5740 = vpop.f32.mrf.mxu0
        %v5741 = vadd.f32 %v5185, %v5740
        %v5742 = vpop.f32.mrf.mxu0
        %v5743 = vadd.f32 %v5187, %v5742
        %5744 = vmatmul.bf16.gmra.mxu0 %v5632
        %v5745 = vpop.f32.mrf.mxu0
        %v5746 = vadd.f32 %v5190, %v5745
        %v5747 = vpop.f32.mrf.mxu0
        %v5748 = vadd.f32 %v5192, %v5747
        %5749 = vmatmul.bf16.gmra.mxu0 %v5633
        %v5750 = vpop.f32.mrf.mxu0
        %v5751 = vadd.f32 %v5195, %v5750
        %v5752 = vpop.f32.mrf.mxu0
        %v5753 = vadd.f32 %v5197, %v5752
        %5754 = vmatmul.bf16.gmra.mxu0 %v5634
        %v5755 = vpop.f32.mrf.mxu0
        %v5756 = vadd.f32 %v5200, %v5755
        %v5757 = vpop.f32.mrf.mxu0
        %v5758 = vadd.f32 %v5202, %v5757
        %5759 = vmatmul.bf16.gmra.mxu0 %v5635
        %v5760 = vpop.f32.mrf.mxu0
        %v5761 = vadd.f32 %v5205, %v5760
        %v5762 = vpop.f32.mrf.mxu0
        %v5763 = vadd.f32 %v5207, %v5762
        %5764 = vmatmul.bf16.gmra.mxu0 %v5636
        %v5765 = vpop.f32.mrf.mxu0
        %v5766 = vadd.f32 %v5210, %v5765
        %v5767 = vpop.f32.mrf.mxu0
        %v5768 = vadd.f32 %v5212, %v5767
        %5769 = vmatmul.bf16.gmra.mxu0 %v5637
        %v5770 = vpop.f32.mrf.mxu0
        %v5771 = vadd.f32 %v5215, %v5770
        %v5772 = vpop.f32.mrf.mxu0
        %v5773 = vadd.f32 %v5217, %v5772
        %5774 = vmatmul.bf16.gmra.mxu0 %v5638
        %v5775 = vpop.f32.mrf.mxu0
        %v5776 = vadd.f32 %v5220, %v5775
        %v5777 = vpop.f32.mrf.mxu0
        %v5778 = vadd.f32 %v5222, %v5777
        %5779 = vmatmul.bf16.gmra.mxu0 %v5639
        %v5780 = vpop.f32.mrf.mxu0
        %v5781 = vadd.f32 %v5225, %v5780
        %v5782 = vpop.f32.mrf.mxu0
        %v5783 = vadd.f32 %v5227, %v5782
        %5784 = vmatmul.bf16.gmra.mxu0 %v5640
        %v5785 = vpop.f32.mrf.mxu0
        %v5786 = vadd.f32 %v5230, %v5785
        %v5787 = vpop.f32.mrf.mxu0
        %v5788 = vadd.f32 %v5232, %v5787
        %5789 = vmatmul.bf16.gmra.mxu0 %v5641
        %v5790 = vpop.f32.mrf.mxu0
        %v5791 = vadd.f32 %v5235, %v5790
        %v5792 = vpop.f32.mrf.mxu0
        %v5793 = vadd.f32 %v5237, %v5792
        %5794 = vdwg.mxu0
        %v5795 = vld [vmem:[#allocation2 + $0x4] sm:$0xf]
        %v5796 = vld [vmem:[#allocation2 + $0x8] sm:$0xf]
        %v5797 = vld [vmem:[#allocation2 + $0xc] sm:$0x1]
        %v5798 = vld [vmem:[#allocation2 + $0x14] sm:$0xf]
        %v5799 = vld [vmem:[#allocation2 + $0x18] sm:$0xf]
        %v5800 = vld [vmem:[#allocation2 + $0x1c] sm:$0x1]
        %v5801 = vld [vmem:[#allocation2 + $0x24] sm:$0xf]
        %v5802 = vld [vmem:[#allocation2 + $0x28] sm:$0xf]
        %v5803 = vld [vmem:[#allocation2 + $0x2c] sm:$0x1]
        %v5804 = vld [vmem:[#allocation2 + $0x34] sm:$0xf]
        %v5805 = vld [vmem:[#allocation2 + $0x38] sm:$0xf]
        %v5806 = vld [vmem:[#allocation2 + $0x3c] sm:$0x1]
        %v5807 = vld [vmem:[#allocation2 + $0x44] sm:$0xf]
        %v5808 = vld [vmem:[#allocation2 + $0x48] sm:$0xf]
        %v5809 = vld [vmem:[#allocation2 + $0x4c] sm:$0x1]
        %v5810 = vld [vmem:[#allocation2 + $0x54] sm:$0xf]
        %v5811 = vld [vmem:[#allocation2 + $0x58] sm:$0xf]
        %v5812 = vld [vmem:[#allocation2 + $0x5c] sm:$0x1]
        %v5813 = vld [vmem:[#allocation2 + $0x64] sm:$0xf]
        %v5814 = vld [vmem:[#allocation2 + $0x68] sm:$0xf]
        %v5815 = vld [vmem:[#allocation2 + $0x6c] sm:$0x1]
        %v5816 = vld [vmem:[#allocation2 + $0x74] sm:$0xf]
        %v5817 = vld [vmem:[#allocation2 + $0x78] sm:$0xf]
        %v5818 = vld [vmem:[#allocation2 + $0x7c] sm:$0x1]
        %v5819 = vld [vmem:[#allocation2 + $0x84] sm:$0xf]
        %v5820 = vld [vmem:[#allocation2 + $0x88] sm:$0xf]
        %v5821 = vld [vmem:[#allocation2 + $0x8c] sm:$0x1]
        %v5822 = vld [vmem:[#allocation2 + $0x94] sm:$0xf]
        %v5823 = vld [vmem:[#allocation2 + $0x98] sm:$0xf]
        %v5824 = vld [vmem:[#allocation2 + $0x9c] sm:$0x1]
        %v5825 = vld [vmem:[#allocation2 + $0xa4] sm:$0xf]
        %v5826 = vld [vmem:[#allocation2 + $0xa8] sm:$0xf]
        %v5827 = vld [vmem:[#allocation2 + $0xac] sm:$0x1]
        %v5828 = vld [vmem:[#allocation2 + $0xb4] sm:$0xf]
        %v5829 = vld [vmem:[#allocation2 + $0xb8] sm:$0xf]
        %v5830 = vld [vmem:[#allocation2 + $0xbc] sm:$0x1]
        %v5831 = vld [vmem:[#allocation2 + $0xc4] sm:$0xf]
        %v5832 = vld [vmem:[#allocation2 + $0xc8] sm:$0xf]
        %v5833 = vld [vmem:[#allocation2 + $0xcc] sm:$0x1]
        %v5834 = vld [vmem:[#allocation2 + $0xd4] sm:$0xf]
        %v5835 = vld [vmem:[#allocation2 + $0xd8] sm:$0xf]
        %v5836 = vld [vmem:[#allocation2 + $0xdc] sm:$0x1]
        %v5837 = vld [vmem:[#allocation2 + $0xe4] sm:$0xf]
        %v5838 = vld [vmem:[#allocation2 + $0xe8] sm:$0xf]
        %v5839 = vld [vmem:[#allocation2 + $0xec] sm:$0x1]
        %v5840 = vld [vmem:[#allocation2 + $0xf4] sm:$0xf]
        %v5841 = vld [vmem:[#allocation2 + $0xf8] sm:$0xf]
        %v5842 = vld [vmem:[#allocation2 + $0xfc] sm:$0x1]
        %s5843 = scalar_lea.vmem [#allocation3], 128
        %v5844 = vld [vmem:[%s5843] sm:$0xf]
        %v5845 = vld [vmem:[%s5843 + $0x4] sm:$0xf]
        %v5846 = vld [vmem:[%s5843 + $0x8] sm:$0xf]
        %v5847 = vld [vmem:[%s5843 + $0xc] sm:$0xf]
        %v5848 = vld [vmem:[%s5843 + $0x10] sm:$0xf]
        %v5849 = vld [vmem:[%s5843 + $0x14] sm:$0xf]
        %v5850 = vld [vmem:[%s5843 + $0x18] sm:$0xf]
        %v5851 = vld [vmem:[%s5843 + $0x1c] sm:$0xf]
        %v5852 = vld [vmem:[%s5843 + $0x20] sm:$0xf]
        %v5853 = vld [vmem:[%s5843 + $0x24] sm:$0xf]
        %v5854 = vld [vmem:[%s5843 + $0x28] sm:$0xf]
        %v5855 = vld [vmem:[%s5843 + $0x2c] sm:$0xf]
        %v5856 = vld [vmem:[%s5843 + $0x30] sm:$0xf]
        %v5857 = vld [vmem:[%s5843 + $0x34] sm:$0xf]
        %v5858 = vld [vmem:[%s5843 + $0x38] sm:$0xf]
        %v5859 = vld [vmem:[%s5843 + $0x3c] sm:$0xf]
        %v5861 = vshrl.u32 %v5795, 16
        %v5863 = vrot.slane %v5861, 4
        %v5864 = vshll.u32 %v5795, 16
        %v5866 = vrot.slane %v5864, 5
        %v5867 = vor.u32 %v5863, %v5866
        %v5868 = vrot.slane %v5867, 4
        %v5870 = vshll.u32 %v5796, 16
        %v5872 = vrot.slane %v5870, 5
        %v5873 = vsel %vm486, %v5868, %v5872
        %v5874 = vshrl.u32 %v5796, 16
        %v5876 = vrot.slane %v5874, 4
        %v5877 = vor.u32 %v5876, %v5872
        %v5878 = vrot.slane %v5877, 4
        %v5880 = vshll.u32 %v5797, 16
        %v5882 = vrot.slane %v5880, 5
        %v5883 = vsel %vm486, %v5878, %v5882
        %v5885 = vshrl.u32 %v5798, 16
        %v5887 = vrot.slane %v5885, 4
        %v5888 = vshll.u32 %v5798, 16
        %v5890 = vrot.slane %v5888, 5
        %v5891 = vor.u32 %v5887, %v5890
        %v5892 = vrot.slane %v5891, 4
        %v5894 = vshll.u32 %v5799, 16
        %v5896 = vrot.slane %v5894, 5
        %v5897 = vsel %vm486, %v5892, %v5896
        %v5898 = vshrl.u32 %v5799, 16
        %v5900 = vrot.slane %v5898, 4
        %v5901 = vor.u32 %v5900, %v5896
        %v5902 = vrot.slane %v5901, 4
        %v5904 = vshll.u32 %v5800, 16
        %v5906 = vrot.slane %v5904, 5
        %v5907 = vsel %vm486, %v5902, %v5906
        %v5909 = vshrl.u32 %v5801, 16
        %v5911 = vrot.slane %v5909, 4
        %v5912 = vshll.u32 %v5801, 16
        %v5914 = vrot.slane %v5912, 5
        %v5915 = vor.u32 %v5911, %v5914
        %v5916 = vrot.slane %v5915, 4
        %v5918 = vshll.u32 %v5802, 16
        %v5920 = vrot.slane %v5918, 5
        %v5921 = vsel %vm486, %v5916, %v5920
        %v5922 = vshrl.u32 %v5802, 16
        %v5924 = vrot.slane %v5922, 4
        %v5925 = vor.u32 %v5924, %v5920
        %v5926 = vrot.slane %v5925, 4
        %v5928 = vshll.u32 %v5803, 16
        %v5930 = vrot.slane %v5928, 5
        %v5931 = vsel %vm486, %v5926, %v5930
        %v5933 = vshrl.u32 %v5804, 16
        %v5935 = vrot.slane %v5933, 4
        %v5936 = vshll.u32 %v5804, 16
        %v5938 = vrot.slane %v5936, 5
        %v5939 = vor.u32 %v5935, %v5938
        %v5940 = vrot.slane %v5939, 4
        %v5942 = vshll.u32 %v5805, 16
        %v5944 = vrot.slane %v5942, 5
        %v5945 = vsel %vm486, %v5940, %v5944
        %v5946 = vshrl.u32 %v5805, 16
        %v5948 = vrot.slane %v5946, 4
        %v5949 = vor.u32 %v5948, %v5944
        %v5950 = vrot.slane %v5949, 4
        %v5952 = vshll.u32 %v5806, 16
        %v5954 = vrot.slane %v5952, 5
        %v5955 = vsel %vm486, %v5950, %v5954
        %v5957 = vshrl.u32 %v5807, 16
        %v5959 = vrot.slane %v5957, 4
        %v5960 = vshll.u32 %v5807, 16
        %v5962 = vrot.slane %v5960, 5
        %v5963 = vor.u32 %v5959, %v5962
        %v5964 = vrot.slane %v5963, 4
        %v5966 = vshll.u32 %v5808, 16
        %v5968 = vrot.slane %v5966, 5
        %v5969 = vsel %vm486, %v5964, %v5968
        %v5970 = vshrl.u32 %v5808, 16
        %v5972 = vrot.slane %v5970, 4
        %v5973 = vor.u32 %v5972, %v5968
        %v5974 = vrot.slane %v5973, 4
        %v5976 = vshll.u32 %v5809, 16
        %v5978 = vrot.slane %v5976, 5
        %v5979 = vsel %vm486, %v5974, %v5978
        %v5981 = vshrl.u32 %v5810, 16
        %v5983 = vrot.slane %v5981, 4
        %v5984 = vshll.u32 %v5810, 16
        %v5986 = vrot.slane %v5984, 5
        %v5987 = vor.u32 %v5983, %v5986
        %v5988 = vrot.slane %v5987, 4
        %v5990 = vshll.u32 %v5811, 16
        %v5992 = vrot.slane %v5990, 5
        %v5993 = vsel %vm486, %v5988, %v5992
        %v5994 = vshrl.u32 %v5811, 16
        %v5996 = vrot.slane %v5994, 4
        %v5997 = vor.u32 %v5996, %v5992
        %v5998 = vrot.slane %v5997, 4
        %v6000 = vshll.u32 %v5812, 16
        %v6002 = vrot.slane %v6000, 5
        %v6003 = vsel %vm486, %v5998, %v6002
        %v6005 = vshrl.u32 %v5813, 16
        %v6007 = vrot.slane %v6005, 4
        %v6008 = vshll.u32 %v5813, 16
        %v6010 = vrot.slane %v6008, 5
        %v6011 = vor.u32 %v6007, %v6010
        %v6012 = vrot.slane %v6011, 4
        %v6014 = vshll.u32 %v5814, 16
        %v6016 = vrot.slane %v6014, 5
        %v6017 = vsel %vm486, %v6012, %v6016
        %v6018 = vshrl.u32 %v5814, 16
        %v6020 = vrot.slane %v6018, 4
        %v6021 = vor.u32 %v6020, %v6016
        %v6022 = vrot.slane %v6021, 4
        %v6024 = vshll.u32 %v5815, 16
        %v6026 = vrot.slane %v6024, 5
        %v6027 = vsel %vm486, %v6022, %v6026
        %v6029 = vshrl.u32 %v5816, 16
        %v6031 = vrot.slane %v6029, 4
        %v6032 = vshll.u32 %v5816, 16
        %v6034 = vrot.slane %v6032, 5
        %v6035 = vor.u32 %v6031, %v6034
        %v6036 = vrot.slane %v6035, 4
        %v6038 = vshll.u32 %v5817, 16
        %v6040 = vrot.slane %v6038, 5
        %v6041 = vsel %vm486, %v6036, %v6040
        %v6042 = vshrl.u32 %v5817, 16
        %v6044 = vrot.slane %v6042, 4
        %v6045 = vor.u32 %v6044, %v6040
        %v6046 = vrot.slane %v6045, 4
        %v6048 = vshll.u32 %v5818, 16
        %v6050 = vrot.slane %v6048, 5
        %v6051 = vsel %vm486, %v6046, %v6050
        %v6053 = vshrl.u32 %v5819, 16
        %v6055 = vrot.slane %v6053, 4
        %v6056 = vshll.u32 %v5819, 16
        %v6058 = vrot.slane %v6056, 5
        %v6059 = vor.u32 %v6055, %v6058
        %v6060 = vrot.slane %v6059, 4
        %v6062 = vshll.u32 %v5820, 16
        %v6064 = vrot.slane %v6062, 5
        %v6065 = vsel %vm486, %v6060, %v6064
        %v6066 = vshrl.u32 %v5820, 16
        %v6068 = vrot.slane %v6066, 4
        %v6069 = vor.u32 %v6068, %v6064
        %v6070 = vrot.slane %v6069, 4
        %v6072 = vshll.u32 %v5821, 16
        %v6074 = vrot.slane %v6072, 5
        %v6075 = vsel %vm486, %v6070, %v6074
        %v6077 = vshrl.u32 %v5822, 16
        %v6079 = vrot.slane %v6077, 4
        %v6080 = vshll.u32 %v5822, 16
        %v6082 = vrot.slane %v6080, 5
        %v6083 = vor.u32 %v6079, %v6082
        %v6084 = vrot.slane %v6083, 4
        %v6086 = vshll.u32 %v5823, 16
        %v6088 = vrot.slane %v6086, 5
        %v6089 = vsel %vm486, %v6084, %v6088
        %v6090 = vshrl.u32 %v5823, 16
        %v6092 = vrot.slane %v6090, 4
        %v6093 = vor.u32 %v6092, %v6088
        %v6094 = vrot.slane %v6093, 4
        %v6096 = vshll.u32 %v5824, 16
        %v6098 = vrot.slane %v6096, 5
        %v6099 = vsel %vm486, %v6094, %v6098
        %v6101 = vshrl.u32 %v5825, 16
        %v6103 = vrot.slane %v6101, 4
        %v6104 = vshll.u32 %v5825, 16
        %v6106 = vrot.slane %v6104, 5
        %v6107 = vor.u32 %v6103, %v6106
        %v6108 = vrot.slane %v6107, 4
        %v6110 = vshll.u32 %v5826, 16
        %v6112 = vrot.slane %v6110, 5
        %v6113 = vsel %vm486, %v6108, %v6112
        %v6114 = vshrl.u32 %v5826, 16
        %v6116 = vrot.slane %v6114, 4
        %v6117 = vor.u32 %v6116, %v6112
        %v6118 = vrot.slane %v6117, 4
        %v6120 = vshll.u32 %v5827, 16
        %v6122 = vrot.slane %v6120, 5
        %v6123 = vsel %vm486, %v6118, %v6122
        %v6125 = vshrl.u32 %v5828, 16
        %v6127 = vrot.slane %v6125, 4
        %v6128 = vshll.u32 %v5828, 16
        %v6130 = vrot.slane %v6128, 5
        %v6131 = vor.u32 %v6127, %v6130
        %v6132 = vrot.slane %v6131, 4
        %v6134 = vshll.u32 %v5829, 16
        %v6136 = vrot.slane %v6134, 5
        %v6137 = vsel %vm486, %v6132, %v6136
        %v6138 = vshrl.u32 %v5829, 16
        %v6140 = vrot.slane %v6138, 4
        %v6141 = vor.u32 %v6140, %v6136
        %v6142 = vrot.slane %v6141, 4
        %v6144 = vshll.u32 %v5830, 16
        %v6146 = vrot.slane %v6144, 5
        %v6147 = vsel %vm486, %v6142, %v6146
        %v6149 = vshrl.u32 %v5831, 16
        %v6151 = vrot.slane %v6149, 4
        %v6152 = vshll.u32 %v5831, 16
        %v6154 = vrot.slane %v6152, 5
        %v6155 = vor.u32 %v6151, %v6154
        %v6156 = vrot.slane %v6155, 4
        %v6158 = vshll.u32 %v5832, 16
        %v6160 = vrot.slane %v6158, 5
        %v6161 = vsel %vm486, %v6156, %v6160
        %v6162 = vshrl.u32 %v5832, 16
        %v6164 = vrot.slane %v6162, 4
        %v6165 = vor.u32 %v6164, %v6160
        %v6166 = vrot.slane %v6165, 4
        %v6168 = vshll.u32 %v5833, 16
        %v6170 = vrot.slane %v6168, 5
        %v6171 = vsel %vm486, %v6166, %v6170
        %v6173 = vshrl.u32 %v5834, 16
        %v6175 = vrot.slane %v6173, 4
        %v6176 = vshll.u32 %v5834, 16
        %v6178 = vrot.slane %v6176, 5
        %v6179 = vor.u32 %v6175, %v6178
        %v6180 = vrot.slane %v6179, 4
        %v6182 = vshll.u32 %v5835, 16
        %v6184 = vrot.slane %v6182, 5
        %v6185 = vsel %vm486, %v6180, %v6184
        %v6186 = vshrl.u32 %v5835, 16
        %v6188 = vrot.slane %v6186, 4
        %v6189 = vor.u32 %v6188, %v6184
        %v6190 = vrot.slane %v6189, 4
        %v6192 = vshll.u32 %v5836, 16
        %v6194 = vrot.slane %v6192, 5
        %v6195 = vsel %vm486, %v6190, %v6194
        %v6197 = vshrl.u32 %v5837, 16
        %v6199 = vrot.slane %v6197, 4
        %v6200 = vshll.u32 %v5837, 16
        %v6202 = vrot.slane %v6200, 5
        %v6203 = vor.u32 %v6199, %v6202
        %v6204 = vrot.slane %v6203, 4
        %v6206 = vshll.u32 %v5838, 16
        %v6208 = vrot.slane %v6206, 5
        %v6209 = vsel %vm486, %v6204, %v6208
        %v6210 = vshrl.u32 %v5838, 16
        %v6212 = vrot.slane %v6210, 4
        %v6213 = vor.u32 %v6212, %v6208
        %v6214 = vrot.slane %v6213, 4
        %v6216 = vshll.u32 %v5839, 16
        %v6218 = vrot.slane %v6216, 5
        %v6219 = vsel %vm486, %v6214, %v6218
        %v6221 = vshrl.u32 %v5840, 16
        %v6223 = vrot.slane %v6221, 4
        %v6224 = vshll.u32 %v5840, 16
        %v6226 = vrot.slane %v6224, 5
        %v6227 = vor.u32 %v6223, %v6226
        %v6228 = vrot.slane %v6227, 4
        %v6230 = vshll.u32 %v5841, 16
        %v6232 = vrot.slane %v6230, 5
        %v6233 = vsel %vm486, %v6228, %v6232
        %v6234 = vshrl.u32 %v5841, 16
        %v6236 = vrot.slane %v6234, 4
        %v6237 = vor.u32 %v6236, %v6232
        %v6238 = vrot.slane %v6237, 4
        %v6240 = vshll.u32 %v5842, 16
        %v6242 = vrot.slane %v6240, 5
        %v6243 = vsel %vm486, %v6238, %v6242
        %v6244 = vunpack.c.l.b16 %v5873
        %v6245 = vunpack.c.l.b16 %v5883
        %v6246 = vunpack.c.l.b16 %v5897
        %v6247 = vunpack.c.l.b16 %v5907
        %v6248 = vunpack.c.l.b16 %v5921
        %v6249 = vunpack.c.l.b16 %v5931
        %v6250 = vunpack.c.l.b16 %v5945
        %v6251 = vunpack.c.l.b16 %v5955
        %v6252 = vunpack.c.l.b16 %v5969
        %v6253 = vunpack.c.l.b16 %v5979
        %v6254 = vunpack.c.l.b16 %v5993
        %v6255 = vunpack.c.l.b16 %v6003
        %v6256 = vunpack.c.l.b16 %v6017
        %v6257 = vunpack.c.l.b16 %v6027
        %v6258 = vunpack.c.l.b16 %v6041
        %v6259 = vunpack.c.l.b16 %v6051
        %v6260 = vunpack.c.l.b16 %v6065
        %v6261 = vunpack.c.l.b16 %v6075
        %v6262 = vunpack.c.l.b16 %v6089
        %v6263 = vunpack.c.l.b16 %v6099
        %v6264 = vunpack.c.l.b16 %v6113
        %v6265 = vunpack.c.l.b16 %v6123
        %v6266 = vunpack.c.l.b16 %v6137
        %v6267 = vunpack.c.l.b16 %v6147
        %v6268 = vunpack.c.l.b16 %v6161
        %v6269 = vunpack.c.l.b16 %v6171
        %v6270 = vunpack.c.l.b16 %v6185
        %v6271 = vunpack.c.l.b16 %v6195
        %v6272 = vunpack.c.l.b16 %v6209
        %v6273 = vunpack.c.l.b16 %v6219
        %v6274 = vunpack.c.l.b16 %v6233
        %v6275 = vunpack.c.l.b16 %v6243
        %v6276 = vpack.c.b16 %v6245, %v6244
        %v6277 = vpack.c.b16 %v6247, %v6246
        %v6278 = vpack.c.b16 %v6249, %v6248
        %v6279 = vpack.c.b16 %v6251, %v6250
        %v6280 = vpack.c.b16 %v6253, %v6252
        %v6281 = vpack.c.b16 %v6255, %v6254
        %v6282 = vpack.c.b16 %v6257, %v6256
        %v6283 = vpack.c.b16 %v6259, %v6258
        %v6284 = vpack.c.b16 %v6261, %v6260
        %v6285 = vpack.c.b16 %v6263, %v6262
        %v6286 = vpack.c.b16 %v6265, %v6264
        %v6287 = vpack.c.b16 %v6267, %v6266
        %v6288 = vpack.c.b16 %v6269, %v6268
        %v6289 = vpack.c.b16 %v6271, %v6270
        %v6290 = vpack.c.b16 %v6273, %v6272
        %v6291 = vpack.c.b16 %v6275, %v6274
        %v6324 = vunpack.c.l.b16 %v5844
        %v6325 = vunpack.c.l.b16 %v5845
        %v6326 = vunpack.c.l.b16 %v5846
        %v6327 = vunpack.c.l.b16 %v5847
        %v6328 = vunpack.c.l.b16 %v5848
        %v6329 = vunpack.c.l.b16 %v5849
        %v6330 = vunpack.c.l.b16 %v5850
        %v6331 = vunpack.c.l.b16 %v5851
        %v6332 = vunpack.c.l.b16 %v5852
        %v6333 = vunpack.c.l.b16 %v5853
        %v6334 = vunpack.c.l.b16 %v5854
        %v6335 = vunpack.c.l.b16 %v5855
        %v6336 = vunpack.c.l.b16 %v5856
        %v6337 = vunpack.c.l.b16 %v5857
        %v6338 = vunpack.c.l.b16 %v5858
        %v6339 = vunpack.c.l.b16 %v5859
        %v6340 = vpack.c.b16 %v6325, %v6324
        %v6341 = vpack.c.b16 %v6327, %v6326
        %v6342 = vpack.c.b16 %v6329, %v6328
        %v6343 = vpack.c.b16 %v6331, %v6330
        %v6344 = vpack.c.b16 %v6333, %v6332
        %v6345 = vpack.c.b16 %v6335, %v6334
        %v6346 = vpack.c.b16 %v6337, %v6336
        %v6347 = vpack.c.b16 %v6339, %v6338
        %6356 = vmatpush.bf16.msra.mxu0 %v6347
        %6357 = vmatpush.bf16.msra.mxu0 %v6346
        %6358 = vmatpush.bf16.msra.mxu0 %v6345
        %6359 = vmatpush.bf16.msra.mxu0 %v6344
        %6360 = vmatpush.bf16.msra.mxu0 %v6343
        %6361 = vmatpush.bf16.msra.mxu0 %v6342
        %6362 = vmatpush.bf16.msra.mxu0 %v6341
        %6363 = vmatpush.bf16.msra.mxu0 %v6340
        %6364 = vmatmul.bf16.gmra.mxu0 %v6276
        %v6365 = vpop.f32.mrf.mxu0
        %v6366 = vadd.f32 0.0, %v6365
        %v6367 = vpop.f32.mrf.mxu0
        %v6368 = vadd.f32 0.0, %v6367
        %6369 = vmatmul.bf16.gmra.mxu0 %v6277
        %v6370 = vpop.f32.mrf.mxu0
        %v6371 = vadd.f32 0.0, %v6370
        %v6372 = vpop.f32.mrf.mxu0
        %v6373 = vadd.f32 0.0, %v6372
        %6374 = vmatmul.bf16.gmra.mxu0 %v6278
        %v6375 = vpop.f32.mrf.mxu0
        %v6376 = vadd.f32 0.0, %v6375
        %v6377 = vpop.f32.mrf.mxu0
        %v6378 = vadd.f32 0.0, %v6377
        %6379 = vmatmul.bf16.gmra.mxu0 %v6279
        %v6380 = vpop.f32.mrf.mxu0
        %v6381 = vadd.f32 0.0, %v6380
        %v6382 = vpop.f32.mrf.mxu0
        %v6383 = vadd.f32 0.0, %v6382
        %6384 = vmatmul.bf16.gmra.mxu0 %v6280
        %v6385 = vpop.f32.mrf.mxu0
        %v6386 = vadd.f32 0.0, %v6385
        %v6387 = vpop.f32.mrf.mxu0
        %v6388 = vadd.f32 0.0, %v6387
        %6389 = vmatmul.bf16.gmra.mxu0 %v6281
        %v6390 = vpop.f32.mrf.mxu0
        %v6391 = vadd.f32 0.0, %v6390
        %v6392 = vpop.f32.mrf.mxu0
        %v6393 = vadd.f32 0.0, %v6392
        %6394 = vmatmul.bf16.gmra.mxu0 %v6282
        %v6395 = vpop.f32.mrf.mxu0
        %v6396 = vadd.f32 0.0, %v6395
        %v6397 = vpop.f32.mrf.mxu0
        %v6398 = vadd.f32 0.0, %v6397
        %6399 = vmatmul.bf16.gmra.mxu0 %v6283
        %v6400 = vpop.f32.mrf.mxu0
        %v6401 = vadd.f32 0.0, %v6400
        %v6402 = vpop.f32.mrf.mxu0
        %v6403 = vadd.f32 0.0, %v6402
        %6404 = vmatmul.bf16.gmra.mxu0 %v6284
        %v6405 = vpop.f32.mrf.mxu0
        %v6406 = vadd.f32 0.0, %v6405
        %v6407 = vpop.f32.mrf.mxu0
        %v6408 = vadd.f32 0.0, %v6407
        %6409 = vmatmul.bf16.gmra.mxu0 %v6285
        %v6410 = vpop.f32.mrf.mxu0
        %v6411 = vadd.f32 0.0, %v6410
        %v6412 = vpop.f32.mrf.mxu0
        %v6413 = vadd.f32 0.0, %v6412
        %6414 = vmatmul.bf16.gmra.mxu0 %v6286
        %v6415 = vpop.f32.mrf.mxu0
        %v6416 = vadd.f32 0.0, %v6415
        %v6417 = vpop.f32.mrf.mxu0
        %v6418 = vadd.f32 0.0, %v6417
        %6419 = vmatmul.bf16.gmra.mxu0 %v6287
        %v6420 = vpop.f32.mrf.mxu0
        %v6421 = vadd.f32 0.0, %v6420
        %v6422 = vpop.f32.mrf.mxu0
        %v6423 = vadd.f32 0.0, %v6422
        %6424 = vmatmul.bf16.gmra.mxu0 %v6288
        %v6425 = vpop.f32.mrf.mxu0
        %v6426 = vadd.f32 0.0, %v6425
        %v6427 = vpop.f32.mrf.mxu0
        %v6428 = vadd.f32 0.0, %v6427
        %6429 = vmatmul.bf16.gmra.mxu0 %v6289
        %v6430 = vpop.f32.mrf.mxu0
        %v6431 = vadd.f32 0.0, %v6430
        %v6432 = vpop.f32.mrf.mxu0
        %v6433 = vadd.f32 0.0, %v6432
        %6434 = vmatmul.bf16.gmra.mxu0 %v6290
        %v6435 = vpop.f32.mrf.mxu0
        %v6436 = vadd.f32 0.0, %v6435
        %v6437 = vpop.f32.mrf.mxu0
        %v6438 = vadd.f32 0.0, %v6437
        %6439 = vmatmul.bf16.gmra.mxu0 %v6291
        %v6440 = vpop.f32.mrf.mxu0
        %v6441 = vadd.f32 0.0, %v6440
        %v6442 = vpop.f32.mrf.mxu0
        %v6443 = vadd.f32 0.0, %v6442
        %6444 = vdwg.mxu0
        %v6445 = vadd.f32 %v5716, %v6366
        %v6446 = vadd.f32 %v5718, %v6368
        %v6447 = vadd.f32 %v5721, %v6371
        %v6448 = vadd.f32 %v5723, %v6373
        %v6449 = vadd.f32 %v5726, %v6376
        %v6450 = vadd.f32 %v5728, %v6378
        %v6451 = vadd.f32 %v5731, %v6381
        %v6452 = vadd.f32 %v5733, %v6383
        %v6453 = vadd.f32 %v5736, %v6386
        %v6454 = vadd.f32 %v5738, %v6388
        %v6455 = vadd.f32 %v5741, %v6391
        %v6456 = vadd.f32 %v5743, %v6393
        %v6457 = vadd.f32 %v5746, %v6396
        %v6458 = vadd.f32 %v5748, %v6398
        %v6459 = vadd.f32 %v5751, %v6401
        %v6460 = vadd.f32 %v5753, %v6403
        %v6461 = vadd.f32 %v5756, %v6406
        %v6462 = vadd.f32 %v5758, %v6408
        %v6463 = vadd.f32 %v5761, %v6411
        %v6464 = vadd.f32 %v5763, %v6413
        %v6465 = vadd.f32 %v5766, %v6416
        %v6466 = vadd.f32 %v5768, %v6418
        %v6467 = vadd.f32 %v5771, %v6421
        %v6468 = vadd.f32 %v5773, %v6423
        %v6469 = vadd.f32 %v5776, %v6426
        %v6470 = vadd.f32 %v5778, %v6428
        %v6471 = vadd.f32 %v5781, %v6431
        %v6472 = vadd.f32 %v5783, %v6433
        %v6473 = vadd.f32 %v5786, %v6436
        %v6474 = vadd.f32 %v5788, %v6438
        %v6475 = vadd.f32 %v5791, %v6441
        %v6476 = vadd.f32 %v5793, %v6443
        %v6477 = vld [vmem:[%s4812] sm:$0x8]
        %v6478 = vld [vmem:[%s4812 + $0x4] sm:$0xf]
        %v6479 = vld [vmem:[%s4812 + $0x8] sm:$0xf]
        %v6480 = vld [vmem:[%s4812 + $0x10] sm:$0x8]
        %v6481 = vld [vmem:[%s4812 + $0x14] sm:$0xf]
        %v6482 = vld [vmem:[%s4812 + $0x18] sm:$0xf]
        %v6483 = vld [vmem:[%s4812 + $0x20] sm:$0x8]
        %v6484 = vld [vmem:[%s4812 + $0x24] sm:$0xf]
        %v6485 = vld [vmem:[%s4812 + $0x28] sm:$0xf]
        %v6486 = vld [vmem:[%s4812 + $0x30] sm:$0x8]
        %v6487 = vld [vmem:[%s4812 + $0x34] sm:$0xf]
        %v6488 = vld [vmem:[%s4812 + $0x38] sm:$0xf]
        %v6489 = vld [vmem:[%s4812 + $0x40] sm:$0x8]
        %v6490 = vld [vmem:[%s4812 + $0x44] sm:$0xf]
        %v6491 = vld [vmem:[%s4812 + $0x48] sm:$0xf]
        %v6492 = vld [vmem:[%s4812 + $0x50] sm:$0x8]
        %v6493 = vld [vmem:[%s4812 + $0x54] sm:$0xf]
        %v6494 = vld [vmem:[%s4812 + $0x58] sm:$0xf]
        %v6495 = vld [vmem:[%s4812 + $0x60] sm:$0x8]
        %v6496 = vld [vmem:[%s4812 + $0x64] sm:$0xf]
        %v6497 = vld [vmem:[%s4812 + $0x68] sm:$0xf]
        %v6498 = vld [vmem:[%s4812 + $0x70] sm:$0x8]
        %v6499 = vld [vmem:[%s4812 + $0x74] sm:$0xf]
        %v6500 = vld [vmem:[%s4812 + $0x78] sm:$0xf]
        %v6501 = vld [vmem:[%s4812 + $0x80] sm:$0x8]
        %v6502 = vld [vmem:[%s4812 + $0x84] sm:$0xf]
        %v6503 = vld [vmem:[%s4812 + $0x88] sm:$0xf]
        %v6504 = vld [vmem:[%s4812 + $0x90] sm:$0x8]
        %v6505 = vld [vmem:[%s4812 + $0x94] sm:$0xf]
        %v6506 = vld [vmem:[%s4812 + $0x98] sm:$0xf]
        %v6507 = vld [vmem:[%s4812 + $0xa0] sm:$0x8]
        %v6508 = vld [vmem:[%s4812 + $0xa4] sm:$0xf]
        %v6509 = vld [vmem:[%s4812 + $0xa8] sm:$0xf]
        %v6510 = vld [vmem:[%s4812 + $0xb0] sm:$0x8]
        %v6511 = vld [vmem:[%s4812 + $0xb4] sm:$0xf]
        %v6512 = vld [vmem:[%s4812 + $0xb8] sm:$0xf]
        %v6513 = vld [vmem:[%s4812 + $0xc0] sm:$0x8]
        %v6514 = vld [vmem:[%s4812 + $0xc4] sm:$0xf]
        %v6515 = vld [vmem:[%s4812 + $0xc8] sm:$0xf]
        %v6516 = vld [vmem:[%s4812 + $0xd0] sm:$0x8]
        %v6517 = vld [vmem:[%s4812 + $0xd4] sm:$0xf]
        %v6518 = vld [vmem:[%s4812 + $0xd8] sm:$0xf]
        %v6519 = vld [vmem:[%s4812 + $0xe0] sm:$0x8]
        %v6520 = vld [vmem:[%s4812 + $0xe4] sm:$0xf]
        %v6521 = vld [vmem:[%s4812 + $0xe8] sm:$0xf]
        %v6522 = vld [vmem:[%s4812 + $0xf0] sm:$0x8]
        %v6523 = vld [vmem:[%s4812 + $0xf4] sm:$0xf]
        %v6524 = vld [vmem:[%s4812 + $0xf8] sm:$0xf]
        %s6525 = scalar_lea.vmem [#allocation3], 192
        %v6526 = vld [vmem:[%s6525] sm:$0xf]
        %v6527 = vld [vmem:[%s6525 + $0x4] sm:$0xf]
        %v6528 = vld [vmem:[%s6525 + $0x8] sm:$0xf]
        %v6529 = vld [vmem:[%s6525 + $0xc] sm:$0xf]
        %v6530 = vld [vmem:[%s6525 + $0x10] sm:$0xf]
        %v6531 = vld [vmem:[%s6525 + $0x14] sm:$0xf]
        %v6532 = vld [vmem:[%s6525 + $0x18] sm:$0xf]
        %v6533 = vld [vmem:[%s6525 + $0x1c] sm:$0xf]
        %v6534 = vld [vmem:[%s6525 + $0x20] sm:$0xf]
        %v6535 = vld [vmem:[%s6525 + $0x24] sm:$0xf]
        %v6536 = vld [vmem:[%s6525 + $0x28] sm:$0xf]
        %v6537 = vld [vmem:[%s6525 + $0x2c] sm:$0xf]
        %v6538 = vld [vmem:[%s6525 + $0x30] sm:$0xf]
        %v6539 = vld [vmem:[%s6525 + $0x34] sm:$0xf]
        %v6540 = vld [vmem:[%s6525 + $0x38] sm:$0xf]
        %v6541 = vld [vmem:[%s6525 + $0x3c] sm:$0xf]
        %v6543 = vshrl.u32 %v6477, 16
        %v6545 = vrot.slane %v6543, 7
        %v6546 = vrot.slane %v6545, 4
        %v6548 = vshrl.u32 %v6478, 16
        %v6550 = vrot.slane %v6548, 7
        %v6551 = vshll.u32 %v6478, 16
        %v6553 = vor.u32 %v6550, %v6551
        %v6554 = vsel %vm5241, %v6546, %v6553
        %v6555 = vrot.slane %v6550, 4
        %v6557 = vshrl.u32 %v6479, 16
        %v6559 = vrot.slane %v6557, 7
        %v6560 = vshll.u32 %v6479, 16
        %v6562 = vor.u32 %v6559, %v6560
        %v6563 = vsel %vm5241, %v6555, %v6562
        %v6565 = vshrl.u32 %v6480, 16
        %v6567 = vrot.slane %v6565, 7
        %v6568 = vrot.slane %v6567, 4
        %v6570 = vshrl.u32 %v6481, 16
        %v6572 = vrot.slane %v6570, 7
        %v6573 = vshll.u32 %v6481, 16
        %v6575 = vor.u32 %v6572, %v6573
        %v6576 = vsel %vm5241, %v6568, %v6575
        %v6577 = vrot.slane %v6572, 4
        %v6579 = vshrl.u32 %v6482, 16
        %v6581 = vrot.slane %v6579, 7
        %v6582 = vshll.u32 %v6482, 16
        %v6584 = vor.u32 %v6581, %v6582
        %v6585 = vsel %vm5241, %v6577, %v6584
        %v6587 = vshrl.u32 %v6483, 16
        %v6589 = vrot.slane %v6587, 7
        %v6590 = vrot.slane %v6589, 4
        %v6592 = vshrl.u32 %v6484, 16
        %v6594 = vrot.slane %v6592, 7
        %v6595 = vshll.u32 %v6484, 16
        %v6597 = vor.u32 %v6594, %v6595
        %v6598 = vsel %vm5241, %v6590, %v6597
        %v6599 = vrot.slane %v6594, 4
        %v6601 = vshrl.u32 %v6485, 16
        %v6603 = vrot.slane %v6601, 7
        %v6604 = vshll.u32 %v6485, 16
        %v6606 = vor.u32 %v6603, %v6604
        %v6607 = vsel %vm5241, %v6599, %v6606
        %v6609 = vshrl.u32 %v6486, 16
        %v6611 = vrot.slane %v6609, 7
        %v6612 = vrot.slane %v6611, 4
        %v6614 = vshrl.u32 %v6487, 16
        %v6616 = vrot.slane %v6614, 7
        %v6617 = vshll.u32 %v6487, 16
        %v6619 = vor.u32 %v6616, %v6617
        %v6620 = vsel %vm5241, %v6612, %v6619
        %v6621 = vrot.slane %v6616, 4
        %v6623 = vshrl.u32 %v6488, 16
        %v6625 = vrot.slane %v6623, 7
        %v6626 = vshll.u32 %v6488, 16
        %v6628 = vor.u32 %v6625, %v6626
        %v6629 = vsel %vm5241, %v6621, %v6628
        %v6631 = vshrl.u32 %v6489, 16
        %v6633 = vrot.slane %v6631, 7
        %v6634 = vrot.slane %v6633, 4
        %v6636 = vshrl.u32 %v6490, 16
        %v6638 = vrot.slane %v6636, 7
        %v6639 = vshll.u32 %v6490, 16
        %v6641 = vor.u32 %v6638, %v6639
        %v6642 = vsel %vm5241, %v6634, %v6641
        %v6643 = vrot.slane %v6638, 4
        %v6645 = vshrl.u32 %v6491, 16
        %v6647 = vrot.slane %v6645, 7
        %v6648 = vshll.u32 %v6491, 16
        %v6650 = vor.u32 %v6647, %v6648
        %v6651 = vsel %vm5241, %v6643, %v6650
        %v6653 = vshrl.u32 %v6492, 16
        %v6655 = vrot.slane %v6653, 7
        %v6656 = vrot.slane %v6655, 4
        %v6658 = vshrl.u32 %v6493, 16
        %v6660 = vrot.slane %v6658, 7
        %v6661 = vshll.u32 %v6493, 16
        %v6663 = vor.u32 %v6660, %v6661
        %v6664 = vsel %vm5241, %v6656, %v6663
        %v6665 = vrot.slane %v6660, 4
        %v6667 = vshrl.u32 %v6494, 16
        %v6669 = vrot.slane %v6667, 7
        %v6670 = vshll.u32 %v6494, 16
        %v6672 = vor.u32 %v6669, %v6670
        %v6673 = vsel %vm5241, %v6665, %v6672
        %v6675 = vshrl.u32 %v6495, 16
        %v6677 = vrot.slane %v6675, 7
        %v6678 = vrot.slane %v6677, 4
        %v6680 = vshrl.u32 %v6496, 16
        %v6682 = vrot.slane %v6680, 7
        %v6683 = vshll.u32 %v6496, 16
        %v6685 = vor.u32 %v6682, %v6683
        %v6686 = vsel %vm5241, %v6678, %v6685
        %v6687 = vrot.slane %v6682, 4
        %v6689 = vshrl.u32 %v6497, 16
        %v6691 = vrot.slane %v6689, 7
        %v6692 = vshll.u32 %v6497, 16
        %v6694 = vor.u32 %v6691, %v6692
        %v6695 = vsel %vm5241, %v6687, %v6694
        %v6697 = vshrl.u32 %v6498, 16
        %v6699 = vrot.slane %v6697, 7
        %v6700 = vrot.slane %v6699, 4
        %v6702 = vshrl.u32 %v6499, 16
        %v6704 = vrot.slane %v6702, 7
        %v6705 = vshll.u32 %v6499, 16
        %v6707 = vor.u32 %v6704, %v6705
        %v6708 = vsel %vm5241, %v6700, %v6707
        %v6709 = vrot.slane %v6704, 4
        %v6711 = vshrl.u32 %v6500, 16
        %v6713 = vrot.slane %v6711, 7
        %v6714 = vshll.u32 %v6500, 16
        %v6716 = vor.u32 %v6713, %v6714
        %v6717 = vsel %vm5241, %v6709, %v6716
        %v6719 = vshrl.u32 %v6501, 16
        %v6721 = vrot.slane %v6719, 7
        %v6722 = vrot.slane %v6721, 4
        %v6724 = vshrl.u32 %v6502, 16
        %v6726 = vrot.slane %v6724, 7
        %v6727 = vshll.u32 %v6502, 16
        %v6729 = vor.u32 %v6726, %v6727
        %v6730 = vsel %vm5241, %v6722, %v6729
        %v6731 = vrot.slane %v6726, 4
        %v6733 = vshrl.u32 %v6503, 16
        %v6735 = vrot.slane %v6733, 7
        %v6736 = vshll.u32 %v6503, 16
        %v6738 = vor.u32 %v6735, %v6736
        %v6739 = vsel %vm5241, %v6731, %v6738
        %v6741 = vshrl.u32 %v6504, 16
        %v6743 = vrot.slane %v6741, 7
        %v6744 = vrot.slane %v6743, 4
        %v6746 = vshrl.u32 %v6505, 16
        %v6748 = vrot.slane %v6746, 7
        %v6749 = vshll.u32 %v6505, 16
        %v6751 = vor.u32 %v6748, %v6749
        %v6752 = vsel %vm5241, %v6744, %v6751
        %v6753 = vrot.slane %v6748, 4
        %v6755 = vshrl.u32 %v6506, 16
        %v6757 = vrot.slane %v6755, 7
        %v6758 = vshll.u32 %v6506, 16
        %v6760 = vor.u32 %v6757, %v6758
        %v6761 = vsel %vm5241, %v6753, %v6760
        %v6763 = vshrl.u32 %v6507, 16
        %v6765 = vrot.slane %v6763, 7
        %v6766 = vrot.slane %v6765, 4
        %v6768 = vshrl.u32 %v6508, 16
        %v6770 = vrot.slane %v6768, 7
        %v6771 = vshll.u32 %v6508, 16
        %v6773 = vor.u32 %v6770, %v6771
        %v6774 = vsel %vm5241, %v6766, %v6773
        %v6775 = vrot.slane %v6770, 4
        %v6777 = vshrl.u32 %v6509, 16
        %v6779 = vrot.slane %v6777, 7
        %v6780 = vshll.u32 %v6509, 16
        %v6782 = vor.u32 %v6779, %v6780
        %v6783 = vsel %vm5241, %v6775, %v6782
        %v6785 = vshrl.u32 %v6510, 16
        %v6787 = vrot.slane %v6785, 7
        %v6788 = vrot.slane %v6787, 4
        %v6790 = vshrl.u32 %v6511, 16
        %v6792 = vrot.slane %v6790, 7
        %v6793 = vshll.u32 %v6511, 16
        %v6795 = vor.u32 %v6792, %v6793
        %v6796 = vsel %vm5241, %v6788, %v6795
        %v6797 = vrot.slane %v6792, 4
        %v6799 = vshrl.u32 %v6512, 16
        %v6801 = vrot.slane %v6799, 7
        %v6802 = vshll.u32 %v6512, 16
        %v6804 = vor.u32 %v6801, %v6802
        %v6805 = vsel %vm5241, %v6797, %v6804
        %v6807 = vshrl.u32 %v6513, 16
        %v6809 = vrot.slane %v6807, 7
        %v6810 = vrot.slane %v6809, 4
        %v6812 = vshrl.u32 %v6514, 16
        %v6814 = vrot.slane %v6812, 7
        %v6815 = vshll.u32 %v6514, 16
        %v6817 = vor.u32 %v6814, %v6815
        %v6818 = vsel %vm5241, %v6810, %v6817
        %v6819 = vrot.slane %v6814, 4
        %v6821 = vshrl.u32 %v6515, 16
        %v6823 = vrot.slane %v6821, 7
        %v6824 = vshll.u32 %v6515, 16
        %v6826 = vor.u32 %v6823, %v6824
        %v6827 = vsel %vm5241, %v6819, %v6826
        %v6829 = vshrl.u32 %v6516, 16
        %v6831 = vrot.slane %v6829, 7
        %v6832 = vrot.slane %v6831, 4
        %v6834 = vshrl.u32 %v6517, 16
        %v6836 = vrot.slane %v6834, 7
        %v6837 = vshll.u32 %v6517, 16
        %v6839 = vor.u32 %v6836, %v6837
        %v6840 = vsel %vm5241, %v6832, %v6839
        %v6841 = vrot.slane %v6836, 4
        %v6843 = vshrl.u32 %v6518, 16
        %v6845 = vrot.slane %v6843, 7
        %v6846 = vshll.u32 %v6518, 16
        %v6848 = vor.u32 %v6845, %v6846
        %v6849 = vsel %vm5241, %v6841, %v6848
        %v6851 = vshrl.u32 %v6519, 16
        %v6853 = vrot.slane %v6851, 7
        %v6854 = vrot.slane %v6853, 4
        %v6856 = vshrl.u32 %v6520, 16
        %v6858 = vrot.slane %v6856, 7
        %v6859 = vshll.u32 %v6520, 16
        %v6861 = vor.u32 %v6858, %v6859
        %v6862 = vsel %vm5241, %v6854, %v6861
        %v6863 = vrot.slane %v6858, 4
        %v6865 = vshrl.u32 %v6521, 16
        %v6867 = vrot.slane %v6865, 7
        %v6868 = vshll.u32 %v6521, 16
        %v6870 = vor.u32 %v6867, %v6868
        %v6871 = vsel %vm5241, %v6863, %v6870
        %v6873 = vshrl.u32 %v6522, 16
        %v6875 = vrot.slane %v6873, 7
        %v6876 = vrot.slane %v6875, 4
        %v6878 = vshrl.u32 %v6523, 16
        %v6880 = vrot.slane %v6878, 7
        %v6881 = vshll.u32 %v6523, 16
        %v6883 = vor.u32 %v6880, %v6881
        %v6884 = vsel %vm5241, %v6876, %v6883
        %v6885 = vrot.slane %v6880, 4
        %v6887 = vshrl.u32 %v6524, 16
        %v6889 = vrot.slane %v6887, 7
        %v6890 = vshll.u32 %v6524, 16
        %v6892 = vor.u32 %v6889, %v6890
        %v6893 = vsel %vm5241, %v6885, %v6892
        %v6894 = vunpack.c.l.b16 %v6554
        %v6895 = vunpack.c.l.b16 %v6563
        %v6896 = vunpack.c.l.b16 %v6576
        %v6897 = vunpack.c.l.b16 %v6585
        %v6898 = vunpack.c.l.b16 %v6598
        %v6899 = vunpack.c.l.b16 %v6607
        %v6900 = vunpack.c.l.b16 %v6620
        %v6901 = vunpack.c.l.b16 %v6629
        %v6902 = vunpack.c.l.b16 %v6642
        %v6903 = vunpack.c.l.b16 %v6651
        %v6904 = vunpack.c.l.b16 %v6664
        %v6905 = vunpack.c.l.b16 %v6673
        %v6906 = vunpack.c.l.b16 %v6686
        %v6907 = vunpack.c.l.b16 %v6695
        %v6908 = vunpack.c.l.b16 %v6708
        %v6909 = vunpack.c.l.b16 %v6717
        %v6910 = vunpack.c.l.b16 %v6730
        %v6911 = vunpack.c.l.b16 %v6739
        %v6912 = vunpack.c.l.b16 %v6752
        %v6913 = vunpack.c.l.b16 %v6761
        %v6914 = vunpack.c.l.b16 %v6774
        %v6915 = vunpack.c.l.b16 %v6783
        %v6916 = vunpack.c.l.b16 %v6796
        %v6917 = vunpack.c.l.b16 %v6805
        %v6918 = vunpack.c.l.b16 %v6818
        %v6919 = vunpack.c.l.b16 %v6827
        %v6920 = vunpack.c.l.b16 %v6840
        %v6921 = vunpack.c.l.b16 %v6849
        %v6922 = vunpack.c.l.b16 %v6862
        %v6923 = vunpack.c.l.b16 %v6871
        %v6924 = vunpack.c.l.b16 %v6884
        %v6925 = vunpack.c.l.b16 %v6893
        %v6926 = vpack.c.b16 %v6895, %v6894
        %v6927 = vpack.c.b16 %v6897, %v6896
        %v6928 = vpack.c.b16 %v6899, %v6898
        %v6929 = vpack.c.b16 %v6901, %v6900
        %v6930 = vpack.c.b16 %v6903, %v6902
        %v6931 = vpack.c.b16 %v6905, %v6904
        %v6932 = vpack.c.b16 %v6907, %v6906
        %v6933 = vpack.c.b16 %v6909, %v6908
        %v6934 = vpack.c.b16 %v6911, %v6910
        %v6935 = vpack.c.b16 %v6913, %v6912
        %v6936 = vpack.c.b16 %v6915, %v6914
        %v6937 = vpack.c.b16 %v6917, %v6916
        %v6938 = vpack.c.b16 %v6919, %v6918
        %v6939 = vpack.c.b16 %v6921, %v6920
        %v6940 = vpack.c.b16 %v6923, %v6922
        %v6941 = vpack.c.b16 %v6925, %v6924
        %v6974 = vunpack.c.l.b16 %v6526
        %v6975 = vunpack.c.l.b16 %v6527
        %v6976 = vunpack.c.l.b16 %v6528
        %v6977 = vunpack.c.l.b16 %v6529
        %v6978 = vunpack.c.l.b16 %v6530
        %v6979 = vunpack.c.l.b16 %v6531
        %v6980 = vunpack.c.l.b16 %v6532
        %v6981 = vunpack.c.l.b16 %v6533
        %v6982 = vunpack.c.l.b16 %v6534
        %v6983 = vunpack.c.l.b16 %v6535
        %v6984 = vunpack.c.l.b16 %v6536
        %v6985 = vunpack.c.l.b16 %v6537
        %v6986 = vunpack.c.l.b16 %v6538
        %v6987 = vunpack.c.l.b16 %v6539
        %v6988 = vunpack.c.l.b16 %v6540
        %v6989 = vunpack.c.l.b16 %v6541
        %v6990 = vpack.c.b16 %v6975, %v6974
        %v6991 = vpack.c.b16 %v6977, %v6976
        %v6992 = vpack.c.b16 %v6979, %v6978
        %v6993 = vpack.c.b16 %v6981, %v6980
        %v6994 = vpack.c.b16 %v6983, %v6982
        %v6995 = vpack.c.b16 %v6985, %v6984
        %v6996 = vpack.c.b16 %v6987, %v6986
        %v6997 = vpack.c.b16 %v6989, %v6988
        %7006 = vmatpush.bf16.msra.mxu0 %v6997
        %7007 = vmatpush.bf16.msra.mxu0 %v6996
        %7008 = vmatpush.bf16.msra.mxu0 %v6995
        %7009 = vmatpush.bf16.msra.mxu0 %v6994
        %7010 = vmatpush.bf16.msra.mxu0 %v6993
        %7011 = vmatpush.bf16.msra.mxu0 %v6992
        %7012 = vmatpush.bf16.msra.mxu0 %v6991
        %7013 = vmatpush.bf16.msra.mxu0 %v6990
        %7014 = vmatmul.bf16.gmra.mxu0 %v6926
        %v7015 = vpop.f32.mrf.mxu0
        %v7016 = vadd.f32 0.0, %v7015
        %v7017 = vpop.f32.mrf.mxu0
        %v7018 = vadd.f32 0.0, %v7017
        %7019 = vmatmul.bf16.gmra.mxu0 %v6927
        %v7020 = vpop.f32.mrf.mxu0
        %v7021 = vadd.f32 0.0, %v7020
        %v7022 = vpop.f32.mrf.mxu0
        %v7023 = vadd.f32 0.0, %v7022
        %7024 = vmatmul.bf16.gmra.mxu0 %v6928
        %v7025 = vpop.f32.mrf.mxu0
        %v7026 = vadd.f32 0.0, %v7025
        %v7027 = vpop.f32.mrf.mxu0
        %v7028 = vadd.f32 0.0, %v7027
        %7029 = vmatmul.bf16.gmra.mxu0 %v6929
        %v7030 = vpop.f32.mrf.mxu0
        %v7031 = vadd.f32 0.0, %v7030
        %v7032 = vpop.f32.mrf.mxu0
        %v7033 = vadd.f32 0.0, %v7032
        %7034 = vmatmul.bf16.gmra.mxu0 %v6930
        %v7035 = vpop.f32.mrf.mxu0
        %v7036 = vadd.f32 0.0, %v7035
        %v7037 = vpop.f32.mrf.mxu0
        %v7038 = vadd.f32 0.0, %v7037
        %7039 = vmatmul.bf16.gmra.mxu0 %v6931
        %v7040 = vpop.f32.mrf.mxu0
        %v7041 = vadd.f32 0.0, %v7040
        %v7042 = vpop.f32.mrf.mxu0
        %v7043 = vadd.f32 0.0, %v7042
        %7044 = vmatmul.bf16.gmra.mxu0 %v6932
        %v7045 = vpop.f32.mrf.mxu0
        %v7046 = vadd.f32 0.0, %v7045
        %v7047 = vpop.f32.mrf.mxu0
        %v7048 = vadd.f32 0.0, %v7047
        %7049 = vmatmul.bf16.gmra.mxu0 %v6933
        %v7050 = vpop.f32.mrf.mxu0
        %v7051 = vadd.f32 0.0, %v7050
        %v7052 = vpop.f32.mrf.mxu0
        %v7053 = vadd.f32 0.0, %v7052
        %7054 = vmatmul.bf16.gmra.mxu0 %v6934
        %v7055 = vpop.f32.mrf.mxu0
        %v7056 = vadd.f32 0.0, %v7055
        %v7057 = vpop.f32.mrf.mxu0
        %v7058 = vadd.f32 0.0, %v7057
        %7059 = vmatmul.bf16.gmra.mxu0 %v6935
        %v7060 = vpop.f32.mrf.mxu0
        %v7061 = vadd.f32 0.0, %v7060
        %v7062 = vpop.f32.mrf.mxu0
        %v7063 = vadd.f32 0.0, %v7062
        %7064 = vmatmul.bf16.gmra.mxu0 %v6936
        %v7065 = vpop.f32.mrf.mxu0
        %v7066 = vadd.f32 0.0, %v7065
        %v7067 = vpop.f32.mrf.mxu0
        %v7068 = vadd.f32 0.0, %v7067
        %7069 = vmatmul.bf16.gmra.mxu0 %v6937
        %v7070 = vpop.f32.mrf.mxu0
        %v7071 = vadd.f32 0.0, %v7070
        %v7072 = vpop.f32.mrf.mxu0
        %v7073 = vadd.f32 0.0, %v7072
        %7074 = vmatmul.bf16.gmra.mxu0 %v6938
        %v7075 = vpop.f32.mrf.mxu0
        %v7076 = vadd.f32 0.0, %v7075
        %v7077 = vpop.f32.mrf.mxu0
        %v7078 = vadd.f32 0.0, %v7077
        %7079 = vmatmul.bf16.gmra.mxu0 %v6939
        %v7080 = vpop.f32.mrf.mxu0
        %v7081 = vadd.f32 0.0, %v7080
        %v7082 = vpop.f32.mrf.mxu0
        %v7083 = vadd.f32 0.0, %v7082
        %7084 = vmatmul.bf16.gmra.mxu0 %v6940
        %v7085 = vpop.f32.mrf.mxu0
        %v7086 = vadd.f32 0.0, %v7085
        %v7087 = vpop.f32.mrf.mxu0
        %v7088 = vadd.f32 0.0, %v7087
        %7089 = vmatmul.bf16.gmra.mxu0 %v6941
        %v7090 = vpop.f32.mrf.mxu0
        %v7091 = vadd.f32 0.0, %v7090
        %v7092 = vpop.f32.mrf.mxu0
        %v7093 = vadd.f32 0.0, %v7092
        %7094 = vdwg.mxu0
        %v7095 = vadd.f32 %v6445, %v7016
        %v7096 = vadd.f32 %v6446, %v7018
        %v7097 = vadd.f32 %v6447, %v7021
        %v7098 = vadd.f32 %v6448, %v7023
        %v7099 = vadd.f32 %v6449, %v7026
        %v7100 = vadd.f32 %v6450, %v7028
        %v7101 = vadd.f32 %v6451, %v7031
        %v7102 = vadd.f32 %v6452, %v7033
        %v7103 = vadd.f32 %v6453, %v7036
        %v7104 = vadd.f32 %v6454, %v7038
        %v7105 = vadd.f32 %v6455, %v7041
        %v7106 = vadd.f32 %v6456, %v7043
        %v7107 = vadd.f32 %v6457, %v7046
        %v7108 = vadd.f32 %v6458, %v7048
        %v7109 = vadd.f32 %v6459, %v7051
        %v7110 = vadd.f32 %v6460, %v7053
        %v7111 = vadd.f32 %v6461, %v7056
        %v7112 = vadd.f32 %v6462, %v7058
        %v7113 = vadd.f32 %v6463, %v7061
        %v7114 = vadd.f32 %v6464, %v7063
        %v7115 = vadd.f32 %v6465, %v7066
        %v7116 = vadd.f32 %v6466, %v7068
        %v7117 = vadd.f32 %v6467, %v7071
        %v7118 = vadd.f32 %v6468, %v7073
        %v7119 = vadd.f32 %v6469, %v7076
        %v7120 = vadd.f32 %v6470, %v7078
        %v7121 = vadd.f32 %v6471, %v7081
        %v7122 = vadd.f32 %v6472, %v7083
        %v7123 = vadd.f32 %v6473, %v7086
        %v7124 = vadd.f32 %v6474, %v7088
        %v7125 = vadd.f32 %v6475, %v7091
        %v7126 = vadd.f32 %v6476, %v7093
        %v7127 = vld [vmem:[%s4812 + $0x4] sm:$0xf]
        %v7128 = vld [vmem:[%s4812 + $0x8] sm:$0xf]
        %v7129 = vld [vmem:[%s4812 + $0x14] sm:$0xf]
        %v7130 = vld [vmem:[%s4812 + $0x18] sm:$0xf]
        %v7131 = vld [vmem:[%s4812 + $0x24] sm:$0xf]
        %v7132 = vld [vmem:[%s4812 + $0x28] sm:$0xf]
        %v7133 = vld [vmem:[%s4812 + $0x34] sm:$0xf]
        %v7134 = vld [vmem:[%s4812 + $0x38] sm:$0xf]
        %v7135 = vld [vmem:[%s4812 + $0x44] sm:$0xf]
        %v7136 = vld [vmem:[%s4812 + $0x48] sm:$0xf]
        %v7137 = vld [vmem:[%s4812 + $0x54] sm:$0xf]
        %v7138 = vld [vmem:[%s4812 + $0x58] sm:$0xf]
        %v7139 = vld [vmem:[%s4812 + $0x64] sm:$0xf]
        %v7140 = vld [vmem:[%s4812 + $0x68] sm:$0xf]
        %v7141 = vld [vmem:[%s4812 + $0x74] sm:$0xf]
        %v7142 = vld [vmem:[%s4812 + $0x78] sm:$0xf]
        %v7143 = vld [vmem:[%s4812 + $0x84] sm:$0xf]
        %v7144 = vld [vmem:[%s4812 + $0x88] sm:$0xf]
        %v7145 = vld [vmem:[%s4812 + $0x94] sm:$0xf]
        %v7146 = vld [vmem:[%s4812 + $0x98] sm:$0xf]
        %v7147 = vld [vmem:[%s4812 + $0xa4] sm:$0xf]
        %v7148 = vld [vmem:[%s4812 + $0xa8] sm:$0xf]
        %v7149 = vld [vmem:[%s4812 + $0xb4] sm:$0xf]
        %v7150 = vld [vmem:[%s4812 + $0xb8] sm:$0xf]
        %v7151 = vld [vmem:[%s4812 + $0xc4] sm:$0xf]
        %v7152 = vld [vmem:[%s4812 + $0xc8] sm:$0xf]
        %v7153 = vld [vmem:[%s4812 + $0xd4] sm:$0xf]
        %v7154 = vld [vmem:[%s4812 + $0xd8] sm:$0xf]
        %v7155 = vld [vmem:[%s4812 + $0xe4] sm:$0xf]
        %v7156 = vld [vmem:[%s4812 + $0xe8] sm:$0xf]
        %v7157 = vld [vmem:[%s4812 + $0xf4] sm:$0xf]
        %v7158 = vld [vmem:[%s4812 + $0xf8] sm:$0xf]
        %s7159 = scalar_lea.vmem [#allocation3], 256
        %v7160 = vld [vmem:[%s7159] sm:$0xf]
        %v7161 = vld [vmem:[%s7159 + $0x4] sm:$0xf]
        %v7162 = vld [vmem:[%s7159 + $0x8] sm:$0xf]
        %v7163 = vld [vmem:[%s7159 + $0xc] sm:$0xf]
        %v7164 = vld [vmem:[%s7159 + $0x10] sm:$0xf]
        %v7165 = vld [vmem:[%s7159 + $0x14] sm:$0xf]
        %v7166 = vld [vmem:[%s7159 + $0x18] sm:$0xf]
        %v7167 = vld [vmem:[%s7159 + $0x1c] sm:$0xf]
        %v7168 = vld [vmem:[%s7159 + $0x20] sm:$0xf]
        %v7169 = vld [vmem:[%s7159 + $0x24] sm:$0xf]
        %v7170 = vld [vmem:[%s7159 + $0x28] sm:$0xf]
        %v7171 = vld [vmem:[%s7159 + $0x2c] sm:$0xf]
        %v7172 = vld [vmem:[%s7159 + $0x30] sm:$0xf]
        %v7173 = vld [vmem:[%s7159 + $0x34] sm:$0xf]
        %v7174 = vld [vmem:[%s7159 + $0x38] sm:$0xf]
        %v7175 = vld [vmem:[%s7159 + $0x3c] sm:$0xf]
        %v7208 = vunpack.c.l.b16 %v7127
        %v7209 = vunpack.c.l.b16 %v7128
        %v7210 = vunpack.c.l.b16 %v7129
        %v7211 = vunpack.c.l.b16 %v7130
        %v7212 = vunpack.c.l.b16 %v7131
        %v7213 = vunpack.c.l.b16 %v7132
        %v7214 = vunpack.c.l.b16 %v7133
        %v7215 = vunpack.c.l.b16 %v7134
        %v7216 = vunpack.c.l.b16 %v7135
        %v7217 = vunpack.c.l.b16 %v7136
        %v7218 = vunpack.c.l.b16 %v7137
        %v7219 = vunpack.c.l.b16 %v7138
        %v7220 = vunpack.c.l.b16 %v7139
        %v7221 = vunpack.c.l.b16 %v7140
        %v7222 = vunpack.c.l.b16 %v7141
        %v7223 = vunpack.c.l.b16 %v7142
        %v7224 = vunpack.c.l.b16 %v7143
        %v7225 = vunpack.c.l.b16 %v7144
        %v7226 = vunpack.c.l.b16 %v7145
        %v7227 = vunpack.c.l.b16 %v7146
        %v7228 = vunpack.c.l.b16 %v7147
        %v7229 = vunpack.c.l.b16 %v7148
        %v7230 = vunpack.c.l.b16 %v7149
        %v7231 = vunpack.c.l.b16 %v7150
        %v7232 = vunpack.c.l.b16 %v7151
        %v7233 = vunpack.c.l.b16 %v7152
        %v7234 = vunpack.c.l.b16 %v7153
        %v7235 = vunpack.c.l.b16 %v7154
        %v7236 = vunpack.c.l.b16 %v7155
        %v7237 = vunpack.c.l.b16 %v7156
        %v7238 = vunpack.c.l.b16 %v7157
        %v7239 = vunpack.c.l.b16 %v7158
        %v7240 = vpack.c.b16 %v7209, %v7208
        %v7241 = vpack.c.b16 %v7211, %v7210
        %v7242 = vpack.c.b16 %v7213, %v7212
        %v7243 = vpack.c.b16 %v7215, %v7214
        %v7244 = vpack.c.b16 %v7217, %v7216
        %v7245 = vpack.c.b16 %v7219, %v7218
        %v7246 = vpack.c.b16 %v7221, %v7220
        %v7247 = vpack.c.b16 %v7223, %v7222
        %v7248 = vpack.c.b16 %v7225, %v7224
        %v7249 = vpack.c.b16 %v7227, %v7226
        %v7250 = vpack.c.b16 %v7229, %v7228
        %v7251 = vpack.c.b16 %v7231, %v7230
        %v7252 = vpack.c.b16 %v7233, %v7232
        %v7253 = vpack.c.b16 %v7235, %v7234
        %v7254 = vpack.c.b16 %v7237, %v7236
        %v7255 = vpack.c.b16 %v7239, %v7238
        %v7288 = vunpack.c.l.b16 %v7160
        %v7289 = vunpack.c.l.b16 %v7161
        %v7290 = vunpack.c.l.b16 %v7162
        %v7291 = vunpack.c.l.b16 %v7163
        %v7292 = vunpack.c.l.b16 %v7164
        %v7293 = vunpack.c.l.b16 %v7165
        %v7294 = vunpack.c.l.b16 %v7166
        %v7295 = vunpack.c.l.b16 %v7167
        %v7296 = vunpack.c.l.b16 %v7168
        %v7297 = vunpack.c.l.b16 %v7169
        %v7298 = vunpack.c.l.b16 %v7170
        %v7299 = vunpack.c.l.b16 %v7171
        %v7300 = vunpack.c.l.b16 %v7172
        %v7301 = vunpack.c.l.b16 %v7173
        %v7302 = vunpack.c.l.b16 %v7174
        %v7303 = vunpack.c.l.b16 %v7175
        %v7304 = vpack.c.b16 %v7289, %v7288
        %v7305 = vpack.c.b16 %v7291, %v7290
        %v7306 = vpack.c.b16 %v7293, %v7292
        %v7307 = vpack.c.b16 %v7295, %v7294
        %v7308 = vpack.c.b16 %v7297, %v7296
        %v7309 = vpack.c.b16 %v7299, %v7298
        %v7310 = vpack.c.b16 %v7301, %v7300
        %v7311 = vpack.c.b16 %v7303, %v7302
        %7320 = vmatpush.bf16.msra.mxu0 %v7311
        %7321 = vmatpush.bf16.msra.mxu0 %v7310
        %7322 = vmatpush.bf16.msra.mxu0 %v7309
        %7323 = vmatpush.bf16.msra.mxu0 %v7308
        %7324 = vmatpush.bf16.msra.mxu0 %v7307
        %7325 = vmatpush.bf16.msra.mxu0 %v7306
        %7326 = vmatpush.bf16.msra.mxu0 %v7305
        %7327 = vmatpush.bf16.msra.mxu0 %v7304
        %7328 = vmatmul.bf16.gmra.mxu0 %v7240
        %v7329 = vpop.f32.mrf.mxu0
        %v7330 = vadd.f32 0.0, %v7329
        %v7331 = vpop.f32.mrf.mxu0
        %v7332 = vadd.f32 0.0, %v7331
        %7333 = vmatmul.bf16.gmra.mxu0 %v7241
        %v7334 = vpop.f32.mrf.mxu0
        %v7335 = vadd.f32 0.0, %v7334
        %v7336 = vpop.f32.mrf.mxu0
        %v7337 = vadd.f32 0.0, %v7336
        %7338 = vmatmul.bf16.gmra.mxu0 %v7242
        %v7339 = vpop.f32.mrf.mxu0
        %v7340 = vadd.f32 0.0, %v7339
        %v7341 = vpop.f32.mrf.mxu0
        %v7342 = vadd.f32 0.0, %v7341
        %7343 = vmatmul.bf16.gmra.mxu0 %v7243
        %v7344 = vpop.f32.mrf.mxu0
        %v7345 = vadd.f32 0.0, %v7344
        %v7346 = vpop.f32.mrf.mxu0
        %v7347 = vadd.f32 0.0, %v7346
        %7348 = vmatmul.bf16.gmra.mxu0 %v7244
        %v7349 = vpop.f32.mrf.mxu0
        %v7350 = vadd.f32 0.0, %v7349
        %v7351 = vpop.f32.mrf.mxu0
        %v7352 = vadd.f32 0.0, %v7351
        %7353 = vmatmul.bf16.gmra.mxu0 %v7245
        %v7354 = vpop.f32.mrf.mxu0
        %v7355 = vadd.f32 0.0, %v7354
        %v7356 = vpop.f32.mrf.mxu0
        %v7357 = vadd.f32 0.0, %v7356
        %7358 = vmatmul.bf16.gmra.mxu0 %v7246
        %v7359 = vpop.f32.mrf.mxu0
        %v7360 = vadd.f32 0.0, %v7359
        %v7361 = vpop.f32.mrf.mxu0
        %v7362 = vadd.f32 0.0, %v7361
        %7363 = vmatmul.bf16.gmra.mxu0 %v7247
        %v7364 = vpop.f32.mrf.mxu0
        %v7365 = vadd.f32 0.0, %v7364
        %v7366 = vpop.f32.mrf.mxu0
        %v7367 = vadd.f32 0.0, %v7366
        %7368 = vmatmul.bf16.gmra.mxu0 %v7248
        %v7369 = vpop.f32.mrf.mxu0
        %v7370 = vadd.f32 0.0, %v7369
        %v7371 = vpop.f32.mrf.mxu0
        %v7372 = vadd.f32 0.0, %v7371
        %7373 = vmatmul.bf16.gmra.mxu0 %v7249
        %v7374 = vpop.f32.mrf.mxu0
        %v7375 = vadd.f32 0.0, %v7374
        %v7376 = vpop.f32.mrf.mxu0
        %v7377 = vadd.f32 0.0, %v7376
        %7378 = vmatmul.bf16.gmra.mxu0 %v7250
        %v7379 = vpop.f32.mrf.mxu0
        %v7380 = vadd.f32 0.0, %v7379
        %v7381 = vpop.f32.mrf.mxu0
        %v7382 = vadd.f32 0.0, %v7381
        %7383 = vmatmul.bf16.gmra.mxu0 %v7251
        %v7384 = vpop.f32.mrf.mxu0
        %v7385 = vadd.f32 0.0, %v7384
        %v7386 = vpop.f32.mrf.mxu0
        %v7387 = vadd.f32 0.0, %v7386
        %7388 = vmatmul.bf16.gmra.mxu0 %v7252
        %v7389 = vpop.f32.mrf.mxu0
        %v7390 = vadd.f32 0.0, %v7389
        %v7391 = vpop.f32.mrf.mxu0
        %v7392 = vadd.f32 0.0, %v7391
        %7393 = vmatmul.bf16.gmra.mxu0 %v7253
        %v7394 = vpop.f32.mrf.mxu0
        %v7395 = vadd.f32 0.0, %v7394
        %v7396 = vpop.f32.mrf.mxu0
        %v7397 = vadd.f32 0.0, %v7396
        %7398 = vmatmul.bf16.gmra.mxu0 %v7254
        %v7399 = vpop.f32.mrf.mxu0
        %v7400 = vadd.f32 0.0, %v7399
        %v7401 = vpop.f32.mrf.mxu0
        %v7402 = vadd.f32 0.0, %v7401
        %7403 = vmatmul.bf16.gmra.mxu0 %v7255
        %v7404 = vpop.f32.mrf.mxu0
        %v7405 = vadd.f32 0.0, %v7404
        %v7406 = vpop.f32.mrf.mxu0
        %v7407 = vadd.f32 0.0, %v7406
        %7408 = vdwg.mxu0
        %v7409 = vadd.f32 %v7095, %v7330
        %v7410 = vadd.f32 %v7096, %v7332
        %v7411 = vadd.f32 %v7097, %v7335
        %v7412 = vadd.f32 %v7098, %v7337
        %v7413 = vadd.f32 %v7099, %v7340
        %v7414 = vadd.f32 %v7100, %v7342
        %v7415 = vadd.f32 %v7101, %v7345
        %v7416 = vadd.f32 %v7102, %v7347
        %v7417 = vadd.f32 %v7103, %v7350
        %v7418 = vadd.f32 %v7104, %v7352
        %v7419 = vadd.f32 %v7105, %v7355
        %v7420 = vadd.f32 %v7106, %v7357
        %v7421 = vadd.f32 %v7107, %v7360
        %v7422 = vadd.f32 %v7108, %v7362
        %v7423 = vadd.f32 %v7109, %v7365
        %v7424 = vadd.f32 %v7110, %v7367
        %v7425 = vadd.f32 %v7111, %v7370
        %v7426 = vadd.f32 %v7112, %v7372
        %v7427 = vadd.f32 %v7113, %v7375
        %v7428 = vadd.f32 %v7114, %v7377
        %v7429 = vadd.f32 %v7115, %v7380
        %v7430 = vadd.f32 %v7116, %v7382
        %v7431 = vadd.f32 %v7117, %v7385
        %v7432 = vadd.f32 %v7118, %v7387
        %v7433 = vadd.f32 %v7119, %v7390
        %v7434 = vadd.f32 %v7120, %v7392
        %v7435 = vadd.f32 %v7121, %v7395
        %v7436 = vadd.f32 %v7122, %v7397
        %v7437 = vadd.f32 %v7123, %v7400
        %v7438 = vadd.f32 %v7124, %v7402
        %v7439 = vadd.f32 %v7125, %v7405
        %v7440 = vadd.f32 %v7126, %v7407
        %v7441 = vld [vmem:[%s4812 + $0x4] sm:$0xf]
        %v7442 = vld [vmem:[%s4812 + $0x8] sm:$0xf]
        %v7443 = vld [vmem:[%s4812 + $0xc] sm:$0x1]
        %v7444 = vld [vmem:[%s4812 + $0x14] sm:$0xf]
        %v7445 = vld [vmem:[%s4812 + $0x18] sm:$0xf]
        %v7446 = vld [vmem:[%s4812 + $0x1c] sm:$0x1]
        %v7447 = vld [vmem:[%s4812 + $0x24] sm:$0xf]
        %v7448 = vld [vmem:[%s4812 + $0x28] sm:$0xf]
        %v7449 = vld [vmem:[%s4812 + $0x2c] sm:$0x1]
        %v7450 = vld [vmem:[%s4812 + $0x34] sm:$0xf]
        %v7451 = vld [vmem:[%s4812 + $0x38] sm:$0xf]
        %v7452 = vld [vmem:[%s4812 + $0x3c] sm:$0x1]
        %v7453 = vld [vmem:[%s4812 + $0x44] sm:$0xf]
        %v7454 = vld [vmem:[%s4812 + $0x48] sm:$0xf]
        %v7455 = vld [vmem:[%s4812 + $0x4c] sm:$0x1]
        %v7456 = vld [vmem:[%s4812 + $0x54] sm:$0xf]
        %v7457 = vld [vmem:[%s4812 + $0x58] sm:$0xf]
        %v7458 = vld [vmem:[%s4812 + $0x5c] sm:$0x1]
        %v7459 = vld [vmem:[%s4812 + $0x64] sm:$0xf]
        %v7460 = vld [vmem:[%s4812 + $0x68] sm:$0xf]
        %v7461 = vld [vmem:[%s4812 + $0x6c] sm:$0x1]
        %v7462 = vld [vmem:[%s4812 + $0x74] sm:$0xf]
        %v7463 = vld [vmem:[%s4812 + $0x78] sm:$0xf]
        %v7464 = vld [vmem:[%s4812 + $0x7c] sm:$0x1]
        %v7465 = vld [vmem:[%s4812 + $0x84] sm:$0xf]
        %v7466 = vld [vmem:[%s4812 + $0x88] sm:$0xf]
        %v7467 = vld [vmem:[%s4812 + $0x8c] sm:$0x1]
        %v7468 = vld [vmem:[%s4812 + $0x94] sm:$0xf]
        %v7469 = vld [vmem:[%s4812 + $0x98] sm:$0xf]
        %v7470 = vld [vmem:[%s4812 + $0x9c] sm:$0x1]
        %v7471 = vld [vmem:[%s4812 + $0xa4] sm:$0xf]
        %v7472 = vld [vmem:[%s4812 + $0xa8] sm:$0xf]
        %v7473 = vld [vmem:[%s4812 + $0xac] sm:$0x1]
        %v7474 = vld [vmem:[%s4812 + $0xb4] sm:$0xf]
        %v7475 = vld [vmem:[%s4812 + $0xb8] sm:$0xf]
        %v7476 = vld [vmem:[%s4812 + $0xbc] sm:$0x1]
        %v7477 = vld [vmem:[%s4812 + $0xc4] sm:$0xf]
        %v7478 = vld [vmem:[%s4812 + $0xc8] sm:$0xf]
        %v7479 = vld [vmem:[%s4812 + $0xcc] sm:$0x1]
        %v7480 = vld [vmem:[%s4812 + $0xd4] sm:$0xf]
        %v7481 = vld [vmem:[%s4812 + $0xd8] sm:$0xf]
        %v7482 = vld [vmem:[%s4812 + $0xdc] sm:$0x1]
        %v7483 = vld [vmem:[%s4812 + $0xe4] sm:$0xf]
        %v7484 = vld [vmem:[%s4812 + $0xe8] sm:$0xf]
        %v7485 = vld [vmem:[%s4812 + $0xec] sm:$0x1]
        %v7486 = vld [vmem:[%s4812 + $0xf4] sm:$0xf]
        %v7487 = vld [vmem:[%s4812 + $0xf8] sm:$0xf]
        %v7488 = vld [vmem:[%s4812 + $0xfc] sm:$0x1]
        %s7489 = scalar_lea.vmem [#allocation3], 320
        %v7490 = vld [vmem:[%s7489] sm:$0xf]
        %v7491 = vld [vmem:[%s7489 + $0x4] sm:$0xf]
        %v7492 = vld [vmem:[%s7489 + $0x8] sm:$0xf]
        %v7493 = vld [vmem:[%s7489 + $0xc] sm:$0xf]
        %v7494 = vld [vmem:[%s7489 + $0x10] sm:$0xf]
        %v7495 = vld [vmem:[%s7489 + $0x14] sm:$0xf]
        %v7496 = vld [vmem:[%s7489 + $0x18] sm:$0xf]
        %v7497 = vld [vmem:[%s7489 + $0x1c] sm:$0xf]
        %v7498 = vld [vmem:[%s7489 + $0x20] sm:$0xf]
        %v7499 = vld [vmem:[%s7489 + $0x24] sm:$0xf]
        %v7500 = vld [vmem:[%s7489 + $0x28] sm:$0xf]
        %v7501 = vld [vmem:[%s7489 + $0x2c] sm:$0xf]
        %v7502 = vld [vmem:[%s7489 + $0x30] sm:$0xf]
        %v7503 = vld [vmem:[%s7489 + $0x34] sm:$0xf]
        %v7504 = vld [vmem:[%s7489 + $0x38] sm:$0xf]
        %v7505 = vld [vmem:[%s7489 + $0x3c] sm:$0xf]
        %v7507 = vshrl.u32 %v7441, 16
        %v7509 = vrot.slane %v7507, 4
        %v7510 = vshll.u32 %v7441, 16
        %v7512 = vrot.slane %v7510, 5
        %v7513 = vor.u32 %v7509, %v7512
        %v7514 = vrot.slane %v7513, 4
        %v7516 = vshll.u32 %v7442, 16
        %v7518 = vrot.slane %v7516, 5
        %v7519 = vsel %vm486, %v7514, %v7518
        %v7520 = vshrl.u32 %v7442, 16
        %v7522 = vrot.slane %v7520, 4
        %v7523 = vor.u32 %v7522, %v7518
        %v7524 = vrot.slane %v7523, 4
        %v7526 = vshll.u32 %v7443, 16
        %v7528 = vrot.slane %v7526, 5
        %v7529 = vsel %vm486, %v7524, %v7528
        %v7531 = vshrl.u32 %v7444, 16
        %v7533 = vrot.slane %v7531, 4
        %v7534 = vshll.u32 %v7444, 16
        %v7536 = vrot.slane %v7534, 5
        %v7537 = vor.u32 %v7533, %v7536
        %v7538 = vrot.slane %v7537, 4
        %v7540 = vshll.u32 %v7445, 16
        %v7542 = vrot.slane %v7540, 5
        %v7543 = vsel %vm486, %v7538, %v7542
        %v7544 = vshrl.u32 %v7445, 16
        %v7546 = vrot.slane %v7544, 4
        %v7547 = vor.u32 %v7546, %v7542
        %v7548 = vrot.slane %v7547, 4
        %v7550 = vshll.u32 %v7446, 16
        %v7552 = vrot.slane %v7550, 5
        %v7553 = vsel %vm486, %v7548, %v7552
        %v7555 = vshrl.u32 %v7447, 16
        %v7557 = vrot.slane %v7555, 4
        %v7558 = vshll.u32 %v7447, 16
        %v7560 = vrot.slane %v7558, 5
        %v7561 = vor.u32 %v7557, %v7560
        %v7562 = vrot.slane %v7561, 4
        %v7564 = vshll.u32 %v7448, 16
        %v7566 = vrot.slane %v7564, 5
        %v7567 = vsel %vm486, %v7562, %v7566
        %v7568 = vshrl.u32 %v7448, 16
        %v7570 = vrot.slane %v7568, 4
        %v7571 = vor.u32 %v7570, %v7566
        %v7572 = vrot.slane %v7571, 4
        %v7574 = vshll.u32 %v7449, 16
        %v7576 = vrot.slane %v7574, 5
        %v7577 = vsel %vm486, %v7572, %v7576
        %v7579 = vshrl.u32 %v7450, 16
        %v7581 = vrot.slane %v7579, 4
        %v7582 = vshll.u32 %v7450, 16
        %v7584 = vrot.slane %v7582, 5
        %v7585 = vor.u32 %v7581, %v7584
        %v7586 = vrot.slane %v7585, 4
        %v7588 = vshll.u32 %v7451, 16
        %v7590 = vrot.slane %v7588, 5
        %v7591 = vsel %vm486, %v7586, %v7590
        %v7592 = vshrl.u32 %v7451, 16
        %v7594 = vrot.slane %v7592, 4
        %v7595 = vor.u32 %v7594, %v7590
        %v7596 = vrot.slane %v7595, 4
        %v7598 = vshll.u32 %v7452, 16
        %v7600 = vrot.slane %v7598, 5
        %v7601 = vsel %vm486, %v7596, %v7600
        %v7603 = vshrl.u32 %v7453, 16
        %v7605 = vrot.slane %v7603, 4
        %v7606 = vshll.u32 %v7453, 16
        %v7608 = vrot.slane %v7606, 5
        %v7609 = vor.u32 %v7605, %v7608
        %v7610 = vrot.slane %v7609, 4
        %v7612 = vshll.u32 %v7454, 16
        %v7614 = vrot.slane %v7612, 5
        %v7615 = vsel %vm486, %v7610, %v7614
        %v7616 = vshrl.u32 %v7454, 16
        %v7618 = vrot.slane %v7616, 4
        %v7619 = vor.u32 %v7618, %v7614
        %v7620 = vrot.slane %v7619, 4
        %v7622 = vshll.u32 %v7455, 16
        %v7624 = vrot.slane %v7622, 5
        %v7625 = vsel %vm486, %v7620, %v7624
        %v7627 = vshrl.u32 %v7456, 16
        %v7629 = vrot.slane %v7627, 4
        %v7630 = vshll.u32 %v7456, 16
        %v7632 = vrot.slane %v7630, 5
        %v7633 = vor.u32 %v7629, %v7632
        %v7634 = vrot.slane %v7633, 4
        %v7636 = vshll.u32 %v7457, 16
        %v7638 = vrot.slane %v7636, 5
        %v7639 = vsel %vm486, %v7634, %v7638
        %v7640 = vshrl.u32 %v7457, 16
        %v7642 = vrot.slane %v7640, 4
        %v7643 = vor.u32 %v7642, %v7638
        %v7644 = vrot.slane %v7643, 4
        %v7646 = vshll.u32 %v7458, 16
        %v7648 = vrot.slane %v7646, 5
        %v7649 = vsel %vm486, %v7644, %v7648
        %v7651 = vshrl.u32 %v7459, 16
        %v7653 = vrot.slane %v7651, 4
        %v7654 = vshll.u32 %v7459, 16
        %v7656 = vrot.slane %v7654, 5
        %v7657 = vor.u32 %v7653, %v7656
        %v7658 = vrot.slane %v7657, 4
        %v7660 = vshll.u32 %v7460, 16
        %v7662 = vrot.slane %v7660, 5
        %v7663 = vsel %vm486, %v7658, %v7662
        %v7664 = vshrl.u32 %v7460, 16
        %v7666 = vrot.slane %v7664, 4
        %v7667 = vor.u32 %v7666, %v7662
        %v7668 = vrot.slane %v7667, 4
        %v7670 = vshll.u32 %v7461, 16
        %v7672 = vrot.slane %v7670, 5
        %v7673 = vsel %vm486, %v7668, %v7672
        %v7675 = vshrl.u32 %v7462, 16
        %v7677 = vrot.slane %v7675, 4
        %v7678 = vshll.u32 %v7462, 16
        %v7680 = vrot.slane %v7678, 5
        %v7681 = vor.u32 %v7677, %v7680
        %v7682 = vrot.slane %v7681, 4
        %v7684 = vshll.u32 %v7463, 16
        %v7686 = vrot.slane %v7684, 5
        %v7687 = vsel %vm486, %v7682, %v7686
        %v7688 = vshrl.u32 %v7463, 16
        %v7690 = vrot.slane %v7688, 4
        %v7691 = vor.u32 %v7690, %v7686
        %v7692 = vrot.slane %v7691, 4
        %v7694 = vshll.u32 %v7464, 16
        %v7696 = vrot.slane %v7694, 5
        %v7697 = vsel %vm486, %v7692, %v7696
        %v7699 = vshrl.u32 %v7465, 16
        %v7701 = vrot.slane %v7699, 4
        %v7702 = vshll.u32 %v7465, 16
        %v7704 = vrot.slane %v7702, 5
        %v7705 = vor.u32 %v7701, %v7704
        %v7706 = vrot.slane %v7705, 4
        %v7708 = vshll.u32 %v7466, 16
        %v7710 = vrot.slane %v7708, 5
        %v7711 = vsel %vm486, %v7706, %v7710
        %v7712 = vshrl.u32 %v7466, 16
        %v7714 = vrot.slane %v7712, 4
        %v7715 = vor.u32 %v7714, %v7710
        %v7716 = vrot.slane %v7715, 4
        %v7718 = vshll.u32 %v7467, 16
        %v7720 = vrot.slane %v7718, 5
        %v7721 = vsel %vm486, %v7716, %v7720
        %v7723 = vshrl.u32 %v7468, 16
        %v7725 = vrot.slane %v7723, 4
        %v7726 = vshll.u32 %v7468, 16
        %v7728 = vrot.slane %v7726, 5
        %v7729 = vor.u32 %v7725, %v7728
        %v7730 = vrot.slane %v7729, 4
        %v7732 = vshll.u32 %v7469, 16
        %v7734 = vrot.slane %v7732, 5
        %v7735 = vsel %vm486, %v7730, %v7734
        %v7736 = vshrl.u32 %v7469, 16
        %v7738 = vrot.slane %v7736, 4
        %v7739 = vor.u32 %v7738, %v7734
        %v7740 = vrot.slane %v7739, 4
        %v7742 = vshll.u32 %v7470, 16
        %v7744 = vrot.slane %v7742, 5
        %v7745 = vsel %vm486, %v7740, %v7744
        %v7747 = vshrl.u32 %v7471, 16
        %v7749 = vrot.slane %v7747, 4
        %v7750 = vshll.u32 %v7471, 16
        %v7752 = vrot.slane %v7750, 5
        %v7753 = vor.u32 %v7749, %v7752
        %v7754 = vrot.slane %v7753, 4
        %v7756 = vshll.u32 %v7472, 16
        %v7758 = vrot.slane %v7756, 5
        %v7759 = vsel %vm486, %v7754, %v7758
        %v7760 = vshrl.u32 %v7472, 16
        %v7762 = vrot.slane %v7760, 4
        %v7763 = vor.u32 %v7762, %v7758
        %v7764 = vrot.slane %v7763, 4
        %v7766 = vshll.u32 %v7473, 16
        %v7768 = vrot.slane %v7766, 5
        %v7769 = vsel %vm486, %v7764, %v7768
        %v7771 = vshrl.u32 %v7474, 16
        %v7773 = vrot.slane %v7771, 4
        %v7774 = vshll.u32 %v7474, 16
        %v7776 = vrot.slane %v7774, 5
        %v7777 = vor.u32 %v7773, %v7776
        %v7778 = vrot.slane %v7777, 4
        %v7780 = vshll.u32 %v7475, 16
        %v7782 = vrot.slane %v7780, 5
        %v7783 = vsel %vm486, %v7778, %v7782
        %v7784 = vshrl.u32 %v7475, 16
        %v7786 = vrot.slane %v7784, 4
        %v7787 = vor.u32 %v7786, %v7782
        %v7788 = vrot.slane %v7787, 4
        %v7790 = vshll.u32 %v7476, 16
        %v7792 = vrot.slane %v7790, 5
        %v7793 = vsel %vm486, %v7788, %v7792
        %v7795 = vshrl.u32 %v7477, 16
        %v7797 = vrot.slane %v7795, 4
        %v7798 = vshll.u32 %v7477, 16
        %v7800 = vrot.slane %v7798, 5
        %v7801 = vor.u32 %v7797, %v7800
        %v7802 = vrot.slane %v7801, 4
        %v7804 = vshll.u32 %v7478, 16
        %v7806 = vrot.slane %v7804, 5
        %v7807 = vsel %vm486, %v7802, %v7806
        %v7808 = vshrl.u32 %v7478, 16
        %v7810 = vrot.slane %v7808, 4
        %v7811 = vor.u32 %v7810, %v7806
        %v7812 = vrot.slane %v7811, 4
        %v7814 = vshll.u32 %v7479, 16
        %v7816 = vrot.slane %v7814, 5
        %v7817 = vsel %vm486, %v7812, %v7816
        %v7819 = vshrl.u32 %v7480, 16
        %v7821 = vrot.slane %v7819, 4
        %v7822 = vshll.u32 %v7480, 16
        %v7824 = vrot.slane %v7822, 5
        %v7825 = vor.u32 %v7821, %v7824
        %v7826 = vrot.slane %v7825, 4
        %v7828 = vshll.u32 %v7481, 16
        %v7830 = vrot.slane %v7828, 5
        %v7831 = vsel %vm486, %v7826, %v7830
        %v7832 = vshrl.u32 %v7481, 16
        %v7834 = vrot.slane %v7832, 4
        %v7835 = vor.u32 %v7834, %v7830
        %v7836 = vrot.slane %v7835, 4
        %v7838 = vshll.u32 %v7482, 16
        %v7840 = vrot.slane %v7838, 5
        %v7841 = vsel %vm486, %v7836, %v7840
        %v7843 = vshrl.u32 %v7483, 16
        %v7845 = vrot.slane %v7843, 4
        %v7846 = vshll.u32 %v7483, 16
        %v7848 = vrot.slane %v7846, 5
        %v7849 = vor.u32 %v7845, %v7848
        %v7850 = vrot.slane %v7849, 4
        %v7852 = vshll.u32 %v7484, 16
        %v7854 = vrot.slane %v7852, 5
        %v7855 = vsel %vm486, %v7850, %v7854
        %v7856 = vshrl.u32 %v7484, 16
        %v7858 = vrot.slane %v7856, 4
        %v7859 = vor.u32 %v7858, %v7854
        %v7860 = vrot.slane %v7859, 4
        %v7862 = vshll.u32 %v7485, 16
        %v7864 = vrot.slane %v7862, 5
        %v7865 = vsel %vm486, %v7860, %v7864
        %v7867 = vshrl.u32 %v7486, 16
        %v7869 = vrot.slane %v7867, 4
        %v7870 = vshll.u32 %v7486, 16
        %v7872 = vrot.slane %v7870, 5
        %v7873 = vor.u32 %v7869, %v7872
        %v7874 = vrot.slane %v7873, 4
        %v7876 = vshll.u32 %v7487, 16
        %v7878 = vrot.slane %v7876, 5
        %v7879 = vsel %vm486, %v7874, %v7878
        %v7880 = vshrl.u32 %v7487, 16
        %v7882 = vrot.slane %v7880, 4
        %v7883 = vor.u32 %v7882, %v7878
        %v7884 = vrot.slane %v7883, 4
        %v7886 = vshll.u32 %v7488, 16
        %v7888 = vrot.slane %v7886, 5
        %v7889 = vsel %vm486, %v7884, %v7888
        %v7890 = vunpack.c.l.b16 %v7519
        %v7891 = vunpack.c.l.b16 %v7529
        %v7892 = vunpack.c.l.b16 %v7543
        %v7893 = vunpack.c.l.b16 %v7553
        %v7894 = vunpack.c.l.b16 %v7567
        %v7895 = vunpack.c.l.b16 %v7577
        %v7896 = vunpack.c.l.b16 %v7591
        %v7897 = vunpack.c.l.b16 %v7601
        %v7898 = vunpack.c.l.b16 %v7615
        %v7899 = vunpack.c.l.b16 %v7625
        %v7900 = vunpack.c.l.b16 %v7639
        %v7901 = vunpack.c.l.b16 %v7649
        %v7902 = vunpack.c.l.b16 %v7663
        %v7903 = vunpack.c.l.b16 %v7673
        %v7904 = vunpack.c.l.b16 %v7687
        %v7905 = vunpack.c.l.b16 %v7697
        %v7906 = vunpack.c.l.b16 %v7711
        %v7907 = vunpack.c.l.b16 %v7721
        %v7908 = vunpack.c.l.b16 %v7735
        %v7909 = vunpack.c.l.b16 %v7745
        %v7910 = vunpack.c.l.b16 %v7759
        %v7911 = vunpack.c.l.b16 %v7769
        %v7912 = vunpack.c.l.b16 %v7783
        %v7913 = vunpack.c.l.b16 %v7793
        %v7914 = vunpack.c.l.b16 %v7807
        %v7915 = vunpack.c.l.b16 %v7817
        %v7916 = vunpack.c.l.b16 %v7831
        %v7917 = vunpack.c.l.b16 %v7841
        %v7918 = vunpack.c.l.b16 %v7855
        %v7919 = vunpack.c.l.b16 %v7865
        %v7920 = vunpack.c.l.b16 %v7879
        %v7921 = vunpack.c.l.b16 %v7889
        %v7922 = vpack.c.b16 %v7891, %v7890
        %v7923 = vpack.c.b16 %v7893, %v7892
        %v7924 = vpack.c.b16 %v7895, %v7894
        %v7925 = vpack.c.b16 %v7897, %v7896
        %v7926 = vpack.c.b16 %v7899, %v7898
        %v7927 = vpack.c.b16 %v7901, %v7900
        %v7928 = vpack.c.b16 %v7903, %v7902
        %v7929 = vpack.c.b16 %v7905, %v7904
        %v7930 = vpack.c.b16 %v7907, %v7906
        %v7931 = vpack.c.b16 %v7909, %v7908
        %v7932 = vpack.c.b16 %v7911, %v7910
        %v7933 = vpack.c.b16 %v7913, %v7912
        %v7934 = vpack.c.b16 %v7915, %v7914
        %v7935 = vpack.c.b16 %v7917, %v7916
        %v7936 = vpack.c.b16 %v7919, %v7918
        %v7937 = vpack.c.b16 %v7921, %v7920
        %v7970 = vunpack.c.l.b16 %v7490
        %v7971 = vunpack.c.l.b16 %v7491
        %v7972 = vunpack.c.l.b16 %v7492
        %v7973 = vunpack.c.l.b16 %v7493
        %v7974 = vunpack.c.l.b16 %v7494
        %v7975 = vunpack.c.l.b16 %v7495
        %v7976 = vunpack.c.l.b16 %v7496
        %v7977 = vunpack.c.l.b16 %v7497
        %v7978 = vunpack.c.l.b16 %v7498
        %v7979 = vunpack.c.l.b16 %v7499
        %v7980 = vunpack.c.l.b16 %v7500
        %v7981 = vunpack.c.l.b16 %v7501
        %v7982 = vunpack.c.l.b16 %v7502
        %v7983 = vunpack.c.l.b16 %v7503
        %v7984 = vunpack.c.l.b16 %v7504
        %v7985 = vunpack.c.l.b16 %v7505
        %v7986 = vpack.c.b16 %v7971, %v7970
        %v7987 = vpack.c.b16 %v7973, %v7972
        %v7988 = vpack.c.b16 %v7975, %v7974
        %v7989 = vpack.c.b16 %v7977, %v7976
        %v7990 = vpack.c.b16 %v7979, %v7978
        %v7991 = vpack.c.b16 %v7981, %v7980
        %v7992 = vpack.c.b16 %v7983, %v7982
        %v7993 = vpack.c.b16 %v7985, %v7984
        %8002 = vmatpush.bf16.msra.mxu0 %v7993
        %8003 = vmatpush.bf16.msra.mxu0 %v7992
        %8004 = vmatpush.bf16.msra.mxu0 %v7991
        %8005 = vmatpush.bf16.msra.mxu0 %v7990
        %8006 = vmatpush.bf16.msra.mxu0 %v7989
        %8007 = vmatpush.bf16.msra.mxu0 %v7988
        %8008 = vmatpush.bf16.msra.mxu0 %v7987
        %8009 = vmatpush.bf16.msra.mxu0 %v7986
        %8010 = vmatmul.bf16.gmra.mxu0 %v7922
        %v8011 = vpop.f32.mrf.mxu0
        %v8012 = vadd.f32 0.0, %v8011
        %v8013 = vpop.f32.mrf.mxu0
        %v8014 = vadd.f32 0.0, %v8013
        %8015 = vmatmul.bf16.gmra.mxu0 %v7923
        %v8016 = vpop.f32.mrf.mxu0
        %v8017 = vadd.f32 0.0, %v8016
        %v8018 = vpop.f32.mrf.mxu0
        %v8019 = vadd.f32 0.0, %v8018
        %8020 = vmatmul.bf16.gmra.mxu0 %v7924
        %v8021 = vpop.f32.mrf.mxu0
        %v8022 = vadd.f32 0.0, %v8021
        %v8023 = vpop.f32.mrf.mxu0
        %v8024 = vadd.f32 0.0, %v8023
        %8025 = vmatmul.bf16.gmra.mxu0 %v7925
        %v8026 = vpop.f32.mrf.mxu0
        %v8027 = vadd.f32 0.0, %v8026
        %v8028 = vpop.f32.mrf.mxu0
        %v8029 = vadd.f32 0.0, %v8028
        %8030 = vmatmul.bf16.gmra.mxu0 %v7926
        %v8031 = vpop.f32.mrf.mxu0
        %v8032 = vadd.f32 0.0, %v8031
        %v8033 = vpop.f32.mrf.mxu0
        %v8034 = vadd.f32 0.0, %v8033
        %8035 = vmatmul.bf16.gmra.mxu0 %v7927
        %v8036 = vpop.f32.mrf.mxu0
        %v8037 = vadd.f32 0.0, %v8036
        %v8038 = vpop.f32.mrf.mxu0
        %v8039 = vadd.f32 0.0, %v8038
        %8040 = vmatmul.bf16.gmra.mxu0 %v7928
        %v8041 = vpop.f32.mrf.mxu0
        %v8042 = vadd.f32 0.0, %v8041
        %v8043 = vpop.f32.mrf.mxu0
        %v8044 = vadd.f32 0.0, %v8043
        %8045 = vmatmul.bf16.gmra.mxu0 %v7929
        %v8046 = vpop.f32.mrf.mxu0
        %v8047 = vadd.f32 0.0, %v8046
        %v8048 = vpop.f32.mrf.mxu0
        %v8049 = vadd.f32 0.0, %v8048
        %8050 = vmatmul.bf16.gmra.mxu0 %v7930
        %v8051 = vpop.f32.mrf.mxu0
        %v8052 = vadd.f32 0.0, %v8051
        %v8053 = vpop.f32.mrf.mxu0
        %v8054 = vadd.f32 0.0, %v8053
        %8055 = vmatmul.bf16.gmra.mxu0 %v7931
        %v8056 = vpop.f32.mrf.mxu0
        %v8057 = vadd.f32 0.0, %v8056
        %v8058 = vpop.f32.mrf.mxu0
        %v8059 = vadd.f32 0.0, %v8058
        %8060 = vmatmul.bf16.gmra.mxu0 %v7932
        %v8061 = vpop.f32.mrf.mxu0
        %v8062 = vadd.f32 0.0, %v8061
        %v8063 = vpop.f32.mrf.mxu0
        %v8064 = vadd.f32 0.0, %v8063
        %8065 = vmatmul.bf16.gmra.mxu0 %v7933
        %v8066 = vpop.f32.mrf.mxu0
        %v8067 = vadd.f32 0.0, %v8066
        %v8068 = vpop.f32.mrf.mxu0
        %v8069 = vadd.f32 0.0, %v8068
        %8070 = vmatmul.bf16.gmra.mxu0 %v7934
        %v8071 = vpop.f32.mrf.mxu0
        %v8072 = vadd.f32 0.0, %v8071
        %v8073 = vpop.f32.mrf.mxu0
        %v8074 = vadd.f32 0.0, %v8073
        %8075 = vmatmul.bf16.gmra.mxu0 %v7935
        %v8076 = vpop.f32.mrf.mxu0
        %v8077 = vadd.f32 0.0, %v8076
        %v8078 = vpop.f32.mrf.mxu0
        %v8079 = vadd.f32 0.0, %v8078
        %8080 = vmatmul.bf16.gmra.mxu0 %v7936
        %v8081 = vpop.f32.mrf.mxu0
        %v8082 = vadd.f32 0.0, %v8081
        %v8083 = vpop.f32.mrf.mxu0
        %v8084 = vadd.f32 0.0, %v8083
        %8085 = vmatmul.bf16.gmra.mxu0 %v7937
        %v8086 = vpop.f32.mrf.mxu0
        %v8087 = vadd.f32 0.0, %v8086
        %v8088 = vpop.f32.mrf.mxu0
        %v8089 = vadd.f32 0.0, %v8088
        %8090 = vdwg.mxu0
        %v8091 = vadd.f32 %v7409, %v8012
        %v8092 = vadd.f32 %v7410, %v8014
        %v8093 = vadd.f32 %v7411, %v8017
        %v8094 = vadd.f32 %v7412, %v8019
        %v8095 = vadd.f32 %v7413, %v8022
        %v8096 = vadd.f32 %v7414, %v8024
        %v8097 = vadd.f32 %v7415, %v8027
        %v8098 = vadd.f32 %v7416, %v8029
        %v8099 = vadd.f32 %v7417, %v8032
        %v8100 = vadd.f32 %v7418, %v8034
        %v8101 = vadd.f32 %v7419, %v8037
        %v8102 = vadd.f32 %v7420, %v8039
        %v8103 = vadd.f32 %v7421, %v8042
        %v8104 = vadd.f32 %v7422, %v8044
        %v8105 = vadd.f32 %v7423, %v8047
        %v8106 = vadd.f32 %v7424, %v8049
        %v8107 = vadd.f32 %v7425, %v8052
        %v8108 = vadd.f32 %v7426, %v8054
        %v8109 = vadd.f32 %v7427, %v8057
        %v8110 = vadd.f32 %v7428, %v8059
        %v8111 = vadd.f32 %v7429, %v8062
        %v8112 = vadd.f32 %v7430, %v8064
        %v8113 = vadd.f32 %v7431, %v8067
        %v8114 = vadd.f32 %v7432, %v8069
        %v8115 = vadd.f32 %v7433, %v8072
        %v8116 = vadd.f32 %v7434, %v8074
        %v8117 = vadd.f32 %v7435, %v8077
        %v8118 = vadd.f32 %v7436, %v8079
        %v8119 = vadd.f32 %v7437, %v8082
        %v8120 = vadd.f32 %v7438, %v8084
        %v8121 = vadd.f32 %v7439, %v8087
        %v8122 = vadd.f32 %v7440, %v8089
        %s8123 = scalar_lea.vmem [#allocation2], 32
        %v8124 = vld [vmem:[%s8123] sm:$0x8]
        %v8125 = vld [vmem:[%s8123 + $0x4] sm:$0xf]
        %v8126 = vld [vmem:[%s8123 + $0x8] sm:$0xf]
        %v8127 = vld [vmem:[%s8123 + $0x10] sm:$0x8]
        %v8128 = vld [vmem:[%s8123 + $0x14] sm:$0xf]
        %v8129 = vld [vmem:[%s8123 + $0x18] sm:$0xf]
        %v8130 = vld [vmem:[%s8123 + $0x20] sm:$0x8]
        %v8131 = vld [vmem:[%s8123 + $0x24] sm:$0xf]
        %v8132 = vld [vmem:[%s8123 + $0x28] sm:$0xf]
        %v8133 = vld [vmem:[%s8123 + $0x30] sm:$0x8]
        %v8134 = vld [vmem:[%s8123 + $0x34] sm:$0xf]
        %v8135 = vld [vmem:[%s8123 + $0x38] sm:$0xf]
        %v8136 = vld [vmem:[%s8123 + $0x40] sm:$0x8]
        %v8137 = vld [vmem:[%s8123 + $0x44] sm:$0xf]
        %v8138 = vld [vmem:[%s8123 + $0x48] sm:$0xf]
        %v8139 = vld [vmem:[%s8123 + $0x50] sm:$0x8]
        %v8140 = vld [vmem:[%s8123 + $0x54] sm:$0xf]
        %v8141 = vld [vmem:[%s8123 + $0x58] sm:$0xf]
        %v8142 = vld [vmem:[%s8123 + $0x60] sm:$0x8]
        %v8143 = vld [vmem:[%s8123 + $0x64] sm:$0xf]
        %v8144 = vld [vmem:[%s8123 + $0x68] sm:$0xf]
        %v8145 = vld [vmem:[%s8123 + $0x70] sm:$0x8]
        %v8146 = vld [vmem:[%s8123 + $0x74] sm:$0xf]
        %v8147 = vld [vmem:[%s8123 + $0x78] sm:$0xf]
        %v8148 = vld [vmem:[%s8123 + $0x80] sm:$0x8]
        %v8149 = vld [vmem:[%s8123 + $0x84] sm:$0xf]
        %v8150 = vld [vmem:[%s8123 + $0x88] sm:$0xf]
        %v8151 = vld [vmem:[%s8123 + $0x90] sm:$0x8]
        %v8152 = vld [vmem:[%s8123 + $0x94] sm:$0xf]
        %v8153 = vld [vmem:[%s8123 + $0x98] sm:$0xf]
        %v8154 = vld [vmem:[%s8123 + $0xa0] sm:$0x8]
        %v8155 = vld [vmem:[%s8123 + $0xa4] sm:$0xf]
        %v8156 = vld [vmem:[%s8123 + $0xa8] sm:$0xf]
        %v8157 = vld [vmem:[%s8123 + $0xb0] sm:$0x8]
        %v8158 = vld [vmem:[%s8123 + $0xb4] sm:$0xf]
        %v8159 = vld [vmem:[%s8123 + $0xb8] sm:$0xf]
        %v8160 = vld [vmem:[%s8123 + $0xc0] sm:$0x8]
        %v8161 = vld [vmem:[%s8123 + $0xc4] sm:$0xf]
        %v8162 = vld [vmem:[%s8123 + $0xc8] sm:$0xf]
        %v8163 = vld [vmem:[%s8123 + $0xd0] sm:$0x8]
        %v8164 = vld [vmem:[%s8123 + $0xd4] sm:$0xf]
        %v8165 = vld [vmem:[%s8123 + $0xd8] sm:$0xf]
        %v8166 = vld [vmem:[%s8123 + $0xe0] sm:$0x8]
        %v8167 = vld [vmem:[%s8123 + $0xe4] sm:$0xf]
        %v8168 = vld [vmem:[%s8123 + $0xe8] sm:$0xf]
        %v8169 = vld [vmem:[%s8123 + $0xf0] sm:$0x8]
        %v8170 = vld [vmem:[%s8123 + $0xf4] sm:$0xf]
        %v8171 = vld [vmem:[%s8123 + $0xf8] sm:$0xf]
        %s8172 = scalar_lea.vmem [#allocation3], 384
        %v8173 = vld [vmem:[%s8172] sm:$0xf]
        %v8174 = vld [vmem:[%s8172 + $0x4] sm:$0xf]
        %v8175 = vld [vmem:[%s8172 + $0x8] sm:$0xf]
        %v8176 = vld [vmem:[%s8172 + $0xc] sm:$0xf]
        %v8177 = vld [vmem:[%s8172 + $0x10] sm:$0xf]
        %v8178 = vld [vmem:[%s8172 + $0x14] sm:$0xf]
        %v8179 = vld [vmem:[%s8172 + $0x18] sm:$0xf]
        %v8180 = vld [vmem:[%s8172 + $0x1c] sm:$0xf]
        %v8181 = vld [vmem:[%s8172 + $0x20] sm:$0xf]
        %v8182 = vld [vmem:[%s8172 + $0x24] sm:$0xf]
        %v8183 = vld [vmem:[%s8172 + $0x28] sm:$0xf]
        %v8184 = vld [vmem:[%s8172 + $0x2c] sm:$0xf]
        %v8185 = vld [vmem:[%s8172 + $0x30] sm:$0xf]
        %v8186 = vld [vmem:[%s8172 + $0x34] sm:$0xf]
        %v8187 = vld [vmem:[%s8172 + $0x38] sm:$0xf]
        %v8188 = vld [vmem:[%s8172 + $0x3c] sm:$0xf]
        %v8190 = vshrl.u32 %v8124, 16
        %v8192 = vrot.slane %v8190, 7
        %v8193 = vrot.slane %v8192, 4
        %v8195 = vshrl.u32 %v8125, 16
        %v8197 = vrot.slane %v8195, 7
        %v8198 = vshll.u32 %v8125, 16
        %v8200 = vor.u32 %v8197, %v8198
        %v8201 = vsel %vm5241, %v8193, %v8200
        %v8202 = vrot.slane %v8197, 4
        %v8204 = vshrl.u32 %v8126, 16
        %v8206 = vrot.slane %v8204, 7
        %v8207 = vshll.u32 %v8126, 16
        %v8209 = vor.u32 %v8206, %v8207
        %v8210 = vsel %vm5241, %v8202, %v8209
        %v8212 = vshrl.u32 %v8127, 16
        %v8214 = vrot.slane %v8212, 7
        %v8215 = vrot.slane %v8214, 4
        %v8217 = vshrl.u32 %v8128, 16
        %v8219 = vrot.slane %v8217, 7
        %v8220 = vshll.u32 %v8128, 16
        %v8222 = vor.u32 %v8219, %v8220
        %v8223 = vsel %vm5241, %v8215, %v8222
        %v8224 = vrot.slane %v8219, 4
        %v8226 = vshrl.u32 %v8129, 16
        %v8228 = vrot.slane %v8226, 7
        %v8229 = vshll.u32 %v8129, 16
        %v8231 = vor.u32 %v8228, %v8229
        %v8232 = vsel %vm5241, %v8224, %v8231
        %v8234 = vshrl.u32 %v8130, 16
        %v8236 = vrot.slane %v8234, 7
        %v8237 = vrot.slane %v8236, 4
        %v8239 = vshrl.u32 %v8131, 16
        %v8241 = vrot.slane %v8239, 7
        %v8242 = vshll.u32 %v8131, 16
        %v8244 = vor.u32 %v8241, %v8242
        %v8245 = vsel %vm5241, %v8237, %v8244
        %v8246 = vrot.slane %v8241, 4
        %v8248 = vshrl.u32 %v8132, 16
        %v8250 = vrot.slane %v8248, 7
        %v8251 = vshll.u32 %v8132, 16
        %v8253 = vor.u32 %v8250, %v8251
        %v8254 = vsel %vm5241, %v8246, %v8253
        %v8256 = vshrl.u32 %v8133, 16
        %v8258 = vrot.slane %v8256, 7
        %v8259 = vrot.slane %v8258, 4
        %v8261 = vshrl.u32 %v8134, 16
        %v8263 = vrot.slane %v8261, 7
        %v8264 = vshll.u32 %v8134, 16
        %v8266 = vor.u32 %v8263, %v8264
        %v8267 = vsel %vm5241, %v8259, %v8266
        %v8268 = vrot.slane %v8263, 4
        %v8270 = vshrl.u32 %v8135, 16
        %v8272 = vrot.slane %v8270, 7
        %v8273 = vshll.u32 %v8135, 16
        %v8275 = vor.u32 %v8272, %v8273
        %v8276 = vsel %vm5241, %v8268, %v8275
        %v8278 = vshrl.u32 %v8136, 16
        %v8280 = vrot.slane %v8278, 7
        %v8281 = vrot.slane %v8280, 4
        %v8283 = vshrl.u32 %v8137, 16
        %v8285 = vrot.slane %v8283, 7
        %v8286 = vshll.u32 %v8137, 16
        %v8288 = vor.u32 %v8285, %v8286
        %v8289 = vsel %vm5241, %v8281, %v8288
        %v8290 = vrot.slane %v8285, 4
        %v8292 = vshrl.u32 %v8138, 16
        %v8294 = vrot.slane %v8292, 7
        %v8295 = vshll.u32 %v8138, 16
        %v8297 = vor.u32 %v8294, %v8295
        %v8298 = vsel %vm5241, %v8290, %v8297
        %v8300 = vshrl.u32 %v8139, 16
        %v8302 = vrot.slane %v8300, 7
        %v8303 = vrot.slane %v8302, 4
        %v8305 = vshrl.u32 %v8140, 16
        %v8307 = vrot.slane %v8305, 7
        %v8308 = vshll.u32 %v8140, 16
        %v8310 = vor.u32 %v8307, %v8308
        %v8311 = vsel %vm5241, %v8303, %v8310
        %v8312 = vrot.slane %v8307, 4
        %v8314 = vshrl.u32 %v8141, 16
        %v8316 = vrot.slane %v8314, 7
        %v8317 = vshll.u32 %v8141, 16
        %v8319 = vor.u32 %v8316, %v8317
        %v8320 = vsel %vm5241, %v8312, %v8319
        %v8322 = vshrl.u32 %v8142, 16
        %v8324 = vrot.slane %v8322, 7
        %v8325 = vrot.slane %v8324, 4
        %v8327 = vshrl.u32 %v8143, 16
        %v8329 = vrot.slane %v8327, 7
        %v8330 = vshll.u32 %v8143, 16
        %v8332 = vor.u32 %v8329, %v8330
        %v8333 = vsel %vm5241, %v8325, %v8332
        %v8334 = vrot.slane %v8329, 4
        %v8336 = vshrl.u32 %v8144, 16
        %v8338 = vrot.slane %v8336, 7
        %v8339 = vshll.u32 %v8144, 16
        %v8341 = vor.u32 %v8338, %v8339
        %v8342 = vsel %vm5241, %v8334, %v8341
        %v8344 = vshrl.u32 %v8145, 16
        %v8346 = vrot.slane %v8344, 7
        %v8347 = vrot.slane %v8346, 4
        %v8349 = vshrl.u32 %v8146, 16
        %v8351 = vrot.slane %v8349, 7
        %v8352 = vshll.u32 %v8146, 16
        %v8354 = vor.u32 %v8351, %v8352
        %v8355 = vsel %vm5241, %v8347, %v8354
        %v8356 = vrot.slane %v8351, 4
        %v8358 = vshrl.u32 %v8147, 16
        %v8360 = vrot.slane %v8358, 7
        %v8361 = vshll.u32 %v8147, 16
        %v8363 = vor.u32 %v8360, %v8361
        %v8364 = vsel %vm5241, %v8356, %v8363
        %v8366 = vshrl.u32 %v8148, 16
        %v8368 = vrot.slane %v8366, 7
        %v8369 = vrot.slane %v8368, 4
        %v8371 = vshrl.u32 %v8149, 16
        %v8373 = vrot.slane %v8371, 7
        %v8374 = vshll.u32 %v8149, 16
        %v8376 = vor.u32 %v8373, %v8374
        %v8377 = vsel %vm5241, %v8369, %v8376
        %v8378 = vrot.slane %v8373, 4
        %v8380 = vshrl.u32 %v8150, 16
        %v8382 = vrot.slane %v8380, 7
        %v8383 = vshll.u32 %v8150, 16
        %v8385 = vor.u32 %v8382, %v8383
        %v8386 = vsel %vm5241, %v8378, %v8385
        %v8388 = vshrl.u32 %v8151, 16
        %v8390 = vrot.slane %v8388, 7
        %v8391 = vrot.slane %v8390, 4
        %v8393 = vshrl.u32 %v8152, 16
        %v8395 = vrot.slane %v8393, 7
        %v8396 = vshll.u32 %v8152, 16
        %v8398 = vor.u32 %v8395, %v8396
        %v8399 = vsel %vm5241, %v8391, %v8398
        %v8400 = vrot.slane %v8395, 4
        %v8402 = vshrl.u32 %v8153, 16
        %v8404 = vrot.slane %v8402, 7
        %v8405 = vshll.u32 %v8153, 16
        %v8407 = vor.u32 %v8404, %v8405
        %v8408 = vsel %vm5241, %v8400, %v8407
        %v8410 = vshrl.u32 %v8154, 16
        %v8412 = vrot.slane %v8410, 7
        %v8413 = vrot.slane %v8412, 4
        %v8415 = vshrl.u32 %v8155, 16
        %v8417 = vrot.slane %v8415, 7
        %v8418 = vshll.u32 %v8155, 16
        %v8420 = vor.u32 %v8417, %v8418
        %v8421 = vsel %vm5241, %v8413, %v8420
        %v8422 = vrot.slane %v8417, 4
        %v8424 = vshrl.u32 %v8156, 16
        %v8426 = vrot.slane %v8424, 7
        %v8427 = vshll.u32 %v8156, 16
        %v8429 = vor.u32 %v8426, %v8427
        %v8430 = vsel %vm5241, %v8422, %v8429
        %v8432 = vshrl.u32 %v8157, 16
        %v8434 = vrot.slane %v8432, 7
        %v8435 = vrot.slane %v8434, 4
        %v8437 = vshrl.u32 %v8158, 16
        %v8439 = vrot.slane %v8437, 7
        %v8440 = vshll.u32 %v8158, 16
        %v8442 = vor.u32 %v8439, %v8440
        %v8443 = vsel %vm5241, %v8435, %v8442
        %v8444 = vrot.slane %v8439, 4
        %v8446 = vshrl.u32 %v8159, 16
        %v8448 = vrot.slane %v8446, 7
        %v8449 = vshll.u32 %v8159, 16
        %v8451 = vor.u32 %v8448, %v8449
        %v8452 = vsel %vm5241, %v8444, %v8451
        %v8454 = vshrl.u32 %v8160, 16
        %v8456 = vrot.slane %v8454, 7
        %v8457 = vrot.slane %v8456, 4
        %v8459 = vshrl.u32 %v8161, 16
        %v8461 = vrot.slane %v8459, 7
        %v8462 = vshll.u32 %v8161, 16
        %v8464 = vor.u32 %v8461, %v8462
        %v8465 = vsel %vm5241, %v8457, %v8464
        %v8466 = vrot.slane %v8461, 4
        %v8468 = vshrl.u32 %v8162, 16
        %v8470 = vrot.slane %v8468, 7
        %v8471 = vshll.u32 %v8162, 16
        %v8473 = vor.u32 %v8470, %v8471
        %v8474 = vsel %vm5241, %v8466, %v8473
        %v8476 = vshrl.u32 %v8163, 16
        %v8478 = vrot.slane %v8476, 7
        %v8479 = vrot.slane %v8478, 4
        %v8481 = vshrl.u32 %v8164, 16
        %v8483 = vrot.slane %v8481, 7
        %v8484 = vshll.u32 %v8164, 16
        %v8486 = vor.u32 %v8483, %v8484
        %v8487 = vsel %vm5241, %v8479, %v8486
        %v8488 = vrot.slane %v8483, 4
        %v8490 = vshrl.u32 %v8165, 16
        %v8492 = vrot.slane %v8490, 7
        %v8493 = vshll.u32 %v8165, 16
        %v8495 = vor.u32 %v8492, %v8493
        %v8496 = vsel %vm5241, %v8488, %v8495
        %v8498 = vshrl.u32 %v8166, 16
        %v8500 = vrot.slane %v8498, 7
        %v8501 = vrot.slane %v8500, 4
        %v8503 = vshrl.u32 %v8167, 16
        %v8505 = vrot.slane %v8503, 7
        %v8506 = vshll.u32 %v8167, 16
        %v8508 = vor.u32 %v8505, %v8506
        %v8509 = vsel %vm5241, %v8501, %v8508
        %v8510 = vrot.slane %v8505, 4
        %v8512 = vshrl.u32 %v8168, 16
        %v8514 = vrot.slane %v8512, 7
        %v8515 = vshll.u32 %v8168, 16
        %v8517 = vor.u32 %v8514, %v8515
        %v8518 = vsel %vm5241, %v8510, %v8517
        %v8520 = vshrl.u32 %v8169, 16
        %v8522 = vrot.slane %v8520, 7
        %v8523 = vrot.slane %v8522, 4
        %v8525 = vshrl.u32 %v8170, 16
        %v8527 = vrot.slane %v8525, 7
        %v8528 = vshll.u32 %v8170, 16
        %v8530 = vor.u32 %v8527, %v8528
        %v8531 = vsel %vm5241, %v8523, %v8530
        %v8532 = vrot.slane %v8527, 4
        %v8534 = vshrl.u32 %v8171, 16
        %v8536 = vrot.slane %v8534, 7
        %v8537 = vshll.u32 %v8171, 16
        %v8539 = vor.u32 %v8536, %v8537
        %v8540 = vsel %vm5241, %v8532, %v8539
        %v8541 = vunpack.c.l.b16 %v8201
        %v8542 = vunpack.c.l.b16 %v8210
        %v8543 = vunpack.c.l.b16 %v8223
        %v8544 = vunpack.c.l.b16 %v8232
        %v8545 = vunpack.c.l.b16 %v8245
        %v8546 = vunpack.c.l.b16 %v8254
        %v8547 = vunpack.c.l.b16 %v8267
        %v8548 = vunpack.c.l.b16 %v8276
        %v8549 = vunpack.c.l.b16 %v8289
        %v8550 = vunpack.c.l.b16 %v8298
        %v8551 = vunpack.c.l.b16 %v8311
        %v8552 = vunpack.c.l.b16 %v8320
        %v8553 = vunpack.c.l.b16 %v8333
        %v8554 = vunpack.c.l.b16 %v8342
        %v8555 = vunpack.c.l.b16 %v8355
        %v8556 = vunpack.c.l.b16 %v8364
        %v8557 = vunpack.c.l.b16 %v8377
        %v8558 = vunpack.c.l.b16 %v8386
        %v8559 = vunpack.c.l.b16 %v8399
        %v8560 = vunpack.c.l.b16 %v8408
        %v8561 = vunpack.c.l.b16 %v8421
        %v8562 = vunpack.c.l.b16 %v8430
        %v8563 = vunpack.c.l.b16 %v8443
        %v8564 = vunpack.c.l.b16 %v8452
        %v8565 = vunpack.c.l.b16 %v8465
        %v8566 = vunpack.c.l.b16 %v8474
        %v8567 = vunpack.c.l.b16 %v8487
        %v8568 = vunpack.c.l.b16 %v8496
        %v8569 = vunpack.c.l.b16 %v8509
        %v8570 = vunpack.c.l.b16 %v8518
        %v8571 = vunpack.c.l.b16 %v8531
        %v8572 = vunpack.c.l.b16 %v8540
        %v8573 = vpack.c.b16 %v8542, %v8541
        %v8574 = vpack.c.b16 %v8544, %v8543
        %v8575 = vpack.c.b16 %v8546, %v8545
        %v8576 = vpack.c.b16 %v8548, %v8547
        %v8577 = vpack.c.b16 %v8550, %v8549
        %v8578 = vpack.c.b16 %v8552, %v8551
        %v8579 = vpack.c.b16 %v8554, %v8553
        %v8580 = vpack.c.b16 %v8556, %v8555
        %v8581 = vpack.c.b16 %v8558, %v8557
        %v8582 = vpack.c.b16 %v8560, %v8559
        %v8583 = vpack.c.b16 %v8562, %v8561
        %v8584 = vpack.c.b16 %v8564, %v8563
        %v8585 = vpack.c.b16 %v8566, %v8565
        %v8586 = vpack.c.b16 %v8568, %v8567
        %v8587 = vpack.c.b16 %v8570, %v8569
        %v8588 = vpack.c.b16 %v8572, %v8571
        %v8621 = vunpack.c.l.b16 %v8173
        %v8622 = vunpack.c.l.b16 %v8174
        %v8623 = vunpack.c.l.b16 %v8175
        %v8624 = vunpack.c.l.b16 %v8176
        %v8625 = vunpack.c.l.b16 %v8177
        %v8626 = vunpack.c.l.b16 %v8178
        %v8627 = vunpack.c.l.b16 %v8179
        %v8628 = vunpack.c.l.b16 %v8180
        %v8629 = vunpack.c.l.b16 %v8181
        %v8630 = vunpack.c.l.b16 %v8182
        %v8631 = vunpack.c.l.b16 %v8183
        %v8632 = vunpack.c.l.b16 %v8184
        %v8633 = vunpack.c.l.b16 %v8185
        %v8634 = vunpack.c.l.b16 %v8186
        %v8635 = vunpack.c.l.b16 %v8187
        %v8636 = vunpack.c.l.b16 %v8188
        %v8637 = vpack.c.b16 %v8622, %v8621
        %v8638 = vpack.c.b16 %v8624, %v8623
        %v8639 = vpack.c.b16 %v8626, %v8625
        %v8640 = vpack.c.b16 %v8628, %v8627
        %v8641 = vpack.c.b16 %v8630, %v8629
        %v8642 = vpack.c.b16 %v8632, %v8631
        %v8643 = vpack.c.b16 %v8634, %v8633
        %v8644 = vpack.c.b16 %v8636, %v8635
        %8653 = vmatpush.bf16.msra.mxu0 %v8644
        %8654 = vmatpush.bf16.msra.mxu0 %v8643
        %8655 = vmatpush.bf16.msra.mxu0 %v8642
        %8656 = vmatpush.bf16.msra.mxu0 %v8641
        %8657 = vmatpush.bf16.msra.mxu0 %v8640
        %8658 = vmatpush.bf16.msra.mxu0 %v8639
        %8659 = vmatpush.bf16.msra.mxu0 %v8638
        %8660 = vmatpush.bf16.msra.mxu0 %v8637
        %8661 = vmatmul.bf16.gmra.mxu0 %v8573
        %v8662 = vpop.f32.mrf.mxu0
        %v8663 = vadd.f32 0.0, %v8662
        %v8664 = vpop.f32.mrf.mxu0
        %v8665 = vadd.f32 0.0, %v8664
        %8666 = vmatmul.bf16.gmra.mxu0 %v8574
        %v8667 = vpop.f32.mrf.mxu0
        %v8668 = vadd.f32 0.0, %v8667
        %v8669 = vpop.f32.mrf.mxu0
        %v8670 = vadd.f32 0.0, %v8669
        %8671 = vmatmul.bf16.gmra.mxu0 %v8575
        %v8672 = vpop.f32.mrf.mxu0
        %v8673 = vadd.f32 0.0, %v8672
        %v8674 = vpop.f32.mrf.mxu0
        %v8675 = vadd.f32 0.0, %v8674
        %8676 = vmatmul.bf16.gmra.mxu0 %v8576
        %v8677 = vpop.f32.mrf.mxu0
        %v8678 = vadd.f32 0.0, %v8677
        %v8679 = vpop.f32.mrf.mxu0
        %v8680 = vadd.f32 0.0, %v8679
        %8681 = vmatmul.bf16.gmra.mxu0 %v8577
        %v8682 = vpop.f32.mrf.mxu0
        %v8683 = vadd.f32 0.0, %v8682
        %v8684 = vpop.f32.mrf.mxu0
        %v8685 = vadd.f32 0.0, %v8684
        %8686 = vmatmul.bf16.gmra.mxu0 %v8578
        %v8687 = vpop.f32.mrf.mxu0
        %v8688 = vadd.f32 0.0, %v8687
        %v8689 = vpop.f32.mrf.mxu0
        %v8690 = vadd.f32 0.0, %v8689
        %8691 = vmatmul.bf16.gmra.mxu0 %v8579
        %v8692 = vpop.f32.mrf.mxu0
        %v8693 = vadd.f32 0.0, %v8692
        %v8694 = vpop.f32.mrf.mxu0
        %v8695 = vadd.f32 0.0, %v8694
        %8696 = vmatmul.bf16.gmra.mxu0 %v8580
        %v8697 = vpop.f32.mrf.mxu0
        %v8698 = vadd.f32 0.0, %v8697
        %v8699 = vpop.f32.mrf.mxu0
        %v8700 = vadd.f32 0.0, %v8699
        %8701 = vmatmul.bf16.gmra.mxu0 %v8581
        %v8702 = vpop.f32.mrf.mxu0
        %v8703 = vadd.f32 0.0, %v8702
        %v8704 = vpop.f32.mrf.mxu0
        %v8705 = vadd.f32 0.0, %v8704
        %8706 = vmatmul.bf16.gmra.mxu0 %v8582
        %v8707 = vpop.f32.mrf.mxu0
        %v8708 = vadd.f32 0.0, %v8707
        %v8709 = vpop.f32.mrf.mxu0
        %v8710 = vadd.f32 0.0, %v8709
        %8711 = vmatmul.bf16.gmra.mxu0 %v8583
        %v8712 = vpop.f32.mrf.mxu0
        %v8713 = vadd.f32 0.0, %v8712
        %v8714 = vpop.f32.mrf.mxu0
        %v8715 = vadd.f32 0.0, %v8714
        %8716 = vmatmul.bf16.gmra.mxu0 %v8584
        %v8717 = vpop.f32.mrf.mxu0
        %v8718 = vadd.f32 0.0, %v8717
        %v8719 = vpop.f32.mrf.mxu0
        %v8720 = vadd.f32 0.0, %v8719
        %8721 = vmatmul.bf16.gmra.mxu0 %v8585
        %v8722 = vpop.f32.mrf.mxu0
        %v8723 = vadd.f32 0.0, %v8722
        %v8724 = vpop.f32.mrf.mxu0
        %v8725 = vadd.f32 0.0, %v8724
        %8726 = vmatmul.bf16.gmra.mxu0 %v8586
        %v8727 = vpop.f32.mrf.mxu0
        %v8728 = vadd.f32 0.0, %v8727
        %v8729 = vpop.f32.mrf.mxu0
        %v8730 = vadd.f32 0.0, %v8729
        %8731 = vmatmul.bf16.gmra.mxu0 %v8587
        %v8732 = vpop.f32.mrf.mxu0
        %v8733 = vadd.f32 0.0, %v8732
        %v8734 = vpop.f32.mrf.mxu0
        %v8735 = vadd.f32 0.0, %v8734
        %8736 = vmatmul.bf16.gmra.mxu0 %v8588
        %v8737 = vpop.f32.mrf.mxu0
        %v8738 = vadd.f32 0.0, %v8737
        %v8739 = vpop.f32.mrf.mxu0
        %v8740 = vadd.f32 0.0, %v8739
        %8741 = vdwg.mxu0
        %v8742 = vadd.f32 %v8091, %v8663
        %v8743 = vadd.f32 %v8092, %v8665
        %v8744 = vadd.f32 %v8093, %v8668
        %v8745 = vadd.f32 %v8094, %v8670
        %v8746 = vadd.f32 %v8095, %v8673
        %v8747 = vadd.f32 %v8096, %v8675
        %v8748 = vadd.f32 %v8097, %v8678
        %v8749 = vadd.f32 %v8098, %v8680
        %v8750 = vadd.f32 %v8099, %v8683
        %v8751 = vadd.f32 %v8100, %v8685
        %v8752 = vadd.f32 %v8101, %v8688
        %v8753 = vadd.f32 %v8102, %v8690
        %v8754 = vadd.f32 %v8103, %v8693
        %v8755 = vadd.f32 %v8104, %v8695
        %v8756 = vadd.f32 %v8105, %v8698
        %v8757 = vadd.f32 %v8106, %v8700
        %v8758 = vadd.f32 %v8107, %v8703
        %v8759 = vadd.f32 %v8108, %v8705
        %v8760 = vadd.f32 %v8109, %v8708
        %v8761 = vadd.f32 %v8110, %v8710
        %v8762 = vadd.f32 %v8111, %v8713
        %v8763 = vadd.f32 %v8112, %v8715
        %v8764 = vadd.f32 %v8113, %v8718
        %v8765 = vadd.f32 %v8114, %v8720
        %v8766 = vadd.f32 %v8115, %v8723
        %v8767 = vadd.f32 %v8116, %v8725
        %v8768 = vadd.f32 %v8117, %v8728
        %v8769 = vadd.f32 %v8118, %v8730
        %v8770 = vadd.f32 %v8119, %v8733
        %v8771 = vadd.f32 %v8120, %v8735
        %v8772 = vadd.f32 %v8121, %v8738
        %v8773 = vadd.f32 %v8122, %v8740
        %v8774 = vld [vmem:[%s8123 + $0x4] sm:$0xf]
        %v8775 = vld [vmem:[%s8123 + $0x8] sm:$0xf]
        %v8776 = vld [vmem:[%s8123 + $0x14] sm:$0xf]
        %v8777 = vld [vmem:[%s8123 + $0x18] sm:$0xf]
        %v8778 = vld [vmem:[%s8123 + $0x24] sm:$0xf]
        %v8779 = vld [vmem:[%s8123 + $0x28] sm:$0xf]
        %v8780 = vld [vmem:[%s8123 + $0x34] sm:$0xf]
        %v8781 = vld [vmem:[%s8123 + $0x38] sm:$0xf]
        %v8782 = vld [vmem:[%s8123 + $0x44] sm:$0xf]
        %v8783 = vld [vmem:[%s8123 + $0x48] sm:$0xf]
        %v8784 = vld [vmem:[%s8123 + $0x54] sm:$0xf]
        %v8785 = vld [vmem:[%s8123 + $0x58] sm:$0xf]
        %v8786 = vld [vmem:[%s8123 + $0x64] sm:$0xf]
        %v8787 = vld [vmem:[%s8123 + $0x68] sm:$0xf]
        %v8788 = vld [vmem:[%s8123 + $0x74] sm:$0xf]
        %v8789 = vld [vmem:[%s8123 + $0x78] sm:$0xf]
        %v8790 = vld [vmem:[%s8123 + $0x84] sm:$0xf]
        %v8791 = vld [vmem:[%s8123 + $0x88] sm:$0xf]
        %v8792 = vld [vmem:[%s8123 + $0x94] sm:$0xf]
        %v8793 = vld [vmem:[%s8123 + $0x98] sm:$0xf]
        %v8794 = vld [vmem:[%s8123 + $0xa4] sm:$0xf]
        %v8795 = vld [vmem:[%s8123 + $0xa8] sm:$0xf]
        %v8796 = vld [vmem:[%s8123 + $0xb4] sm:$0xf]
        %v8797 = vld [vmem:[%s8123 + $0xb8] sm:$0xf]
        %v8798 = vld [vmem:[%s8123 + $0xc4] sm:$0xf]
        %v8799 = vld [vmem:[%s8123 + $0xc8] sm:$0xf]
        %v8800 = vld [vmem:[%s8123 + $0xd4] sm:$0xf]
        %v8801 = vld [vmem:[%s8123 + $0xd8] sm:$0xf]
        %v8802 = vld [vmem:[%s8123 + $0xe4] sm:$0xf]
        %v8803 = vld [vmem:[%s8123 + $0xe8] sm:$0xf]
        %v8804 = vld [vmem:[%s8123 + $0xf4] sm:$0xf]
        %v8805 = vld [vmem:[%s8123 + $0xf8] sm:$0xf]
        %s8806 = scalar_lea.vmem [#allocation3], 448
        %v8807 = vld [vmem:[%s8806] sm:$0xf]
        %v8808 = vld [vmem:[%s8806 + $0x4] sm:$0xf]
        %v8809 = vld [vmem:[%s8806 + $0x8] sm:$0xf]
        %v8810 = vld [vmem:[%s8806 + $0xc] sm:$0xf]
        %v8811 = vld [vmem:[%s8806 + $0x10] sm:$0xf]
        %v8812 = vld [vmem:[%s8806 + $0x14] sm:$0xf]
        %v8813 = vld [vmem:[%s8806 + $0x18] sm:$0xf]
        %v8814 = vld [vmem:[%s8806 + $0x1c] sm:$0xf]
        %v8815 = vld [vmem:[%s8806 + $0x20] sm:$0xf]
        %v8816 = vld [vmem:[%s8806 + $0x24] sm:$0xf]
        %v8817 = vld [vmem:[%s8806 + $0x28] sm:$0xf]
        %v8818 = vld [vmem:[%s8806 + $0x2c] sm:$0xf]
        %v8819 = vld [vmem:[%s8806 + $0x30] sm:$0xf]
        %v8820 = vld [vmem:[%s8806 + $0x34] sm:$0xf]
        %v8821 = vld [vmem:[%s8806 + $0x38] sm:$0xf]
        %v8822 = vld [vmem:[%s8806 + $0x3c] sm:$0xf]
        %v8855 = vunpack.c.l.b16 %v8774
        %v8856 = vunpack.c.l.b16 %v8775
        %v8857 = vunpack.c.l.b16 %v8776
        %v8858 = vunpack.c.l.b16 %v8777
        %v8859 = vunpack.c.l.b16 %v8778
        %v8860 = vunpack.c.l.b16 %v8779
        %v8861 = vunpack.c.l.b16 %v8780
        %v8862 = vunpack.c.l.b16 %v8781
        %v8863 = vunpack.c.l.b16 %v8782
        %v8864 = vunpack.c.l.b16 %v8783
        %v8865 = vunpack.c.l.b16 %v8784
        %v8866 = vunpack.c.l.b16 %v8785
        %v8867 = vunpack.c.l.b16 %v8786
        %v8868 = vunpack.c.l.b16 %v8787
        %v8869 = vunpack.c.l.b16 %v8788
        %v8870 = vunpack.c.l.b16 %v8789
        %v8871 = vunpack.c.l.b16 %v8790
        %v8872 = vunpack.c.l.b16 %v8791
        %v8873 = vunpack.c.l.b16 %v8792
        %v8874 = vunpack.c.l.b16 %v8793
        %v8875 = vunpack.c.l.b16 %v8794
        %v8876 = vunpack.c.l.b16 %v8795
        %v8877 = vunpack.c.l.b16 %v8796
        %v8878 = vunpack.c.l.b16 %v8797
        %v8879 = vunpack.c.l.b16 %v8798
        %v8880 = vunpack.c.l.b16 %v8799
        %v8881 = vunpack.c.l.b16 %v8800
        %v8882 = vunpack.c.l.b16 %v8801
        %v8883 = vunpack.c.l.b16 %v8802
        %v8884 = vunpack.c.l.b16 %v8803
        %v8885 = vunpack.c.l.b16 %v8804
        %v8886 = vunpack.c.l.b16 %v8805
        %v8887 = vpack.c.b16 %v8856, %v8855
        %v8888 = vpack.c.b16 %v8858, %v8857
        %v8889 = vpack.c.b16 %v8860, %v8859
        %v8890 = vpack.c.b16 %v8862, %v8861
        %v8891 = vpack.c.b16 %v8864, %v8863
        %v8892 = vpack.c.b16 %v8866, %v8865
        %v8893 = vpack.c.b16 %v8868, %v8867
        %v8894 = vpack.c.b16 %v8870, %v8869
        %v8895 = vpack.c.b16 %v8872, %v8871
        %v8896 = vpack.c.b16 %v8874, %v8873
        %v8897 = vpack.c.b16 %v8876, %v8875
        %v8898 = vpack.c.b16 %v8878, %v8877
        %v8899 = vpack.c.b16 %v8880, %v8879
        %v8900 = vpack.c.b16 %v8882, %v8881
        %v8901 = vpack.c.b16 %v8884, %v8883
        %v8902 = vpack.c.b16 %v8886, %v8885
        %v8935 = vunpack.c.l.b16 %v8807
        %v8936 = vunpack.c.l.b16 %v8808
        %v8937 = vunpack.c.l.b16 %v8809
        %v8938 = vunpack.c.l.b16 %v8810
        %v8939 = vunpack.c.l.b16 %v8811
        %v8940 = vunpack.c.l.b16 %v8812
        %v8941 = vunpack.c.l.b16 %v8813
        %v8942 = vunpack.c.l.b16 %v8814
        %v8943 = vunpack.c.l.b16 %v8815
        %v8944 = vunpack.c.l.b16 %v8816
        %v8945 = vunpack.c.l.b16 %v8817
        %v8946 = vunpack.c.l.b16 %v8818
        %v8947 = vunpack.c.l.b16 %v8819
        %v8948 = vunpack.c.l.b16 %v8820
        %v8949 = vunpack.c.l.b16 %v8821
        %v8950 = vunpack.c.l.b16 %v8822
        %v8951 = vpack.c.b16 %v8936, %v8935
        %v8952 = vpack.c.b16 %v8938, %v8937
        %v8953 = vpack.c.b16 %v8940, %v8939
        %v8954 = vpack.c.b16 %v8942, %v8941
        %v8955 = vpack.c.b16 %v8944, %v8943
        %v8956 = vpack.c.b16 %v8946, %v8945
        %v8957 = vpack.c.b16 %v8948, %v8947
        %v8958 = vpack.c.b16 %v8950, %v8949
        %8967 = vmatpush.bf16.msra.mxu0 %v8958
        %8968 = vmatpush.bf16.msra.mxu0 %v8957
        %8969 = vmatpush.bf16.msra.mxu0 %v8956
        %8970 = vmatpush.bf16.msra.mxu0 %v8955
        %8971 = vmatpush.bf16.msra.mxu0 %v8954
        %8972 = vmatpush.bf16.msra.mxu0 %v8953
        %8973 = vmatpush.bf16.msra.mxu0 %v8952
        %8974 = vmatpush.bf16.msra.mxu0 %v8951
        %8975 = vmatmul.bf16.gmra.mxu0 %v8887
        %v8976 = vpop.f32.mrf.mxu0
        %v8977 = vadd.f32 0.0, %v8976
        %v8978 = vpop.f32.mrf.mxu0
        %v8979 = vadd.f32 0.0, %v8978
        %8980 = vmatmul.bf16.gmra.mxu0 %v8888
        %v8981 = vpop.f32.mrf.mxu0
        %v8982 = vadd.f32 0.0, %v8981
        %v8983 = vpop.f32.mrf.mxu0
        %v8984 = vadd.f32 0.0, %v8983
        %8985 = vmatmul.bf16.gmra.mxu0 %v8889
        %v8986 = vpop.f32.mrf.mxu0
        %v8987 = vadd.f32 0.0, %v8986
        %v8988 = vpop.f32.mrf.mxu0
        %v8989 = vadd.f32 0.0, %v8988
        %8990 = vmatmul.bf16.gmra.mxu0 %v8890
        %v8991 = vpop.f32.mrf.mxu0
        %v8992 = vadd.f32 0.0, %v8991
        %v8993 = vpop.f32.mrf.mxu0
        %v8994 = vadd.f32 0.0, %v8993
        %8995 = vmatmul.bf16.gmra.mxu0 %v8891
        %v8996 = vpop.f32.mrf.mxu0
        %v8997 = vadd.f32 0.0, %v8996
        %v8998 = vpop.f32.mrf.mxu0
        %v8999 = vadd.f32 0.0, %v8998
        %9000 = vmatmul.bf16.gmra.mxu0 %v8892
        %v9001 = vpop.f32.mrf.mxu0
        %v9002 = vadd.f32 0.0, %v9001
        %v9003 = vpop.f32.mrf.mxu0
        %v9004 = vadd.f32 0.0, %v9003
        %9005 = vmatmul.bf16.gmra.mxu0 %v8893
        %v9006 = vpop.f32.mrf.mxu0
        %v9007 = vadd.f32 0.0, %v9006
        %v9008 = vpop.f32.mrf.mxu0
        %v9009 = vadd.f32 0.0, %v9008
        %9010 = vmatmul.bf16.gmra.mxu0 %v8894
        %v9011 = vpop.f32.mrf.mxu0
        %v9012 = vadd.f32 0.0, %v9011
        %v9013 = vpop.f32.mrf.mxu0
        %v9014 = vadd.f32 0.0, %v9013
        %9015 = vmatmul.bf16.gmra.mxu0 %v8895
        %v9016 = vpop.f32.mrf.mxu0
        %v9017 = vadd.f32 0.0, %v9016
        %v9018 = vpop.f32.mrf.mxu0
        %v9019 = vadd.f32 0.0, %v9018
        %9020 = vmatmul.bf16.gmra.mxu0 %v8896
        %v9021 = vpop.f32.mrf.mxu0
        %v9022 = vadd.f32 0.0, %v9021
        %v9023 = vpop.f32.mrf.mxu0
        %v9024 = vadd.f32 0.0, %v9023
        %9025 = vmatmul.bf16.gmra.mxu0 %v8897
        %v9026 = vpop.f32.mrf.mxu0
        %v9027 = vadd.f32 0.0, %v9026
        %v9028 = vpop.f32.mrf.mxu0
        %v9029 = vadd.f32 0.0, %v9028
        %9030 = vmatmul.bf16.gmra.mxu0 %v8898
        %v9031 = vpop.f32.mrf.mxu0
        %v9032 = vadd.f32 0.0, %v9031
        %v9033 = vpop.f32.mrf.mxu0
        %v9034 = vadd.f32 0.0, %v9033
        %9035 = vmatmul.bf16.gmra.mxu0 %v8899
        %v9036 = vpop.f32.mrf.mxu0
        %v9037 = vadd.f32 0.0, %v9036
        %v9038 = vpop.f32.mrf.mxu0
        %v9039 = vadd.f32 0.0, %v9038
        %9040 = vmatmul.bf16.gmra.mxu0 %v8900
        %v9041 = vpop.f32.mrf.mxu0
        %v9042 = vadd.f32 0.0, %v9041
        %v9043 = vpop.f32.mrf.mxu0
        %v9044 = vadd.f32 0.0, %v9043
        %9045 = vmatmul.bf16.gmra.mxu0 %v8901
        %v9046 = vpop.f32.mrf.mxu0
        %v9047 = vadd.f32 0.0, %v9046
        %v9048 = vpop.f32.mrf.mxu0
        %v9049 = vadd.f32 0.0, %v9048
        %9050 = vmatmul.bf16.gmra.mxu0 %v8902
        %v9051 = vpop.f32.mrf.mxu0
        %v9052 = vadd.f32 0.0, %v9051
        %v9053 = vpop.f32.mrf.mxu0
        %v9054 = vadd.f32 0.0, %v9053
        %9055 = vdwg.mxu0
        %v9056 = vadd.f32 %v8742, %v8977
        %v9057 = vadd.f32 %v8743, %v8979
        %v9058 = vadd.f32 %v8744, %v8982
        %v9059 = vadd.f32 %v8745, %v8984
        %v9060 = vadd.f32 %v8746, %v8987
        %v9061 = vadd.f32 %v8747, %v8989
        %v9062 = vadd.f32 %v8748, %v8992
        %v9063 = vadd.f32 %v8749, %v8994
        %v9064 = vadd.f32 %v8750, %v8997
        %v9065 = vadd.f32 %v8751, %v8999
        %v9066 = vadd.f32 %v8752, %v9002
        %v9067 = vadd.f32 %v8753, %v9004
        %v9068 = vadd.f32 %v8754, %v9007
        %v9069 = vadd.f32 %v8755, %v9009
        %v9070 = vadd.f32 %v8756, %v9012
        %v9071 = vadd.f32 %v8757, %v9014
        %v9072 = vadd.f32 %v8758, %v9017
        %v9073 = vadd.f32 %v8759, %v9019
        %v9074 = vadd.f32 %v8760, %v9022
        %v9075 = vadd.f32 %v8761, %v9024
        %v9076 = vadd.f32 %v8762, %v9027
        %v9077 = vadd.f32 %v8763, %v9029
        %v9078 = vadd.f32 %v8764, %v9032
        %v9079 = vadd.f32 %v8765, %v9034
        %v9080 = vadd.f32 %v8766, %v9037
        %v9081 = vadd.f32 %v8767, %v9039
        %v9082 = vadd.f32 %v8768, %v9042
        %v9083 = vadd.f32 %v8769, %v9044
        %v9084 = vadd.f32 %v8770, %v9047
        %v9085 = vadd.f32 %v8771, %v9049
        %v9086 = vadd.f32 %v8772, %v9052
        %v9087 = vadd.f32 %v8773, %v9054
        %v9088 = vld [vmem:[%s8123 + $0x4] sm:$0xf]
        %v9089 = vld [vmem:[%s8123 + $0x8] sm:$0xf]
        %v9090 = vld [vmem:[%s8123 + $0xc] sm:$0x1]
        %v9091 = vld [vmem:[%s8123 + $0x14] sm:$0xf]
        %v9092 = vld [vmem:[%s8123 + $0x18] sm:$0xf]
        %v9093 = vld [vmem:[%s8123 + $0x1c] sm:$0x1]
        %v9094 = vld [vmem:[%s8123 + $0x24] sm:$0xf]
        %v9095 = vld [vmem:[%s8123 + $0x28] sm:$0xf]
        %v9096 = vld [vmem:[%s8123 + $0x2c] sm:$0x1]
        %v9097 = vld [vmem:[%s8123 + $0x34] sm:$0xf]
        %v9098 = vld [vmem:[%s8123 + $0x38] sm:$0xf]
        %v9099 = vld [vmem:[%s8123 + $0x3c] sm:$0x1]
        %v9100 = vld [vmem:[%s8123 + $0x44] sm:$0xf]
        %v9101 = vld [vmem:[%s8123 + $0x48] sm:$0xf]
        %v9102 = vld [vmem:[%s8123 + $0x4c] sm:$0x1]
        %v9103 = vld [vmem:[%s8123 + $0x54] sm:$0xf]
        %v9104 = vld [vmem:[%s8123 + $0x58] sm:$0xf]
        %v9105 = vld [vmem:[%s8123 + $0x5c] sm:$0x1]
        %v9106 = vld [vmem:[%s8123 + $0x64] sm:$0xf]
        %v9107 = vld [vmem:[%s8123 + $0x68] sm:$0xf]
        %v9108 = vld [vmem:[%s8123 + $0x6c] sm:$0x1]
        %v9109 = vld [vmem:[%s8123 + $0x74] sm:$0xf]
        %v9110 = vld [vmem:[%s8123 + $0x78] sm:$0xf]
        %v9111 = vld [vmem:[%s8123 + $0x7c] sm:$0x1]
        %v9112 = vld [vmem:[%s8123 + $0x84] sm:$0xf]
        %v9113 = vld [vmem:[%s8123 + $0x88] sm:$0xf]
        %v9114 = vld [vmem:[%s8123 + $0x8c] sm:$0x1]
        %v9115 = vld [vmem:[%s8123 + $0x94] sm:$0xf]
        %v9116 = vld [vmem:[%s8123 + $0x98] sm:$0xf]
        %v9117 = vld [vmem:[%s8123 + $0x9c] sm:$0x1]
        %v9118 = vld [vmem:[%s8123 + $0xa4] sm:$0xf]
        %v9119 = vld [vmem:[%s8123 + $0xa8] sm:$0xf]
        %v9120 = vld [vmem:[%s8123 + $0xac] sm:$0x1]
        %v9121 = vld [vmem:[%s8123 + $0xb4] sm:$0xf]
        %v9122 = vld [vmem:[%s8123 + $0xb8] sm:$0xf]
        %v9123 = vld [vmem:[%s8123 + $0xbc] sm:$0x1]
        %v9124 = vld [vmem:[%s8123 + $0xc4] sm:$0xf]
        %v9125 = vld [vmem:[%s8123 + $0xc8] sm:$0xf]
        %v9126 = vld [vmem:[%s8123 + $0xcc] sm:$0x1]
        %v9127 = vld [vmem:[%s8123 + $0xd4] sm:$0xf]
        %v9128 = vld [vmem:[%s8123 + $0xd8] sm:$0xf]
        %v9129 = vld [vmem:[%s8123 + $0xdc] sm:$0x1]
        %v9130 = vld [vmem:[%s8123 + $0xe4] sm:$0xf]
        %v9131 = vld [vmem:[%s8123 + $0xe8] sm:$0xf]
        %v9132 = vld [vmem:[%s8123 + $0xec] sm:$0x1]
        %v9133 = vld [vmem:[%s8123 + $0xf4] sm:$0xf]
        %v9134 = vld [vmem:[%s8123 + $0xf8] sm:$0xf]
        %v9135 = vld [vmem:[%s8123 + $0xfc] sm:$0x1]
        %s9136 = scalar_lea.vmem [#allocation3], 512
        %v9137 = vld [vmem:[%s9136] sm:$0xf]
        %v9138 = vld [vmem:[%s9136 + $0x4] sm:$0xf]
        %v9139 = vld [vmem:[%s9136 + $0x8] sm:$0xf]
        %v9140 = vld [vmem:[%s9136 + $0xc] sm:$0xf]
        %v9141 = vld [vmem:[%s9136 + $0x10] sm:$0xf]
        %v9142 = vld [vmem:[%s9136 + $0x14] sm:$0xf]
        %v9143 = vld [vmem:[%s9136 + $0x18] sm:$0xf]
        %v9144 = vld [vmem:[%s9136 + $0x1c] sm:$0xf]
        %v9145 = vld [vmem:[%s9136 + $0x20] sm:$0xf]
        %v9146 = vld [vmem:[%s9136 + $0x24] sm:$0xf]
        %v9147 = vld [vmem:[%s9136 + $0x28] sm:$0xf]
        %v9148 = vld [vmem:[%s9136 + $0x2c] sm:$0xf]
        %v9149 = vld [vmem:[%s9136 + $0x30] sm:$0xf]
        %v9150 = vld [vmem:[%s9136 + $0x34] sm:$0xf]
        %v9151 = vld [vmem:[%s9136 + $0x38] sm:$0xf]
        %v9152 = vld [vmem:[%s9136 + $0x3c] sm:$0xf]
        %v9154 = vshrl.u32 %v9088, 16
        %v9156 = vrot.slane %v9154, 4
        %v9157 = vshll.u32 %v9088, 16
        %v9159 = vrot.slane %v9157, 5
        %v9160 = vor.u32 %v9156, %v9159
        %v9161 = vrot.slane %v9160, 4
        %v9163 = vshll.u32 %v9089, 16
        %v9165 = vrot.slane %v9163, 5
        %v9166 = vsel %vm486, %v9161, %v9165
        %v9167 = vshrl.u32 %v9089, 16
        %v9169 = vrot.slane %v9167, 4
        %v9170 = vor.u32 %v9169, %v9165
        %v9171 = vrot.slane %v9170, 4
        %v9173 = vshll.u32 %v9090, 16
        %v9175 = vrot.slane %v9173, 5
        %v9176 = vsel %vm486, %v9171, %v9175
        %v9178 = vshrl.u32 %v9091, 16
        %v9180 = vrot.slane %v9178, 4
        %v9181 = vshll.u32 %v9091, 16
        %v9183 = vrot.slane %v9181, 5
        %v9184 = vor.u32 %v9180, %v9183
        %v9185 = vrot.slane %v9184, 4
        %v9187 = vshll.u32 %v9092, 16
        %v9189 = vrot.slane %v9187, 5
        %v9190 = vsel %vm486, %v9185, %v9189
        %v9191 = vshrl.u32 %v9092, 16
        %v9193 = vrot.slane %v9191, 4
        %v9194 = vor.u32 %v9193, %v9189
        %v9195 = vrot.slane %v9194, 4
        %v9197 = vshll.u32 %v9093, 16
        %v9199 = vrot.slane %v9197, 5
        %v9200 = vsel %vm486, %v9195, %v9199
        %v9202 = vshrl.u32 %v9094, 16
        %v9204 = vrot.slane %v9202, 4
        %v9205 = vshll.u32 %v9094, 16
        %v9207 = vrot.slane %v9205, 5
        %v9208 = vor.u32 %v9204, %v9207
        %v9209 = vrot.slane %v9208, 4
        %v9211 = vshll.u32 %v9095, 16
        %v9213 = vrot.slane %v9211, 5
        %v9214 = vsel %vm486, %v9209, %v9213
        %v9215 = vshrl.u32 %v9095, 16
        %v9217 = vrot.slane %v9215, 4
        %v9218 = vor.u32 %v9217, %v9213
        %v9219 = vrot.slane %v9218, 4
        %v9221 = vshll.u32 %v9096, 16
        %v9223 = vrot.slane %v9221, 5
        %v9224 = vsel %vm486, %v9219, %v9223
        %v9226 = vshrl.u32 %v9097, 16
        %v9228 = vrot.slane %v9226, 4
        %v9229 = vshll.u32 %v9097, 16
        %v9231 = vrot.slane %v9229, 5
        %v9232 = vor.u32 %v9228, %v9231
        %v9233 = vrot.slane %v9232, 4
        %v9235 = vshll.u32 %v9098, 16
        %v9237 = vrot.slane %v9235, 5
        %v9238 = vsel %vm486, %v9233, %v9237
        %v9239 = vshrl.u32 %v9098, 16
        %v9241 = vrot.slane %v9239, 4
        %v9242 = vor.u32 %v9241, %v9237
        %v9243 = vrot.slane %v9242, 4
        %v9245 = vshll.u32 %v9099, 16
        %v9247 = vrot.slane %v9245, 5
        %v9248 = vsel %vm486, %v9243, %v9247
        %v9250 = vshrl.u32 %v9100, 16
        %v9252 = vrot.slane %v9250, 4
        %v9253 = vshll.u32 %v9100, 16
        %v9255 = vrot.slane %v9253, 5
        %v9256 = vor.u32 %v9252, %v9255
        %v9257 = vrot.slane %v9256, 4
        %v9259 = vshll.u32 %v9101, 16
        %v9261 = vrot.slane %v9259, 5
        %v9262 = vsel %vm486, %v9257, %v9261
        %v9263 = vshrl.u32 %v9101, 16
        %v9265 = vrot.slane %v9263, 4
        %v9266 = vor.u32 %v9265, %v9261
        %v9267 = vrot.slane %v9266, 4
        %v9269 = vshll.u32 %v9102, 16
        %v9271 = vrot.slane %v9269, 5
        %v9272 = vsel %vm486, %v9267, %v9271
        %v9274 = vshrl.u32 %v9103, 16
        %v9276 = vrot.slane %v9274, 4
        %v9277 = vshll.u32 %v9103, 16
        %v9279 = vrot.slane %v9277, 5
        %v9280 = vor.u32 %v9276, %v9279
        %v9281 = vrot.slane %v9280, 4
        %v9283 = vshll.u32 %v9104, 16
        %v9285 = vrot.slane %v9283, 5
        %v9286 = vsel %vm486, %v9281, %v9285
        %v9287 = vshrl.u32 %v9104, 16
        %v9289 = vrot.slane %v9287, 4
        %v9290 = vor.u32 %v9289, %v9285
        %v9291 = vrot.slane %v9290, 4
        %v9293 = vshll.u32 %v9105, 16
        %v9295 = vrot.slane %v9293, 5
        %v9296 = vsel %vm486, %v9291, %v9295
        %v9298 = vshrl.u32 %v9106, 16
        %v9300 = vrot.slane %v9298, 4
        %v9301 = vshll.u32 %v9106, 16
        %v9303 = vrot.slane %v9301, 5
        %v9304 = vor.u32 %v9300, %v9303
        %v9305 = vrot.slane %v9304, 4
        %v9307 = vshll.u32 %v9107, 16
        %v9309 = vrot.slane %v9307, 5
        %v9310 = vsel %vm486, %v9305, %v9309
        %v9311 = vshrl.u32 %v9107, 16
        %v9313 = vrot.slane %v9311, 4
        %v9314 = vor.u32 %v9313, %v9309
        %v9315 = vrot.slane %v9314, 4
        %v9317 = vshll.u32 %v9108, 16
        %v9319 = vrot.slane %v9317, 5
        %v9320 = vsel %vm486, %v9315, %v9319
        %v9322 = vshrl.u32 %v9109, 16
        %v9324 = vrot.slane %v9322, 4
        %v9325 = vshll.u32 %v9109, 16
        %v9327 = vrot.slane %v9325, 5
        %v9328 = vor.u32 %v9324, %v9327
        %v9329 = vrot.slane %v9328, 4
        %v9331 = vshll.u32 %v9110, 16
        %v9333 = vrot.slane %v9331, 5
        %v9334 = vsel %vm486, %v9329, %v9333
        %v9335 = vshrl.u32 %v9110, 16
        %v9337 = vrot.slane %v9335, 4
        %v9338 = vor.u32 %v9337, %v9333
        %v9339 = vrot.slane %v9338, 4
        %v9341 = vshll.u32 %v9111, 16
        %v9343 = vrot.slane %v9341, 5
        %v9344 = vsel %vm486, %v9339, %v9343
        %v9346 = vshrl.u32 %v9112, 16
        %v9348 = vrot.slane %v9346, 4
        %v9349 = vshll.u32 %v9112, 16
        %v9351 = vrot.slane %v9349, 5
        %v9352 = vor.u32 %v9348, %v9351
        %v9353 = vrot.slane %v9352, 4
        %v9355 = vshll.u32 %v9113, 16
        %v9357 = vrot.slane %v9355, 5
        %v9358 = vsel %vm486, %v9353, %v9357
        %v9359 = vshrl.u32 %v9113, 16
        %v9361 = vrot.slane %v9359, 4
        %v9362 = vor.u32 %v9361, %v9357
        %v9363 = vrot.slane %v9362, 4
        %v9365 = vshll.u32 %v9114, 16
        %v9367 = vrot.slane %v9365, 5
        %v9368 = vsel %vm486, %v9363, %v9367
        %v9370 = vshrl.u32 %v9115, 16
        %v9372 = vrot.slane %v9370, 4
        %v9373 = vshll.u32 %v9115, 16
        %v9375 = vrot.slane %v9373, 5
        %v9376 = vor.u32 %v9372, %v9375
        %v9377 = vrot.slane %v9376, 4
        %v9379 = vshll.u32 %v9116, 16
        %v9381 = vrot.slane %v9379, 5
        %v9382 = vsel %vm486, %v9377, %v9381
        %v9383 = vshrl.u32 %v9116, 16
        %v9385 = vrot.slane %v9383, 4
        %v9386 = vor.u32 %v9385, %v9381
        %v9387 = vrot.slane %v9386, 4
        %v9389 = vshll.u32 %v9117, 16
        %v9391 = vrot.slane %v9389, 5
        %v9392 = vsel %vm486, %v9387, %v9391
        %v9394 = vshrl.u32 %v9118, 16
        %v9396 = vrot.slane %v9394, 4
        %v9397 = vshll.u32 %v9118, 16
        %v9399 = vrot.slane %v9397, 5
        %v9400 = vor.u32 %v9396, %v9399
        %v9401 = vrot.slane %v9400, 4
        %v9403 = vshll.u32 %v9119, 16
        %v9405 = vrot.slane %v9403, 5
        %v9406 = vsel %vm486, %v9401, %v9405
        %v9407 = vshrl.u32 %v9119, 16
        %v9409 = vrot.slane %v9407, 4
        %v9410 = vor.u32 %v9409, %v9405
        %v9411 = vrot.slane %v9410, 4
        %v9413 = vshll.u32 %v9120, 16
        %v9415 = vrot.slane %v9413, 5
        %v9416 = vsel %vm486, %v9411, %v9415
        %v9418 = vshrl.u32 %v9121, 16
        %v9420 = vrot.slane %v9418, 4
        %v9421 = vshll.u32 %v9121, 16
        %v9423 = vrot.slane %v9421, 5
        %v9424 = vor.u32 %v9420, %v9423
        %v9425 = vrot.slane %v9424, 4
        %v9427 = vshll.u32 %v9122, 16
        %v9429 = vrot.slane %v9427, 5
        %v9430 = vsel %vm486, %v9425, %v9429
        %v9431 = vshrl.u32 %v9122, 16
        %v9433 = vrot.slane %v9431, 4
        %v9434 = vor.u32 %v9433, %v9429
        %v9435 = vrot.slane %v9434, 4
        %v9437 = vshll.u32 %v9123, 16
        %v9439 = vrot.slane %v9437, 5
        %v9440 = vsel %vm486, %v9435, %v9439
        %v9442 = vshrl.u32 %v9124, 16
        %v9444 = vrot.slane %v9442, 4
        %v9445 = vshll.u32 %v9124, 16
        %v9447 = vrot.slane %v9445, 5
        %v9448 = vor.u32 %v9444, %v9447
        %v9449 = vrot.slane %v9448, 4
        %v9451 = vshll.u32 %v9125, 16
        %v9453 = vrot.slane %v9451, 5
        %v9454 = vsel %vm486, %v9449, %v9453
        %v9455 = vshrl.u32 %v9125, 16
        %v9457 = vrot.slane %v9455, 4
        %v9458 = vor.u32 %v9457, %v9453
        %v9459 = vrot.slane %v9458, 4
        %v9461 = vshll.u32 %v9126, 16
        %v9463 = vrot.slane %v9461, 5
        %v9464 = vsel %vm486, %v9459, %v9463
        %v9466 = vshrl.u32 %v9127, 16
        %v9468 = vrot.slane %v9466, 4
        %v9469 = vshll.u32 %v9127, 16
        %v9471 = vrot.slane %v9469, 5
        %v9472 = vor.u32 %v9468, %v9471
        %v9473 = vrot.slane %v9472, 4
        %v9475 = vshll.u32 %v9128, 16
        %v9477 = vrot.slane %v9475, 5
        %v9478 = vsel %vm486, %v9473, %v9477
        %v9479 = vshrl.u32 %v9128, 16
        %v9481 = vrot.slane %v9479, 4
        %v9482 = vor.u32 %v9481, %v9477
        %v9483 = vrot.slane %v9482, 4
        %v9485 = vshll.u32 %v9129, 16
        %v9487 = vrot.slane %v9485, 5
        %v9488 = vsel %vm486, %v9483, %v9487
        %v9490 = vshrl.u32 %v9130, 16
        %v9492 = vrot.slane %v9490, 4
        %v9493 = vshll.u32 %v9130, 16
        %v9495 = vrot.slane %v9493, 5
        %v9496 = vor.u32 %v9492, %v9495
        %v9497 = vrot.slane %v9496, 4
        %v9499 = vshll.u32 %v9131, 16
        %v9501 = vrot.slane %v9499, 5
        %v9502 = vsel %vm486, %v9497, %v9501
        %v9503 = vshrl.u32 %v9131, 16
        %v9505 = vrot.slane %v9503, 4
        %v9506 = vor.u32 %v9505, %v9501
        %v9507 = vrot.slane %v9506, 4
        %v9509 = vshll.u32 %v9132, 16
        %v9511 = vrot.slane %v9509, 5
        %v9512 = vsel %vm486, %v9507, %v9511
        %v9514 = vshrl.u32 %v9133, 16
        %v9516 = vrot.slane %v9514, 4
        %v9517 = vshll.u32 %v9133, 16
        %v9519 = vrot.slane %v9517, 5
        %v9520 = vor.u32 %v9516, %v9519
        %v9521 = vrot.slane %v9520, 4
        %v9523 = vshll.u32 %v9134, 16
        %v9525 = vrot.slane %v9523, 5
        %v9526 = vsel %vm486, %v9521, %v9525
        %v9527 = vshrl.u32 %v9134, 16
        %v9529 = vrot.slane %v9527, 4
        %v9530 = vor.u32 %v9529, %v9525
        %v9531 = vrot.slane %v9530, 4
        %v9533 = vshll.u32 %v9135, 16
        %v9535 = vrot.slane %v9533, 5
        %v9536 = vsel %vm486, %v9531, %v9535
        %v9537 = vunpack.c.l.b16 %v9166
        %v9538 = vunpack.c.l.b16 %v9176
        %v9539 = vunpack.c.l.b16 %v9190
        %v9540 = vunpack.c.l.b16 %v9200
        %v9541 = vunpack.c.l.b16 %v9214
        %v9542 = vunpack.c.l.b16 %v9224
        %v9543 = vunpack.c.l.b16 %v9238
        %v9544 = vunpack.c.l.b16 %v9248
        %v9545 = vunpack.c.l.b16 %v9262
        %v9546 = vunpack.c.l.b16 %v9272
        %v9547 = vunpack.c.l.b16 %v9286
        %v9548 = vunpack.c.l.b16 %v9296
        %v9549 = vunpack.c.l.b16 %v9310
        %v9550 = vunpack.c.l.b16 %v9320
        %v9551 = vunpack.c.l.b16 %v9334
        %v9552 = vunpack.c.l.b16 %v9344
        %v9553 = vunpack.c.l.b16 %v9358
        %v9554 = vunpack.c.l.b16 %v9368
        %v9555 = vunpack.c.l.b16 %v9382
        %v9556 = vunpack.c.l.b16 %v9392
        %v9557 = vunpack.c.l.b16 %v9406
        %v9558 = vunpack.c.l.b16 %v9416
        %v9559 = vunpack.c.l.b16 %v9430
        %v9560 = vunpack.c.l.b16 %v9440
        %v9561 = vunpack.c.l.b16 %v9454
        %v9562 = vunpack.c.l.b16 %v9464
        %v9563 = vunpack.c.l.b16 %v9478
        %v9564 = vunpack.c.l.b16 %v9488
        %v9565 = vunpack.c.l.b16 %v9502
        %v9566 = vunpack.c.l.b16 %v9512
        %v9567 = vunpack.c.l.b16 %v9526
        %v9568 = vunpack.c.l.b16 %v9536
        %v9569 = vpack.c.b16 %v9538, %v9537
        %v9570 = vpack.c.b16 %v9540, %v9539
        %v9571 = vpack.c.b16 %v9542, %v9541
        %v9572 = vpack.c.b16 %v9544, %v9543
        %v9573 = vpack.c.b16 %v9546, %v9545
        %v9574 = vpack.c.b16 %v9548, %v9547
        %v9575 = vpack.c.b16 %v9550, %v9549
        %v9576 = vpack.c.b16 %v9552, %v9551
        %v9577 = vpack.c.b16 %v9554, %v9553
        %v9578 = vpack.c.b16 %v9556, %v9555
        %v9579 = vpack.c.b16 %v9558, %v9557
        %v9580 = vpack.c.b16 %v9560, %v9559
        %v9581 = vpack.c.b16 %v9562, %v9561
        %v9582 = vpack.c.b16 %v9564, %v9563
        %v9583 = vpack.c.b16 %v9566, %v9565
        %v9584 = vpack.c.b16 %v9568, %v9567
        %v9617 = vunpack.c.l.b16 %v9137
        %v9618 = vunpack.c.l.b16 %v9138
        %v9619 = vunpack.c.l.b16 %v9139
        %v9620 = vunpack.c.l.b16 %v9140
        %v9621 = vunpack.c.l.b16 %v9141
        %v9622 = vunpack.c.l.b16 %v9142
        %v9623 = vunpack.c.l.b16 %v9143
        %v9624 = vunpack.c.l.b16 %v9144
        %v9625 = vunpack.c.l.b16 %v9145
        %v9626 = vunpack.c.l.b16 %v9146
        %v9627 = vunpack.c.l.b16 %v9147
        %v9628 = vunpack.c.l.b16 %v9148
        %v9629 = vunpack.c.l.b16 %v9149
        %v9630 = vunpack.c.l.b16 %v9150
        %v9631 = vunpack.c.l.b16 %v9151
        %v9632 = vunpack.c.l.b16 %v9152
        %v9633 = vpack.c.b16 %v9618, %v9617
        %v9634 = vpack.c.b16 %v9620, %v9619
        %v9635 = vpack.c.b16 %v9622, %v9621
        %v9636 = vpack.c.b16 %v9624, %v9623
        %v9637 = vpack.c.b16 %v9626, %v9625
        %v9638 = vpack.c.b16 %v9628, %v9627
        %v9639 = vpack.c.b16 %v9630, %v9629
        %v9640 = vpack.c.b16 %v9632, %v9631
        %9649 = vmatpush.bf16.msra.mxu0 %v9640
        %9650 = vmatpush.bf16.msra.mxu0 %v9639
        %9651 = vmatpush.bf16.msra.mxu0 %v9638
        %9652 = vmatpush.bf16.msra.mxu0 %v9637
        %9653 = vmatpush.bf16.msra.mxu0 %v9636
        %9654 = vmatpush.bf16.msra.mxu0 %v9635
        %9655 = vmatpush.bf16.msra.mxu0 %v9634
        %9656 = vmatpush.bf16.msra.mxu0 %v9633
        %9657 = vmatmul.bf16.gmra.mxu0 %v9569
        %v9658 = vpop.f32.mrf.mxu0
        %v9659 = vadd.f32 0.0, %v9658
        %v9660 = vpop.f32.mrf.mxu0
        %v9661 = vadd.f32 0.0, %v9660
        %9662 = vmatmul.bf16.gmra.mxu0 %v9570
        %v9663 = vpop.f32.mrf.mxu0
        %v9664 = vadd.f32 0.0, %v9663
        %v9665 = vpop.f32.mrf.mxu0
        %v9666 = vadd.f32 0.0, %v9665
        %9667 = vmatmul.bf16.gmra.mxu0 %v9571
        %v9668 = vpop.f32.mrf.mxu0
        %v9669 = vadd.f32 0.0, %v9668
        %v9670 = vpop.f32.mrf.mxu0
        %v9671 = vadd.f32 0.0, %v9670
        %9672 = vmatmul.bf16.gmra.mxu0 %v9572
        %v9673 = vpop.f32.mrf.mxu0
        %v9674 = vadd.f32 0.0, %v9673
        %v9675 = vpop.f32.mrf.mxu0
        %v9676 = vadd.f32 0.0, %v9675
        %9677 = vmatmul.bf16.gmra.mxu0 %v9573
        %v9678 = vpop.f32.mrf.mxu0
        %v9679 = vadd.f32 0.0, %v9678
        %v9680 = vpop.f32.mrf.mxu0
        %v9681 = vadd.f32 0.0, %v9680
        %9682 = vmatmul.bf16.gmra.mxu0 %v9574
        %v9683 = vpop.f32.mrf.mxu0
        %v9684 = vadd.f32 0.0, %v9683
        %v9685 = vpop.f32.mrf.mxu0
        %v9686 = vadd.f32 0.0, %v9685
        %9687 = vmatmul.bf16.gmra.mxu0 %v9575
        %v9688 = vpop.f32.mrf.mxu0
        %v9689 = vadd.f32 0.0, %v9688
        %v9690 = vpop.f32.mrf.mxu0
        %v9691 = vadd.f32 0.0, %v9690
        %9692 = vmatmul.bf16.gmra.mxu0 %v9576
        %v9693 = vpop.f32.mrf.mxu0
        %v9694 = vadd.f32 0.0, %v9693
        %v9695 = vpop.f32.mrf.mxu0
        %v9696 = vadd.f32 0.0, %v9695
        %9697 = vmatmul.bf16.gmra.mxu0 %v9577
        %v9698 = vpop.f32.mrf.mxu0
        %v9699 = vadd.f32 0.0, %v9698
        %v9700 = vpop.f32.mrf.mxu0
        %v9701 = vadd.f32 0.0, %v9700
        %9702 = vmatmul.bf16.gmra.mxu0 %v9578
        %v9703 = vpop.f32.mrf.mxu0
        %v9704 = vadd.f32 0.0, %v9703
        %v9705 = vpop.f32.mrf.mxu0
        %v9706 = vadd.f32 0.0, %v9705
        %9707 = vmatmul.bf16.gmra.mxu0 %v9579
        %v9708 = vpop.f32.mrf.mxu0
        %v9709 = vadd.f32 0.0, %v9708
        %v9710 = vpop.f32.mrf.mxu0
        %v9711 = vadd.f32 0.0, %v9710
        %9712 = vmatmul.bf16.gmra.mxu0 %v9580
        %v9713 = vpop.f32.mrf.mxu0
        %v9714 = vadd.f32 0.0, %v9713
        %v9715 = vpop.f32.mrf.mxu0
        %v9716 = vadd.f32 0.0, %v9715
        %9717 = vmatmul.bf16.gmra.mxu0 %v9581
        %v9718 = vpop.f32.mrf.mxu0
        %v9719 = vadd.f32 0.0, %v9718
        %v9720 = vpop.f32.mrf.mxu0
        %v9721 = vadd.f32 0.0, %v9720
        %9722 = vmatmul.bf16.gmra.mxu0 %v9582
        %v9723 = vpop.f32.mrf.mxu0
        %v9724 = vadd.f32 0.0, %v9723
        %v9725 = vpop.f32.mrf.mxu0
        %v9726 = vadd.f32 0.0, %v9725
        %9727 = vmatmul.bf16.gmra.mxu0 %v9583
        %v9728 = vpop.f32.mrf.mxu0
        %v9729 = vadd.f32 0.0, %v9728
        %v9730 = vpop.f32.mrf.mxu0
        %v9731 = vadd.f32 0.0, %v9730
        %9732 = vmatmul.bf16.gmra.mxu0 %v9584
        %v9733 = vpop.f32.mrf.mxu0
        %v9734 = vadd.f32 0.0, %v9733
        %v9735 = vpop.f32.mrf.mxu0
        %v9736 = vadd.f32 0.0, %v9735
        %9737 = vdwg.mxu0
        %v9738 = vadd.f32 %v9056, %v9659
        %v9739 = vadd.f32 %v9057, %v9661
        %v9740 = vadd.f32 %v9058, %v9664
        %v9741 = vadd.f32 %v9059, %v9666
        %v9742 = vadd.f32 %v9060, %v9669
        %v9743 = vadd.f32 %v9061, %v9671
        %v9744 = vadd.f32 %v9062, %v9674
        %v9745 = vadd.f32 %v9063, %v9676
        %v9746 = vadd.f32 %v9064, %v9679
        %v9747 = vadd.f32 %v9065, %v9681
        %v9748 = vadd.f32 %v9066, %v9684
        %v9749 = vadd.f32 %v9067, %v9686
        %v9750 = vadd.f32 %v9068, %v9689
        %v9751 = vadd.f32 %v9069, %v9691
        %v9752 = vadd.f32 %v9070, %v9694
        %v9753 = vadd.f32 %v9071, %v9696
        %v9754 = vadd.f32 %v9072, %v9699
        %v9755 = vadd.f32 %v9073, %v9701
        %v9756 = vadd.f32 %v9074, %v9704
        %v9757 = vadd.f32 %v9075, %v9706
        %v9758 = vadd.f32 %v9076, %v9709
        %v9759 = vadd.f32 %v9077, %v9711
        %v9760 = vadd.f32 %v9078, %v9714
        %v9761 = vadd.f32 %v9079, %v9716
        %v9762 = vadd.f32 %v9080, %v9719
        %v9763 = vadd.f32 %v9081, %v9721
        %v9764 = vadd.f32 %v9082, %v9724
        %v9765 = vadd.f32 %v9083, %v9726
        %v9766 = vadd.f32 %v9084, %v9729
        %v9767 = vadd.f32 %v9085, %v9731
        %v9768 = vadd.f32 %v9086, %v9734
        %v9769 = vadd.f32 %v9087, %v9736
        %v9770 = vld [vmem:[%s5] sm:$0x1]
        %v9772 = vperm.slane %v9770, 0
        %v9774 = vmul.f32 %v9738, %v9772
        %v9775 = vmul.f32 %v9739, %v9772
        %v9776 = vmul.f32 %v9740, %v9772
        %v9777 = vmul.f32 %v9741, %v9772
        %v9778 = vmul.f32 %v9742, %v9772
        %v9779 = vmul.f32 %v9743, %v9772
        %v9780 = vmul.f32 %v9744, %v9772
        %v9781 = vmul.f32 %v9745, %v9772
        %v9782 = vmul.f32 %v9746, %v9772
        %v9783 = vmul.f32 %v9747, %v9772
        %v9784 = vmul.f32 %v9748, %v9772
        %v9785 = vmul.f32 %v9749, %v9772
        %v9786 = vmul.f32 %v9750, %v9772
        %v9787 = vmul.f32 %v9751, %v9772
        %v9788 = vmul.f32 %v9752, %v9772
        %v9789 = vmul.f32 %v9753, %v9772
        %v9790 = vmul.f32 %v9754, %v9772
        %v9791 = vmul.f32 %v9755, %v9772
        %v9792 = vmul.f32 %v9756, %v9772
        %v9793 = vmul.f32 %v9757, %v9772
        %v9794 = vmul.f32 %v9758, %v9772
        %v9795 = vmul.f32 %v9759, %v9772
        %v9796 = vmul.f32 %v9760, %v9772
        %v9797 = vmul.f32 %v9761, %v9772
        %v9798 = vmul.f32 %v9762, %v9772
        %v9799 = vmul.f32 %v9763, %v9772
        %v9800 = vmul.f32 %v9764, %v9772
        %v9801 = vmul.f32 %v9765, %v9772
        %v9802 = vmul.f32 %v9766, %v9772
        %v9803 = vmul.f32 %v9767, %v9772
        %v9804 = vmul.f32 %v9768, %v9772
        %v9805 = vmul.f32 %v9769, %v9772
        %vm9854 = vcmask 1046528
        %v9855 = vrot.slane %v4845, 1
        %v9856 = vrot.slane %v4846, 1
        %v9857 = vsel %vm9854, %v9855, %v9856
        %v9858 = vrot.slane %v4847, 1
        %v9859 = vsel %vm9854, %v9856, %v9858
        %v9860 = vrot.slane %v4848, 1
        %v9861 = vrot.slane %v4849, 1
        %v9862 = vsel %vm9854, %v9860, %v9861
        %v9863 = vrot.slane %v4850, 1
        %v9864 = vsel %vm9854, %v9861, %v9863
        %v9865 = vrot.slane %v4851, 1
        %v9866 = vrot.slane %v4852, 1
        %v9867 = vsel %vm9854, %v9865, %v9866
        %v9868 = vrot.slane %v4853, 1
        %v9869 = vsel %vm9854, %v9866, %v9868
        %v9870 = vrot.slane %v4854, 1
        %v9871 = vrot.slane %v4855, 1
        %v9872 = vsel %vm9854, %v9870, %v9871
        %v9873 = vrot.slane %v4856, 1
        %v9874 = vsel %vm9854, %v9871, %v9873
        %v9875 = vrot.slane %v4857, 1
        %v9876 = vrot.slane %v4858, 1
        %v9877 = vsel %vm9854, %v9875, %v9876
        %v9878 = vrot.slane %v4859, 1
        %v9879 = vsel %vm9854, %v9876, %v9878
        %v9880 = vrot.slane %v4860, 1
        %v9881 = vrot.slane %v4861, 1
        %v9882 = vsel %vm9854, %v9880, %v9881
        %v9883 = vrot.slane %v4862, 1
        %v9884 = vsel %vm9854, %v9881, %v9883
        %v9885 = vrot.slane %v4863, 1
        %v9886 = vrot.slane %v4864, 1
        %v9887 = vsel %vm9854, %v9885, %v9886
        %v9888 = vrot.slane %v4865, 1
        %v9889 = vsel %vm9854, %v9886, %v9888
        %v9890 = vrot.slane %v4866, 1
        %v9891 = vrot.slane %v4867, 1
        %v9892 = vsel %vm9854, %v9890, %v9891
        %v9893 = vrot.slane %v4868, 1
        %v9894 = vsel %vm9854, %v9891, %v9893
        %v9895 = vrot.slane %v4869, 1
        %v9896 = vrot.slane %v4870, 1
        %v9897 = vsel %vm9854, %v9895, %v9896
        %v9898 = vrot.slane %v4871, 1
        %v9899 = vsel %vm9854, %v9896, %v9898
        %v9900 = vrot.slane %v4872, 1
        %v9901 = vrot.slane %v4873, 1
        %v9902 = vsel %vm9854, %v9900, %v9901
        %v9903 = vrot.slane %v4874, 1
        %v9904 = vsel %vm9854, %v9901, %v9903
        %v9905 = vrot.slane %v4875, 1
        %v9906 = vrot.slane %v4876, 1
        %v9907 = vsel %vm9854, %v9905, %v9906
        %v9908 = vrot.slane %v4877, 1
        %v9909 = vsel %vm9854, %v9906, %v9908
        %v9910 = vrot.slane %v4878, 1
        %v9911 = vrot.slane %v4879, 1
        %v9912 = vsel %vm9854, %v9910, %v9911
        %v9913 = vrot.slane %v4880, 1
        %v9914 = vsel %vm9854, %v9911, %v9913
        %v9915 = vrot.slane %v4881, 1
        %v9916 = vrot.slane %v4882, 1
        %v9917 = vsel %vm9854, %v9915, %v9916
        %v9918 = vrot.slane %v4883, 1
        %v9919 = vsel %vm9854, %v9916, %v9918
        %v9920 = vrot.slane %v4884, 1
        %v9921 = vrot.slane %v4885, 1
        %v9922 = vsel %vm9854, %v9920, %v9921
        %v9923 = vrot.slane %v4886, 1
        %v9924 = vsel %vm9854, %v9921, %v9923
        %v9925 = vrot.slane %v4887, 1
        %v9926 = vrot.slane %v4888, 1
        %v9927 = vsel %vm9854, %v9925, %v9926
        %v9928 = vrot.slane %v4889, 1
        %v9929 = vsel %vm9854, %v9926, %v9928
        %v9930 = vrot.slane %v4890, 1
        %v9931 = vrot.slane %v4891, 1
        %v9932 = vsel %vm9854, %v9930, %v9931
        %v9933 = vrot.slane %v4892, 1
        %v9934 = vsel %vm9854, %v9931, %v9933
        %v9967 = vadd.f32 %v9774, %v9857
        %v9968 = vadd.f32 %v9775, %v9859
        %v9969 = vadd.f32 %v9776, %v9862
        %v9970 = vadd.f32 %v9777, %v9864
        %v9971 = vadd.f32 %v9778, %v9867
        %v9972 = vadd.f32 %v9779, %v9869
        %v9973 = vadd.f32 %v9780, %v9872
        %v9974 = vadd.f32 %v9781, %v9874
        %v9975 = vadd.f32 %v9782, %v9877
        %v9976 = vadd.f32 %v9783, %v9879
        %v9977 = vadd.f32 %v9784, %v9882
        %v9978 = vadd.f32 %v9785, %v9884
        %v9979 = vadd.f32 %v9786, %v9887
        %v9980 = vadd.f32 %v9787, %v9889
        %v9981 = vadd.f32 %v9788, %v9892
        %v9982 = vadd.f32 %v9789, %v9894
        %v9983 = vadd.f32 %v9790, %v9897
        %v9984 = vadd.f32 %v9791, %v9899
        %v9985 = vadd.f32 %v9792, %v9902
        %v9986 = vadd.f32 %v9793, %v9904
        %v9987 = vadd.f32 %v9794, %v9907
        %v9988 = vadd.f32 %v9795, %v9909
        %v9989 = vadd.f32 %v9796, %v9912
        %v9990 = vadd.f32 %v9797, %v9914
        %v9991 = vadd.f32 %v9798, %v9917
        %v9992 = vadd.f32 %v9799, %v9919
        %v9993 = vadd.f32 %v9800, %v9922
        %v9994 = vadd.f32 %v9801, %v9924
        %v9995 = vadd.f32 %v9802, %v9927
        %v9996 = vadd.f32 %v9803, %v9929
        %v9997 = vadd.f32 %v9804, %v9932
        %v9998 = vadd.f32 %v9805, %v9934
        %v9999 = vld [vmem:[%s6] sm:$0x1]
        %v10001 = vperm.slane %v9999, 0
        %v10003 = vadd.f32 %v9967, %v10001
        %v10004 = vadd.f32 %v9968, %v10001
        %v10005 = vadd.f32 %v9969, %v10001
        %v10006 = vadd.f32 %v9970, %v10001
        %v10007 = vadd.f32 %v9971, %v10001
        %v10008 = vadd.f32 %v9972, %v10001
        %v10009 = vadd.f32 %v9973, %v10001
        %v10010 = vadd.f32 %v9974, %v10001
        %v10011 = vadd.f32 %v9975, %v10001
        %v10012 = vadd.f32 %v9976, %v10001
        %v10013 = vadd.f32 %v9977, %v10001
        %v10014 = vadd.f32 %v9978, %v10001
        %v10015 = vadd.f32 %v9979, %v10001
        %v10016 = vadd.f32 %v9980, %v10001
        %v10017 = vadd.f32 %v9981, %v10001
        %v10018 = vadd.f32 %v9982, %v10001
        %v10019 = vadd.f32 %v9983, %v10001
        %v10020 = vadd.f32 %v9984, %v10001
        %v10021 = vadd.f32 %v9985, %v10001
        %v10022 = vadd.f32 %v9986, %v10001
        %v10023 = vadd.f32 %v9987, %v10001
        %v10024 = vadd.f32 %v9988, %v10001
        %v10025 = vadd.f32 %v9989, %v10001
        %v10026 = vadd.f32 %v9990, %v10001
        %v10027 = vadd.f32 %v9991, %v10001
        %v10028 = vadd.f32 %v9992, %v10001
        %v10029 = vadd.f32 %v9993, %v10001
        %v10030 = vadd.f32 %v9994, %v10001
        %v10031 = vadd.f32 %v9995, %v10001
        %v10032 = vadd.f32 %v9996, %v10001
        %v10033 = vadd.f32 %v9997, %v10001
        %v10034 = vadd.f32 %v9998, %v10001
        %v10035 = vmax.f32 %v10003, 0.0
        %v10036 = vmax.f32 %v10004, 0.0
        %v10037 = vmax.f32 %v10005, 0.0
        %v10038 = vmax.f32 %v10006, 0.0
        %v10039 = vmax.f32 %v10007, 0.0
        %v10040 = vmax.f32 %v10008, 0.0
        %v10041 = vmax.f32 %v10009, 0.0
        %v10042 = vmax.f32 %v10010, 0.0
        %v10043 = vmax.f32 %v10011, 0.0
        %v10044 = vmax.f32 %v10012, 0.0
        %v10045 = vmax.f32 %v10013, 0.0
        %v10046 = vmax.f32 %v10014, 0.0
        %v10047 = vmax.f32 %v10015, 0.0
        %v10048 = vmax.f32 %v10016, 0.0
        %v10049 = vmax.f32 %v10017, 0.0
        %v10050 = vmax.f32 %v10018, 0.0
        %v10051 = vmax.f32 %v10019, 0.0
        %v10052 = vmax.f32 %v10020, 0.0
        %v10053 = vmax.f32 %v10021, 0.0
        %v10054 = vmax.f32 %v10022, 0.0
        %v10055 = vmax.f32 %v10023, 0.0
        %v10056 = vmax.f32 %v10024, 0.0
        %v10057 = vmax.f32 %v10025, 0.0
        %v10058 = vmax.f32 %v10026, 0.0
        %v10059 = vmax.f32 %v10027, 0.0
        %v10060 = vmax.f32 %v10028, 0.0
        %v10061 = vmax.f32 %v10029, 0.0
        %v10062 = vmax.f32 %v10030, 0.0
        %v10063 = vmax.f32 %v10031, 0.0
        %v10064 = vmax.f32 %v10032, 0.0
        %v10065 = vmax.f32 %v10033, 0.0
        %v10066 = vmax.f32 %v10034, 0.0
        %10067 = vst [vmem:[%s288] sm:$0xff] %v10035
        %10068 = vst [vmem:[%s288 + $0x8] sm:$0xff] %v10036
        %10069 = vst [vmem:[%s288 + $0x10] sm:$0xff] %v10037
        %10070 = vst [vmem:[%s288 + $0x18] sm:$0xff] %v10038
        %10071 = vst [vmem:[%s288 + $0x20] sm:$0xff] %v10039
        %10072 = vst [vmem:[%s288 + $0x28] sm:$0xff] %v10040
        %10073 = vst [vmem:[%s288 + $0x30] sm:$0xff] %v10041
        %10074 = vst [vmem:[%s288 + $0x38] sm:$0xff] %v10042
        %10075 = vst [vmem:[%s288 + $0x40] sm:$0xff] %v10043
        %10076 = vst [vmem:[%s288 + $0x48] sm:$0xff] %v10044
        %10077 = vst [vmem:[%s288 + $0x50] sm:$0xff] %v10045
        %10078 = vst [vmem:[%s288 + $0x58] sm:$0xff] %v10046
        %10079 = vst [vmem:[%s288 + $0x60] sm:$0xff] %v10047
        %10080 = vst [vmem:[%s288 + $0x68] sm:$0xff] %v10048
        %10081 = vst [vmem:[%s288 + $0x70] sm:$0xff] %v10049
        %10082 = vst [vmem:[%s288 + $0x78] sm:$0xff] %v10050
        %10083 = vst [vmem:[%s288 + $0x80] sm:$0xff] %v10051
        %10084 = vst [vmem:[%s288 + $0x88] sm:$0xff] %v10052
        %10085 = vst [vmem:[%s288 + $0x90] sm:$0xff] %v10053
        %10086 = vst [vmem:[%s288 + $0x98] sm:$0xff] %v10054
        %10087 = vst [vmem:[%s288 + $0xa0] sm:$0xff] %v10055
        %10088 = vst [vmem:[%s288 + $0xa8] sm:$0xff] %v10056
        %10089 = vst [vmem:[%s288 + $0xb0] sm:$0xff] %v10057
        %10090 = vst [vmem:[%s288 + $0xb8] sm:$0xff] %v10058
        %10091 = vst [vmem:[%s288 + $0xc0] sm:$0xff] %v10059
        %10092 = vst [vmem:[%s288 + $0xc8] sm:$0xff] %v10060
        %10093 = vst [vmem:[%s288 + $0xd0] sm:$0xff] %v10061
        %10094 = vst [vmem:[%s288 + $0xd8] sm:$0xff] %v10062
        %10095 = vst [vmem:[%s288 + $0xe0] sm:$0xff] %v10063
        %10096 = vst [vmem:[%s288 + $0xe8] sm:$0xff] %v10064
        %10097 = vst [vmem:[%s288 + $0xf0] sm:$0xff] %v10065
        %10098 = vst [vmem:[%s288 + $0xf8] sm:$0xff] %v10066
        %s10099 = sand.u32 %s182, 1
        %s10100 = scalar_lea.sflag [#allocation5], %s10099
        %s10101 = sand.u32 %s182, 1
        %s10102 = smul.addr %s10101, 256
        %s10103 = scalar_lea.vmem [#allocation6], %s10102
        // Predicated region
        $region57: #{tpu_custom_call.1} parent=47 // pred_check
          %p10104 = pneg %p192
        $region58: #{tpu_custom_call.1} parent=47 // pred_check_branch
          %10106 = sbr.rel (%p10104) target = $region60
        $region59: #{tpu_custom_call.1} parent=47 // pred_region
          %10108 = vsyncadd %s10100, 0
          %s10109 = smul.addr %s22, 32
          %s10110 = smul.addr %s10109, 8
          %s10111 = scalar_lea.hbm %s7, %s10110
          %s10112 = sshll.u32 %s10103, 4
          %s10113 = int_to_ptr.vmem [resolvable:$true] %s10112
          %s10114 = sshll.u32 %s10111, 4
          %s10115 = int_to_ptr.hbm [resolvable:$true] %s10114
          %10120 = dma.vmem_to_hbm [thread:$0]  %s10113, 4096, %s10115, %s10100, 128, 128, 8
        $region60: #{tpu_custom_call.1} parent=47 // pred_fallthru
          _
      $region48: #{tpu_custom_call.1} parent=5 // pred_fallthru
        _
      %p10121 = scmp.le.s32.totalorder 2, %s17
      // Predicated region
      $region61: #{tpu_custom_call.1} parent=5 // pred_check
        %p10122 = pneg %p10121
      $region62: #{tpu_custom_call.1} parent=5 // pred_check_branch
        %10124 = sbr.rel (%p10122) target = $region64
      $region63: #{tpu_custom_call.1} parent=5 // pred_region
        %s10125 = ssub.s32 %s17, 2
        // Predicated region
        $region65: #{tpu_custom_call.1} parent=63 // pred_check
          %p10126 = pneg %p198
        $region66: #{tpu_custom_call.1} parent=63 // pred_check_branch
          %10128 = sbr.rel (%p10126) target = $region68
        $region67: #{tpu_custom_call.1} parent=63 // pred_region
          %s10129 = sand.u32 %s183, 1
          %s10130 = scalar_lea.sflag [#allocation5], %s10129
          %s10131 = sand.u32 %s183, 1
          %s10132 = smul.addr %s10131, 256
          %s10133 = scalar_lea.vmem [#allocation6], %s10132
          %10135 = dma.done %s10130, 4096
        $region68: #{tpu_custom_call.1} parent=63 // pred_fallthru
          _
      $region64: #{tpu_custom_call.1} parent=5 // pred_fallthru
        _
    $region6: #{tpu_custom_call.1} parent=1 // loop_footer
      %s21 = sadd.s32 1, %s17
    $region7: #{tpu_custom_call.1} parent=1 // loop_footer_branch
      %16 = sbr.rel target = $region3
    $region8: #{tpu_custom_call.1} parent=1 // loop_exit
      _
    %10136 = vsyncpa [#allocation4], 1
    %s10137 = scalar_lea.sflag [#allocation4], 1
    %10138 = vsyncpa %s10137, 1
    %10139 = vsyncpa [#allocation5], 1
    %s10140 = scalar_lea.sflag [#allocation5], 1
    %10141 = vsyncpa %s10140, 1

</llo_original>
